<compile_context>
chip_gen: v7x
topology: tpu7x:2x2x1
jax: 0.10.0
libtpu: 0.0.40
codegen_flags: <defaults>
</compile_context>

<pallas_src>
import functools

import jax
import jax.numpy as jnp
from jax.experimental import pallas as pl
from jax.experimental.pallas import tpu as pltpu

OUT_H = 550
OUT_W = 550

# 8*ceil(ceil(550/k)/8) for k=1..5 -> last block is always >=95% full.
_ROW_TILES = (550, 280, 184, 144, 112)


# -----------------------------------------------------------------------------
# Interpolation matrix (PyTorch align_corners=False / half-pixel semantics),
# built with iota comparisons (no jnp.eye -> no O(in^2) temp).
# -----------------------------------------------------------------------------
def _interp_matrix(out_size: int, in_size: int) -> jnp.ndarray:
    scale = in_size / out_size
    o = jnp.arange(out_size, dtype=jnp.float32)
    src = jnp.maximum((o + 0.5) * scale - 0.5, 0.0)          # clamp below 0
    i0 = jnp.minimum(jnp.floor(src).astype(jnp.int32), in_size - 1)
    i1 = jnp.minimum(i0 + 1, in_size - 1)
    frac = src - i0.astype(jnp.float32)
    cols = jnp.arange(in_size, dtype=jnp.int32)[None, :]
    w0 = (1.0 - frac)[:, None] * (cols == i0[:, None]).astype(jnp.float32)
    w1 = frac[:, None] * (cols == i1[:, None]).astype(jnp.float32)
    # at the right boundary i0 == i1 and the weights still sum to 1
    return w0 + w1


# -----------------------------------------------------------------------------
# Generation-aware VMEM budgeting.
# -----------------------------------------------------------------------------
def _vmem_capacity_bytes() -> int:
    try:
        return int(pltpu.get_tpu_info().vmem_capacity_bytes)
    except Exception:
        return 64 * 1024 * 1024          # conservative (v7x-sized) fallback


def _vmem_bytes(th, kh, w, in_bytes, precision, n, n_s):
    wstack = 2 if precision == "bfloat16" else 1   # hi/lo stacked weights
    wbytes = 2 if precision == "bfloat16" else 4
    cbytes = 2 if precision == "bfloat16" else 4
    img_bufs = 1 if (n == 1 and n_s == 1) else 2
    img = img_bufs * 3 * kh * w * in_bytes
    wy = 2 * wstack * th * kh * wbytes
    wxt = wstack * w * OUT_W * wbytes              # Buffered(1): fetched once
    out = 2 * 3 * th * OUT_W * 4
    acc = 3 * th * w * 4 if n_s > 1 else 0
    temps = 2 * kh * w * cbytes + 2 * th * w * 4 + th * OUT_W * 4
    return img + wy + wxt + out + acc + temps


def _choose_tiles(h, w, in_bytes, precision, n, budget, row_tile, source_tile):
    row_cands = (min(row_tile, OUT_H),) if row_tile else _ROW_TILES
    if source_tile:
        src_cands = (min(source_tile, h),)
    else:
        src_cands = (h,) + tuple(k for k in (512, 384, 256, 192, 128, 96, 64, 32)
                                 if k < h)
    # Prefer keeping the whole source band resident (kh == h, no reduction axis),
    # and within that the biggest output-row tile that fits the budget.
    for kh in src_cands:
        n_s = -(-h // kh)
        for th in row_cands:
            if _vmem_bytes(th, kh, w, in_bytes, precision, n, n_s) <= budget:
                return th, kh
    # TODO(synk): extremely wide sources would additionally need W tiling.
    return row_cands[-1], src_cands[-1]


# -----------------------------------------------------------------------------
# Kernel factory.  One grid step processes all 3 channels of one
# (batch, output-row-block) pair; the optional grid axis `s` accumulates the
# row pass over source-height bands.
# -----------------------------------------------------------------------------
def _make_kernel(*, precision, n_s, kh, h_src, src_is_int, mask_src, use_acc):
    hi_lo = precision == "bfloat16"
    cdt = jnp.bfloat16 if hi_lo else jnp.float32

    def load_plane(img_ref, c_in, s):
        x = img_ref[0, c_in]                         # (KH, W) in source dtype
        if src_is_int:
            x = x.astype(jnp.int32)                  # widen uint8/int8 first
        x = x.astype(cdt)                            # cast happens on-chip
        if mask_src:                                 # zero rows past real H
            rows = jax.lax.broadcasted_iota(jnp.int32, x.shape, 0)
            x = jnp.where(rows + s * kh < h_src, x, jnp.zeros_like(x))
        return x

    def row_pass(wy_ref, x):                         # (TH,KH)@(KH,W) -> f32
        t = jnp.dot(wy_ref[0], x, preferred_element_type=jnp.float32)
        if hi_lo:                                    # bf16 hi/lo weight split
            t = t + jnp.dot(wy_ref[1], x, preferred_element_type=jnp.float32)
        return t

    def col_pass(wxt_ref, t):                        # (TH,W)@(W,550) -> f32
        tc = t.astype(cdt)
        o = jnp.dot(tc, wxt_ref[0], preferred_element_type=jnp.float32)
        if hi_lo:
            o = o + jnp.dot(tc, wxt_ref[1], preferred_element_type=jnp.float32)
        return o

    if use_acc:
        def kernel(img_ref, wy_ref, wxt_ref, out_ref, acc_ref):
            s = pl.program_id(2)

            @pl.when(s == 0)
            def _init():
                acc_ref[...] = jnp.zeros_like(acc_ref)

            for c_out in range(3):                   # BGR: out c reads in 2-c
                x = load_plane(img_ref, 2 - c_out, s)
                acc_ref[c_out] = acc_ref[c_out] + row_pass(wy_ref, x)

            @pl.when(s == n_s - 1)
            def _finalize():
                for c_out in range(3):
                    out_ref[0, c_out] = col_pass(wxt_ref, acc_ref[c_out])
    else:
        def kernel(img_ref, wy_ref, wxt_ref, out_ref):
            for c_out in range(3):
                x = load_plane(img_ref, 2 - c_out, 0)
                out_ref[0, c_out] = col_pass(wxt_ref, row_pass(wy_ref, x))

    return kernel


def _split_weight(m, precision):
    """f32 matrix -> stacked (1,...) f32 or (2,...) bf16 hi/lo."""
    if precision == "bfloat16":
        hi = m.astype(jnp.bfloat16)
        lo = (m - hi.astype(jnp.float32)).astype(jnp.bfloat16)
        return jnp.stack([hi, lo])
    return m[None]


def _spec(shape, index_map, mode=None):
    if mode is None:
        return pl.BlockSpec(shape, index_map)
    return pl.BlockSpec(shape, index_map, pipeline_mode=mode)


# -----------------------------------------------------------------------------
# Public wrapper.
# -----------------------------------------------------------------------------
@functools.partial(
    jax.jit, static_argnames=("data_format", "precision", "row_tile", "source_tile"))
def fast_base_transform(img, *, data_format="NHWC", precision=None,
                        row_tile=None, source_tile=None):
    """img: (N,H,W,3) [or (N,3,H,W) with data_format='NCHW'], any dtype.
    Returns (N,3,550,550) float32: bilinear resize, /255, BGR channel order."""
    if data_format == "NHWC":
        n, h, w, c = img.shape
        # transpose in the SOURCE dtype (no pre-cast) -> minimal HBM traffic;
        # the cast to the compute dtype happens inside the kernel.
        img = jnp.transpose(img, (0, 3, 1, 2))
    elif data_format == "NCHW":                      # caller already NCHW: no transpose
        n, c, h, w = img.shape
    else:
        raise ValueError("data_format must be 'NHWC' or 'NCHW'")
    if c != 3:
        raise ValueError("FastBaseTransform expects 3 channels")

    src_is_int = bool(jnp.issubdtype(img.dtype, jnp.integer))
    if precision is None:
        # integer / bf16 pixels are exact in bf16 -> take the fast MXU path;
        # float32 inputs keep exact f32 (PyTorch-close) semantics.
        precision = "bfloat16" if (src_is_int or img.dtype == jnp.bfloat16) else "float32"
    if precision not in ("float32", "bfloat16"):
        raise ValueError("precision must be 'float32' or 'bfloat16'")

    if row_tile is not None and not (row_tile == OUT_H or row_tile % 8 == 0):
        raise ValueError("row_tile must be 550 or a multiple of 8")
    if source_tile is not None and not (source_tile >= h or source_tile % 8 == 0):
        raise ValueError("source_tile must cover H or be a multiple of 8")

    phys = _vmem_capacity_bytes()
    budget = int(phys * 0.72)            # ~92 MiB on v5e/v6e (128), ~46 MiB on v7x (64)
    in_bytes = img.dtype.itemsize
    th, kh = _choose_tiles(h, w, in_bytes, precision, n, budget, row_tile, source_tile)
    n_r = -(-OUT_H // th)
    n_s = -(-h // kh)
    use_acc = n_s > 1
    mask_src = use_acc and (h % kh != 0)

    # Interp weights; 1/255 folded into wy so the scaling rides through the MXU.
    wy = _interp_matrix(OUT_H, h) * (1.0 / 255.0)
    # Zero-pad to full block multiples so weight blocks never contain garbage.
    wy = jnp.zeros((n_r * th, n_s * kh), jnp.float32).at[:OUT_H, :h].set(wy)
    wxt = _interp_matrix(OUT_W, w).T                 # (W, OUT_W)

    wy_in = _split_weight(wy, precision)             # (1|2, n_r*th, n_s*kh)
    wxt_in = _split_weight(wxt, precision)           # (1|2, W, OUT_W)
    wstack = wy_in.shape[0]

    est = _vmem_bytes(th, kh, w, in_bytes, precision, n, n_s)
    vmem_limit = int(min(max(int(est * 1.5), 32 * 1024 * 1024), phys * 0.85))

    kernel = _make_kernel(precision=precision, n_s=n_s, kh=kh, h_src=h,
                          src_is_int=src_is_int, mask_src=mask_src, use_acc=use_acc)

    # Single-buffer blocks whose index never changes (halves their footprint).
    img_mode = pl.Buffered(1) if (n == 1 and n_s == 1) else None
    wy_mode = pl.Buffered(1) if (n_r == 1 and n_s == 1) else None

    in_specs = [
        _spec((1, 3, kh, w), lambda b, r, s: (b, 0, s, 0), img_mode),
        _spec((wstack, th, kh), lambda b, r, s: (0, r, s), wy_mode),
        _spec((wstack, w, OUT_W), lambda b, r, s: (0, 0, 0), pl.Buffered(1)),
    ]
    scratch = [pltpu.VMEM((3, th, w), jnp.float32)] if use_acc else []

    return pl.pallas_call(
        kernel,
        out_shape=jax.ShapeDtypeStruct((n, 3, OUT_H, OUT_W), jnp.float32),
        grid_spec=pltpu.PrefetchScalarGridSpec(
            num_scalar_prefetch=0,
            grid=(n, n_r, n_s),
            in_specs=in_specs,
            out_specs=pl.BlockSpec((1, 3, th, OUT_W), lambda b, r, s: (b, 0, r, 0)),
            scratch_shapes=scratch,
        ),
        compiler_params=pltpu.CompilerParams(
            # batch and output-row-block axes are independent -> both "parallel"
            # so v7x's two TensorCores split the work finely; the source-band
            # reduction axis s is innermost / "arbitrary".
            dimension_semantics=("parallel", "parallel", "arbitrary"),
            vmem_limit_bytes=vmem_limit,
        ),
    )(img, wy_in, wxt_in)


# -----------------------------------------------------------------------------
# References for the self-test.
# -----------------------------------------------------------------------------
def _reference(img_nhwc):
    """Pure-JAX reference using the same interpolation matrices (f32)."""
    x = jnp.transpose(img_nhwc.astype(jnp.float32), (0, 3, 1, 2))
    _, _, h, w = x.shape
    wy = _interp_matrix(OUT_H, h)
    wx = _interp_matrix(OUT_W, w)
    out = jnp.einsum("oh,nchw,pw->ncop", wy, x, wx) / 255.0
    return out[:, ::-1, :, :]                        # (2, 1, 0) channel swap


def _resize_reference(img_nhwc):
    """Independent semantics check via jax.image.resize (half-pixel bilinear)."""
    x = jnp.transpose(img_nhwc.astype(jnp.float32), (0, 3, 1, 2))
    n, c, _, _ = x.shape
    out = jax.image.resize(x, (n, c, OUT_H, OUT_W), method="bilinear",
                           antialias=False) / 255.0
    return out[:, ::-1, :, :]


if __name__ == "__main__":
    key = jax.random.PRNGKey(0)
    k1, k2, k3, k4 = jax.random.split(key, 4)

    # (a) square f32 batch: exact-precision path, whole-output block, S=1.
    x_sq = jax.random.uniform(k1, (2, 16, 16, 3), jnp.float32) * 255.0
    out = jax.block_until_ready(fast_base_transform(x_sq))
    ref = _reference(x_sq)
    assert out.shape == (2, 3, OUT_H, OUT_W), out.shape
    assert out.dtype == jnp.float32
    assert jnp.allclose(out, ref, atol=3e-5, rtol=1e-5), "mismatch (square, f32)"
    assert jnp.allclose(out, _resize_reference(x_sq), atol=1e-2), \
        "mismatch vs jax.image.resize semantics check"

    # (b) caller already has NCHW -> the glue transpose is skipped entirely.
    out_nchw = jax.block_until_ready(
        fast_base_transform(jnp.transpose(x_sq, (0, 3, 1, 2)), data_format="NCHW"))
    assert jnp.allclose(out_nchw, ref, atol=3e-5, rtol=1e-5), "mismatch (NCHW path)"

    # (c) tall image, f32 exact path.
    x_tall = jax.random.uniform(k2, (1, 24, 16, 3), jnp.float32) * 255.0
    out_t = jax.block_until_ready(fast_base_transform(x_tall))
    assert jnp.allclose(out_t, _reference(x_tall), atol=3e-5, rtol=1e-5), \
        "mismatch (tall, f32)"

    # (d) forced output-row tiling (partial 550 % 280 block) + source-height
    #     banding with accumulation over the s axis (64 = 2 x 32).
    x_big = jax.random.uniform(k3, (1, 64, 32, 3), jnp.float32) * 255.0
    out_b = jax.block_until_ready(
        fast_base_transform(x_big, row_tile=280, source_tile=32))
    assert jnp.allclose(out_b, _reference(x_big), atol=3e-5, rtol=1e-5), \
        "mismatch (row-tiled + source-banded)"

    # (e) bf16 integer-valued pixels (camera-frame-like): dtype-preserving
    #     transpose, in-kernel cast, bf16 hi/lo weight matmuls (fast path).
    x_int = jnp.round(jax.random.uniform(k4, (1, 20, 24, 3)) * 255.0)
    out_h = jax.block_until_ready(fast_base_transform(x_int.astype(jnp.bfloat16)))
    assert jnp.allclose(out_h, _reference(x_int), atol=6e-3), \
        "mismatch (bf16 fast path)"

    print("KERNEL_OK")
</pallas_src>

<mosaic_0001>
module attributes {stable_mosaic.version = 11 : i64} {
  func.func @kernel(%arg0: i32, %arg1: i32, %arg2: i32, %arg3: memref<1x3x16x16xf32, #tpu.memory_space<vmem>>, %arg4: memref<1x550x16xf32, #tpu.memory_space<vmem>>, %arg5: memref<1x16x550xf32, #tpu.memory_space<vmem>>, %arg6: memref<1x3x550x550xf32, #tpu.memory_space<vmem>>) attributes {dimension_semantics = [#tpu.dimension_semantics<parallel>, #tpu.dimension_semantics<parallel>, #tpu.dimension_semantics<arbitrary>], iteration_bounds = array<i64: 2, 1, 1>, scalar_prefetch = 0 : i64, scratch_operands = 0 : i64, tpu.core_type = #tpu.core_type<tc>, window_params = [{transform_indices = @transform_0, window_bounds = array<i64: 1, 3, 16, 16>}, {pipeline_mode = #tpu.pipeline_mode<synchronous>, transform_indices = @transform_1, window_bounds = array<i64: 1, 550, 16>}, {pipeline_mode = #tpu.pipeline_mode<synchronous>, transform_indices = @transform_2, window_bounds = array<i64: 1, 16, 550>}, {transform_indices = @transform_3, window_bounds = array<i64: 1, 3, 550, 550>}]} {
    %c0 = arith.constant 0 : index
    %c2 = arith.constant 2 : index
    %c0_0 = arith.constant 0 : index
    %c0_1 = arith.constant 0 : index
    %0 = vector.load %arg3[%c0, %c2, %c0_0, %c0_1] : memref<1x3x16x16xf32, #tpu.memory_space<vmem>>, vector<1x1x16x16xf32>
    %1 = vector.shape_cast %0 : vector<1x1x16x16xf32> to vector<16x16xf32>
    %c0_2 = arith.constant 0 : index
    %c0_3 = arith.constant 0 : index
    %c0_4 = arith.constant 0 : index
    %2 = vector.load %arg4[%c0_2, %c0_3, %c0_4] : memref<1x550x16xf32, #tpu.memory_space<vmem>>, vector<1x550x16xf32>
    %3 = vector.shape_cast %2 : vector<1x550x16xf32> to vector<550x16xf32>
    %cst = arith.constant dense<0.000000e+00> : vector<550x16xf32>
    %4 = tpu.matmul %3, %1, %cst {dimension_numbers = #tpu.dot_dimension_numbers<[1], [0], [0], [1], [0, 0, 1, 1], [], []>} : vector<550x16xf32>, vector<16x16xf32>, vector<550x16xf32> -> vector<550x16xf32>
    %c0_5 = arith.constant 0 : index
    %c0_6 = arith.constant 0 : index
    %c0_7 = arith.constant 0 : index
    %5 = vector.load %arg5[%c0_5, %c0_6, %c0_7] : memref<1x16x550xf32, #tpu.memory_space<vmem>>, vector<1x16x550xf32>
    %6 = vector.shape_cast %5 : vector<1x16x550xf32> to vector<16x550xf32>
    %cst_8 = arith.constant dense<0.000000e+00> : vector<550x550xf32>
    %7 = tpu.matmul %4, %6, %cst_8 {dimension_numbers = #tpu.dot_dimension_numbers<[1], [0], [0], [1], [0, 0, 1, 1], [], []>} : vector<550x16xf32>, vector<16x550xf32>, vector<550x550xf32> -> vector<550x550xf32>
    %c0_9 = arith.constant 0 : index
    %c0_10 = arith.constant 0 : index
    %c0_11 = arith.constant 0 : index
    %c0_12 = arith.constant 0 : index
    %8 = vector.load %arg6[%c0_9, %c0_10, %c0_11, %c0_12] : memref<1x3x550x550xf32, #tpu.memory_space<vmem>>, vector<1x1x550x550xf32>
    %9 = vector.shape_cast %8 : vector<1x1x550x550xf32> to vector<550x550xf32>
    %10 = vector.shape_cast %7 : vector<550x550xf32> to vector<1x1x550x550xf32>
    tpu.vector_store %arg6[%c0_9, %c0_10, %c0_11, %c0_12], %10 {strides = array<i32>} : memref<1x3x550x550xf32, #tpu.memory_space<vmem>>, vector<1x1x550x550xf32>,
    %c0_13 = arith.constant 0 : index
    %c1 = arith.constant 1 : index
    %c0_14 = arith.constant 0 : index
    %c0_15 = arith.constant 0 : index
    %11 = vector.load %arg3[%c0_13, %c1, %c0_14, %c0_15] : memref<1x3x16x16xf32, #tpu.memory_space<vmem>>, vector<1x1x16x16xf32>
    %12 = vector.shape_cast %11 : vector<1x1x16x16xf32> to vector<16x16xf32>
    %c0_16 = arith.constant 0 : index
    %c0_17 = arith.constant 0 : index
    %c0_18 = arith.constant 0 : index
    %13 = vector.load %arg4[%c0_16, %c0_17, %c0_18] : memref<1x550x16xf32, #tpu.memory_space<vmem>>, vector<1x550x16xf32>
    %14 = vector.shape_cast %13 : vector<1x550x16xf32> to vector<550x16xf32>
    %cst_19 = arith.constant dense<0.000000e+00> : vector<550x16xf32>
    %15 = tpu.matmul %14, %12, %cst_19 {dimension_numbers = #tpu.dot_dimension_numbers<[1], [0], [0], [1], [0, 0, 1, 1], [], []>} : vector<550x16xf32>, vector<16x16xf32>, vector<550x16xf32> -> vector<550x16xf32>
    %c0_20 = arith.constant 0 : index
    %c0_21 = arith.constant 0 : index
    %c0_22 = arith.constant 0 : index
    %16 = vector.load %arg5[%c0_20, %c0_21, %c0_22] : memref<1x16x550xf32, #tpu.memory_space<vmem>>, vector<1x16x550xf32>
    %17 = vector.shape_cast %16 : vector<1x16x550xf32> to vector<16x550xf32>
    %cst_23 = arith.constant dense<0.000000e+00> : vector<550x550xf32>
    %18 = tpu.matmul %15, %17, %cst_23 {dimension_numbers = #tpu.dot_dimension_numbers<[1], [0], [0], [1], [0, 0, 1, 1], [], []>} : vector<550x16xf32>, vector<16x550xf32>, vector<550x550xf32> -> vector<550x550xf32>
    %c0_24 = arith.constant 0 : index
    %c1_25 = arith.constant 1 : index
    %c0_26 = arith.constant 0 : index
    %c0_27 = arith.constant 0 : index
    %19 = vector.load %arg6[%c0_24, %c1_25, %c0_26, %c0_27] : memref<1x3x550x550xf32, #tpu.memory_space<vmem>>, vector<1x1x550x550xf32>
    %20 = vector.shape_cast %19 : vector<1x1x550x550xf32> to vector<550x550xf32>
    %21 = vector.shape_cast %18 : vector<550x550xf32> to vector<1x1x550x550xf32>
    tpu.vector_store %arg6[%c0_24, %c1_25, %c0_26, %c0_27], %21 {strides = array<i32>} : memref<1x3x550x550xf32, #tpu.memory_space<vmem>>, vector<1x1x550x550xf32>,
    %c0_28 = arith.constant 0 : index
    %c0_29 = arith.constant 0 : index
    %c0_30 = arith.constant 0 : index
    %c0_31 = arith.constant 0 : index
    %22 = vector.load %arg3[%c0_28, %c0_29, %c0_30, %c0_31] : memref<1x3x16x16xf32, #tpu.memory_space<vmem>>, vector<1x1x16x16xf32>
    %23 = vector.shape_cast %22 : vector<1x1x16x16xf32> to vector<16x16xf32>
    %c0_32 = arith.constant 0 : index
    %c0_33 = arith.constant 0 : index
    %c0_34 = arith.constant 0 : index
    %24 = vector.load %arg4[%c0_32, %c0_33, %c0_34] : memref<1x550x16xf32, #tpu.memory_space<vmem>>, vector<1x550x16xf32>
    %25 = vector.shape_cast %24 : vector<1x550x16xf32> to vector<550x16xf32>
    %cst_35 = arith.constant dense<0.000000e+00> : vector<550x16xf32>
    %26 = tpu.matmul %25, %23, %cst_35 {dimension_numbers = #tpu.dot_dimension_numbers<[1], [0], [0], [1], [0, 0, 1, 1], [], []>} : vector<550x16xf32>, vector<16x16xf32>, vector<550x16xf32> -> vector<550x16xf32>
    %c0_36 = arith.constant 0 : index
    %c0_37 = arith.constant 0 : index
    %c0_38 = arith.constant 0 : index
    %27 = vector.load %arg5[%c0_36, %c0_37, %c0_38] : memref<1x16x550xf32, #tpu.memory_space<vmem>>, vector<1x16x550xf32>
    %28 = vector.shape_cast %27 : vector<1x16x550xf32> to vector<16x550xf32>
    %cst_39 = arith.constant dense<0.000000e+00> : vector<550x550xf32>
    %29 = tpu.matmul %26, %28, %cst_39 {dimension_numbers = #tpu.dot_dimension_numbers<[1], [0], [0], [1], [0, 0, 1, 1], [], []>} : vector<550x16xf32>, vector<16x550xf32>, vector<550x550xf32> -> vector<550x550xf32>
    %c0_40 = arith.constant 0 : index
    %c2_41 = arith.constant 2 : index
    %c0_42 = arith.constant 0 : index
    %c0_43 = arith.constant 0 : index
    %30 = vector.load %arg6[%c0_40, %c2_41, %c0_42, %c0_43] : memref<1x3x550x550xf32, #tpu.memory_space<vmem>>, vector<1x1x550x550xf32>
    %31 = vector.shape_cast %30 : vector<1x1x550x550xf32> to vector<550x550xf32>
    %32 = vector.shape_cast %29 : vector<550x550xf32> to vector<1x1x550x550xf32>
    tpu.vector_store %arg6[%c0_40, %c2_41, %c0_42, %c0_43], %32 {strides = array<i32>} : memref<1x3x550x550xf32, #tpu.memory_space<vmem>>, vector<1x1x550x550xf32>,
    return
  }
  func.func @transform_0(%arg0: i32, %arg1: i32, %arg2: i32) -> (i32, i32, i32, i32) {
    %c0_i32 = arith.constant 0 : i32
    %c0_i32_0 = arith.constant 0 : i32
    %c0_i32_1 = arith.constant 0 : i32
    return %arg0, %c0_i32, %arg2, %c0_i32_0 : i32, i32, i32, i32
  }
  func.func @transform_1(%arg0: i32, %arg1: i32, %arg2: i32) -> (i32, i32, i32) {
    %c0_i32 = arith.constant 0 : i32
    %c0_i32_0 = arith.constant 0 : i32
    return %c0_i32, %arg1, %arg2 : i32, i32, i32
  }
  func.func @transform_2(%arg0: i32, %arg1: i32, %arg2: i32) -> (i32, i32, i32) {
    %c0_i32 = arith.constant 0 : i32
    %c0_i32_0 = arith.constant 0 : i32
    %c0_i32_1 = arith.constant 0 : i32
    %c0_i32_2 = arith.constant 0 : i32
    return %c0_i32, %c0_i32_0, %c0_i32_1 : i32, i32, i32
  }
  func.func @transform_3(%arg0: i32, %arg1: i32, %arg2: i32) -> (i32, i32, i32, i32) {
    %c0_i32 = arith.constant 0 : i32
    %c0_i32_0 = arith.constant 0 : i32
    %c0_i32_1 = arith.constant 0 : i32
    return %arg0, %c0_i32, %arg1, %c0_i32_0 : i32, i32, i32, i32
  }
}

</mosaic_0001>

<llo_original>
// kernel: fast_base_transform.1
$region0: #{fast_base_transform.1}
  #allocation0 [shape = 'u32[]', space=smem, size = 0x4, offset = 0x4, fixed_abs, tag = 'smem constant byte address 0x4 - core index']
  #allocation1 [shape = 'u32[144,128]{1,0:T(1,128)}', space=vmem, size = 0x12000, scoped, tag = 'internal scratch']
  %s0 = inlined_call_operand.hbm [shape: f32[2,3,16,16], index: 0, kind: input, shape index: {}]
  %s1 = inlined_call_operand.vmem [shape: f32[1,550,16], index: 1, kind: input, shape index: {}]
  %s2 = inlined_call_operand.vmem [shape: f32[1,16,550], index: 2, kind: input, shape index: {}]
  %s3 = inlined_call_operand.vmem [shape: f32[2,3,550,550], index: 3, kind: output, shape index: {}]
  %s4 = sld [smem:[#allocation0]]
  $region49: #{fast_base_transform.1} parent=0
    _
  %s6 = ssub.s32 1, %s4
  %s7 = scalar_select 0, %s6, %s4
  $region1: #{fast_base_transform.1} parent=0
    #allocation2 [shape = 'u8[49152]{0}', space=vmem, size = 0xc000, scoped, tag = 'input window, operand 0']
    #allocation3 [shape = 's32[2]{0}', space=sflag, size = 0x8, scoped, tag = 'scoped memory for fast_base_transform.1']
    %8 = vsyncpa [#allocation3], 0
    %s9 = scalar_lea.sflag [#allocation3], 1
    %10 = vsyncpa %s9, 0
    loop: start=0, step=1, limit=4
    $region2: #{fast_base_transform.1} parent=1 // loop_pre_header
      _
    $region3: #{fast_base_transform.1} parent=1 // loop_header
      %s12 = sphi 0, %s16
      %p13 = scmp.ge.s32.totalorder %s12, 4
      %s19 = sphi 0, %s38
      %s20 = sphi 0, %s34
      %s21 = sphi 0, %s30
      %s22 = sphi 0, %s19
      %s23 = sphi 0, %s20
      %s24 = sphi 0, %s21
      %s25 = sphi 0, %s22
      %s26 = sphi 0, %s23
      %s27 = sphi 0, %s24
      %s43 = sphi 0, %s45
      %s46 = sphi 0, %s43
      %s47 = sphi 0, %s46
      %s63 = sphi 0, %s47
      %s71 = sphi 0, %s73
      %s74 = sphi 0, %s71
      %s75 = sphi 0, %s74
      %s91 = sphi 0, %s75
      %s95 = sphi 0, %s95
      %s97 = sphi 0, %s95
      %s98 = sphi 0, %s97
      %s112 = sphi 0, %s98
      %s120 = sphi 0, %s122
      %s123 = sphi 0, %s120
      %s124 = sphi 0, %s123
      %s140 = sphi 0, %s124
    $region4: #{fast_base_transform.1} parent=1 // loop_header_branch
      %15 = sbr.rel (%p13) target = $region8
    $region5: #{fast_base_transform.1} parent=1 // loop_body
      %s17 = ssub.s32 %s12, 1
      %s18 = ssub.s32 %s12, 2
      %s28 = sadd.s32 1, %s21
      %p29 = scmp.ge.s32.totalorder %s28, 1
      %s30 = scalar_select %p29, 0, %s28
      %s31 = sadd.s32 1, %s20
      %s32 = scalar_select %p29, %s31, %s20
      %p33 = scmp.ge.s32.totalorder %s32, 1
      %s34 = scalar_select %p33, 0, %s32
      %s35 = sadd.s32 1, %s19
      %s36 = scalar_select %p33, %s35, %s19
      %p37 = scmp.ge.s32.totalorder %s36, 2
      %s38 = scalar_select %p37, 0, %s36
      %s39 = ssub.s32 %s19, %s38
      %s40 = ssub.s32 %s21, %s30
      %s41 = sor.u32 %s39, %s40
      %p42 = scmp.eq.s32.totalorder %s41, 0
      %s44 = sadd.s32 %s43, 1
      %s45 = scalar_select %p42, %s43, %s44
      %p48 = pneg %p42
      %p49 = scmp.eq.s32.totalorder %s12, 1
      %p50 = por %p48, %p49
      %p51 = scmp.ne.s32.totalorder %s43, %s46
      %p52 = scmp.eq.s32.totalorder %s12, 0
      %p53 = por %p51, %p52
      %p54 = scmp.ne.s32.totalorder %s43, %s46
      %p55 = scmp.eq.s32.totalorder %s17, 1
      %p56 = por %p54, %p55
      %p57 = scmp.ne.s32.totalorder %s46, %s47
      %p58 = scmp.eq.s32.totalorder %s17, 0
      %p59 = por %p57, %p58
      %p60 = scmp.ne.s32.totalorder %s46, %s47
      %p61 = scmp.eq.s32.totalorder %s18, 1
      %p62 = por %p60, %p61
      %p64 = scmp.ne.s32.totalorder %s47, %s63
      %p65 = scmp.eq.s32.totalorder %s18, 0
      %p66 = por %p64, %p65
      %s67 = ssub.s32 %s20, %s34
      %s68 = ssub.s32 %s21, %s30
      %s69 = sor.u32 %s67, %s68
      %p70 = scmp.eq.s32.totalorder %s69, 0
      %s72 = sadd.s32 %s71, 1
      %s73 = scalar_select %p70, %s71, %s72
      %p76 = pneg %p70
      %p77 = scmp.eq.s32.totalorder %s12, 1
      %p78 = por %p76, %p77
      %p79 = scmp.ne.s32.totalorder %s71, %s74
      %p80 = scmp.eq.s32.totalorder %s12, 0
      %p81 = por %p79, %p80
      %p82 = scmp.ne.s32.totalorder %s71, %s74
      %p83 = scmp.eq.s32.totalorder %s17, 1
      %p84 = por %p82, %p83
      %p85 = scmp.ne.s32.totalorder %s74, %s75
      %p86 = scmp.eq.s32.totalorder %s17, 0
      %p87 = por %p85, %p86
      %p88 = scmp.ne.s32.totalorder %s74, %s75
      %p89 = scmp.eq.s32.totalorder %s18, 1
      %p90 = por %p88, %p89
      %p92 = scmp.ne.s32.totalorder %s75, %s91
      %p93 = scmp.eq.s32.totalorder %s18, 0
      %p94 = por %p92, %p93
      %s96 = sadd.s32 %s95, 1
      %p99 = scmp.eq.s32.totalorder %s12, 1
      %p100 = scmp.ne.s32.totalorder %s95, %s97
      %p101 = scmp.eq.s32.totalorder %s12, 0
      %p102 = por %p100, %p101
      %p103 = scmp.ne.s32.totalorder %s95, %s97
      %p104 = scmp.eq.s32.totalorder %s17, 1
      %p105 = por %p103, %p104
      %p106 = scmp.ne.s32.totalorder %s97, %s98
      %p107 = scmp.eq.s32.totalorder %s17, 0
      %p108 = por %p106, %p107
      %p109 = scmp.ne.s32.totalorder %s97, %s98
      %p110 = scmp.eq.s32.totalorder %s18, 1
      %p111 = por %p109, %p110
      %p113 = scmp.ne.s32.totalorder %s98, %s112
      %p114 = scmp.eq.s32.totalorder %s18, 0
      %p115 = por %p113, %p114
      %s116 = ssub.s32 %s19, %s38
      %s117 = ssub.s32 %s20, %s34
      %s118 = sor.u32 %s116, %s117
      %p119 = scmp.eq.s32.totalorder %s118, 0
      %s121 = sadd.s32 %s120, 1
      %s122 = scalar_select %p119, %s120, %s121
      %p125 = pneg %p119
      %p126 = scmp.eq.s32.totalorder %s12, 1
      %p127 = por %p125, %p126
      %p128 = scmp.ne.s32.totalorder %s120, %s123
      %p129 = scmp.eq.s32.totalorder %s12, 0
      %p130 = por %p128, %p129
      %p131 = scmp.ne.s32.totalorder %s120, %s123
      %p132 = scmp.eq.s32.totalorder %s17, 1
      %p133 = por %p131, %p132
      %p134 = scmp.ne.s32.totalorder %s123, %s124
      %p135 = scmp.eq.s32.totalorder %s17, 0
      %p136 = por %p134, %p135
      %p137 = scmp.ne.s32.totalorder %s123, %s124
      %p138 = scmp.eq.s32.totalorder %s18, 1
      %p139 = por %p137, %p138
      %p141 = scmp.ne.s32.totalorder %s124, %s140
      %p142 = scmp.eq.s32.totalorder %s18, 0
      %p143 = por %p141, %p142
      %p144 = scmp.le.s32.totalorder 1, %s12
      %p145 = scmp.lt.s32.totalorder %s12, 3
      %p146 = pnand %p144, %p145
      %p147 = pneg %p146
      // Predicated region
      $region9: #{fast_base_transform.1} parent=5 // pred_check
        _
      $region10: #{fast_base_transform.1} parent=5 // pred_check_branch
        %149 = sbr.rel (%p146) target = $region12
      $region11: #{fast_base_transform.1} parent=5 // pred_region
        %s150 = ssub.s32 %s12, 1
        // Predicated region
        $region13: #{fast_base_transform.1} parent=11 // pred_check
          %p151 = pneg %p87
        $region14: #{fast_base_transform.1} parent=11 // pred_check_branch
          %153 = sbr.rel (%p151) target = $region16
        $region15: #{fast_base_transform.1} parent=11 // pred_region
          %s154 = smul.u32 69, %s23
          %p155 = scmp.lt.s32.totalorder %s154, 68
          %s156 = scalar_select %p155, %s154, 68
          %p157 = scmp.lt.s32.totalorder %s24, 0
          %s158 = scalar_select %p157, %s24, 0
          %s159 = sadd.s32 %s158, %s156
          %s160 = smul.addr %s159, 8
          %s161 = scalar_lea.vmem %s1, %s160
          %s162 = smul.u32 69, %s23
        $region16: #{fast_base_transform.1} parent=11 // pred_fallthru
          _
        // Predicated region
        $region17: #{fast_base_transform.1} parent=11 // pred_check
          %p163 = pneg %p108
        $region18: #{fast_base_transform.1} parent=11 // pred_check_branch
          %165 = sbr.rel (%p163) target = $region20
        $region19: #{fast_base_transform.1} parent=11 // pred_region
          _
        $region20: #{fast_base_transform.1} parent=11 // pred_fallthru
          _
      $region12: #{fast_base_transform.1} parent=5 // pred_fallthru
        _
      %p166 = scmp.lt.s32.totalorder %s12, 2
      // Predicated region
      $region21: #{fast_base_transform.1} parent=5 // pred_check
        %p167 = pneg %p166
      $region22: #{fast_base_transform.1} parent=5 // pred_check_branch
        %169 = sbr.rel (%p167) target = $region24
      $region23: #{fast_base_transform.1} parent=5 // pred_region
        // Predicated region
        $region25: #{fast_base_transform.1} parent=23 // pred_check
          %p170 = pneg %p53
        $region26: #{fast_base_transform.1} parent=23 // pred_check_branch
          %172 = sbr.rel (%p170) target = $region28
        $region27: #{fast_base_transform.1} parent=23 // pred_region
          %s173 = sand.u32 %s43, 1
          %s174 = scalar_lea.sflag [#allocation3], %s173
          %s175 = sand.u32 %s43, 1
          %s176 = smul.addr %s175, 48
          %s177 = scalar_lea.vmem [#allocation2], %s176
          %s178 = smul.u32 2, %s21
          %s180 = ssub.s32 768, 768
          %181 = vsyncadd %s174, %s180
          %s182 = smul.addr %s19, 6
          %s183 = sadd.s32 %s178, %s182
          %s184 = smul.addr %s183, 128
          %s185 = scalar_lea.hbm %s0, %s184
          %s186 = sshll.u32 %s177, 4
          %s187 = int_to_ptr.vmem [resolvable:$true] %s186
          %192 = dma.hbm_to_vmem [thread:$0]  %s185, 768, %s187, %s174, 128, 128, 8
        $region28: #{fast_base_transform.1} parent=23 // pred_fallthru
          _
      $region24: #{fast_base_transform.1} parent=5 // pred_fallthru
        _
      %p193 = scmp.le.s32.totalorder 1, %s12
      %p194 = scmp.lt.s32.totalorder %s12, 3
      %p195 = pnand %p193, %p194
      %p196 = pneg %p195
      // Predicated region
      $region29: #{fast_base_transform.1} parent=5 // pred_check
        _
      $region30: #{fast_base_transform.1} parent=5 // pred_check_branch
        %198 = sbr.rel (%p195) target = $region32
      $region31: #{fast_base_transform.1} parent=5 // pred_region
        %s199 = ssub.s32 %s12, 1
        %s200 = sand.u32 %s46, 1
        %s201 = scalar_lea.sflag [#allocation3], %s200
        %s202 = sand.u32 %s46, 1
        %s203 = smul.addr %s202, 48
        %s204 = scalar_lea.vmem [#allocation2], %s203
        // Predicated region
        $region33: #{fast_base_transform.1} parent=31 // pred_check
          %p205 = pneg %p59
        $region34: #{fast_base_transform.1} parent=31 // pred_check_branch
          %207 = sbr.rel (%p205) target = $region36
        $region35: #{fast_base_transform.1} parent=31 // pred_region
          %208 = dma.done %s201, 768
        $region36: #{fast_base_transform.1} parent=31 // pred_fallthru
          _
        %s209 = sand.u32 %s46, 1
        %s210 = scalar_lea.sflag [#allocation3], %s209
        %s211 = sand.u32 %s46, 1
        %s212 = smul.addr %s211, 48
        %s213 = scalar_lea.vmem [#allocation2], %s212
        %p214 = pneg %p59
        %p215 = pneg %p56
        %s216 = smul.u32 69, %s23
        %p217 = scmp.lt.s32.totalorder %s216, 68
        %s218 = scalar_select %p217, %s216, 68
        %p219 = scmp.lt.s32.totalorder %s24, 0
        %s220 = scalar_select %p219, %s24, 0
        %s221 = sadd.s32 %s220, %s218
        %s222 = smul.addr %s221, 8
        %s223 = scalar_lea.vmem %s1, %s222
        %p224 = pneg %p87
        %p225 = pneg %p84
        %p226 = pneg %p108
        %p227 = pneg %p105
        %p228 = pneg %p136
        %p229 = pneg %p133
        %s230 = smul.u32 69, %s23
        %p231 = scmp.lt.s32.totalorder %s22, 1
        %s232 = scalar_select %p231, %s22, 1
        %p233 = scmp.lt.s32.totalorder %s230, 68
        %s234 = scalar_select %p233, %s230, 68
        %s235 = smul.addr %s234, 5
        %s236 = smul.addr %s232, 1035
        %s237 = sadd.s32 %s235, %s236
        %s238 = smul.addr %s237, 8
        %s239 = scalar_lea.vmem %s3, %s238
        %s240 = smul.u32 2, %s24
        %s241 = smul.u32 69, %s23
        %p242 = scmp.lt.s32.totalorder %s241, 68
        %s243 = scalar_select %p242, %s241, 68
        %p244 = scmp.lt.s32.totalorder %s24, 0
        %s245 = scalar_select %p244, %s24, 0
        %s246 = sadd.s32 %s245, %s243
        %s247 = smul.addr %s246, 8
        %s248 = scalar_lea.vmem %s1, %s247
        %s249 = smul.u32 69, %s23
        %s250 = smul.u32 69, %s23
        %p251 = scmp.lt.s32.totalorder %s22, 1
        %s252 = scalar_select %p251, %s22, 1
        %p253 = scmp.lt.s32.totalorder %s250, 68
        %s254 = scalar_select %p253, %s250, 68
        %s255 = smul.addr %s254, 5
        %s256 = smul.addr %s252, 1035
        %s257 = sadd.s32 %s255, %s256
        %s258 = smul.addr %s257, 8
        %s259 = scalar_lea.vmem %s3, %s258
        %s260 = smul.u32 69, %s23
        %s261 = scalar_lea.vmem %s204, 32 [#allocation2]
        %v262 = vld [vmem:[%s261] sm:$0xff]
        %v263 = vld [vmem:[%s261 + $0x8] sm:$0xff]
        %v264 = vld [vmem:[%s248] sm:$0xff]
        %v265 = vld [vmem:[%s248 + $0x8] sm:$0xff]
        %v266 = vld [vmem:[%s248 + $0x10] sm:$0xff]
        %v267 = vld [vmem:[%s248 + $0x18] sm:$0xff]
        %v268 = vld [vmem:[%s248 + $0x20] sm:$0xff]
        %v269 = vld [vmem:[%s248 + $0x28] sm:$0xff]
        %v270 = vld [vmem:[%s248 + $0x30] sm:$0xff]
        %v271 = vld [vmem:[%s248 + $0x38] sm:$0xff]
        %v272 = vld [vmem:[%s248 + $0x40] sm:$0xff]
        %v273 = vld [vmem:[%s248 + $0x48] sm:$0xff]
        %v274 = vld [vmem:[%s248 + $0x50] sm:$0xff]
        %v275 = vld [vmem:[%s248 + $0x58] sm:$0xff]
        %v276 = vld [vmem:[%s248 + $0x60] sm:$0xff]
        %v277 = vld [vmem:[%s248 + $0x68] sm:$0xff]
        %v278 = vld [vmem:[%s248 + $0x70] sm:$0xff]
        %v279 = vld [vmem:[%s248 + $0x78] sm:$0xff]
        %v280 = vld [vmem:[%s248 + $0x80] sm:$0xff]
        %v281 = vld [vmem:[%s248 + $0x88] sm:$0xff]
        %v282 = vld [vmem:[%s248 + $0x90] sm:$0xff]
        %v283 = vld [vmem:[%s248 + $0x98] sm:$0xff]
        %v284 = vld [vmem:[%s248 + $0xa0] sm:$0xff]
        %v285 = vld [vmem:[%s248 + $0xa8] sm:$0xff]
        %v286 = vld [vmem:[%s248 + $0xb0] sm:$0xff]
        %v287 = vld [vmem:[%s248 + $0xb8] sm:$0xff]
        %v288 = vld [vmem:[%s248 + $0xc0] sm:$0xff]
        %v289 = vld [vmem:[%s248 + $0xc8] sm:$0xff]
        %v290 = vld [vmem:[%s248 + $0xd0] sm:$0xff]
        %v291 = vld [vmem:[%s248 + $0xd8] sm:$0xff]
        %v292 = vld [vmem:[%s248 + $0xe0] sm:$0xff]
        %v293 = vld [vmem:[%s248 + $0xe8] sm:$0xff]
        %v294 = vld [vmem:[%s248 + $0xf0] sm:$0xff]
        %v295 = vld [vmem:[%s248 + $0xf8] sm:$0xff]
        %v296 = vld [vmem:[%s248 + $0x100] sm:$0xff]
        %v297 = vld [vmem:[%s248 + $0x108] sm:$0xff]
        %v298 = vld [vmem:[%s248 + $0x110] sm:$0xff]
        %v299 = vld [vmem:[%s248 + $0x118] sm:$0xff]
        %v300 = vld [vmem:[%s248 + $0x120] sm:$0xff]
        %v301 = vld [vmem:[%s248 + $0x128] sm:$0xff]
        %v302 = vld [vmem:[%s248 + $0x130] sm:$0xff]
        %v303 = vld [vmem:[%s248 + $0x138] sm:$0xff]
        %v304 = vld [vmem:[%s248 + $0x140] sm:$0xff]
        %v305 = vld [vmem:[%s248 + $0x148] sm:$0xff]
        %v306 = vld [vmem:[%s248 + $0x150] sm:$0xff]
        %v307 = vld [vmem:[%s248 + $0x158] sm:$0xff]
        %v308 = vld [vmem:[%s248 + $0x160] sm:$0xff]
        %v309 = vld [vmem:[%s248 + $0x168] sm:$0xff]
        %v310 = vld [vmem:[%s248 + $0x170] sm:$0xff]
        %v311 = vld [vmem:[%s248 + $0x178] sm:$0xff]
        %v312 = vld [vmem:[%s248 + $0x180] sm:$0xff]
        %v313 = vld [vmem:[%s248 + $0x188] sm:$0xff]
        %v314 = vld [vmem:[%s248 + $0x190] sm:$0xff]
        %v315 = vld [vmem:[%s248 + $0x198] sm:$0xff]
        %v316 = vld [vmem:[%s248 + $0x1a0] sm:$0xff]
        %v317 = vld [vmem:[%s248 + $0x1a8] sm:$0xff]
        %v318 = vld [vmem:[%s248 + $0x1b0] sm:$0xff]
        %v319 = vld [vmem:[%s248 + $0x1b8] sm:$0xff]
        %v320 = vld [vmem:[%s248 + $0x1c0] sm:$0xff]
        %v321 = vld [vmem:[%s248 + $0x1c8] sm:$0xff]
        %v322 = vld [vmem:[%s248 + $0x1d0] sm:$0xff]
        %v323 = vld [vmem:[%s248 + $0x1d8] sm:$0xff]
        %v324 = vld [vmem:[%s248 + $0x1e0] sm:$0xff]
        %v325 = vld [vmem:[%s248 + $0x1e8] sm:$0xff]
        %v326 = vld [vmem:[%s248 + $0x1f0] sm:$0xff]
        %v327 = vld [vmem:[%s248 + $0x1f8] sm:$0xff]
        %v328 = vld [vmem:[%s248 + $0x200] sm:$0xff]
        %v329 = vld [vmem:[%s248 + $0x208] sm:$0xff]
        %v330 = vld [vmem:[%s248 + $0x210] sm:$0xff]
        %v331 = vld [vmem:[%s248 + $0x218] sm:$0xff]
        %v332 = vld [vmem:[%s248 + $0x220] sm:$0x3f]
        %vm333 = vcmask 130048
        %v335 = vsel %vm333, %v264, 0
        %v338 = vsel %vm333, %v265, 0
        %v341 = vsel %vm333, %v266, 0
        %v344 = vsel %vm333, %v267, 0
        %v347 = vsel %vm333, %v268, 0
        %v350 = vsel %vm333, %v269, 0
        %v353 = vsel %vm333, %v270, 0
        %v356 = vsel %vm333, %v271, 0
        %v359 = vsel %vm333, %v272, 0
        %v362 = vsel %vm333, %v273, 0
        %v365 = vsel %vm333, %v274, 0
        %v368 = vsel %vm333, %v275, 0
        %v371 = vsel %vm333, %v276, 0
        %v374 = vsel %vm333, %v277, 0
        %v377 = vsel %vm333, %v278, 0
        %v380 = vsel %vm333, %v279, 0
        %v383 = vsel %vm333, %v280, 0
        %v386 = vsel %vm333, %v281, 0
        %v389 = vsel %vm333, %v282, 0
        %v392 = vsel %vm333, %v283, 0
        %v395 = vsel %vm333, %v284, 0
        %v398 = vsel %vm333, %v285, 0
        %v401 = vsel %vm333, %v286, 0
        %v404 = vsel %vm333, %v287, 0
        %v407 = vsel %vm333, %v288, 0
        %v410 = vsel %vm333, %v289, 0
        %v413 = vsel %vm333, %v290, 0
        %v416 = vsel %vm333, %v291, 0
        %v419 = vsel %vm333, %v292, 0
        %v422 = vsel %vm333, %v293, 0
        %v425 = vsel %vm333, %v294, 0
        %v428 = vsel %vm333, %v295, 0
        %v431 = vsel %vm333, %v296, 0
        %v434 = vsel %vm333, %v297, 0
        %v437 = vsel %vm333, %v298, 0
        %v440 = vsel %vm333, %v299, 0
        %v443 = vsel %vm333, %v300, 0
        %v446 = vsel %vm333, %v301, 0
        %v449 = vsel %vm333, %v302, 0
        %v452 = vsel %vm333, %v303, 0
        %v455 = vsel %vm333, %v304, 0
        %v458 = vsel %vm333, %v305, 0
        %v461 = vsel %vm333, %v306, 0
        %v464 = vsel %vm333, %v307, 0
        %v467 = vsel %vm333, %v308, 0
        %v470 = vsel %vm333, %v309, 0
        %v473 = vsel %vm333, %v310, 0
        %v476 = vsel %vm333, %v311, 0
        %v479 = vsel %vm333, %v312, 0
        %v482 = vsel %vm333, %v313, 0
        %v485 = vsel %vm333, %v314, 0
        %v488 = vsel %vm333, %v315, 0
        %v491 = vsel %vm333, %v316, 0
        %v494 = vsel %vm333, %v317, 0
        %v497 = vsel %vm333, %v318, 0
        %v500 = vsel %vm333, %v319, 0
        %v503 = vsel %vm333, %v320, 0
        %v506 = vsel %vm333, %v321, 0
        %v509 = vsel %vm333, %v322, 0
        %v512 = vsel %vm333, %v323, 0
        %v515 = vsel %vm333, %v324, 0
        %v518 = vsel %vm333, %v325, 0
        %v521 = vsel %vm333, %v326, 0
        %v524 = vsel %vm333, %v327, 0
        %v527 = vsel %vm333, %v328, 0
        %v530 = vsel %vm333, %v329, 0
        %v533 = vsel %vm333, %v330, 0
        %v536 = vsel %vm333, %v331, 0
        %v539 = vsel %vm333, %v332, 0
        %541 = vmatprep.subr.mxu0 0.0
        %542 = vmatpush1.msra.mxu0 %v262
        %543 = vmatprep.subr.mxu0 0.0
        %544 = vmatpush1.msra.mxu0 %v263
        %545 = vmatprep.subr.mxu0 0.0
        %546 = vmatpush1.msra.mxu0 0.0
        %547 = vmatprep.subr.mxu0 0.0
        %548 = vmatpush1.msra.mxu0 0.0
        %549 = vmatprep.subr.mxu0 0.0
        %550 = vmatpush1.msra.mxu0 0.0
        %551 = vmatprep.subr.mxu0 0.0
        %552 = vmatpush1.msra.mxu0 0.0
        %553 = vmatprep.subr.mxu0 0.0
        %554 = vmatpush1.msra.mxu0 0.0
        %555 = vmatprep.subr.mxu0 0.0
        %556 = vmatpush1.msra.mxu0 0.0
        %557 = vmatprep.subr.mxu0 0.0
        %558 = vmatpush1.msra.mxu0 0.0
        %559 = vmatprep.subr.mxu0 0.0
        %560 = vmatpush1.msra.mxu0 0.0
        %561 = vmatprep.subr.mxu0 0.0
        %562 = vmatpush1.msra.mxu0 0.0
        %563 = vmatprep.subr.mxu0 0.0
        %564 = vmatpush1.msra.mxu0 0.0
        %565 = vmatprep.subr.mxu0 0.0
        %566 = vmatpush1.msra.mxu0 0.0
        %567 = vmatprep.subr.mxu0 0.0
        %568 = vmatpush1.msra.mxu0 0.0
        %569 = vmatprep.subr.mxu0 0.0
        %570 = vmatpush1.msra.mxu0 0.0
        %571 = vmatprep.subr.mxu0 0.0
        %572 = vmatpush1.msra.mxu0 0.0
        %573 = vmatprep.subr.mxu0 0.0
        %574 = vmatpush1.msra.mxu0 0.0
        %575 = vmatprep.subr.mxu0 0.0
        %576 = vmatpush1.msra.mxu0 0.0
        %577 = vmatprep.subr.mxu0 0.0
        %578 = vmatpush1.msra.mxu0 0.0
        %579 = vmatprep.subr.mxu0 0.0
        %580 = vmatpush1.msra.mxu0 0.0
        %581 = vmatprep.subr.mxu0 0.0
        %582 = vmatpush1.msra.mxu0 0.0
        %583 = vmatprep.subr.mxu0 0.0
        %584 = vmatpush1.msra.mxu0 0.0
        %585 = vmatprep.subr.mxu0 0.0
        %586 = vmatpush1.msra.mxu0 0.0
        %587 = vmatprep.subr.mxu0 0.0
        %588 = vmatpush1.msra.mxu0 0.0
        %589 = vmatprep.subr.mxu0 0.0
        %590 = vmatpush1.msra.mxu0 0.0
        %591 = vmatprep.subr.mxu0 0.0
        %592 = vmatpush1.msra.mxu0 0.0
        %593 = vmatprep.subr.mxu0 0.0
        %594 = vmatpush1.msra.mxu0 0.0
        %595 = vmatprep.subr.mxu0 0.0
        %596 = vmatpush1.msra.mxu0 0.0
        %597 = vmatprep.subr.mxu0 0.0
        %598 = vmatpush1.msra.mxu0 0.0
        %599 = vmatprep.subr.mxu0 0.0
        %600 = vmatpush1.msra.mxu0 0.0
        %601 = vmatprep.subr.mxu0 0.0
        %602 = vmatpush1.msra.mxu0 0.0
        %603 = vmatprep.subr.mxu0 0.0
        %604 = vmatpush1.msra.mxu0 0.0
        %605 = vmatprep.mubr.f32.mxu0 0.0
        %606 = vmatmul.mubr.f32.gmra.mrb[0].mxu0 %v335
        %v607 = vpop.f32.mrb[0].mxu0
        %v608 = vadd.f32 0.0, %v607
        %v609 = vpop.f32.mrb[0].mxu0
        %610 = vmatprep.mubr.f32.mxu0 0.0
        %611 = vmatmul.mubr.f32.gmra.mrb[0].mxu0 %v338
        %v612 = vpop.f32.mrb[0].mxu0
        %v613 = vadd.f32 0.0, %v612
        %v614 = vpop.f32.mrb[0].mxu0
        %615 = vmatprep.mubr.f32.mxu0 0.0
        %616 = vmatmul.mubr.f32.gmra.mrb[0].mxu0 %v341
        %v617 = vpop.f32.mrb[0].mxu0
        %v618 = vadd.f32 0.0, %v617
        %v619 = vpop.f32.mrb[0].mxu0
        %620 = vmatprep.mubr.f32.mxu0 0.0
        %621 = vmatmul.mubr.f32.gmra.mrb[0].mxu0 %v344
        %v622 = vpop.f32.mrb[0].mxu0
        %v623 = vadd.f32 0.0, %v622
        %v624 = vpop.f32.mrb[0].mxu0
        %625 = vmatprep.mubr.f32.mxu0 0.0
        %626 = vmatmul.mubr.f32.gmra.mrb[0].mxu0 %v347
        %v627 = vpop.f32.mrb[0].mxu0
        %v628 = vadd.f32 0.0, %v627
        %v629 = vpop.f32.mrb[0].mxu0
        %630 = vmatprep.mubr.f32.mxu0 0.0
        %631 = vmatmul.mubr.f32.gmra.mrb[0].mxu0 %v350
        %v632 = vpop.f32.mrb[0].mxu0
        %v633 = vadd.f32 0.0, %v632
        %v634 = vpop.f32.mrb[0].mxu0
        %635 = vmatprep.mubr.f32.mxu0 0.0
        %636 = vmatmul.mubr.f32.gmra.mrb[0].mxu0 %v353
        %v637 = vpop.f32.mrb[0].mxu0
        %v638 = vadd.f32 0.0, %v637
        %v639 = vpop.f32.mrb[0].mxu0
        %640 = vmatprep.mubr.f32.mxu0 0.0
        %641 = vmatmul.mubr.f32.gmra.mrb[0].mxu0 %v356
        %v642 = vpop.f32.mrb[0].mxu0
        %v643 = vadd.f32 0.0, %v642
        %v644 = vpop.f32.mrb[0].mxu0
        %645 = vmatprep.mubr.f32.mxu0 0.0
        %646 = vmatmul.mubr.f32.gmra.mrb[0].mxu0 %v359
        %v647 = vpop.f32.mrb[0].mxu0
        %v648 = vadd.f32 0.0, %v647
        %v649 = vpop.f32.mrb[0].mxu0
        %650 = vmatprep.mubr.f32.mxu0 0.0
        %651 = vmatmul.mubr.f32.gmra.mrb[0].mxu0 %v362
        %v652 = vpop.f32.mrb[0].mxu0
        %v653 = vadd.f32 0.0, %v652
        %v654 = vpop.f32.mrb[0].mxu0
        %655 = vmatprep.mubr.f32.mxu0 0.0
        %656 = vmatmul.mubr.f32.gmra.mrb[0].mxu0 %v365
        %v657 = vpop.f32.mrb[0].mxu0
        %v658 = vadd.f32 0.0, %v657
        %v659 = vpop.f32.mrb[0].mxu0
        %660 = vmatprep.mubr.f32.mxu0 0.0
        %661 = vmatmul.mubr.f32.gmra.mrb[0].mxu0 %v368
        %v662 = vpop.f32.mrb[0].mxu0
        %v663 = vadd.f32 0.0, %v662
        %v664 = vpop.f32.mrb[0].mxu0
        %665 = vmatprep.mubr.f32.mxu0 0.0
        %666 = vmatmul.mubr.f32.gmra.mrb[0].mxu0 %v371
        %v667 = vpop.f32.mrb[0].mxu0
        %v668 = vadd.f32 0.0, %v667
        %v669 = vpop.f32.mrb[0].mxu0
        %670 = vmatprep.mubr.f32.mxu0 0.0
        %671 = vmatmul.mubr.f32.gmra.mrb[0].mxu0 %v374
        %v672 = vpop.f32.mrb[0].mxu0
        %v673 = vadd.f32 0.0, %v672
        %v674 = vpop.f32.mrb[0].mxu0
        %675 = vmatprep.mubr.f32.mxu0 0.0
        %676 = vmatmul.mubr.f32.gmra.mrb[0].mxu0 %v377
        %v677 = vpop.f32.mrb[0].mxu0
        %v678 = vadd.f32 0.0, %v677
        %v679 = vpop.f32.mrb[0].mxu0
        %680 = vmatprep.mubr.f32.mxu0 0.0
        %681 = vmatmul.mubr.f32.gmra.mrb[0].mxu0 %v380
        %v682 = vpop.f32.mrb[0].mxu0
        %v683 = vadd.f32 0.0, %v682
        %v684 = vpop.f32.mrb[0].mxu0
        %685 = vmatprep.mubr.f32.mxu0 0.0
        %686 = vmatmul.mubr.f32.gmra.mrb[0].mxu0 %v383
        %v687 = vpop.f32.mrb[0].mxu0
        %v688 = vadd.f32 0.0, %v687
        %v689 = vpop.f32.mrb[0].mxu0
        %690 = vmatprep.mubr.f32.mxu0 0.0
        %691 = vmatmul.mubr.f32.gmra.mrb[0].mxu0 %v386
        %v692 = vpop.f32.mrb[0].mxu0
        %v693 = vadd.f32 0.0, %v692
        %v694 = vpop.f32.mrb[0].mxu0
        %695 = vmatprep.mubr.f32.mxu0 0.0
        %696 = vmatmul.mubr.f32.gmra.mrb[0].mxu0 %v389
        %v697 = vpop.f32.mrb[0].mxu0
        %v698 = vadd.f32 0.0, %v697
        %v699 = vpop.f32.mrb[0].mxu0
        %700 = vmatprep.mubr.f32.mxu0 0.0
        %701 = vmatmul.mubr.f32.gmra.mrb[0].mxu0 %v392
        %v702 = vpop.f32.mrb[0].mxu0
        %v703 = vadd.f32 0.0, %v702
        %v704 = vpop.f32.mrb[0].mxu0
        %705 = vmatprep.mubr.f32.mxu0 0.0
        %706 = vmatmul.mubr.f32.gmra.mrb[0].mxu0 %v395
        %v707 = vpop.f32.mrb[0].mxu0
        %v708 = vadd.f32 0.0, %v707
        %v709 = vpop.f32.mrb[0].mxu0
        %710 = vmatprep.mubr.f32.mxu0 0.0
        %711 = vmatmul.mubr.f32.gmra.mrb[0].mxu0 %v398
        %v712 = vpop.f32.mrb[0].mxu0
        %v713 = vadd.f32 0.0, %v712
        %v714 = vpop.f32.mrb[0].mxu0
        %715 = vmatprep.mubr.f32.mxu0 0.0
        %716 = vmatmul.mubr.f32.gmra.mrb[0].mxu0 %v401
        %v717 = vpop.f32.mrb[0].mxu0
        %v718 = vadd.f32 0.0, %v717
        %v719 = vpop.f32.mrb[0].mxu0
        %720 = vmatprep.mubr.f32.mxu0 0.0
        %721 = vmatmul.mubr.f32.gmra.mrb[0].mxu0 %v404
        %v722 = vpop.f32.mrb[0].mxu0
        %v723 = vadd.f32 0.0, %v722
        %v724 = vpop.f32.mrb[0].mxu0
        %725 = vmatprep.mubr.f32.mxu0 0.0
        %726 = vmatmul.mubr.f32.gmra.mrb[0].mxu0 %v407
        %v727 = vpop.f32.mrb[0].mxu0
        %v728 = vadd.f32 0.0, %v727
        %v729 = vpop.f32.mrb[0].mxu0
        %730 = vmatprep.mubr.f32.mxu0 0.0
        %731 = vmatmul.mubr.f32.gmra.mrb[0].mxu0 %v410
        %v732 = vpop.f32.mrb[0].mxu0
        %v733 = vadd.f32 0.0, %v732
        %v734 = vpop.f32.mrb[0].mxu0
        %735 = vmatprep.mubr.f32.mxu0 0.0
        %736 = vmatmul.mubr.f32.gmra.mrb[0].mxu0 %v413
        %v737 = vpop.f32.mrb[0].mxu0
        %v738 = vadd.f32 0.0, %v737
        %v739 = vpop.f32.mrb[0].mxu0
        %740 = vmatprep.mubr.f32.mxu0 0.0
        %741 = vmatmul.mubr.f32.gmra.mrb[0].mxu0 %v416
        %v742 = vpop.f32.mrb[0].mxu0
        %v743 = vadd.f32 0.0, %v742
        %v744 = vpop.f32.mrb[0].mxu0
        %745 = vmatprep.mubr.f32.mxu0 0.0
        %746 = vmatmul.mubr.f32.gmra.mrb[0].mxu0 %v419
        %v747 = vpop.f32.mrb[0].mxu0
        %v748 = vadd.f32 0.0, %v747
        %v749 = vpop.f32.mrb[0].mxu0
        %750 = vmatprep.mubr.f32.mxu0 0.0
        %751 = vmatmul.mubr.f32.gmra.mrb[0].mxu0 %v422
        %v752 = vpop.f32.mrb[0].mxu0
        %v753 = vadd.f32 0.0, %v752
        %v754 = vpop.f32.mrb[0].mxu0
        %755 = vmatprep.mubr.f32.mxu0 0.0
        %756 = vmatmul.mubr.f32.gmra.mrb[0].mxu0 %v425
        %v757 = vpop.f32.mrb[0].mxu0
        %v758 = vadd.f32 0.0, %v757
        %v759 = vpop.f32.mrb[0].mxu0
        %760 = vmatprep.mubr.f32.mxu0 0.0
        %761 = vmatmul.mubr.f32.gmra.mrb[0].mxu0 %v428
        %v762 = vpop.f32.mrb[0].mxu0
        %v763 = vadd.f32 0.0, %v762
        %v764 = vpop.f32.mrb[0].mxu0
        %765 = vmatprep.mubr.f32.mxu0 0.0
        %766 = vmatmul.mubr.f32.gmra.mrb[0].mxu0 %v431
        %v767 = vpop.f32.mrb[0].mxu0
        %v768 = vadd.f32 0.0, %v767
        %v769 = vpop.f32.mrb[0].mxu0
        %770 = vmatprep.mubr.f32.mxu0 0.0
        %771 = vmatmul.mubr.f32.gmra.mrb[0].mxu0 %v434
        %v772 = vpop.f32.mrb[0].mxu0
        %v773 = vadd.f32 0.0, %v772
        %v774 = vpop.f32.mrb[0].mxu0
        %775 = vmatprep.mubr.f32.mxu0 0.0
        %776 = vmatmul.mubr.f32.gmra.mrb[0].mxu0 %v437
        %v777 = vpop.f32.mrb[0].mxu0
        %v778 = vadd.f32 0.0, %v777
        %v779 = vpop.f32.mrb[0].mxu0
        %780 = vmatprep.mubr.f32.mxu0 0.0
        %781 = vmatmul.mubr.f32.gmra.mrb[0].mxu0 %v440
        %v782 = vpop.f32.mrb[0].mxu0
        %v783 = vadd.f32 0.0, %v782
        %v784 = vpop.f32.mrb[0].mxu0
        %785 = vmatprep.mubr.f32.mxu0 0.0
        %786 = vmatmul.mubr.f32.gmra.mrb[0].mxu0 %v443
        %v787 = vpop.f32.mrb[0].mxu0
        %v788 = vadd.f32 0.0, %v787
        %v789 = vpop.f32.mrb[0].mxu0
        %790 = vmatprep.mubr.f32.mxu0 0.0
        %791 = vmatmul.mubr.f32.gmra.mrb[0].mxu0 %v446
        %v792 = vpop.f32.mrb[0].mxu0
        %v793 = vadd.f32 0.0, %v792
        %v794 = vpop.f32.mrb[0].mxu0
        %795 = vmatprep.mubr.f32.mxu0 0.0
        %796 = vmatmul.mubr.f32.gmra.mrb[0].mxu0 %v449
        %v797 = vpop.f32.mrb[0].mxu0
        %v798 = vadd.f32 0.0, %v797
        %v799 = vpop.f32.mrb[0].mxu0
        %800 = vmatprep.mubr.f32.mxu0 0.0
        %801 = vmatmul.mubr.f32.gmra.mrb[0].mxu0 %v452
        %v802 = vpop.f32.mrb[0].mxu0
        %v803 = vadd.f32 0.0, %v802
        %v804 = vpop.f32.mrb[0].mxu0
        %805 = vmatprep.mubr.f32.mxu0 0.0
        %806 = vmatmul.mubr.f32.gmra.mrb[0].mxu0 %v455
        %v807 = vpop.f32.mrb[0].mxu0
        %v808 = vadd.f32 0.0, %v807
        %v809 = vpop.f32.mrb[0].mxu0
        %810 = vmatprep.mubr.f32.mxu0 0.0
        %811 = vmatmul.mubr.f32.gmra.mrb[0].mxu0 %v458
        %v812 = vpop.f32.mrb[0].mxu0
        %v813 = vadd.f32 0.0, %v812
        %v814 = vpop.f32.mrb[0].mxu0
        %815 = vmatprep.mubr.f32.mxu0 0.0
        %816 = vmatmul.mubr.f32.gmra.mrb[0].mxu0 %v461
        %v817 = vpop.f32.mrb[0].mxu0
        %v818 = vadd.f32 0.0, %v817
        %v819 = vpop.f32.mrb[0].mxu0
        %820 = vmatprep.mubr.f32.mxu0 0.0
        %821 = vmatmul.mubr.f32.gmra.mrb[0].mxu0 %v464
        %v822 = vpop.f32.mrb[0].mxu0
        %v823 = vadd.f32 0.0, %v822
        %v824 = vpop.f32.mrb[0].mxu0
        %825 = vmatprep.mubr.f32.mxu0 0.0
        %826 = vmatmul.mubr.f32.gmra.mrb[0].mxu0 %v467
        %v827 = vpop.f32.mrb[0].mxu0
        %v828 = vadd.f32 0.0, %v827
        %v829 = vpop.f32.mrb[0].mxu0
        %830 = vmatprep.mubr.f32.mxu0 0.0
        %831 = vmatmul.mubr.f32.gmra.mrb[0].mxu0 %v470
        %v832 = vpop.f32.mrb[0].mxu0
        %v833 = vadd.f32 0.0, %v832
        %v834 = vpop.f32.mrb[0].mxu0
        %835 = vmatprep.mubr.f32.mxu0 0.0
        %836 = vmatmul.mubr.f32.gmra.mrb[0].mxu0 %v473
        %v837 = vpop.f32.mrb[0].mxu0
        %v838 = vadd.f32 0.0, %v837
        %v839 = vpop.f32.mrb[0].mxu0
        %840 = vmatprep.mubr.f32.mxu0 0.0
        %841 = vmatmul.mubr.f32.gmra.mrb[0].mxu0 %v476
        %v842 = vpop.f32.mrb[0].mxu0
        %v843 = vadd.f32 0.0, %v842
        %v844 = vpop.f32.mrb[0].mxu0
        %845 = vmatprep.mubr.f32.mxu0 0.0
        %846 = vmatmul.mubr.f32.gmra.mrb[0].mxu0 %v479
        %v847 = vpop.f32.mrb[0].mxu0
        %v848 = vadd.f32 0.0, %v847
        %v849 = vpop.f32.mrb[0].mxu0
        %850 = vmatprep.mubr.f32.mxu0 0.0
        %851 = vmatmul.mubr.f32.gmra.mrb[0].mxu0 %v482
        %v852 = vpop.f32.mrb[0].mxu0
        %v853 = vadd.f32 0.0, %v852
        %v854 = vpop.f32.mrb[0].mxu0
        %855 = vmatprep.mubr.f32.mxu0 0.0
        %856 = vmatmul.mubr.f32.gmra.mrb[0].mxu0 %v485
        %v857 = vpop.f32.mrb[0].mxu0
        %v858 = vadd.f32 0.0, %v857
        %v859 = vpop.f32.mrb[0].mxu0
        %860 = vmatprep.mubr.f32.mxu0 0.0
        %861 = vmatmul.mubr.f32.gmra.mrb[0].mxu0 %v488
        %v862 = vpop.f32.mrb[0].mxu0
        %v863 = vadd.f32 0.0, %v862
        %v864 = vpop.f32.mrb[0].mxu0
        %865 = vmatprep.mubr.f32.mxu0 0.0
        %866 = vmatmul.mubr.f32.gmra.mrb[0].mxu0 %v491
        %v867 = vpop.f32.mrb[0].mxu0
        %v868 = vadd.f32 0.0, %v867
        %v869 = vpop.f32.mrb[0].mxu0
        %870 = vmatprep.mubr.f32.mxu0 0.0
        %871 = vmatmul.mubr.f32.gmra.mrb[0].mxu0 %v494
        %v872 = vpop.f32.mrb[0].mxu0
        %v873 = vadd.f32 0.0, %v872
        %v874 = vpop.f32.mrb[0].mxu0
        %875 = vmatprep.mubr.f32.mxu0 0.0
        %876 = vmatmul.mubr.f32.gmra.mrb[0].mxu0 %v497
        %v877 = vpop.f32.mrb[0].mxu0
        %v878 = vadd.f32 0.0, %v877
        %v879 = vpop.f32.mrb[0].mxu0
        %880 = vmatprep.mubr.f32.mxu0 0.0
        %881 = vmatmul.mubr.f32.gmra.mrb[0].mxu0 %v500
        %v882 = vpop.f32.mrb[0].mxu0
        %v883 = vadd.f32 0.0, %v882
        %v884 = vpop.f32.mrb[0].mxu0
        %885 = vmatprep.mubr.f32.mxu0 0.0
        %886 = vmatmul.mubr.f32.gmra.mrb[0].mxu0 %v503
        %v887 = vpop.f32.mrb[0].mxu0
        %v888 = vadd.f32 0.0, %v887
        %v889 = vpop.f32.mrb[0].mxu0
        %890 = vmatprep.mubr.f32.mxu0 0.0
        %891 = vmatmul.mubr.f32.gmra.mrb[0].mxu0 %v506
        %v892 = vpop.f32.mrb[0].mxu0
        %v893 = vadd.f32 0.0, %v892
        %v894 = vpop.f32.mrb[0].mxu0
        %895 = vmatprep.mubr.f32.mxu0 0.0
        %896 = vmatmul.mubr.f32.gmra.mrb[0].mxu0 %v509
        %v897 = vpop.f32.mrb[0].mxu0
        %v898 = vadd.f32 0.0, %v897
        %v899 = vpop.f32.mrb[0].mxu0
        %900 = vmatprep.mubr.f32.mxu0 0.0
        %901 = vmatmul.mubr.f32.gmra.mrb[0].mxu0 %v512
        %v902 = vpop.f32.mrb[0].mxu0
        %v903 = vadd.f32 0.0, %v902
        %v904 = vpop.f32.mrb[0].mxu0
        %905 = vmatprep.mubr.f32.mxu0 0.0
        %906 = vmatmul.mubr.f32.gmra.mrb[0].mxu0 %v515
        %v907 = vpop.f32.mrb[0].mxu0
        %v908 = vadd.f32 0.0, %v907
        %v909 = vpop.f32.mrb[0].mxu0
        %910 = vmatprep.mubr.f32.mxu0 0.0
        %911 = vmatmul.mubr.f32.gmra.mrb[0].mxu0 %v518
        %v912 = vpop.f32.mrb[0].mxu0
        %v913 = vadd.f32 0.0, %v912
        %v914 = vpop.f32.mrb[0].mxu0
        %915 = vmatprep.mubr.f32.mxu0 0.0
        %916 = vmatmul.mubr.f32.gmra.mrb[0].mxu0 %v521
        %v917 = vpop.f32.mrb[0].mxu0
        %v918 = vadd.f32 0.0, %v917
        %v919 = vpop.f32.mrb[0].mxu0
        %920 = vmatprep.mubr.f32.mxu0 0.0
        %921 = vmatmul.mubr.f32.gmra.mrb[0].mxu0 %v524
        %v922 = vpop.f32.mrb[0].mxu0
        %v923 = vadd.f32 0.0, %v922
        %v924 = vpop.f32.mrb[0].mxu0
        %925 = vmatprep.mubr.f32.mxu0 0.0
        %926 = vmatmul.mubr.f32.gmra.mrb[0].mxu0 %v527
        %v927 = vpop.f32.mrb[0].mxu0
        %v928 = vadd.f32 0.0, %v927
        %v929 = vpop.f32.mrb[0].mxu0
        %930 = vmatprep.mubr.f32.mxu0 0.0
        %931 = vmatmul.mubr.f32.gmra.mrb[0].mxu0 %v530
        %v932 = vpop.f32.mrb[0].mxu0
        %v933 = vadd.f32 0.0, %v932
        %v934 = vpop.f32.mrb[0].mxu0
        %935 = vmatprep.mubr.f32.mxu0 0.0
        %936 = vmatmul.mubr.f32.gmra.mrb[0].mxu0 %v533
        %v937 = vpop.f32.mrb[0].mxu0
        %v938 = vadd.f32 0.0, %v937
        %v939 = vpop.f32.mrb[0].mxu0
        %940 = vmatprep.mubr.f32.mxu0 0.0
        %941 = vmatmul.mubr.f32.gmra.mrb[0].mxu0 %v536
        %v942 = vpop.f32.mrb[0].mxu0
        %v943 = vadd.f32 0.0, %v942
        %v944 = vpop.f32.mrb[0].mxu0
        %945 = vmatprep.mubr.f32.mxu0 0.0
        %946 = vmatmul.mubr.f32.gmra.mrb[0].mxu0 %v539
        %v947 = vpop.f32.mrb[0].mxu0
        %v948 = vadd.f32 0.0, %v947
        %v949 = vpop.f32.mrb[0].mxu0
        %950 = vdwg.mxu0
        %v951 = vld [vmem:[%s2] sm:$0xff]
        %v952 = vld [vmem:[%s2 + $0x8] sm:$0xff]
        %v953 = vld [vmem:[%s2 + $0x10] sm:$0xff]
        %v954 = vld [vmem:[%s2 + $0x18] sm:$0xff]
        %v955 = vld [vmem:[%s2 + $0x20] sm:$0xff]
        %v956 = vld [vmem:[%s2 + $0x28] sm:$0xff]
        %v957 = vld [vmem:[%s2 + $0x30] sm:$0xff]
        %v958 = vld [vmem:[%s2 + $0x38] sm:$0xff]
        %v959 = vld [vmem:[%s2 + $0x40] sm:$0xff]
        %v960 = vld [vmem:[%s2 + $0x48] sm:$0xff]
        %v962 = vsel %vm333, %v608, 0
        %v965 = vsel %vm333, %v613, 0
        %v968 = vsel %vm333, %v618, 0
        %v971 = vsel %vm333, %v623, 0
        %v974 = vsel %vm333, %v628, 0
        %v977 = vsel %vm333, %v633, 0
        %v980 = vsel %vm333, %v638, 0
        %v983 = vsel %vm333, %v643, 0
        %v986 = vsel %vm333, %v648, 0
        %v989 = vsel %vm333, %v653, 0
        %v992 = vsel %vm333, %v658, 0
        %v995 = vsel %vm333, %v663, 0
        %v998 = vsel %vm333, %v668, 0
        %v1001 = vsel %vm333, %v673, 0
        %v1004 = vsel %vm333, %v678, 0
        %v1007 = vsel %vm333, %v683, 0
        %v1010 = vsel %vm333, %v688, 0
        %v1013 = vsel %vm333, %v693, 0
        %v1016 = vsel %vm333, %v698, 0
        %v1019 = vsel %vm333, %v703, 0
        %v1022 = vsel %vm333, %v708, 0
        %v1025 = vsel %vm333, %v713, 0
        %v1028 = vsel %vm333, %v718, 0
        %v1031 = vsel %vm333, %v723, 0
        %v1034 = vsel %vm333, %v728, 0
        %v1037 = vsel %vm333, %v733, 0
        %v1040 = vsel %vm333, %v738, 0
        %v1043 = vsel %vm333, %v743, 0
        %v1046 = vsel %vm333, %v748, 0
        %v1049 = vsel %vm333, %v753, 0
        %v1052 = vsel %vm333, %v758, 0
        %v1055 = vsel %vm333, %v763, 0
        %v1058 = vsel %vm333, %v768, 0
        %v1061 = vsel %vm333, %v773, 0
        %v1064 = vsel %vm333, %v778, 0
        %v1067 = vsel %vm333, %v783, 0
        %v1070 = vsel %vm333, %v788, 0
        %v1073 = vsel %vm333, %v793, 0
        %v1076 = vsel %vm333, %v798, 0
        %v1079 = vsel %vm333, %v803, 0
        %v1082 = vsel %vm333, %v808, 0
        %v1085 = vsel %vm333, %v813, 0
        %v1088 = vsel %vm333, %v818, 0
        %v1091 = vsel %vm333, %v823, 0
        %v1094 = vsel %vm333, %v828, 0
        %v1097 = vsel %vm333, %v833, 0
        %v1100 = vsel %vm333, %v838, 0
        %v1103 = vsel %vm333, %v843, 0
        %v1106 = vsel %vm333, %v848, 0
        %v1109 = vsel %vm333, %v853, 0
        %v1112 = vsel %vm333, %v858, 0
        %v1115 = vsel %vm333, %v863, 0
        %v1118 = vsel %vm333, %v868, 0
        %v1121 = vsel %vm333, %v873, 0
        %v1124 = vsel %vm333, %v878, 0
        %v1127 = vsel %vm333, %v883, 0
        %v1130 = vsel %vm333, %v888, 0
        %v1133 = vsel %vm333, %v893, 0
        %v1136 = vsel %vm333, %v898, 0
        %v1139 = vsel %vm333, %v903, 0
        %v1142 = vsel %vm333, %v908, 0
        %v1145 = vsel %vm333, %v913, 0
        %v1148 = vsel %vm333, %v918, 0
        %v1151 = vsel %vm333, %v923, 0
        %v1154 = vsel %vm333, %v928, 0
        %v1157 = vsel %vm333, %v933, 0
        %v1160 = vsel %vm333, %v938, 0
        %v1163 = vsel %vm333, %v943, 0
        %v1166 = vsel %vm333, %v948, 0
        %1168 = vmatprep.subr.mxu0 %v952
        %1169 = vmatpush1.msra.mxu0 %v951
        %1170 = vmatprep.subr.mxu0 %v957
        %1171 = vmatpush1.msra.mxu0 %v956
        %1172 = vmatprep.subr.mxu0 0.0
        %1173 = vmatpush1.msra.mxu0 0.0
        %1174 = vmatprep.subr.mxu0 0.0
        %1175 = vmatpush1.msra.mxu0 0.0
        %1176 = vmatprep.subr.mxu0 0.0
        %1177 = vmatpush1.msra.mxu0 0.0
        %1178 = vmatprep.subr.mxu0 0.0
        %1179 = vmatpush1.msra.mxu0 0.0
        %1180 = vmatprep.subr.mxu0 0.0
        %1181 = vmatpush1.msra.mxu0 0.0
        %1182 = vmatprep.subr.mxu0 0.0
        %1183 = vmatpush1.msra.mxu0 0.0
        %1184 = vmatprep.subr.mxu0 0.0
        %1185 = vmatpush1.msra.mxu0 0.0
        %1186 = vmatprep.subr.mxu0 0.0
        %1187 = vmatpush1.msra.mxu0 0.0
        %1188 = vmatprep.subr.mxu0 0.0
        %1189 = vmatpush1.msra.mxu0 0.0
        %1190 = vmatprep.subr.mxu0 0.0
        %1191 = vmatpush1.msra.mxu0 0.0
        %1192 = vmatprep.subr.mxu0 0.0
        %1193 = vmatpush1.msra.mxu0 0.0
        %1194 = vmatprep.subr.mxu0 0.0
        %1195 = vmatpush1.msra.mxu0 0.0
        %1196 = vmatprep.subr.mxu0 0.0
        %1197 = vmatpush1.msra.mxu0 0.0
        %1198 = vmatprep.subr.mxu0 0.0
        %1199 = vmatpush1.msra.mxu0 0.0
        %1200 = vmatprep.subr.mxu0 0.0
        %1201 = vmatpush1.msra.mxu0 0.0
        %1202 = vmatprep.subr.mxu0 0.0
        %1203 = vmatpush1.msra.mxu0 0.0
        %1204 = vmatprep.subr.mxu0 0.0
        %1205 = vmatpush1.msra.mxu0 0.0
        %1206 = vmatprep.subr.mxu0 0.0
        %1207 = vmatpush1.msra.mxu0 0.0
        %1208 = vmatprep.subr.mxu0 0.0
        %1209 = vmatpush1.msra.mxu0 0.0
        %1210 = vmatprep.subr.mxu0 0.0
        %1211 = vmatpush1.msra.mxu0 0.0
        %1212 = vmatprep.subr.mxu0 0.0
        %1213 = vmatpush1.msra.mxu0 0.0
        %1214 = vmatprep.subr.mxu0 0.0
        %1215 = vmatpush1.msra.mxu0 0.0
        %1216 = vmatprep.subr.mxu0 0.0
        %1217 = vmatpush1.msra.mxu0 0.0
        %1218 = vmatprep.subr.mxu0 0.0
        %1219 = vmatpush1.msra.mxu0 0.0
        %1220 = vmatprep.subr.mxu0 0.0
        %1221 = vmatpush1.msra.mxu0 0.0
        %1222 = vmatprep.subr.mxu0 0.0
        %1223 = vmatpush1.msra.mxu0 0.0
        %1224 = vmatprep.subr.mxu0 0.0
        %1225 = vmatpush1.msra.mxu0 0.0
        %1226 = vmatprep.subr.mxu0 0.0
        %1227 = vmatpush1.msra.mxu0 0.0
        %1228 = vmatprep.subr.mxu0 0.0
        %1229 = vmatpush1.msra.mxu0 0.0
        %1230 = vmatprep.subr.mxu0 0.0
        %1231 = vmatpush1.msra.mxu0 0.0
        %1232 = vmatprep.mubr.f32.mxu0 0.0
        %1233 = vmatmul.mubr.f32.gmra.mrb[0].mxu0 %v962
        %v1234 = vpop.f32.mrb[0].mxu0
        %v1235 = vadd.f32 0.0, %v1234
        %v1236 = vpop.f32.mrb[0].mxu0
        %v1237 = vadd.f32 0.0, %v1236
        %1238 = vmatprep.mubr.f32.mxu0 0.0
        %1239 = vmatmul.mubr.f32.gmra.mrb[0].mxu0 %v965
        %v1240 = vpop.f32.mrb[0].mxu0
        %v1241 = vadd.f32 0.0, %v1240
        %v1242 = vpop.f32.mrb[0].mxu0
        %v1243 = vadd.f32 0.0, %v1242
        %1244 = vmatprep.mubr.f32.mxu0 0.0
        %1245 = vmatmul.mubr.f32.gmra.mrb[0].mxu0 %v968
        %v1246 = vpop.f32.mrb[0].mxu0
        %v1247 = vadd.f32 0.0, %v1246
        %v1248 = vpop.f32.mrb[0].mxu0
        %v1249 = vadd.f32 0.0, %v1248
        %1250 = vmatprep.mubr.f32.mxu0 0.0
        %1251 = vmatmul.mubr.f32.gmra.mrb[0].mxu0 %v971
        %v1252 = vpop.f32.mrb[0].mxu0
        %v1253 = vadd.f32 0.0, %v1252
        %v1254 = vpop.f32.mrb[0].mxu0
        %v1255 = vadd.f32 0.0, %v1254
        %1256 = vmatprep.mubr.f32.mxu0 0.0
        %1257 = vmatmul.mubr.f32.gmra.mrb[0].mxu0 %v974
        %v1258 = vpop.f32.mrb[0].mxu0
        %v1259 = vadd.f32 0.0, %v1258
        %v1260 = vpop.f32.mrb[0].mxu0
        %v1261 = vadd.f32 0.0, %v1260
        %1262 = vmatprep.mubr.f32.mxu0 0.0
        %1263 = vmatmul.mubr.f32.gmra.mrb[0].mxu0 %v977
        %v1264 = vpop.f32.mrb[0].mxu0
        %v1265 = vadd.f32 0.0, %v1264
        %v1266 = vpop.f32.mrb[0].mxu0
        %v1267 = vadd.f32 0.0, %v1266
        %1268 = vmatprep.mubr.f32.mxu0 0.0
        %1269 = vmatmul.mubr.f32.gmra.mrb[0].mxu0 %v980
        %v1270 = vpop.f32.mrb[0].mxu0
        %v1271 = vadd.f32 0.0, %v1270
        %v1272 = vpop.f32.mrb[0].mxu0
        %v1273 = vadd.f32 0.0, %v1272
        %1274 = vmatprep.mubr.f32.mxu0 0.0
        %1275 = vmatmul.mubr.f32.gmra.mrb[0].mxu0 %v983
        %v1276 = vpop.f32.mrb[0].mxu0
        %v1277 = vadd.f32 0.0, %v1276
        %v1278 = vpop.f32.mrb[0].mxu0
        %v1279 = vadd.f32 0.0, %v1278
        %1280 = vmatprep.mubr.f32.mxu0 0.0
        %1281 = vmatmul.mubr.f32.gmra.mrb[0].mxu0 %v986
        %v1282 = vpop.f32.mrb[0].mxu0
        %v1283 = vadd.f32 0.0, %v1282
        %v1284 = vpop.f32.mrb[0].mxu0
        %v1285 = vadd.f32 0.0, %v1284
        %1286 = vmatprep.mubr.f32.mxu0 0.0
        %1287 = vmatmul.mubr.f32.gmra.mrb[0].mxu0 %v989
        %v1288 = vpop.f32.mrb[0].mxu0
        %v1289 = vadd.f32 0.0, %v1288
        %v1290 = vpop.f32.mrb[0].mxu0
        %v1291 = vadd.f32 0.0, %v1290
        %1292 = vmatprep.mubr.f32.mxu0 0.0
        %1293 = vmatmul.mubr.f32.gmra.mrb[0].mxu0 %v992
        %v1294 = vpop.f32.mrb[0].mxu0
        %v1295 = vadd.f32 0.0, %v1294
        %v1296 = vpop.f32.mrb[0].mxu0
        %v1297 = vadd.f32 0.0, %v1296
        %1298 = vmatprep.mubr.f32.mxu0 0.0
        %1299 = vmatmul.mubr.f32.gmra.mrb[0].mxu0 %v995
        %v1300 = vpop.f32.mrb[0].mxu0
        %v1301 = vadd.f32 0.0, %v1300
        %v1302 = vpop.f32.mrb[0].mxu0
        %v1303 = vadd.f32 0.0, %v1302
        %1304 = vmatprep.mubr.f32.mxu0 0.0
        %1305 = vmatmul.mubr.f32.gmra.mrb[0].mxu0 %v998
        %v1306 = vpop.f32.mrb[0].mxu0
        %v1307 = vadd.f32 0.0, %v1306
        %v1308 = vpop.f32.mrb[0].mxu0
        %v1309 = vadd.f32 0.0, %v1308
        %1310 = vmatprep.mubr.f32.mxu0 0.0
        %1311 = vmatmul.mubr.f32.gmra.mrb[0].mxu0 %v1001
        %v1312 = vpop.f32.mrb[0].mxu0
        %v1313 = vadd.f32 0.0, %v1312
        %v1314 = vpop.f32.mrb[0].mxu0
        %v1315 = vadd.f32 0.0, %v1314
        %1316 = vmatprep.mubr.f32.mxu0 0.0
        %1317 = vmatmul.mubr.f32.gmra.mrb[0].mxu0 %v1004
        %v1318 = vpop.f32.mrb[0].mxu0
        %v1319 = vadd.f32 0.0, %v1318
        %v1320 = vpop.f32.mrb[0].mxu0
        %v1321 = vadd.f32 0.0, %v1320
        %1322 = vmatprep.mubr.f32.mxu0 0.0
        %1323 = vmatmul.mubr.f32.gmra.mrb[0].mxu0 %v1007
        %v1324 = vpop.f32.mrb[0].mxu0
        %v1325 = vadd.f32 0.0, %v1324
        %v1326 = vpop.f32.mrb[0].mxu0
        %v1327 = vadd.f32 0.0, %v1326
        %1328 = vmatprep.mubr.f32.mxu0 0.0
        %1329 = vmatmul.mubr.f32.gmra.mrb[0].mxu0 %v1010
        %v1330 = vpop.f32.mrb[0].mxu0
        %v1331 = vadd.f32 0.0, %v1330
        %v1332 = vpop.f32.mrb[0].mxu0
        %v1333 = vadd.f32 0.0, %v1332
        %1334 = vmatprep.mubr.f32.mxu0 0.0
        %1335 = vmatmul.mubr.f32.gmra.mrb[0].mxu0 %v1013
        %v1336 = vpop.f32.mrb[0].mxu0
        %v1337 = vadd.f32 0.0, %v1336
        %v1338 = vpop.f32.mrb[0].mxu0
        %v1339 = vadd.f32 0.0, %v1338
        %1340 = vmatprep.mubr.f32.mxu0 0.0
        %1341 = vmatmul.mubr.f32.gmra.mrb[0].mxu0 %v1016
        %v1342 = vpop.f32.mrb[0].mxu0
        %v1343 = vadd.f32 0.0, %v1342
        %v1344 = vpop.f32.mrb[0].mxu0
        %v1345 = vadd.f32 0.0, %v1344
        %1346 = vmatprep.mubr.f32.mxu0 0.0
        %1347 = vmatmul.mubr.f32.gmra.mrb[0].mxu0 %v1019
        %v1348 = vpop.f32.mrb[0].mxu0
        %v1349 = vadd.f32 0.0, %v1348
        %v1350 = vpop.f32.mrb[0].mxu0
        %v1351 = vadd.f32 0.0, %v1350
        %1352 = vmatprep.mubr.f32.mxu0 0.0
        %1353 = vmatmul.mubr.f32.gmra.mrb[0].mxu0 %v1022
        %v1354 = vpop.f32.mrb[0].mxu0
        %v1355 = vadd.f32 0.0, %v1354
        %v1356 = vpop.f32.mrb[0].mxu0
        %v1357 = vadd.f32 0.0, %v1356
        %1358 = vmatprep.mubr.f32.mxu0 0.0
        %1359 = vmatmul.mubr.f32.gmra.mrb[0].mxu0 %v1025
        %v1360 = vpop.f32.mrb[0].mxu0
        %v1361 = vadd.f32 0.0, %v1360
        %v1362 = vpop.f32.mrb[0].mxu0
        %v1363 = vadd.f32 0.0, %v1362
        %1364 = vmatprep.mubr.f32.mxu0 0.0
        %1365 = vmatmul.mubr.f32.gmra.mrb[0].mxu0 %v1028
        %v1366 = vpop.f32.mrb[0].mxu0
        %v1367 = vadd.f32 0.0, %v1366
        %v1368 = vpop.f32.mrb[0].mxu0
        %v1369 = vadd.f32 0.0, %v1368
        %1370 = vmatprep.mubr.f32.mxu0 0.0
        %1371 = vmatmul.mubr.f32.gmra.mrb[0].mxu0 %v1031
        %v1372 = vpop.f32.mrb[0].mxu0
        %v1373 = vadd.f32 0.0, %v1372
        %v1374 = vpop.f32.mrb[0].mxu0
        %v1375 = vadd.f32 0.0, %v1374
        %1376 = vmatprep.mubr.f32.mxu0 0.0
        %1377 = vmatmul.mubr.f32.gmra.mrb[0].mxu0 %v1034
        %v1378 = vpop.f32.mrb[0].mxu0
        %v1379 = vadd.f32 0.0, %v1378
        %v1380 = vpop.f32.mrb[0].mxu0
        %v1381 = vadd.f32 0.0, %v1380
        %1382 = vmatprep.mubr.f32.mxu0 0.0
        %1383 = vmatmul.mubr.f32.gmra.mrb[0].mxu0 %v1037
        %v1384 = vpop.f32.mrb[0].mxu0
        %v1385 = vadd.f32 0.0, %v1384
        %v1386 = vpop.f32.mrb[0].mxu0
        %v1387 = vadd.f32 0.0, %v1386
        %1388 = vmatprep.mubr.f32.mxu0 0.0
        %1389 = vmatmul.mubr.f32.gmra.mrb[0].mxu0 %v1040
        %v1390 = vpop.f32.mrb[0].mxu0
        %v1391 = vadd.f32 0.0, %v1390
        %v1392 = vpop.f32.mrb[0].mxu0
        %v1393 = vadd.f32 0.0, %v1392
        %1394 = vmatprep.mubr.f32.mxu0 0.0
        %1395 = vmatmul.mubr.f32.gmra.mrb[0].mxu0 %v1043
        %v1396 = vpop.f32.mrb[0].mxu0
        %v1397 = vadd.f32 0.0, %v1396
        %v1398 = vpop.f32.mrb[0].mxu0
        %v1399 = vadd.f32 0.0, %v1398
        %1400 = vmatprep.mubr.f32.mxu0 0.0
        %1401 = vmatmul.mubr.f32.gmra.mrb[0].mxu0 %v1046
        %v1402 = vpop.f32.mrb[0].mxu0
        %v1403 = vadd.f32 0.0, %v1402
        %v1404 = vpop.f32.mrb[0].mxu0
        %v1405 = vadd.f32 0.0, %v1404
        %1406 = vmatprep.mubr.f32.mxu0 0.0
        %1407 = vmatmul.mubr.f32.gmra.mrb[0].mxu0 %v1049
        %v1408 = vpop.f32.mrb[0].mxu0
        %v1409 = vadd.f32 0.0, %v1408
        %v1410 = vpop.f32.mrb[0].mxu0
        %v1411 = vadd.f32 0.0, %v1410
        %1412 = vmatprep.mubr.f32.mxu0 0.0
        %1413 = vmatmul.mubr.f32.gmra.mrb[0].mxu0 %v1052
        %v1414 = vpop.f32.mrb[0].mxu0
        %v1415 = vadd.f32 0.0, %v1414
        %v1416 = vpop.f32.mrb[0].mxu0
        %v1417 = vadd.f32 0.0, %v1416
        %1418 = vmatprep.mubr.f32.mxu0 0.0
        %1419 = vmatmul.mubr.f32.gmra.mrb[0].mxu0 %v1055
        %v1420 = vpop.f32.mrb[0].mxu0
        %v1421 = vadd.f32 0.0, %v1420
        %v1422 = vpop.f32.mrb[0].mxu0
        %v1423 = vadd.f32 0.0, %v1422
        %1424 = vmatprep.mubr.f32.mxu0 0.0
        %1425 = vmatmul.mubr.f32.gmra.mrb[0].mxu0 %v1058
        %v1426 = vpop.f32.mrb[0].mxu0
        %v1427 = vadd.f32 0.0, %v1426
        %v1428 = vpop.f32.mrb[0].mxu0
        %v1429 = vadd.f32 0.0, %v1428
        %1430 = vmatprep.mubr.f32.mxu0 0.0
        %1431 = vmatmul.mubr.f32.gmra.mrb[0].mxu0 %v1061
        %v1432 = vpop.f32.mrb[0].mxu0
        %v1433 = vadd.f32 0.0, %v1432
        %v1434 = vpop.f32.mrb[0].mxu0
        %v1435 = vadd.f32 0.0, %v1434
        %1436 = vmatprep.mubr.f32.mxu0 0.0
        %1437 = vmatmul.mubr.f32.gmra.mrb[0].mxu0 %v1064
        %v1438 = vpop.f32.mrb[0].mxu0
        %v1439 = vadd.f32 0.0, %v1438
        %v1440 = vpop.f32.mrb[0].mxu0
        %v1441 = vadd.f32 0.0, %v1440
        %1442 = vmatprep.mubr.f32.mxu0 0.0
        %1443 = vmatmul.mubr.f32.gmra.mrb[0].mxu0 %v1067
        %v1444 = vpop.f32.mrb[0].mxu0
        %v1445 = vadd.f32 0.0, %v1444
        %v1446 = vpop.f32.mrb[0].mxu0
        %v1447 = vadd.f32 0.0, %v1446
        %1448 = vmatprep.mubr.f32.mxu0 0.0
        %1449 = vmatmul.mubr.f32.gmra.mrb[0].mxu0 %v1070
        %v1450 = vpop.f32.mrb[0].mxu0
        %v1451 = vadd.f32 0.0, %v1450
        %v1452 = vpop.f32.mrb[0].mxu0
        %v1453 = vadd.f32 0.0, %v1452
        %1454 = vmatprep.mubr.f32.mxu0 0.0
        %1455 = vmatmul.mubr.f32.gmra.mrb[0].mxu0 %v1073
        %v1456 = vpop.f32.mrb[0].mxu0
        %v1457 = vadd.f32 0.0, %v1456
        %v1458 = vpop.f32.mrb[0].mxu0
        %v1459 = vadd.f32 0.0, %v1458
        %1460 = vmatprep.mubr.f32.mxu0 0.0
        %1461 = vmatmul.mubr.f32.gmra.mrb[0].mxu0 %v1076
        %v1462 = vpop.f32.mrb[0].mxu0
        %v1463 = vadd.f32 0.0, %v1462
        %v1464 = vpop.f32.mrb[0].mxu0
        %v1465 = vadd.f32 0.0, %v1464
        %1466 = vmatprep.mubr.f32.mxu0 0.0
        %1467 = vmatmul.mubr.f32.gmra.mrb[0].mxu0 %v1079
        %v1468 = vpop.f32.mrb[0].mxu0
        %v1469 = vadd.f32 0.0, %v1468
        %v1470 = vpop.f32.mrb[0].mxu0
        %v1471 = vadd.f32 0.0, %v1470
        %1472 = vmatprep.mubr.f32.mxu0 0.0
        %1473 = vmatmul.mubr.f32.gmra.mrb[0].mxu0 %v1082
        %v1474 = vpop.f32.mrb[0].mxu0
        %v1475 = vadd.f32 0.0, %v1474
        %v1476 = vpop.f32.mrb[0].mxu0
        %v1477 = vadd.f32 0.0, %v1476
        %1478 = vmatprep.mubr.f32.mxu0 0.0
        %1479 = vmatmul.mubr.f32.gmra.mrb[0].mxu0 %v1085
        %v1480 = vpop.f32.mrb[0].mxu0
        %v1481 = vadd.f32 0.0, %v1480
        %v1482 = vpop.f32.mrb[0].mxu0
        %v1483 = vadd.f32 0.0, %v1482
        %1484 = vmatprep.mubr.f32.mxu0 0.0
        %1485 = vmatmul.mubr.f32.gmra.mrb[0].mxu0 %v1088
        %v1486 = vpop.f32.mrb[0].mxu0
        %v1487 = vadd.f32 0.0, %v1486
        %v1488 = vpop.f32.mrb[0].mxu0
        %v1489 = vadd.f32 0.0, %v1488
        %1490 = vmatprep.mubr.f32.mxu0 0.0
        %1491 = vmatmul.mubr.f32.gmra.mrb[0].mxu0 %v1091
        %v1492 = vpop.f32.mrb[0].mxu0
        %v1493 = vadd.f32 0.0, %v1492
        %v1494 = vpop.f32.mrb[0].mxu0
        %v1495 = vadd.f32 0.0, %v1494
        %1496 = vmatprep.mubr.f32.mxu0 0.0
        %1497 = vmatmul.mubr.f32.gmra.mrb[0].mxu0 %v1094
        %v1498 = vpop.f32.mrb[0].mxu0
        %v1499 = vadd.f32 0.0, %v1498
        %v1500 = vpop.f32.mrb[0].mxu0
        %v1501 = vadd.f32 0.0, %v1500
        %1502 = vmatprep.mubr.f32.mxu0 0.0
        %1503 = vmatmul.mubr.f32.gmra.mrb[0].mxu0 %v1097
        %v1504 = vpop.f32.mrb[0].mxu0
        %v1505 = vadd.f32 0.0, %v1504
        %v1506 = vpop.f32.mrb[0].mxu0
        %v1507 = vadd.f32 0.0, %v1506
        %1508 = vmatprep.mubr.f32.mxu0 0.0
        %1509 = vmatmul.mubr.f32.gmra.mrb[0].mxu0 %v1100
        %v1510 = vpop.f32.mrb[0].mxu0
        %v1511 = vadd.f32 0.0, %v1510
        %v1512 = vpop.f32.mrb[0].mxu0
        %v1513 = vadd.f32 0.0, %v1512
        %1514 = vmatprep.mubr.f32.mxu0 0.0
        %1515 = vmatmul.mubr.f32.gmra.mrb[0].mxu0 %v1103
        %v1516 = vpop.f32.mrb[0].mxu0
        %v1517 = vadd.f32 0.0, %v1516
        %v1518 = vpop.f32.mrb[0].mxu0
        %v1519 = vadd.f32 0.0, %v1518
        %1520 = vmatprep.mubr.f32.mxu0 0.0
        %1521 = vmatmul.mubr.f32.gmra.mrb[0].mxu0 %v1106
        %v1522 = vpop.f32.mrb[0].mxu0
        %v1523 = vadd.f32 0.0, %v1522
        %v1524 = vpop.f32.mrb[0].mxu0
        %v1525 = vadd.f32 0.0, %v1524
        %1526 = vmatprep.mubr.f32.mxu0 0.0
        %1527 = vmatmul.mubr.f32.gmra.mrb[0].mxu0 %v1109
        %v1528 = vpop.f32.mrb[0].mxu0
        %v1529 = vadd.f32 0.0, %v1528
        %v1530 = vpop.f32.mrb[0].mxu0
        %v1531 = vadd.f32 0.0, %v1530
        %1532 = vmatprep.mubr.f32.mxu0 0.0
        %1533 = vmatmul.mubr.f32.gmra.mrb[0].mxu0 %v1112
        %v1534 = vpop.f32.mrb[0].mxu0
        %v1535 = vadd.f32 0.0, %v1534
        %v1536 = vpop.f32.mrb[0].mxu0
        %v1537 = vadd.f32 0.0, %v1536
        %1538 = vmatprep.mubr.f32.mxu0 0.0
        %1539 = vmatmul.mubr.f32.gmra.mrb[0].mxu0 %v1115
        %v1540 = vpop.f32.mrb[0].mxu0
        %v1541 = vadd.f32 0.0, %v1540
        %v1542 = vpop.f32.mrb[0].mxu0
        %v1543 = vadd.f32 0.0, %v1542
        %1544 = vmatprep.mubr.f32.mxu0 0.0
        %1545 = vmatmul.mubr.f32.gmra.mrb[0].mxu0 %v1118
        %v1546 = vpop.f32.mrb[0].mxu0
        %v1547 = vadd.f32 0.0, %v1546
        %v1548 = vpop.f32.mrb[0].mxu0
        %v1549 = vadd.f32 0.0, %v1548
        %1550 = vmatprep.mubr.f32.mxu0 0.0
        %1551 = vmatmul.mubr.f32.gmra.mrb[0].mxu0 %v1121
        %v1552 = vpop.f32.mrb[0].mxu0
        %v1553 = vadd.f32 0.0, %v1552
        %v1554 = vpop.f32.mrb[0].mxu0
        %v1555 = vadd.f32 0.0, %v1554
        %1556 = vmatprep.mubr.f32.mxu0 0.0
        %1557 = vmatmul.mubr.f32.gmra.mrb[0].mxu0 %v1124
        %v1558 = vpop.f32.mrb[0].mxu0
        %v1559 = vadd.f32 0.0, %v1558
        %v1560 = vpop.f32.mrb[0].mxu0
        %v1561 = vadd.f32 0.0, %v1560
        %1562 = vmatprep.mubr.f32.mxu0 0.0
        %1563 = vmatmul.mubr.f32.gmra.mrb[0].mxu0 %v1127
        %v1564 = vpop.f32.mrb[0].mxu0
        %v1565 = vadd.f32 0.0, %v1564
        %v1566 = vpop.f32.mrb[0].mxu0
        %v1567 = vadd.f32 0.0, %v1566
        %1568 = vmatprep.mubr.f32.mxu0 0.0
        %1569 = vmatmul.mubr.f32.gmra.mrb[0].mxu0 %v1130
        %v1570 = vpop.f32.mrb[0].mxu0
        %v1571 = vadd.f32 0.0, %v1570
        %v1572 = vpop.f32.mrb[0].mxu0
        %v1573 = vadd.f32 0.0, %v1572
        %1574 = vmatprep.mubr.f32.mxu0 0.0
        %1575 = vmatmul.mubr.f32.gmra.mrb[0].mxu0 %v1133
        %v1576 = vpop.f32.mrb[0].mxu0
        %v1577 = vadd.f32 0.0, %v1576
        %v1578 = vpop.f32.mrb[0].mxu0
        %v1579 = vadd.f32 0.0, %v1578
        %1580 = vmatprep.mubr.f32.mxu0 0.0
        %1581 = vmatmul.mubr.f32.gmra.mrb[0].mxu0 %v1136
        %v1582 = vpop.f32.mrb[0].mxu0
        %v1583 = vadd.f32 0.0, %v1582
        %v1584 = vpop.f32.mrb[0].mxu0
        %v1585 = vadd.f32 0.0, %v1584
        %1586 = vmatprep.mubr.f32.mxu0 0.0
        %1587 = vmatmul.mubr.f32.gmra.mrb[0].mxu0 %v1139
        %v1588 = vpop.f32.mrb[0].mxu0
        %v1589 = vadd.f32 0.0, %v1588
        %v1590 = vpop.f32.mrb[0].mxu0
        %v1591 = vadd.f32 0.0, %v1590
        %1592 = vmatprep.mubr.f32.mxu0 0.0
        %1593 = vmatmul.mubr.f32.gmra.mrb[0].mxu0 %v1142
        %v1594 = vpop.f32.mrb[0].mxu0
        %v1595 = vadd.f32 0.0, %v1594
        %v1596 = vpop.f32.mrb[0].mxu0
        %v1597 = vadd.f32 0.0, %v1596
        %1598 = vmatprep.mubr.f32.mxu0 0.0
        %1599 = vmatmul.mubr.f32.gmra.mrb[0].mxu0 %v1145
        %v1600 = vpop.f32.mrb[0].mxu0
        %v1601 = vadd.f32 0.0, %v1600
        %v1602 = vpop.f32.mrb[0].mxu0
        %v1603 = vadd.f32 0.0, %v1602
        %1604 = vmatprep.mubr.f32.mxu0 0.0
        %1605 = vmatmul.mubr.f32.gmra.mrb[0].mxu0 %v1148
        %v1606 = vpop.f32.mrb[0].mxu0
        %v1607 = vadd.f32 0.0, %v1606
        %v1608 = vpop.f32.mrb[0].mxu0
        %v1609 = vadd.f32 0.0, %v1608
        %1610 = vmatprep.mubr.f32.mxu0 0.0
        %1611 = vmatmul.mubr.f32.gmra.mrb[0].mxu0 %v1151
        %v1612 = vpop.f32.mrb[0].mxu0
        %v1613 = vadd.f32 0.0, %v1612
        %v1614 = vpop.f32.mrb[0].mxu0
        %v1615 = vadd.f32 0.0, %v1614
        %1616 = vmatprep.mubr.f32.mxu0 0.0
        %1617 = vmatmul.mubr.f32.gmra.mrb[0].mxu0 %v1154
        %v1618 = vpop.f32.mrb[0].mxu0
        %v1619 = vadd.f32 0.0, %v1618
        %v1620 = vpop.f32.mrb[0].mxu0
        %v1621 = vadd.f32 0.0, %v1620
        %1622 = vmatprep.mubr.f32.mxu0 0.0
        %1623 = vmatmul.mubr.f32.gmra.mrb[0].mxu0 %v1157
        %v1624 = vpop.f32.mrb[0].mxu0
        %v1625 = vadd.f32 0.0, %v1624
        %v1626 = vpop.f32.mrb[0].mxu0
        %v1627 = vadd.f32 0.0, %v1626
        %1628 = vmatprep.mubr.f32.mxu0 0.0
        %1629 = vmatmul.mubr.f32.gmra.mrb[0].mxu0 %v1160
        %v1630 = vpop.f32.mrb[0].mxu0
        %v1631 = vadd.f32 0.0, %v1630
        %v1632 = vpop.f32.mrb[0].mxu0
        %v1633 = vadd.f32 0.0, %v1632
        %1634 = vmatprep.mubr.f32.mxu0 0.0
        %1635 = vmatmul.mubr.f32.gmra.mrb[0].mxu0 %v1163
        %v1636 = vpop.f32.mrb[0].mxu0
        %v1637 = vadd.f32 0.0, %v1636
        %v1638 = vpop.f32.mrb[0].mxu0
        %v1639 = vadd.f32 0.0, %v1638
        %1640 = vmatprep.mubr.f32.mxu0 0.0
        %1641 = vmatmul.mubr.f32.gmra.mrb[0].mxu0 %v1166
        %v1642 = vpop.f32.mrb[0].mxu0
        %v1643 = vadd.f32 0.0, %v1642
        %v1644 = vpop.f32.mrb[0].mxu0
        %v1645 = vadd.f32 0.0, %v1644
        %1646 = vdwg.mxu0
        %1647 = vmatprep.subr.mxu0 %v954
        %1648 = vmatpush1.msra.mxu0 %v953
        %1649 = vmatprep.subr.mxu0 %v959
        %1650 = vmatpush1.msra.mxu0 %v958
        %1651 = vmatprep.subr.mxu0 0.0
        %1652 = vmatpush1.msra.mxu0 0.0
        %1653 = vmatprep.subr.mxu0 0.0
        %1654 = vmatpush1.msra.mxu0 0.0
        %1655 = vmatprep.subr.mxu0 0.0
        %1656 = vmatpush1.msra.mxu0 0.0
        %1657 = vmatprep.subr.mxu0 0.0
        %1658 = vmatpush1.msra.mxu0 0.0
        %1659 = vmatprep.subr.mxu0 0.0
        %1660 = vmatpush1.msra.mxu0 0.0
        %1661 = vmatprep.subr.mxu0 0.0
        %1662 = vmatpush1.msra.mxu0 0.0
        %1663 = vmatprep.subr.mxu0 0.0
        %1664 = vmatpush1.msra.mxu0 0.0
        %1665 = vmatprep.subr.mxu0 0.0
        %1666 = vmatpush1.msra.mxu0 0.0
        %1667 = vmatprep.subr.mxu0 0.0
        %1668 = vmatpush1.msra.mxu0 0.0
        %1669 = vmatprep.subr.mxu0 0.0
        %1670 = vmatpush1.msra.mxu0 0.0
        %1671 = vmatprep.subr.mxu0 0.0
        %1672 = vmatpush1.msra.mxu0 0.0
        %1673 = vmatprep.subr.mxu0 0.0
        %1674 = vmatpush1.msra.mxu0 0.0
        %1675 = vmatprep.subr.mxu0 0.0
        %1676 = vmatpush1.msra.mxu0 0.0
        %1677 = vmatprep.subr.mxu0 0.0
        %1678 = vmatpush1.msra.mxu0 0.0
        %1679 = vmatprep.subr.mxu0 0.0
        %1680 = vmatpush1.msra.mxu0 0.0
        %1681 = vmatprep.subr.mxu0 0.0
        %1682 = vmatpush1.msra.mxu0 0.0
        %1683 = vmatprep.subr.mxu0 0.0
        %1684 = vmatpush1.msra.mxu0 0.0
        %1685 = vmatprep.subr.mxu0 0.0
        %1686 = vmatpush1.msra.mxu0 0.0
        %1687 = vmatprep.subr.mxu0 0.0
        %1688 = vmatpush1.msra.mxu0 0.0
        %1689 = vmatprep.subr.mxu0 0.0
        %1690 = vmatpush1.msra.mxu0 0.0
        %1691 = vmatprep.subr.mxu0 0.0
        %1692 = vmatpush1.msra.mxu0 0.0
        %1693 = vmatprep.subr.mxu0 0.0
        %1694 = vmatpush1.msra.mxu0 0.0
        %1695 = vmatprep.subr.mxu0 0.0
        %1696 = vmatpush1.msra.mxu0 0.0
        %1697 = vmatprep.subr.mxu0 0.0
        %1698 = vmatpush1.msra.mxu0 0.0
        %1699 = vmatprep.subr.mxu0 0.0
        %1700 = vmatpush1.msra.mxu0 0.0
        %1701 = vmatprep.subr.mxu0 0.0
        %1702 = vmatpush1.msra.mxu0 0.0
        %1703 = vmatprep.subr.mxu0 0.0
        %1704 = vmatpush1.msra.mxu0 0.0
        %1705 = vmatprep.subr.mxu0 0.0
        %1706 = vmatpush1.msra.mxu0 0.0
        %1707 = vmatprep.subr.mxu0 0.0
        %1708 = vmatpush1.msra.mxu0 0.0
        %1709 = vmatprep.subr.mxu0 0.0
        %1710 = vmatpush1.msra.mxu0 0.0
        %1711 = vmatprep.mubr.f32.mxu0 0.0
        %1712 = vmatmul.mubr.f32.gmra.mrb[0].mxu0 %v962
        %v1713 = vpop.f32.mrb[0].mxu0
        %v1714 = vadd.f32 0.0, %v1713
        %v1715 = vpop.f32.mrb[0].mxu0
        %v1716 = vadd.f32 0.0, %v1715
        %1717 = vmatprep.mubr.f32.mxu0 0.0
        %1718 = vmatmul.mubr.f32.gmra.mrb[0].mxu0 %v965
        %v1719 = vpop.f32.mrb[0].mxu0
        %v1720 = vadd.f32 0.0, %v1719
        %v1721 = vpop.f32.mrb[0].mxu0
        %v1722 = vadd.f32 0.0, %v1721
        %1723 = vmatprep.mubr.f32.mxu0 0.0
        %1724 = vmatmul.mubr.f32.gmra.mrb[0].mxu0 %v968
        %v1725 = vpop.f32.mrb[0].mxu0
        %v1726 = vadd.f32 0.0, %v1725
        %v1727 = vpop.f32.mrb[0].mxu0
        %v1728 = vadd.f32 0.0, %v1727
        %1729 = vmatprep.mubr.f32.mxu0 0.0
        %1730 = vmatmul.mubr.f32.gmra.mrb[0].mxu0 %v971
        %v1731 = vpop.f32.mrb[0].mxu0
        %v1732 = vadd.f32 0.0, %v1731
        %v1733 = vpop.f32.mrb[0].mxu0
        %v1734 = vadd.f32 0.0, %v1733
        %1735 = vmatprep.mubr.f32.mxu0 0.0
        %1736 = vmatmul.mubr.f32.gmra.mrb[0].mxu0 %v974
        %v1737 = vpop.f32.mrb[0].mxu0
        %v1738 = vadd.f32 0.0, %v1737
        %v1739 = vpop.f32.mrb[0].mxu0
        %v1740 = vadd.f32 0.0, %v1739
        %1741 = vmatprep.mubr.f32.mxu0 0.0
        %1742 = vmatmul.mubr.f32.gmra.mrb[0].mxu0 %v977
        %v1743 = vpop.f32.mrb[0].mxu0
        %v1744 = vadd.f32 0.0, %v1743
        %v1745 = vpop.f32.mrb[0].mxu0
        %v1746 = vadd.f32 0.0, %v1745
        %1747 = vmatprep.mubr.f32.mxu0 0.0
        %1748 = vmatmul.mubr.f32.gmra.mrb[0].mxu0 %v980
        %v1749 = vpop.f32.mrb[0].mxu0
        %v1750 = vadd.f32 0.0, %v1749
        %v1751 = vpop.f32.mrb[0].mxu0
        %v1752 = vadd.f32 0.0, %v1751
        %1753 = vmatprep.mubr.f32.mxu0 0.0
        %1754 = vmatmul.mubr.f32.gmra.mrb[0].mxu0 %v983
        %v1755 = vpop.f32.mrb[0].mxu0
        %v1756 = vadd.f32 0.0, %v1755
        %v1757 = vpop.f32.mrb[0].mxu0
        %v1758 = vadd.f32 0.0, %v1757
        %1759 = vmatprep.mubr.f32.mxu0 0.0
        %1760 = vmatmul.mubr.f32.gmra.mrb[0].mxu0 %v986
        %v1761 = vpop.f32.mrb[0].mxu0
        %v1762 = vadd.f32 0.0, %v1761
        %v1763 = vpop.f32.mrb[0].mxu0
        %v1764 = vadd.f32 0.0, %v1763
        %1765 = vmatprep.mubr.f32.mxu0 0.0
        %1766 = vmatmul.mubr.f32.gmra.mrb[0].mxu0 %v989
        %v1767 = vpop.f32.mrb[0].mxu0
        %v1768 = vadd.f32 0.0, %v1767
        %v1769 = vpop.f32.mrb[0].mxu0
        %v1770 = vadd.f32 0.0, %v1769
        %1771 = vmatprep.mubr.f32.mxu0 0.0
        %1772 = vmatmul.mubr.f32.gmra.mrb[0].mxu0 %v992
        %v1773 = vpop.f32.mrb[0].mxu0
        %v1774 = vadd.f32 0.0, %v1773
        %v1775 = vpop.f32.mrb[0].mxu0
        %v1776 = vadd.f32 0.0, %v1775
        %1777 = vmatprep.mubr.f32.mxu0 0.0
        %1778 = vmatmul.mubr.f32.gmra.mrb[0].mxu0 %v995
        %v1779 = vpop.f32.mrb[0].mxu0
        %v1780 = vadd.f32 0.0, %v1779
        %v1781 = vpop.f32.mrb[0].mxu0
        %v1782 = vadd.f32 0.0, %v1781
        %1783 = vmatprep.mubr.f32.mxu0 0.0
        %1784 = vmatmul.mubr.f32.gmra.mrb[0].mxu0 %v998
        %v1785 = vpop.f32.mrb[0].mxu0
        %v1786 = vadd.f32 0.0, %v1785
        %v1787 = vpop.f32.mrb[0].mxu0
        %v1788 = vadd.f32 0.0, %v1787
        %1789 = vmatprep.mubr.f32.mxu0 0.0
        %1790 = vmatmul.mubr.f32.gmra.mrb[0].mxu0 %v1001
        %v1791 = vpop.f32.mrb[0].mxu0
        %v1792 = vadd.f32 0.0, %v1791
        %v1793 = vpop.f32.mrb[0].mxu0
        %v1794 = vadd.f32 0.0, %v1793
        %1795 = vmatprep.mubr.f32.mxu0 0.0
        %1796 = vmatmul.mubr.f32.gmra.mrb[0].mxu0 %v1004
        %v1797 = vpop.f32.mrb[0].mxu0
        %v1798 = vadd.f32 0.0, %v1797
        %v1799 = vpop.f32.mrb[0].mxu0
        %v1800 = vadd.f32 0.0, %v1799
        %1801 = vmatprep.mubr.f32.mxu0 0.0
        %1802 = vmatmul.mubr.f32.gmra.mrb[0].mxu0 %v1007
        %v1803 = vpop.f32.mrb[0].mxu0
        %v1804 = vadd.f32 0.0, %v1803
        %v1805 = vpop.f32.mrb[0].mxu0
        %v1806 = vadd.f32 0.0, %v1805
        %1807 = vmatprep.mubr.f32.mxu0 0.0
        %1808 = vmatmul.mubr.f32.gmra.mrb[0].mxu0 %v1010
        %v1809 = vpop.f32.mrb[0].mxu0
        %v1810 = vadd.f32 0.0, %v1809
        %v1811 = vpop.f32.mrb[0].mxu0
        %v1812 = vadd.f32 0.0, %v1811
        %1813 = vmatprep.mubr.f32.mxu0 0.0
        %1814 = vmatmul.mubr.f32.gmra.mrb[0].mxu0 %v1013
        %v1815 = vpop.f32.mrb[0].mxu0
        %v1816 = vadd.f32 0.0, %v1815
        %v1817 = vpop.f32.mrb[0].mxu0
        %v1818 = vadd.f32 0.0, %v1817
        %1819 = vmatprep.mubr.f32.mxu0 0.0
        %1820 = vmatmul.mubr.f32.gmra.mrb[0].mxu0 %v1016
        %v1821 = vpop.f32.mrb[0].mxu0
        %v1822 = vadd.f32 0.0, %v1821
        %v1823 = vpop.f32.mrb[0].mxu0
        %v1824 = vadd.f32 0.0, %v1823
        %1825 = vmatprep.mubr.f32.mxu0 0.0
        %1826 = vmatmul.mubr.f32.gmra.mrb[0].mxu0 %v1019
        %v1827 = vpop.f32.mrb[0].mxu0
        %v1828 = vadd.f32 0.0, %v1827
        %v1829 = vpop.f32.mrb[0].mxu0
        %v1830 = vadd.f32 0.0, %v1829
        %1831 = vmatprep.mubr.f32.mxu0 0.0
        %1832 = vmatmul.mubr.f32.gmra.mrb[0].mxu0 %v1022
        %v1833 = vpop.f32.mrb[0].mxu0
        %v1834 = vadd.f32 0.0, %v1833
        %v1835 = vpop.f32.mrb[0].mxu0
        %v1836 = vadd.f32 0.0, %v1835
        %1837 = vmatprep.mubr.f32.mxu0 0.0
        %1838 = vmatmul.mubr.f32.gmra.mrb[0].mxu0 %v1025
        %v1839 = vpop.f32.mrb[0].mxu0
        %v1840 = vadd.f32 0.0, %v1839
        %v1841 = vpop.f32.mrb[0].mxu0
        %v1842 = vadd.f32 0.0, %v1841
        %1843 = vmatprep.mubr.f32.mxu0 0.0
        %1844 = vmatmul.mubr.f32.gmra.mrb[0].mxu0 %v1028
        %v1845 = vpop.f32.mrb[0].mxu0
        %v1846 = vadd.f32 0.0, %v1845
        %v1847 = vpop.f32.mrb[0].mxu0
        %v1848 = vadd.f32 0.0, %v1847
        %1849 = vmatprep.mubr.f32.mxu0 0.0
        %1850 = vmatmul.mubr.f32.gmra.mrb[0].mxu0 %v1031
        %v1851 = vpop.f32.mrb[0].mxu0
        %v1852 = vadd.f32 0.0, %v1851
        %v1853 = vpop.f32.mrb[0].mxu0
        %v1854 = vadd.f32 0.0, %v1853
        %1855 = vmatprep.mubr.f32.mxu0 0.0
        %1856 = vmatmul.mubr.f32.gmra.mrb[0].mxu0 %v1034
        %v1857 = vpop.f32.mrb[0].mxu0
        %v1858 = vadd.f32 0.0, %v1857
        %v1859 = vpop.f32.mrb[0].mxu0
        %v1860 = vadd.f32 0.0, %v1859
        %1861 = vmatprep.mubr.f32.mxu0 0.0
        %1862 = vmatmul.mubr.f32.gmra.mrb[0].mxu0 %v1037
        %v1863 = vpop.f32.mrb[0].mxu0
        %v1864 = vadd.f32 0.0, %v1863
        %v1865 = vpop.f32.mrb[0].mxu0
        %v1866 = vadd.f32 0.0, %v1865
        %1867 = vmatprep.mubr.f32.mxu0 0.0
        %1868 = vmatmul.mubr.f32.gmra.mrb[0].mxu0 %v1040
        %v1869 = vpop.f32.mrb[0].mxu0
        %v1870 = vadd.f32 0.0, %v1869
        %v1871 = vpop.f32.mrb[0].mxu0
        %v1872 = vadd.f32 0.0, %v1871
        %1873 = vmatprep.mubr.f32.mxu0 0.0
        %1874 = vmatmul.mubr.f32.gmra.mrb[0].mxu0 %v1043
        %v1875 = vpop.f32.mrb[0].mxu0
        %v1876 = vadd.f32 0.0, %v1875
        %v1877 = vpop.f32.mrb[0].mxu0
        %v1878 = vadd.f32 0.0, %v1877
        %1879 = vmatprep.mubr.f32.mxu0 0.0
        %1880 = vmatmul.mubr.f32.gmra.mrb[0].mxu0 %v1046
        %v1881 = vpop.f32.mrb[0].mxu0
        %v1882 = vadd.f32 0.0, %v1881
        %v1883 = vpop.f32.mrb[0].mxu0
        %v1884 = vadd.f32 0.0, %v1883
        %1885 = vmatprep.mubr.f32.mxu0 0.0
        %1886 = vmatmul.mubr.f32.gmra.mrb[0].mxu0 %v1049
        %v1887 = vpop.f32.mrb[0].mxu0
        %v1888 = vadd.f32 0.0, %v1887
        %v1889 = vpop.f32.mrb[0].mxu0
        %v1890 = vadd.f32 0.0, %v1889
        %1891 = vmatprep.mubr.f32.mxu0 0.0
        %1892 = vmatmul.mubr.f32.gmra.mrb[0].mxu0 %v1052
        %v1893 = vpop.f32.mrb[0].mxu0
        %v1894 = vadd.f32 0.0, %v1893
        %v1895 = vpop.f32.mrb[0].mxu0
        %v1896 = vadd.f32 0.0, %v1895
        %1897 = vmatprep.mubr.f32.mxu0 0.0
        %1898 = vmatmul.mubr.f32.gmra.mrb[0].mxu0 %v1055
        %v1899 = vpop.f32.mrb[0].mxu0
        %v1900 = vadd.f32 0.0, %v1899
        %v1901 = vpop.f32.mrb[0].mxu0
        %v1902 = vadd.f32 0.0, %v1901
        %1903 = vmatprep.mubr.f32.mxu0 0.0
        %1904 = vmatmul.mubr.f32.gmra.mrb[0].mxu0 %v1058
        %v1905 = vpop.f32.mrb[0].mxu0
        %v1906 = vadd.f32 0.0, %v1905
        %v1907 = vpop.f32.mrb[0].mxu0
        %v1908 = vadd.f32 0.0, %v1907
        %1909 = vmatprep.mubr.f32.mxu0 0.0
        %1910 = vmatmul.mubr.f32.gmra.mrb[0].mxu0 %v1061
        %v1911 = vpop.f32.mrb[0].mxu0
        %v1912 = vadd.f32 0.0, %v1911
        %v1913 = vpop.f32.mrb[0].mxu0
        %v1914 = vadd.f32 0.0, %v1913
        %1915 = vmatprep.mubr.f32.mxu0 0.0
        %1916 = vmatmul.mubr.f32.gmra.mrb[0].mxu0 %v1064
        %v1917 = vpop.f32.mrb[0].mxu0
        %v1918 = vadd.f32 0.0, %v1917
        %v1919 = vpop.f32.mrb[0].mxu0
        %v1920 = vadd.f32 0.0, %v1919
        %1921 = vmatprep.mubr.f32.mxu0 0.0
        %1922 = vmatmul.mubr.f32.gmra.mrb[0].mxu0 %v1067
        %v1923 = vpop.f32.mrb[0].mxu0
        %v1924 = vadd.f32 0.0, %v1923
        %v1925 = vpop.f32.mrb[0].mxu0
        %v1926 = vadd.f32 0.0, %v1925
        %1927 = vmatprep.mubr.f32.mxu0 0.0
        %1928 = vmatmul.mubr.f32.gmra.mrb[0].mxu0 %v1070
        %v1929 = vpop.f32.mrb[0].mxu0
        %v1930 = vadd.f32 0.0, %v1929
        %v1931 = vpop.f32.mrb[0].mxu0
        %v1932 = vadd.f32 0.0, %v1931
        %1933 = vmatprep.mubr.f32.mxu0 0.0
        %1934 = vmatmul.mubr.f32.gmra.mrb[0].mxu0 %v1073
        %v1935 = vpop.f32.mrb[0].mxu0
        %v1936 = vadd.f32 0.0, %v1935
        %v1937 = vpop.f32.mrb[0].mxu0
        %v1938 = vadd.f32 0.0, %v1937
        %1939 = vmatprep.mubr.f32.mxu0 0.0
        %1940 = vmatmul.mubr.f32.gmra.mrb[0].mxu0 %v1076
        %v1941 = vpop.f32.mrb[0].mxu0
        %v1942 = vadd.f32 0.0, %v1941
        %v1943 = vpop.f32.mrb[0].mxu0
        %v1944 = vadd.f32 0.0, %v1943
        %1945 = vmatprep.mubr.f32.mxu0 0.0
        %1946 = vmatmul.mubr.f32.gmra.mrb[0].mxu0 %v1079
        %v1947 = vpop.f32.mrb[0].mxu0
        %v1948 = vadd.f32 0.0, %v1947
        %v1949 = vpop.f32.mrb[0].mxu0
        %v1950 = vadd.f32 0.0, %v1949
        %1951 = vmatprep.mubr.f32.mxu0 0.0
        %1952 = vmatmul.mubr.f32.gmra.mrb[0].mxu0 %v1082
        %v1953 = vpop.f32.mrb[0].mxu0
        %v1954 = vadd.f32 0.0, %v1953
        %v1955 = vpop.f32.mrb[0].mxu0
        %v1956 = vadd.f32 0.0, %v1955
        %1957 = vmatprep.mubr.f32.mxu0 0.0
        %1958 = vmatmul.mubr.f32.gmra.mrb[0].mxu0 %v1085
        %v1959 = vpop.f32.mrb[0].mxu0
        %v1960 = vadd.f32 0.0, %v1959
        %v1961 = vpop.f32.mrb[0].mxu0
        %v1962 = vadd.f32 0.0, %v1961
        %1963 = vmatprep.mubr.f32.mxu0 0.0
        %1964 = vmatmul.mubr.f32.gmra.mrb[0].mxu0 %v1088
        %v1965 = vpop.f32.mrb[0].mxu0
        %v1966 = vadd.f32 0.0, %v1965
        %v1967 = vpop.f32.mrb[0].mxu0
        %v1968 = vadd.f32 0.0, %v1967
        %1969 = vmatprep.mubr.f32.mxu0 0.0
        %1970 = vmatmul.mubr.f32.gmra.mrb[0].mxu0 %v1091
        %v1971 = vpop.f32.mrb[0].mxu0
        %v1972 = vadd.f32 0.0, %v1971
        %v1973 = vpop.f32.mrb[0].mxu0
        %v1974 = vadd.f32 0.0, %v1973
        %1975 = vmatprep.mubr.f32.mxu0 0.0
        %1976 = vmatmul.mubr.f32.gmra.mrb[0].mxu0 %v1094
        %v1977 = vpop.f32.mrb[0].mxu0
        %v1978 = vadd.f32 0.0, %v1977
        %v1979 = vpop.f32.mrb[0].mxu0
        %v1980 = vadd.f32 0.0, %v1979
        %1981 = vmatprep.mubr.f32.mxu0 0.0
        %1982 = vmatmul.mubr.f32.gmra.mrb[0].mxu0 %v1097
        %v1983 = vpop.f32.mrb[0].mxu0
        %v1984 = vadd.f32 0.0, %v1983
        %v1985 = vpop.f32.mrb[0].mxu0
        %v1986 = vadd.f32 0.0, %v1985
        %1987 = vmatprep.mubr.f32.mxu0 0.0
        %1988 = vmatmul.mubr.f32.gmra.mrb[0].mxu0 %v1100
        %v1989 = vpop.f32.mrb[0].mxu0
        %v1990 = vadd.f32 0.0, %v1989
        %v1991 = vpop.f32.mrb[0].mxu0
        %v1992 = vadd.f32 0.0, %v1991
        %1993 = vmatprep.mubr.f32.mxu0 0.0
        %1994 = vmatmul.mubr.f32.gmra.mrb[0].mxu0 %v1103
        %v1995 = vpop.f32.mrb[0].mxu0
        %v1996 = vadd.f32 0.0, %v1995
        %v1997 = vpop.f32.mrb[0].mxu0
        %v1998 = vadd.f32 0.0, %v1997
        %1999 = vmatprep.mubr.f32.mxu0 0.0
        %2000 = vmatmul.mubr.f32.gmra.mrb[0].mxu0 %v1106
        %v2001 = vpop.f32.mrb[0].mxu0
        %v2002 = vadd.f32 0.0, %v2001
        %v2003 = vpop.f32.mrb[0].mxu0
        %v2004 = vadd.f32 0.0, %v2003
        %2005 = vmatprep.mubr.f32.mxu0 0.0
        %2006 = vmatmul.mubr.f32.gmra.mrb[0].mxu0 %v1109
        %v2007 = vpop.f32.mrb[0].mxu0
        %v2008 = vadd.f32 0.0, %v2007
        %v2009 = vpop.f32.mrb[0].mxu0
        %v2010 = vadd.f32 0.0, %v2009
        %2011 = vmatprep.mubr.f32.mxu0 0.0
        %2012 = vmatmul.mubr.f32.gmra.mrb[0].mxu0 %v1112
        %v2013 = vpop.f32.mrb[0].mxu0
        %v2014 = vadd.f32 0.0, %v2013
        %v2015 = vpop.f32.mrb[0].mxu0
        %v2016 = vadd.f32 0.0, %v2015
        %2017 = vmatprep.mubr.f32.mxu0 0.0
        %2018 = vmatmul.mubr.f32.gmra.mrb[0].mxu0 %v1115
        %v2019 = vpop.f32.mrb[0].mxu0
        %v2020 = vadd.f32 0.0, %v2019
        %v2021 = vpop.f32.mrb[0].mxu0
        %v2022 = vadd.f32 0.0, %v2021
        %2023 = vmatprep.mubr.f32.mxu0 0.0
        %2024 = vmatmul.mubr.f32.gmra.mrb[0].mxu0 %v1118
        %v2025 = vpop.f32.mrb[0].mxu0
        %v2026 = vadd.f32 0.0, %v2025
        %v2027 = vpop.f32.mrb[0].mxu0
        %v2028 = vadd.f32 0.0, %v2027
        %2029 = vmatprep.mubr.f32.mxu0 0.0
        %2030 = vmatmul.mubr.f32.gmra.mrb[0].mxu0 %v1121
        %v2031 = vpop.f32.mrb[0].mxu0
        %v2032 = vadd.f32 0.0, %v2031
        %v2033 = vpop.f32.mrb[0].mxu0
        %v2034 = vadd.f32 0.0, %v2033
        %2035 = vmatprep.mubr.f32.mxu0 0.0
        %2036 = vmatmul.mubr.f32.gmra.mrb[0].mxu0 %v1124
        %v2037 = vpop.f32.mrb[0].mxu0
        %v2038 = vadd.f32 0.0, %v2037
        %v2039 = vpop.f32.mrb[0].mxu0
        %v2040 = vadd.f32 0.0, %v2039
        %2041 = vmatprep.mubr.f32.mxu0 0.0
        %2042 = vmatmul.mubr.f32.gmra.mrb[0].mxu0 %v1127
        %v2043 = vpop.f32.mrb[0].mxu0
        %v2044 = vadd.f32 0.0, %v2043
        %v2045 = vpop.f32.mrb[0].mxu0
        %v2046 = vadd.f32 0.0, %v2045
        %2047 = vmatprep.mubr.f32.mxu0 0.0
        %2048 = vmatmul.mubr.f32.gmra.mrb[0].mxu0 %v1130
        %v2049 = vpop.f32.mrb[0].mxu0
        %v2050 = vadd.f32 0.0, %v2049
        %v2051 = vpop.f32.mrb[0].mxu0
        %v2052 = vadd.f32 0.0, %v2051
        %2053 = vmatprep.mubr.f32.mxu0 0.0
        %2054 = vmatmul.mubr.f32.gmra.mrb[0].mxu0 %v1133
        %v2055 = vpop.f32.mrb[0].mxu0
        %v2056 = vadd.f32 0.0, %v2055
        %v2057 = vpop.f32.mrb[0].mxu0
        %v2058 = vadd.f32 0.0, %v2057
        %2059 = vmatprep.mubr.f32.mxu0 0.0
        %2060 = vmatmul.mubr.f32.gmra.mrb[0].mxu0 %v1136
        %v2061 = vpop.f32.mrb[0].mxu0
        %v2062 = vadd.f32 0.0, %v2061
        %v2063 = vpop.f32.mrb[0].mxu0
        %v2064 = vadd.f32 0.0, %v2063
        %2065 = vmatprep.mubr.f32.mxu0 0.0
        %2066 = vmatmul.mubr.f32.gmra.mrb[0].mxu0 %v1139
        %v2067 = vpop.f32.mrb[0].mxu0
        %v2068 = vadd.f32 0.0, %v2067
        %v2069 = vpop.f32.mrb[0].mxu0
        %v2070 = vadd.f32 0.0, %v2069
        %2071 = vmatprep.mubr.f32.mxu0 0.0
        %2072 = vmatmul.mubr.f32.gmra.mrb[0].mxu0 %v1142
        %v2073 = vpop.f32.mrb[0].mxu0
        %v2074 = vadd.f32 0.0, %v2073
        %v2075 = vpop.f32.mrb[0].mxu0
        %v2076 = vadd.f32 0.0, %v2075
        %2077 = vmatprep.mubr.f32.mxu0 0.0
        %2078 = vmatmul.mubr.f32.gmra.mrb[0].mxu0 %v1145
        %v2079 = vpop.f32.mrb[0].mxu0
        %v2080 = vadd.f32 0.0, %v2079
        %v2081 = vpop.f32.mrb[0].mxu0
        %v2082 = vadd.f32 0.0, %v2081
        %2083 = vmatprep.mubr.f32.mxu0 0.0
        %2084 = vmatmul.mubr.f32.gmra.mrb[0].mxu0 %v1148
        %v2085 = vpop.f32.mrb[0].mxu0
        %v2086 = vadd.f32 0.0, %v2085
        %v2087 = vpop.f32.mrb[0].mxu0
        %v2088 = vadd.f32 0.0, %v2087
        %2089 = vmatprep.mubr.f32.mxu0 0.0
        %2090 = vmatmul.mubr.f32.gmra.mrb[0].mxu0 %v1151
        %v2091 = vpop.f32.mrb[0].mxu0
        %v2092 = vadd.f32 0.0, %v2091
        %v2093 = vpop.f32.mrb[0].mxu0
        %v2094 = vadd.f32 0.0, %v2093
        %2095 = vmatprep.mubr.f32.mxu0 0.0
        %2096 = vmatmul.mubr.f32.gmra.mrb[0].mxu0 %v1154
        %v2097 = vpop.f32.mrb[0].mxu0
        %v2098 = vadd.f32 0.0, %v2097
        %v2099 = vpop.f32.mrb[0].mxu0
        %v2100 = vadd.f32 0.0, %v2099
        %2101 = vmatprep.mubr.f32.mxu0 0.0
        %2102 = vmatmul.mubr.f32.gmra.mrb[0].mxu0 %v1157
        %v2103 = vpop.f32.mrb[0].mxu0
        %v2104 = vadd.f32 0.0, %v2103
        %v2105 = vpop.f32.mrb[0].mxu0
        %v2106 = vadd.f32 0.0, %v2105
        %2107 = vmatprep.mubr.f32.mxu0 0.0
        %2108 = vmatmul.mubr.f32.gmra.mrb[0].mxu0 %v1160
        %v2109 = vpop.f32.mrb[0].mxu0
        %v2110 = vadd.f32 0.0, %v2109
        %v2111 = vpop.f32.mrb[0].mxu0
        %v2112 = vadd.f32 0.0, %v2111
        %2113 = vmatprep.mubr.f32.mxu0 0.0
        %2114 = vmatmul.mubr.f32.gmra.mrb[0].mxu0 %v1163
        %v2115 = vpop.f32.mrb[0].mxu0
        %v2116 = vadd.f32 0.0, %v2115
        %v2117 = vpop.f32.mrb[0].mxu0
        %v2118 = vadd.f32 0.0, %v2117
        %2119 = vmatprep.mubr.f32.mxu0 0.0
        %2120 = vmatmul.mubr.f32.gmra.mrb[0].mxu0 %v1166
        %v2121 = vpop.f32.mrb[0].mxu0
        %v2122 = vadd.f32 0.0, %v2121
        %v2123 = vpop.f32.mrb[0].mxu0
        %v2124 = vadd.f32 0.0, %v2123
        %2125 = vdwg.mxu0
        %2126 = vmatprep.subr.mxu0 0.0
        %2127 = vmatpush1.msra.mxu0 %v955
        %2128 = vmatprep.subr.mxu0 0.0
        %2129 = vmatpush1.msra.mxu0 %v960
        %2130 = vmatprep.subr.mxu0 0.0
        %2131 = vmatpush1.msra.mxu0 0.0
        %2132 = vmatprep.subr.mxu0 0.0
        %2133 = vmatpush1.msra.mxu0 0.0
        %2134 = vmatprep.subr.mxu0 0.0
        %2135 = vmatpush1.msra.mxu0 0.0
        %2136 = vmatprep.subr.mxu0 0.0
        %2137 = vmatpush1.msra.mxu0 0.0
        %2138 = vmatprep.subr.mxu0 0.0
        %2139 = vmatpush1.msra.mxu0 0.0
        %2140 = vmatprep.subr.mxu0 0.0
        %2141 = vmatpush1.msra.mxu0 0.0
        %2142 = vmatprep.subr.mxu0 0.0
        %2143 = vmatpush1.msra.mxu0 0.0
        %2144 = vmatprep.subr.mxu0 0.0
        %2145 = vmatpush1.msra.mxu0 0.0
        %2146 = vmatprep.subr.mxu0 0.0
        %2147 = vmatpush1.msra.mxu0 0.0
        %2148 = vmatprep.subr.mxu0 0.0
        %2149 = vmatpush1.msra.mxu0 0.0
        %2150 = vmatprep.subr.mxu0 0.0
        %2151 = vmatpush1.msra.mxu0 0.0
        %2152 = vmatprep.subr.mxu0 0.0
        %2153 = vmatpush1.msra.mxu0 0.0
        %2154 = vmatprep.subr.mxu0 0.0
        %2155 = vmatpush1.msra.mxu0 0.0
        %2156 = vmatprep.subr.mxu0 0.0
        %2157 = vmatpush1.msra.mxu0 0.0
        %2158 = vmatprep.subr.mxu0 0.0
        %2159 = vmatpush1.msra.mxu0 0.0
        %2160 = vmatprep.subr.mxu0 0.0
        %2161 = vmatpush1.msra.mxu0 0.0
        %2162 = vmatprep.subr.mxu0 0.0
        %2163 = vmatpush1.msra.mxu0 0.0
        %2164 = vmatprep.subr.mxu0 0.0
        %2165 = vmatpush1.msra.mxu0 0.0
        %2166 = vmatprep.subr.mxu0 0.0
        %2167 = vmatpush1.msra.mxu0 0.0
        %2168 = vmatprep.subr.mxu0 0.0
        %2169 = vmatpush1.msra.mxu0 0.0
        %2170 = vmatprep.subr.mxu0 0.0
        %2171 = vmatpush1.msra.mxu0 0.0
        %2172 = vmatprep.subr.mxu0 0.0
        %2173 = vmatpush1.msra.mxu0 0.0
        %2174 = vmatprep.subr.mxu0 0.0
        %2175 = vmatpush1.msra.mxu0 0.0
        %2176 = vmatprep.subr.mxu0 0.0
        %2177 = vmatpush1.msra.mxu0 0.0
        %2178 = vmatprep.subr.mxu0 0.0
        %2179 = vmatpush1.msra.mxu0 0.0
        %2180 = vmatprep.subr.mxu0 0.0
        %2181 = vmatpush1.msra.mxu0 0.0
        %2182 = vmatprep.subr.mxu0 0.0
        %2183 = vmatpush1.msra.mxu0 0.0
        %2184 = vmatprep.subr.mxu0 0.0
        %2185 = vmatpush1.msra.mxu0 0.0
        %2186 = vmatprep.subr.mxu0 0.0
        %2187 = vmatpush1.msra.mxu0 0.0
        %2188 = vmatprep.subr.mxu0 0.0
        %2189 = vmatpush1.msra.mxu0 0.0
        %2190 = vmatprep.mubr.f32.mxu0 0.0
        %2191 = vmatmul.mubr.f32.gmra.mrb[0].mxu0 %v962
        %v2192 = vpop.f32.mrb[0].mxu0
        %v2193 = vadd.f32 0.0, %v2192
        %v2194 = vpop.f32.mrb[0].mxu0
        %2195 = vmatprep.mubr.f32.mxu0 0.0
        %2196 = vmatmul.mubr.f32.gmra.mrb[0].mxu0 %v965
        %v2197 = vpop.f32.mrb[0].mxu0
        %v2198 = vadd.f32 0.0, %v2197
        %v2199 = vpop.f32.mrb[0].mxu0
        %2200 = vmatprep.mubr.f32.mxu0 0.0
        %2201 = vmatmul.mubr.f32.gmra.mrb[0].mxu0 %v968
        %v2202 = vpop.f32.mrb[0].mxu0
        %v2203 = vadd.f32 0.0, %v2202
        %v2204 = vpop.f32.mrb[0].mxu0
        %2205 = vmatprep.mubr.f32.mxu0 0.0
        %2206 = vmatmul.mubr.f32.gmra.mrb[0].mxu0 %v971
        %v2207 = vpop.f32.mrb[0].mxu0
        %v2208 = vadd.f32 0.0, %v2207
        %v2209 = vpop.f32.mrb[0].mxu0
        %2210 = vmatprep.mubr.f32.mxu0 0.0
        %2211 = vmatmul.mubr.f32.gmra.mrb[0].mxu0 %v974
        %v2212 = vpop.f32.mrb[0].mxu0
        %v2213 = vadd.f32 0.0, %v2212
        %v2214 = vpop.f32.mrb[0].mxu0
        %2215 = vmatprep.mubr.f32.mxu0 0.0
        %2216 = vmatmul.mubr.f32.gmra.mrb[0].mxu0 %v977
        %v2217 = vpop.f32.mrb[0].mxu0
        %v2218 = vadd.f32 0.0, %v2217
        %v2219 = vpop.f32.mrb[0].mxu0
        %2220 = vmatprep.mubr.f32.mxu0 0.0
        %2221 = vmatmul.mubr.f32.gmra.mrb[0].mxu0 %v980
        %v2222 = vpop.f32.mrb[0].mxu0
        %v2223 = vadd.f32 0.0, %v2222
        %v2224 = vpop.f32.mrb[0].mxu0
        %2225 = vmatprep.mubr.f32.mxu0 0.0
        %2226 = vmatmul.mubr.f32.gmra.mrb[0].mxu0 %v983
        %v2227 = vpop.f32.mrb[0].mxu0
        %v2228 = vadd.f32 0.0, %v2227
        %v2229 = vpop.f32.mrb[0].mxu0
        %2230 = vmatprep.mubr.f32.mxu0 0.0
        %2231 = vmatmul.mubr.f32.gmra.mrb[0].mxu0 %v986
        %v2232 = vpop.f32.mrb[0].mxu0
        %v2233 = vadd.f32 0.0, %v2232
        %v2234 = vpop.f32.mrb[0].mxu0
        %2235 = vmatprep.mubr.f32.mxu0 0.0
        %2236 = vmatmul.mubr.f32.gmra.mrb[0].mxu0 %v989
        %v2237 = vpop.f32.mrb[0].mxu0
        %v2238 = vadd.f32 0.0, %v2237
        %v2239 = vpop.f32.mrb[0].mxu0
        %2240 = vmatprep.mubr.f32.mxu0 0.0
        %2241 = vmatmul.mubr.f32.gmra.mrb[0].mxu0 %v992
        %v2242 = vpop.f32.mrb[0].mxu0
        %v2243 = vadd.f32 0.0, %v2242
        %v2244 = vpop.f32.mrb[0].mxu0
        %2245 = vmatprep.mubr.f32.mxu0 0.0
        %2246 = vmatmul.mubr.f32.gmra.mrb[0].mxu0 %v995
        %v2247 = vpop.f32.mrb[0].mxu0
        %v2248 = vadd.f32 0.0, %v2247
        %v2249 = vpop.f32.mrb[0].mxu0
        %2250 = vmatprep.mubr.f32.mxu0 0.0
        %2251 = vmatmul.mubr.f32.gmra.mrb[0].mxu0 %v998
        %v2252 = vpop.f32.mrb[0].mxu0
        %v2253 = vadd.f32 0.0, %v2252
        %v2254 = vpop.f32.mrb[0].mxu0
        %2255 = vmatprep.mubr.f32.mxu0 0.0
        %2256 = vmatmul.mubr.f32.gmra.mrb[0].mxu0 %v1001
        %v2257 = vpop.f32.mrb[0].mxu0
        %v2258 = vadd.f32 0.0, %v2257
        %v2259 = vpop.f32.mrb[0].mxu0
        %2260 = vmatprep.mubr.f32.mxu0 0.0
        %2261 = vmatmul.mubr.f32.gmra.mrb[0].mxu0 %v1004
        %v2262 = vpop.f32.mrb[0].mxu0
        %v2263 = vadd.f32 0.0, %v2262
        %v2264 = vpop.f32.mrb[0].mxu0
        %2265 = vmatprep.mubr.f32.mxu0 0.0
        %2266 = vmatmul.mubr.f32.gmra.mrb[0].mxu0 %v1007
        %v2267 = vpop.f32.mrb[0].mxu0
        %v2268 = vadd.f32 0.0, %v2267
        %v2269 = vpop.f32.mrb[0].mxu0
        %2270 = vmatprep.mubr.f32.mxu0 0.0
        %2271 = vmatmul.mubr.f32.gmra.mrb[0].mxu0 %v1010
        %v2272 = vpop.f32.mrb[0].mxu0
        %v2273 = vadd.f32 0.0, %v2272
        %v2274 = vpop.f32.mrb[0].mxu0
        %2275 = vmatprep.mubr.f32.mxu0 0.0
        %2276 = vmatmul.mubr.f32.gmra.mrb[0].mxu0 %v1013
        %v2277 = vpop.f32.mrb[0].mxu0
        %v2278 = vadd.f32 0.0, %v2277
        %v2279 = vpop.f32.mrb[0].mxu0
        %2280 = vmatprep.mubr.f32.mxu0 0.0
        %2281 = vmatmul.mubr.f32.gmra.mrb[0].mxu0 %v1016
        %v2282 = vpop.f32.mrb[0].mxu0
        %v2283 = vadd.f32 0.0, %v2282
        %v2284 = vpop.f32.mrb[0].mxu0
        %2285 = vmatprep.mubr.f32.mxu0 0.0
        %2286 = vmatmul.mubr.f32.gmra.mrb[0].mxu0 %v1019
        %v2287 = vpop.f32.mrb[0].mxu0
        %v2288 = vadd.f32 0.0, %v2287
        %v2289 = vpop.f32.mrb[0].mxu0
        %2290 = vmatprep.mubr.f32.mxu0 0.0
        %2291 = vmatmul.mubr.f32.gmra.mrb[0].mxu0 %v1022
        %v2292 = vpop.f32.mrb[0].mxu0
        %v2293 = vadd.f32 0.0, %v2292
        %v2294 = vpop.f32.mrb[0].mxu0
        %2295 = vmatprep.mubr.f32.mxu0 0.0
        %2296 = vmatmul.mubr.f32.gmra.mrb[0].mxu0 %v1025
        %v2297 = vpop.f32.mrb[0].mxu0
        %v2298 = vadd.f32 0.0, %v2297
        %v2299 = vpop.f32.mrb[0].mxu0
        %2300 = vmatprep.mubr.f32.mxu0 0.0
        %2301 = vmatmul.mubr.f32.gmra.mrb[0].mxu0 %v1028
        %v2302 = vpop.f32.mrb[0].mxu0
        %v2303 = vadd.f32 0.0, %v2302
        %v2304 = vpop.f32.mrb[0].mxu0
        %2305 = vmatprep.mubr.f32.mxu0 0.0
        %2306 = vmatmul.mubr.f32.gmra.mrb[0].mxu0 %v1031
        %v2307 = vpop.f32.mrb[0].mxu0
        %v2308 = vadd.f32 0.0, %v2307
        %v2309 = vpop.f32.mrb[0].mxu0
        %2310 = vmatprep.mubr.f32.mxu0 0.0
        %2311 = vmatmul.mubr.f32.gmra.mrb[0].mxu0 %v1034
        %v2312 = vpop.f32.mrb[0].mxu0
        %v2313 = vadd.f32 0.0, %v2312
        %v2314 = vpop.f32.mrb[0].mxu0
        %2315 = vmatprep.mubr.f32.mxu0 0.0
        %2316 = vmatmul.mubr.f32.gmra.mrb[0].mxu0 %v1037
        %v2317 = vpop.f32.mrb[0].mxu0
        %v2318 = vadd.f32 0.0, %v2317
        %v2319 = vpop.f32.mrb[0].mxu0
        %2320 = vmatprep.mubr.f32.mxu0 0.0
        %2321 = vmatmul.mubr.f32.gmra.mrb[0].mxu0 %v1040
        %v2322 = vpop.f32.mrb[0].mxu0
        %v2323 = vadd.f32 0.0, %v2322
        %v2324 = vpop.f32.mrb[0].mxu0
        %2325 = vmatprep.mubr.f32.mxu0 0.0
        %2326 = vmatmul.mubr.f32.gmra.mrb[0].mxu0 %v1043
        %v2327 = vpop.f32.mrb[0].mxu0
        %v2328 = vadd.f32 0.0, %v2327
        %v2329 = vpop.f32.mrb[0].mxu0
        %2330 = vmatprep.mubr.f32.mxu0 0.0
        %2331 = vmatmul.mubr.f32.gmra.mrb[0].mxu0 %v1046
        %v2332 = vpop.f32.mrb[0].mxu0
        %v2333 = vadd.f32 0.0, %v2332
        %v2334 = vpop.f32.mrb[0].mxu0
        %2335 = vmatprep.mubr.f32.mxu0 0.0
        %2336 = vmatmul.mubr.f32.gmra.mrb[0].mxu0 %v1049
        %v2337 = vpop.f32.mrb[0].mxu0
        %v2338 = vadd.f32 0.0, %v2337
        %v2339 = vpop.f32.mrb[0].mxu0
        %2340 = vmatprep.mubr.f32.mxu0 0.0
        %2341 = vmatmul.mubr.f32.gmra.mrb[0].mxu0 %v1052
        %v2342 = vpop.f32.mrb[0].mxu0
        %v2343 = vadd.f32 0.0, %v2342
        %v2344 = vpop.f32.mrb[0].mxu0
        %2345 = vmatprep.mubr.f32.mxu0 0.0
        %2346 = vmatmul.mubr.f32.gmra.mrb[0].mxu0 %v1055
        %v2347 = vpop.f32.mrb[0].mxu0
        %v2348 = vadd.f32 0.0, %v2347
        %v2349 = vpop.f32.mrb[0].mxu0
        %2350 = vmatprep.mubr.f32.mxu0 0.0
        %2351 = vmatmul.mubr.f32.gmra.mrb[0].mxu0 %v1058
        %v2352 = vpop.f32.mrb[0].mxu0
        %v2353 = vadd.f32 0.0, %v2352
        %v2354 = vpop.f32.mrb[0].mxu0
        %2355 = vmatprep.mubr.f32.mxu0 0.0
        %2356 = vmatmul.mubr.f32.gmra.mrb[0].mxu0 %v1061
        %v2357 = vpop.f32.mrb[0].mxu0
        %v2358 = vadd.f32 0.0, %v2357
        %v2359 = vpop.f32.mrb[0].mxu0
        %2360 = vmatprep.mubr.f32.mxu0 0.0
        %2361 = vmatmul.mubr.f32.gmra.mrb[0].mxu0 %v1064
        %v2362 = vpop.f32.mrb[0].mxu0
        %v2363 = vadd.f32 0.0, %v2362
        %v2364 = vpop.f32.mrb[0].mxu0
        %2365 = vmatprep.mubr.f32.mxu0 0.0
        %2366 = vmatmul.mubr.f32.gmra.mrb[0].mxu0 %v1067
        %v2367 = vpop.f32.mrb[0].mxu0
        %v2368 = vadd.f32 0.0, %v2367
        %v2369 = vpop.f32.mrb[0].mxu0
        %2370 = vmatprep.mubr.f32.mxu0 0.0
        %2371 = vmatmul.mubr.f32.gmra.mrb[0].mxu0 %v1070
        %v2372 = vpop.f32.mrb[0].mxu0
        %v2373 = vadd.f32 0.0, %v2372
        %v2374 = vpop.f32.mrb[0].mxu0
        %2375 = vmatprep.mubr.f32.mxu0 0.0
        %2376 = vmatmul.mubr.f32.gmra.mrb[0].mxu0 %v1073
        %v2377 = vpop.f32.mrb[0].mxu0
        %v2378 = vadd.f32 0.0, %v2377
        %v2379 = vpop.f32.mrb[0].mxu0
        %2380 = vmatprep.mubr.f32.mxu0 0.0
        %2381 = vmatmul.mubr.f32.gmra.mrb[0].mxu0 %v1076
        %v2382 = vpop.f32.mrb[0].mxu0
        %v2383 = vadd.f32 0.0, %v2382
        %v2384 = vpop.f32.mrb[0].mxu0
        %2385 = vmatprep.mubr.f32.mxu0 0.0
        %2386 = vmatmul.mubr.f32.gmra.mrb[0].mxu0 %v1079
        %v2387 = vpop.f32.mrb[0].mxu0
        %v2388 = vadd.f32 0.0, %v2387
        %v2389 = vpop.f32.mrb[0].mxu0
        %2390 = vmatprep.mubr.f32.mxu0 0.0
        %2391 = vmatmul.mubr.f32.gmra.mrb[0].mxu0 %v1082
        %v2392 = vpop.f32.mrb[0].mxu0
        %v2393 = vadd.f32 0.0, %v2392
        %v2394 = vpop.f32.mrb[0].mxu0
        %2395 = vmatprep.mubr.f32.mxu0 0.0
        %2396 = vmatmul.mubr.f32.gmra.mrb[0].mxu0 %v1085
        %v2397 = vpop.f32.mrb[0].mxu0
        %v2398 = vadd.f32 0.0, %v2397
        %v2399 = vpop.f32.mrb[0].mxu0
        %2400 = vmatprep.mubr.f32.mxu0 0.0
        %2401 = vmatmul.mubr.f32.gmra.mrb[0].mxu0 %v1088
        %v2402 = vpop.f32.mrb[0].mxu0
        %v2403 = vadd.f32 0.0, %v2402
        %v2404 = vpop.f32.mrb[0].mxu0
        %2405 = vmatprep.mubr.f32.mxu0 0.0
        %2406 = vmatmul.mubr.f32.gmra.mrb[0].mxu0 %v1091
        %v2407 = vpop.f32.mrb[0].mxu0
        %v2408 = vadd.f32 0.0, %v2407
        %v2409 = vpop.f32.mrb[0].mxu0
        %2410 = vmatprep.mubr.f32.mxu0 0.0
        %2411 = vmatmul.mubr.f32.gmra.mrb[0].mxu0 %v1094
        %v2412 = vpop.f32.mrb[0].mxu0
        %v2413 = vadd.f32 0.0, %v2412
        %v2414 = vpop.f32.mrb[0].mxu0
        %2415 = vmatprep.mubr.f32.mxu0 0.0
        %2416 = vmatmul.mubr.f32.gmra.mrb[0].mxu0 %v1097
        %v2417 = vpop.f32.mrb[0].mxu0
        %v2418 = vadd.f32 0.0, %v2417
        %v2419 = vpop.f32.mrb[0].mxu0
        %2420 = vmatprep.mubr.f32.mxu0 0.0
        %2421 = vmatmul.mubr.f32.gmra.mrb[0].mxu0 %v1100
        %v2422 = vpop.f32.mrb[0].mxu0
        %v2423 = vadd.f32 0.0, %v2422
        %v2424 = vpop.f32.mrb[0].mxu0
        %2425 = vmatprep.mubr.f32.mxu0 0.0
        %2426 = vmatmul.mubr.f32.gmra.mrb[0].mxu0 %v1103
        %v2427 = vpop.f32.mrb[0].mxu0
        %v2428 = vadd.f32 0.0, %v2427
        %v2429 = vpop.f32.mrb[0].mxu0
        %2430 = vmatprep.mubr.f32.mxu0 0.0
        %2431 = vmatmul.mubr.f32.gmra.mrb[0].mxu0 %v1106
        %v2432 = vpop.f32.mrb[0].mxu0
        %v2433 = vadd.f32 0.0, %v2432
        %v2434 = vpop.f32.mrb[0].mxu0
        %2435 = vmatprep.mubr.f32.mxu0 0.0
        %2436 = vmatmul.mubr.f32.gmra.mrb[0].mxu0 %v1109
        %v2437 = vpop.f32.mrb[0].mxu0
        %v2438 = vadd.f32 0.0, %v2437
        %v2439 = vpop.f32.mrb[0].mxu0
        %2440 = vmatprep.mubr.f32.mxu0 0.0
        %2441 = vmatmul.mubr.f32.gmra.mrb[0].mxu0 %v1112
        %v2442 = vpop.f32.mrb[0].mxu0
        %v2443 = vadd.f32 0.0, %v2442
        %v2444 = vpop.f32.mrb[0].mxu0
        %2445 = vmatprep.mubr.f32.mxu0 0.0
        %2446 = vmatmul.mubr.f32.gmra.mrb[0].mxu0 %v1115
        %v2447 = vpop.f32.mrb[0].mxu0
        %v2448 = vadd.f32 0.0, %v2447
        %v2449 = vpop.f32.mrb[0].mxu0
        %2450 = vmatprep.mubr.f32.mxu0 0.0
        %2451 = vmatmul.mubr.f32.gmra.mrb[0].mxu0 %v1118
        %v2452 = vpop.f32.mrb[0].mxu0
        %v2453 = vadd.f32 0.0, %v2452
        %v2454 = vpop.f32.mrb[0].mxu0
        %2455 = vmatprep.mubr.f32.mxu0 0.0
        %2456 = vmatmul.mubr.f32.gmra.mrb[0].mxu0 %v1121
        %v2457 = vpop.f32.mrb[0].mxu0
        %v2458 = vadd.f32 0.0, %v2457
        %v2459 = vpop.f32.mrb[0].mxu0
        %2460 = vmatprep.mubr.f32.mxu0 0.0
        %2461 = vmatmul.mubr.f32.gmra.mrb[0].mxu0 %v1124
        %v2462 = vpop.f32.mrb[0].mxu0
        %v2463 = vadd.f32 0.0, %v2462
        %v2464 = vpop.f32.mrb[0].mxu0
        %2465 = vmatprep.mubr.f32.mxu0 0.0
        %2466 = vmatmul.mubr.f32.gmra.mrb[0].mxu0 %v1127
        %v2467 = vpop.f32.mrb[0].mxu0
        %v2468 = vadd.f32 0.0, %v2467
        %v2469 = vpop.f32.mrb[0].mxu0
        %2470 = vmatprep.mubr.f32.mxu0 0.0
        %2471 = vmatmul.mubr.f32.gmra.mrb[0].mxu0 %v1130
        %v2472 = vpop.f32.mrb[0].mxu0
        %v2473 = vadd.f32 0.0, %v2472
        %v2474 = vpop.f32.mrb[0].mxu0
        %2475 = vmatprep.mubr.f32.mxu0 0.0
        %2476 = vmatmul.mubr.f32.gmra.mrb[0].mxu0 %v1133
        %v2477 = vpop.f32.mrb[0].mxu0
        %v2478 = vadd.f32 0.0, %v2477
        %v2479 = vpop.f32.mrb[0].mxu0
        %2480 = vmatprep.mubr.f32.mxu0 0.0
        %2481 = vmatmul.mubr.f32.gmra.mrb[0].mxu0 %v1136
        %v2482 = vpop.f32.mrb[0].mxu0
        %v2483 = vadd.f32 0.0, %v2482
        %v2484 = vpop.f32.mrb[0].mxu0
        %2485 = vmatprep.mubr.f32.mxu0 0.0
        %2486 = vmatmul.mubr.f32.gmra.mrb[0].mxu0 %v1139
        %v2487 = vpop.f32.mrb[0].mxu0
        %v2488 = vadd.f32 0.0, %v2487
        %v2489 = vpop.f32.mrb[0].mxu0
        %2490 = vmatprep.mubr.f32.mxu0 0.0
        %2491 = vmatmul.mubr.f32.gmra.mrb[0].mxu0 %v1142
        %v2492 = vpop.f32.mrb[0].mxu0
        %v2493 = vadd.f32 0.0, %v2492
        %v2494 = vpop.f32.mrb[0].mxu0
        %2495 = vmatprep.mubr.f32.mxu0 0.0
        %2496 = vmatmul.mubr.f32.gmra.mrb[0].mxu0 %v1145
        %v2497 = vpop.f32.mrb[0].mxu0
        %v2498 = vadd.f32 0.0, %v2497
        %v2499 = vpop.f32.mrb[0].mxu0
        %2500 = vmatprep.mubr.f32.mxu0 0.0
        %2501 = vmatmul.mubr.f32.gmra.mrb[0].mxu0 %v1148
        %v2502 = vpop.f32.mrb[0].mxu0
        %v2503 = vadd.f32 0.0, %v2502
        %v2504 = vpop.f32.mrb[0].mxu0
        %2505 = vmatprep.mubr.f32.mxu0 0.0
        %2506 = vmatmul.mubr.f32.gmra.mrb[0].mxu0 %v1151
        %v2507 = vpop.f32.mrb[0].mxu0
        %v2508 = vadd.f32 0.0, %v2507
        %v2509 = vpop.f32.mrb[0].mxu0
        %2510 = vmatprep.mubr.f32.mxu0 0.0
        %2511 = vmatmul.mubr.f32.gmra.mrb[0].mxu0 %v1154
        %v2512 = vpop.f32.mrb[0].mxu0
        %v2513 = vadd.f32 0.0, %v2512
        %v2514 = vpop.f32.mrb[0].mxu0
        %2515 = vmatprep.mubr.f32.mxu0 0.0
        %2516 = vmatmul.mubr.f32.gmra.mrb[0].mxu0 %v1157
        %v2517 = vpop.f32.mrb[0].mxu0
        %v2518 = vadd.f32 0.0, %v2517
        %v2519 = vpop.f32.mrb[0].mxu0
        %2520 = vmatprep.mubr.f32.mxu0 0.0
        %2521 = vmatmul.mubr.f32.gmra.mrb[0].mxu0 %v1160
        %v2522 = vpop.f32.mrb[0].mxu0
        %v2523 = vadd.f32 0.0, %v2522
        %v2524 = vpop.f32.mrb[0].mxu0
        %2525 = vmatprep.mubr.f32.mxu0 0.0
        %2526 = vmatmul.mubr.f32.gmra.mrb[0].mxu0 %v1163
        %v2527 = vpop.f32.mrb[0].mxu0
        %v2528 = vadd.f32 0.0, %v2527
        %v2529 = vpop.f32.mrb[0].mxu0
        %2530 = vmatprep.mubr.f32.mxu0 0.0
        %2531 = vmatmul.mubr.f32.gmra.mrb[0].mxu0 %v1166
        %v2532 = vpop.f32.mrb[0].mxu0
        %v2533 = vadd.f32 0.0, %v2532
        %v2534 = vpop.f32.mrb[0].mxu0
        %2535 = vdwg.mxu0
        %2536 = vst [vmem:[%s259] sm:$0xff] %v1235
        %2537 = vst [vmem:[%s259 + $0x8] sm:$0xff] %v1237
        %2538 = vst [vmem:[%s259 + $0x10] sm:$0xff] %v1714
        %2539 = vst [vmem:[%s259 + $0x18] sm:$0xff] %v1716
        %vm2540 = vcmask 310272
        %2541 = vst.msk [vmem:[%s259 + $0x20] sm:$0xff] %vm2540, %v2193
        %2542 = vst [vmem:[%s259 + $0x28] sm:$0xff] %v1241
        %2543 = vst [vmem:[%s259 + $0x30] sm:$0xff] %v1243
        %2544 = vst [vmem:[%s259 + $0x38] sm:$0xff] %v1720
        %2545 = vst [vmem:[%s259 + $0x40] sm:$0xff] %v1722
        %2546 = vst.msk [vmem:[%s259 + $0x48] sm:$0xff] %vm2540, %v2198
        %2547 = vst [vmem:[%s259 + $0x50] sm:$0xff] %v1247
        %2548 = vst [vmem:[%s259 + $0x58] sm:$0xff] %v1249
        %2549 = vst [vmem:[%s259 + $0x60] sm:$0xff] %v1726
        %2550 = vst [vmem:[%s259 + $0x68] sm:$0xff] %v1728
        %2551 = vst.msk [vmem:[%s259 + $0x70] sm:$0xff] %vm2540, %v2203
        %2552 = vst [vmem:[%s259 + $0x78] sm:$0xff] %v1253
        %2553 = vst [vmem:[%s259 + $0x80] sm:$0xff] %v1255
        %2554 = vst [vmem:[%s259 + $0x88] sm:$0xff] %v1732
        %2555 = vst [vmem:[%s259 + $0x90] sm:$0xff] %v1734
        %2556 = vst.msk [vmem:[%s259 + $0x98] sm:$0xff] %vm2540, %v2208
        %2557 = vst [vmem:[%s259 + $0xa0] sm:$0xff] %v1259
        %2558 = vst [vmem:[%s259 + $0xa8] sm:$0xff] %v1261
        %2559 = vst [vmem:[%s259 + $0xb0] sm:$0xff] %v1738
        %2560 = vst [vmem:[%s259 + $0xb8] sm:$0xff] %v1740
        %2561 = vst.msk [vmem:[%s259 + $0xc0] sm:$0xff] %vm2540, %v2213
        %2562 = vst [vmem:[%s259 + $0xc8] sm:$0xff] %v1265
        %2563 = vst [vmem:[%s259 + $0xd0] sm:$0xff] %v1267
        %2564 = vst [vmem:[%s259 + $0xd8] sm:$0xff] %v1744
        %2565 = vst [vmem:[%s259 + $0xe0] sm:$0xff] %v1746
        %2566 = vst.msk [vmem:[%s259 + $0xe8] sm:$0xff] %vm2540, %v2218
        %2567 = vst [vmem:[%s259 + $0xf0] sm:$0xff] %v1271
        %2568 = vst [vmem:[%s259 + $0xf8] sm:$0xff] %v1273
        %2569 = vst [vmem:[%s259 + $0x100] sm:$0xff] %v1750
        %2570 = vst [vmem:[%s259 + $0x108] sm:$0xff] %v1752
        %2571 = vst.msk [vmem:[%s259 + $0x110] sm:$0xff] %vm2540, %v2223
        %2572 = vst [vmem:[%s259 + $0x118] sm:$0xff] %v1277
        %2573 = vst [vmem:[%s259 + $0x120] sm:$0xff] %v1279
        %2574 = vst [vmem:[%s259 + $0x128] sm:$0xff] %v1756
        %2575 = vst [vmem:[%s259 + $0x130] sm:$0xff] %v1758
        %2576 = vst.msk [vmem:[%s259 + $0x138] sm:$0xff] %vm2540, %v2228
        %2577 = vst [vmem:[%s259 + $0x140] sm:$0xff] %v1283
        %2578 = vst [vmem:[%s259 + $0x148] sm:$0xff] %v1285
        %2579 = vst [vmem:[%s259 + $0x150] sm:$0xff] %v1762
        %2580 = vst [vmem:[%s259 + $0x158] sm:$0xff] %v1764
        %2581 = vst.msk [vmem:[%s259 + $0x160] sm:$0xff] %vm2540, %v2233
        %2582 = vst [vmem:[%s259 + $0x168] sm:$0xff] %v1289
        %2583 = vst [vmem:[%s259 + $0x170] sm:$0xff] %v1291
        %2584 = vst [vmem:[%s259 + $0x178] sm:$0xff] %v1768
        %2585 = vst [vmem:[%s259 + $0x180] sm:$0xff] %v1770
        %2586 = vst.msk [vmem:[%s259 + $0x188] sm:$0xff] %vm2540, %v2238
        %2587 = vst [vmem:[%s259 + $0x190] sm:$0xff] %v1295
        %2588 = vst [vmem:[%s259 + $0x198] sm:$0xff] %v1297
        %2589 = vst [vmem:[%s259 + $0x1a0] sm:$0xff] %v1774
        %2590 = vst [vmem:[%s259 + $0x1a8] sm:$0xff] %v1776
        %2591 = vst.msk [vmem:[%s259 + $0x1b0] sm:$0xff] %vm2540, %v2243
        %2592 = vst [vmem:[%s259 + $0x1b8] sm:$0xff] %v1301
        %2593 = vst [vmem:[%s259 + $0x1c0] sm:$0xff] %v1303
        %2594 = vst [vmem:[%s259 + $0x1c8] sm:$0xff] %v1780
        %2595 = vst [vmem:[%s259 + $0x1d0] sm:$0xff] %v1782
        %2596 = vst.msk [vmem:[%s259 + $0x1d8] sm:$0xff] %vm2540, %v2248
        %2597 = vst [vmem:[%s259 + $0x1e0] sm:$0xff] %v1307
        %2598 = vst [vmem:[%s259 + $0x1e8] sm:$0xff] %v1309
        %2599 = vst [vmem:[%s259 + $0x1f0] sm:$0xff] %v1786
        %2600 = vst [vmem:[%s259 + $0x1f8] sm:$0xff] %v1788
        %2601 = vst.msk [vmem:[%s259 + $0x200] sm:$0xff] %vm2540, %v2253
        %2602 = vst [vmem:[%s259 + $0x208] sm:$0xff] %v1313
        %2603 = vst [vmem:[%s259 + $0x210] sm:$0xff] %v1315
        %2604 = vst [vmem:[%s259 + $0x218] sm:$0xff] %v1792
        %2605 = vst [vmem:[%s259 + $0x220] sm:$0xff] %v1794
        %2606 = vst.msk [vmem:[%s259 + $0x228] sm:$0xff] %vm2540, %v2258
        %2607 = vst [vmem:[%s259 + $0x230] sm:$0xff] %v1319
        %2608 = vst [vmem:[%s259 + $0x238] sm:$0xff] %v1321
        %2609 = vst [vmem:[%s259 + $0x240] sm:$0xff] %v1798
        %2610 = vst [vmem:[%s259 + $0x248] sm:$0xff] %v1800
        %2611 = vst.msk [vmem:[%s259 + $0x250] sm:$0xff] %vm2540, %v2263
        %2612 = vst [vmem:[%s259 + $0x258] sm:$0xff] %v1325
        %2613 = vst [vmem:[%s259 + $0x260] sm:$0xff] %v1327
        %2614 = vst [vmem:[%s259 + $0x268] sm:$0xff] %v1804
        %2615 = vst [vmem:[%s259 + $0x270] sm:$0xff] %v1806
        %2616 = vst.msk [vmem:[%s259 + $0x278] sm:$0xff] %vm2540, %v2268
        %2617 = vst [vmem:[%s259 + $0x280] sm:$0xff] %v1331
        %2618 = vst [vmem:[%s259 + $0x288] sm:$0xff] %v1333
        %2619 = vst [vmem:[%s259 + $0x290] sm:$0xff] %v1810
        %2620 = vst [vmem:[%s259 + $0x298] sm:$0xff] %v1812
        %2621 = vst.msk [vmem:[%s259 + $0x2a0] sm:$0xff] %vm2540, %v2273
        %2622 = vst [vmem:[%s259 + $0x2a8] sm:$0xff] %v1337
        %2623 = vst [vmem:[%s259 + $0x2b0] sm:$0xff] %v1339
        %2624 = vst [vmem:[%s259 + $0x2b8] sm:$0xff] %v1816
        %2625 = vst [vmem:[%s259 + $0x2c0] sm:$0xff] %v1818
        %2626 = vst.msk [vmem:[%s259 + $0x2c8] sm:$0xff] %vm2540, %v2278
        %2627 = vst [vmem:[%s259 + $0x2d0] sm:$0xff] %v1343
        %2628 = vst [vmem:[%s259 + $0x2d8] sm:$0xff] %v1345
        %2629 = vst [vmem:[%s259 + $0x2e0] sm:$0xff] %v1822
        %2630 = vst [vmem:[%s259 + $0x2e8] sm:$0xff] %v1824
        %2631 = vst.msk [vmem:[%s259 + $0x2f0] sm:$0xff] %vm2540, %v2283
        %2632 = vst [vmem:[%s259 + $0x2f8] sm:$0xff] %v1349
        %2633 = vst [vmem:[%s259 + $0x300] sm:$0xff] %v1351
        %2634 = vst [vmem:[%s259 + $0x308] sm:$0xff] %v1828
        %2635 = vst [vmem:[%s259 + $0x310] sm:$0xff] %v1830
        %2636 = vst.msk [vmem:[%s259 + $0x318] sm:$0xff] %vm2540, %v2288
        %2637 = vst [vmem:[%s259 + $0x320] sm:$0xff] %v1355
        %2638 = vst [vmem:[%s259 + $0x328] sm:$0xff] %v1357
        %2639 = vst [vmem:[%s259 + $0x330] sm:$0xff] %v1834
        %2640 = vst [vmem:[%s259 + $0x338] sm:$0xff] %v1836
        %2641 = vst.msk [vmem:[%s259 + $0x340] sm:$0xff] %vm2540, %v2293
        %2642 = vst [vmem:[%s259 + $0x348] sm:$0xff] %v1361
        %2643 = vst [vmem:[%s259 + $0x350] sm:$0xff] %v1363
        %2644 = vst [vmem:[%s259 + $0x358] sm:$0xff] %v1840
        %2645 = vst [vmem:[%s259 + $0x360] sm:$0xff] %v1842
        %2646 = vst.msk [vmem:[%s259 + $0x368] sm:$0xff] %vm2540, %v2298
        %2647 = vst [vmem:[%s259 + $0x370] sm:$0xff] %v1367
        %2648 = vst [vmem:[%s259 + $0x378] sm:$0xff] %v1369
        %2649 = vst [vmem:[%s259 + $0x380] sm:$0xff] %v1846
        %2650 = vst [vmem:[%s259 + $0x388] sm:$0xff] %v1848
        %2651 = vst.msk [vmem:[%s259 + $0x390] sm:$0xff] %vm2540, %v2303
        %2652 = vst [vmem:[%s259 + $0x398] sm:$0xff] %v1373
        %2653 = vst [vmem:[%s259 + $0x3a0] sm:$0xff] %v1375
        %2654 = vst [vmem:[%s259 + $0x3a8] sm:$0xff] %v1852
        %2655 = vst [vmem:[%s259 + $0x3b0] sm:$0xff] %v1854
        %2656 = vst.msk [vmem:[%s259 + $0x3b8] sm:$0xff] %vm2540, %v2308
        %2657 = vst [vmem:[%s259 + $0x3c0] sm:$0xff] %v1379
        %2658 = vst [vmem:[%s259 + $0x3c8] sm:$0xff] %v1381
        %2659 = vst [vmem:[%s259 + $0x3d0] sm:$0xff] %v1858
        %2660 = vst [vmem:[%s259 + $0x3d8] sm:$0xff] %v1860
        %2661 = vst.msk [vmem:[%s259 + $0x3e0] sm:$0xff] %vm2540, %v2313
        %2662 = vst [vmem:[%s259 + $0x3e8] sm:$0xff] %v1385
        %2663 = vst [vmem:[%s259 + $0x3f0] sm:$0xff] %v1387
        %2664 = vst [vmem:[%s259 + $0x3f8] sm:$0xff] %v1864
        %2665 = vst [vmem:[%s259 + $0x400] sm:$0xff] %v1866
        %2666 = vst.msk [vmem:[%s259 + $0x408] sm:$0xff] %vm2540, %v2318
        %2667 = vst [vmem:[%s259 + $0x410] sm:$0xff] %v1391
        %2668 = vst [vmem:[%s259 + $0x418] sm:$0xff] %v1393
        %2669 = vst [vmem:[%s259 + $0x420] sm:$0xff] %v1870
        %2670 = vst [vmem:[%s259 + $0x428] sm:$0xff] %v1872
        %2671 = vst.msk [vmem:[%s259 + $0x430] sm:$0xff] %vm2540, %v2323
        %2672 = vst [vmem:[%s259 + $0x438] sm:$0xff] %v1397
        %2673 = vst [vmem:[%s259 + $0x440] sm:$0xff] %v1399
        %2674 = vst [vmem:[%s259 + $0x448] sm:$0xff] %v1876
        %2675 = vst [vmem:[%s259 + $0x450] sm:$0xff] %v1878
        %2676 = vst.msk [vmem:[%s259 + $0x458] sm:$0xff] %vm2540, %v2328
        %2677 = vst [vmem:[%s259 + $0x460] sm:$0xff] %v1403
        %2678 = vst [vmem:[%s259 + $0x468] sm:$0xff] %v1405
        %2679 = vst [vmem:[%s259 + $0x470] sm:$0xff] %v1882
        %2680 = vst [vmem:[%s259 + $0x478] sm:$0xff] %v1884
        %2681 = vst.msk [vmem:[%s259 + $0x480] sm:$0xff] %vm2540, %v2333
        %2682 = vst [vmem:[%s259 + $0x488] sm:$0xff] %v1409
        %2683 = vst [vmem:[%s259 + $0x490] sm:$0xff] %v1411
        %2684 = vst [vmem:[%s259 + $0x498] sm:$0xff] %v1888
        %2685 = vst [vmem:[%s259 + $0x4a0] sm:$0xff] %v1890
        %2686 = vst.msk [vmem:[%s259 + $0x4a8] sm:$0xff] %vm2540, %v2338
        %2687 = vst [vmem:[%s259 + $0x4b0] sm:$0xff] %v1415
        %2688 = vst [vmem:[%s259 + $0x4b8] sm:$0xff] %v1417
        %2689 = vst [vmem:[%s259 + $0x4c0] sm:$0xff] %v1894
        %2690 = vst [vmem:[%s259 + $0x4c8] sm:$0xff] %v1896
        %2691 = vst.msk [vmem:[%s259 + $0x4d0] sm:$0xff] %vm2540, %v2343
        %2692 = vst [vmem:[%s259 + $0x4d8] sm:$0xff] %v1421
        %2693 = vst [vmem:[%s259 + $0x4e0] sm:$0xff] %v1423
        %2694 = vst [vmem:[%s259 + $0x4e8] sm:$0xff] %v1900
        %2695 = vst [vmem:[%s259 + $0x4f0] sm:$0xff] %v1902
        %2696 = vst.msk [vmem:[%s259 + $0x4f8] sm:$0xff] %vm2540, %v2348
        %2697 = vst [vmem:[%s259 + $0x500] sm:$0xff] %v1427
        %2698 = vst [vmem:[%s259 + $0x508] sm:$0xff] %v1429
        %2699 = vst [vmem:[%s259 + $0x510] sm:$0xff] %v1906
        %2700 = vst [vmem:[%s259 + $0x518] sm:$0xff] %v1908
        %2701 = vst.msk [vmem:[%s259 + $0x520] sm:$0xff] %vm2540, %v2353
        %2702 = vst [vmem:[%s259 + $0x528] sm:$0xff] %v1433
        %2703 = vst [vmem:[%s259 + $0x530] sm:$0xff] %v1435
        %2704 = vst [vmem:[%s259 + $0x538] sm:$0xff] %v1912
        %2705 = vst [vmem:[%s259 + $0x540] sm:$0xff] %v1914
        %2706 = vst.msk [vmem:[%s259 + $0x548] sm:$0xff] %vm2540, %v2358
        %2707 = vst [vmem:[%s259 + $0x550] sm:$0xff] %v1439
        %2708 = vst [vmem:[%s259 + $0x558] sm:$0xff] %v1441
        %2709 = vst [vmem:[%s259 + $0x560] sm:$0xff] %v1918
        %2710 = vst [vmem:[%s259 + $0x568] sm:$0xff] %v1920
        %2711 = vst.msk [vmem:[%s259 + $0x570] sm:$0xff] %vm2540, %v2363
        %2712 = vst [vmem:[%s259 + $0x578] sm:$0xff] %v1445
        %2713 = vst [vmem:[%s259 + $0x580] sm:$0xff] %v1447
        %2714 = vst [vmem:[%s259 + $0x588] sm:$0xff] %v1924
        %2715 = vst [vmem:[%s259 + $0x590] sm:$0xff] %v1926
        %2716 = vst.msk [vmem:[%s259 + $0x598] sm:$0xff] %vm2540, %v2368
        %2717 = vst [vmem:[%s259 + $0x5a0] sm:$0xff] %v1451
        %2718 = vst [vmem:[%s259 + $0x5a8] sm:$0xff] %v1453
        %2719 = vst [vmem:[%s259 + $0x5b0] sm:$0xff] %v1930
        %2720 = vst [vmem:[%s259 + $0x5b8] sm:$0xff] %v1932
        %2721 = vst.msk [vmem:[%s259 + $0x5c0] sm:$0xff] %vm2540, %v2373
        %2722 = vst [vmem:[%s259 + $0x5c8] sm:$0xff] %v1457
        %2723 = vst [vmem:[%s259 + $0x5d0] sm:$0xff] %v1459
        %2724 = vst [vmem:[%s259 + $0x5d8] sm:$0xff] %v1936
        %2725 = vst [vmem:[%s259 + $0x5e0] sm:$0xff] %v1938
        %2726 = vst.msk [vmem:[%s259 + $0x5e8] sm:$0xff] %vm2540, %v2378
        %2727 = vst [vmem:[%s259 + $0x5f0] sm:$0xff] %v1463
        %2728 = vst [vmem:[%s259 + $0x5f8] sm:$0xff] %v1465
        %2729 = vst [vmem:[%s259 + $0x600] sm:$0xff] %v1942
        %2730 = vst [vmem:[%s259 + $0x608] sm:$0xff] %v1944
        %2731 = vst.msk [vmem:[%s259 + $0x610] sm:$0xff] %vm2540, %v2383
        %2732 = vst [vmem:[%s259 + $0x618] sm:$0xff] %v1469
        %2733 = vst [vmem:[%s259 + $0x620] sm:$0xff] %v1471
        %2734 = vst [vmem:[%s259 + $0x628] sm:$0xff] %v1948
        %2735 = vst [vmem:[%s259 + $0x630] sm:$0xff] %v1950
        %2736 = vst.msk [vmem:[%s259 + $0x638] sm:$0xff] %vm2540, %v2388
        %2737 = vst [vmem:[%s259 + $0x640] sm:$0xff] %v1475
        %2738 = vst [vmem:[%s259 + $0x648] sm:$0xff] %v1477
        %2739 = vst [vmem:[%s259 + $0x650] sm:$0xff] %v1954
        %2740 = vst [vmem:[%s259 + $0x658] sm:$0xff] %v1956
        %2741 = vst.msk [vmem:[%s259 + $0x660] sm:$0xff] %vm2540, %v2393
        %2742 = vst [vmem:[%s259 + $0x668] sm:$0xff] %v1481
        %2743 = vst [vmem:[%s259 + $0x670] sm:$0xff] %v1483
        %2744 = vst [vmem:[%s259 + $0x678] sm:$0xff] %v1960
        %2745 = vst [vmem:[%s259 + $0x680] sm:$0xff] %v1962
        %2746 = vst.msk [vmem:[%s259 + $0x688] sm:$0xff] %vm2540, %v2398
        %2747 = vst [vmem:[%s259 + $0x690] sm:$0xff] %v1487
        %2748 = vst [vmem:[%s259 + $0x698] sm:$0xff] %v1489
        %2749 = vst [vmem:[%s259 + $0x6a0] sm:$0xff] %v1966
        %2750 = vst [vmem:[%s259 + $0x6a8] sm:$0xff] %v1968
        %2751 = vst.msk [vmem:[%s259 + $0x6b0] sm:$0xff] %vm2540, %v2403
        %2752 = vst [vmem:[%s259 + $0x6b8] sm:$0xff] %v1493
        %2753 = vst [vmem:[%s259 + $0x6c0] sm:$0xff] %v1495
        %2754 = vst [vmem:[%s259 + $0x6c8] sm:$0xff] %v1972
        %2755 = vst [vmem:[%s259 + $0x6d0] sm:$0xff] %v1974
        %2756 = vst.msk [vmem:[%s259 + $0x6d8] sm:$0xff] %vm2540, %v2408
        %2757 = vst [vmem:[%s259 + $0x6e0] sm:$0xff] %v1499
        %2758 = vst [vmem:[%s259 + $0x6e8] sm:$0xff] %v1501
        %2759 = vst [vmem:[%s259 + $0x6f0] sm:$0xff] %v1978
        %2760 = vst [vmem:[%s259 + $0x6f8] sm:$0xff] %v1980
        %2761 = vst.msk [vmem:[%s259 + $0x700] sm:$0xff] %vm2540, %v2413
        %2762 = vst [vmem:[%s259 + $0x708] sm:$0xff] %v1505
        %2763 = vst [vmem:[%s259 + $0x710] sm:$0xff] %v1507
        %2764 = vst [vmem:[%s259 + $0x718] sm:$0xff] %v1984
        %2765 = vst [vmem:[%s259 + $0x720] sm:$0xff] %v1986
        %2766 = vst.msk [vmem:[%s259 + $0x728] sm:$0xff] %vm2540, %v2418
        %2767 = vst [vmem:[%s259 + $0x730] sm:$0xff] %v1511
        %2768 = vst [vmem:[%s259 + $0x738] sm:$0xff] %v1513
        %2769 = vst [vmem:[%s259 + $0x740] sm:$0xff] %v1990
        %2770 = vst [vmem:[%s259 + $0x748] sm:$0xff] %v1992
        %2771 = vst.msk [vmem:[%s259 + $0x750] sm:$0xff] %vm2540, %v2423
        %2772 = vst [vmem:[%s259 + $0x758] sm:$0xff] %v1517
        %2773 = vst [vmem:[%s259 + $0x760] sm:$0xff] %v1519
        %2774 = vst [vmem:[%s259 + $0x768] sm:$0xff] %v1996
        %2775 = vst [vmem:[%s259 + $0x770] sm:$0xff] %v1998
        %2776 = vst.msk [vmem:[%s259 + $0x778] sm:$0xff] %vm2540, %v2428
        %2777 = vst [vmem:[%s259 + $0x780] sm:$0xff] %v1523
        %2778 = vst [vmem:[%s259 + $0x788] sm:$0xff] %v1525
        %2779 = vst [vmem:[%s259 + $0x790] sm:$0xff] %v2002
        %2780 = vst [vmem:[%s259 + $0x798] sm:$0xff] %v2004
        %2781 = vst.msk [vmem:[%s259 + $0x7a0] sm:$0xff] %vm2540, %v2433
        %2782 = vst [vmem:[%s259 + $0x7a8] sm:$0xff] %v1529
        %2783 = vst [vmem:[%s259 + $0x7b0] sm:$0xff] %v1531
        %2784 = vst [vmem:[%s259 + $0x7b8] sm:$0xff] %v2008
        %2785 = vst [vmem:[%s259 + $0x7c0] sm:$0xff] %v2010
        %2786 = vst.msk [vmem:[%s259 + $0x7c8] sm:$0xff] %vm2540, %v2438
        %2787 = vst [vmem:[%s259 + $0x7d0] sm:$0xff] %v1535
        %2788 = vst [vmem:[%s259 + $0x7d8] sm:$0xff] %v1537
        %2789 = vst [vmem:[%s259 + $0x7e0] sm:$0xff] %v2014
        %2790 = vst [vmem:[%s259 + $0x7e8] sm:$0xff] %v2016
        %2791 = vst.msk [vmem:[%s259 + $0x7f0] sm:$0xff] %vm2540, %v2443
        %2792 = vst [vmem:[%s259 + $0x7f8] sm:$0xff] %v1541
        %2793 = vst [vmem:[%s259 + $0x800] sm:$0xff] %v1543
        %2794 = vst [vmem:[%s259 + $0x808] sm:$0xff] %v2020
        %2795 = vst [vmem:[%s259 + $0x810] sm:$0xff] %v2022
        %2796 = vst.msk [vmem:[%s259 + $0x818] sm:$0xff] %vm2540, %v2448
        %2797 = vst [vmem:[%s259 + $0x820] sm:$0xff] %v1547
        %2798 = vst [vmem:[%s259 + $0x828] sm:$0xff] %v1549
        %2799 = vst [vmem:[%s259 + $0x830] sm:$0xff] %v2026
        %2800 = vst [vmem:[%s259 + $0x838] sm:$0xff] %v2028
        %2801 = vst.msk [vmem:[%s259 + $0x840] sm:$0xff] %vm2540, %v2453
        %2802 = vst [vmem:[%s259 + $0x848] sm:$0xff] %v1553
        %2803 = vst [vmem:[%s259 + $0x850] sm:$0xff] %v1555
        %2804 = vst [vmem:[%s259 + $0x858] sm:$0xff] %v2032
        %2805 = vst [vmem:[%s259 + $0x860] sm:$0xff] %v2034
        %2806 = vst.msk [vmem:[%s259 + $0x868] sm:$0xff] %vm2540, %v2458
        %2807 = vst [vmem:[%s259 + $0x870] sm:$0xff] %v1559
        %2808 = vst [vmem:[%s259 + $0x878] sm:$0xff] %v1561
        %2809 = vst [vmem:[%s259 + $0x880] sm:$0xff] %v2038
        %2810 = vst [vmem:[%s259 + $0x888] sm:$0xff] %v2040
        %2811 = vst.msk [vmem:[%s259 + $0x890] sm:$0xff] %vm2540, %v2463
        %2812 = vst [vmem:[%s259 + $0x898] sm:$0xff] %v1565
        %2813 = vst [vmem:[%s259 + $0x8a0] sm:$0xff] %v1567
        %2814 = vst [vmem:[%s259 + $0x8a8] sm:$0xff] %v2044
        %2815 = vst [vmem:[%s259 + $0x8b0] sm:$0xff] %v2046
        %2816 = vst.msk [vmem:[%s259 + $0x8b8] sm:$0xff] %vm2540, %v2468
        %2817 = vst [vmem:[%s259 + $0x8c0] sm:$0xff] %v1571
        %2818 = vst [vmem:[%s259 + $0x8c8] sm:$0xff] %v1573
        %2819 = vst [vmem:[%s259 + $0x8d0] sm:$0xff] %v2050
        %2820 = vst [vmem:[%s259 + $0x8d8] sm:$0xff] %v2052
        %2821 = vst.msk [vmem:[%s259 + $0x8e0] sm:$0xff] %vm2540, %v2473
        %2822 = vst [vmem:[%s259 + $0x8e8] sm:$0xff] %v1577
        %2823 = vst [vmem:[%s259 + $0x8f0] sm:$0xff] %v1579
        %2824 = vst [vmem:[%s259 + $0x8f8] sm:$0xff] %v2056
        %2825 = vst [vmem:[%s259 + $0x900] sm:$0xff] %v2058
        %2826 = vst.msk [vmem:[%s259 + $0x908] sm:$0xff] %vm2540, %v2478
        %2827 = vst [vmem:[%s259 + $0x910] sm:$0xff] %v1583
        %2828 = vst [vmem:[%s259 + $0x918] sm:$0xff] %v1585
        %2829 = vst [vmem:[%s259 + $0x920] sm:$0xff] %v2062
        %2830 = vst [vmem:[%s259 + $0x928] sm:$0xff] %v2064
        %2831 = vst.msk [vmem:[%s259 + $0x930] sm:$0xff] %vm2540, %v2483
        %2832 = vst [vmem:[%s259 + $0x938] sm:$0xff] %v1589
        %2833 = vst [vmem:[%s259 + $0x940] sm:$0xff] %v1591
        %2834 = vst [vmem:[%s259 + $0x948] sm:$0xff] %v2068
        %2835 = vst [vmem:[%s259 + $0x950] sm:$0xff] %v2070
        %2836 = vst.msk [vmem:[%s259 + $0x958] sm:$0xff] %vm2540, %v2488
        %2837 = vst [vmem:[%s259 + $0x960] sm:$0xff] %v1595
        %2838 = vst [vmem:[%s259 + $0x968] sm:$0xff] %v1597
        %2839 = vst [vmem:[%s259 + $0x970] sm:$0xff] %v2074
        %2840 = vst [vmem:[%s259 + $0x978] sm:$0xff] %v2076
        %2841 = vst.msk [vmem:[%s259 + $0x980] sm:$0xff] %vm2540, %v2493
        %2842 = vst [vmem:[%s259 + $0x988] sm:$0xff] %v1601
        %2843 = vst [vmem:[%s259 + $0x990] sm:$0xff] %v1603
        %2844 = vst [vmem:[%s259 + $0x998] sm:$0xff] %v2080
        %2845 = vst [vmem:[%s259 + $0x9a0] sm:$0xff] %v2082
        %2846 = vst.msk [vmem:[%s259 + $0x9a8] sm:$0xff] %vm2540, %v2498
        %2847 = vst [vmem:[%s259 + $0x9b0] sm:$0xff] %v1607
        %2848 = vst [vmem:[%s259 + $0x9b8] sm:$0xff] %v1609
        %2849 = vst [vmem:[%s259 + $0x9c0] sm:$0xff] %v2086
        %2850 = vst [vmem:[%s259 + $0x9c8] sm:$0xff] %v2088
        %2851 = vst.msk [vmem:[%s259 + $0x9d0] sm:$0xff] %vm2540, %v2503
        %2852 = vst [vmem:[%s259 + $0x9d8] sm:$0xff] %v1613
        %2853 = vst [vmem:[%s259 + $0x9e0] sm:$0xff] %v1615
        %2854 = vst [vmem:[%s259 + $0x9e8] sm:$0xff] %v2092
        %2855 = vst [vmem:[%s259 + $0x9f0] sm:$0xff] %v2094
        %2856 = vst.msk [vmem:[%s259 + $0x9f8] sm:$0xff] %vm2540, %v2508
        %2857 = vst [vmem:[%s259 + $0xa00] sm:$0xff] %v1619
        %2858 = vst [vmem:[%s259 + $0xa08] sm:$0xff] %v1621
        %2859 = vst [vmem:[%s259 + $0xa10] sm:$0xff] %v2098
        %2860 = vst [vmem:[%s259 + $0xa18] sm:$0xff] %v2100
        %2861 = vst.msk [vmem:[%s259 + $0xa20] sm:$0xff] %vm2540, %v2513
        %2862 = vst [vmem:[%s259 + $0xa28] sm:$0xff] %v1625
        %2863 = vst [vmem:[%s259 + $0xa30] sm:$0xff] %v1627
        %2864 = vst [vmem:[%s259 + $0xa38] sm:$0xff] %v2104
        %2865 = vst [vmem:[%s259 + $0xa40] sm:$0xff] %v2106
        %2866 = vst.msk [vmem:[%s259 + $0xa48] sm:$0xff] %vm2540, %v2518
        %2867 = vst [vmem:[%s259 + $0xa50] sm:$0xff] %v1631
        %2868 = vst [vmem:[%s259 + $0xa58] sm:$0xff] %v1633
        %2869 = vst [vmem:[%s259 + $0xa60] sm:$0xff] %v2110
        %2870 = vst [vmem:[%s259 + $0xa68] sm:$0xff] %v2112
        %2871 = vst.msk [vmem:[%s259 + $0xa70] sm:$0xff] %vm2540, %v2523
        %2872 = vst [vmem:[%s259 + $0xa78] sm:$0xff] %v1637
        %2873 = vst [vmem:[%s259 + $0xa80] sm:$0xff] %v1639
        %2874 = vst [vmem:[%s259 + $0xa88] sm:$0xff] %v2116
        %2875 = vst [vmem:[%s259 + $0xa90] sm:$0xff] %v2118
        %2876 = vst.msk [vmem:[%s259 + $0xa98] sm:$0xff] %vm2540, %v2528
        %2877 = vst [vmem:[%s259 + $0xaa0] sm:$0x3f] %v1643
        %2878 = vst [vmem:[%s259 + $0xaa8] sm:$0x3f] %v1645
        %2879 = vst [vmem:[%s259 + $0xab0] sm:$0x3f] %v2122
        %2880 = vst [vmem:[%s259 + $0xab8] sm:$0x3f] %v2124
        %vm2881 = vcmask 308224
        %2882 = vst.msk [vmem:[%s259 + $0xac0] sm:$0x3f] %vm2881, %v2533
        %s2883 = scalar_lea.vmem %s204, 16 [#allocation2]
        %v2884 = vld [vmem:[%s2883] sm:$0xff]
        %v2885 = vld [vmem:[%s2883 + $0x8] sm:$0xff]
        %v2886 = vld [vmem:[%s248] sm:$0xff]
        %v2887 = vld [vmem:[%s248 + $0x8] sm:$0xff]
        %v2888 = vld [vmem:[%s248 + $0x10] sm:$0xff]
        %v2889 = vld [vmem:[%s248 + $0x18] sm:$0xff]
        %v2890 = vld [vmem:[%s248 + $0x20] sm:$0xff]
        %v2891 = vld [vmem:[%s248 + $0x28] sm:$0xff]
        %v2892 = vld [vmem:[%s248 + $0x30] sm:$0xff]
        %v2893 = vld [vmem:[%s248 + $0x38] sm:$0xff]
        %v2894 = vld [vmem:[%s248 + $0x40] sm:$0xff]
        %v2895 = vld [vmem:[%s248 + $0x48] sm:$0xff]
        %v2896 = vld [vmem:[%s248 + $0x50] sm:$0xff]
        %v2897 = vld [vmem:[%s248 + $0x58] sm:$0xff]
        %v2898 = vld [vmem:[%s248 + $0x60] sm:$0xff]
        %v2899 = vld [vmem:[%s248 + $0x68] sm:$0xff]
        %v2900 = vld [vmem:[%s248 + $0x70] sm:$0xff]
        %v2901 = vld [vmem:[%s248 + $0x78] sm:$0xff]
        %v2902 = vld [vmem:[%s248 + $0x80] sm:$0xff]
        %v2903 = vld [vmem:[%s248 + $0x88] sm:$0xff]
        %v2904 = vld [vmem:[%s248 + $0x90] sm:$0xff]
        %v2905 = vld [vmem:[%s248 + $0x98] sm:$0xff]
        %v2906 = vld [vmem:[%s248 + $0xa0] sm:$0xff]
        %v2907 = vld [vmem:[%s248 + $0xa8] sm:$0xff]
        %v2908 = vld [vmem:[%s248 + $0xb0] sm:$0xff]
        %v2909 = vld [vmem:[%s248 + $0xb8] sm:$0xff]
        %v2910 = vld [vmem:[%s248 + $0xc0] sm:$0xff]
        %v2911 = vld [vmem:[%s248 + $0xc8] sm:$0xff]
        %v2912 = vld [vmem:[%s248 + $0xd0] sm:$0xff]
        %v2913 = vld [vmem:[%s248 + $0xd8] sm:$0xff]
        %v2914 = vld [vmem:[%s248 + $0xe0] sm:$0xff]
        %v2915 = vld [vmem:[%s248 + $0xe8] sm:$0xff]
        %v2916 = vld [vmem:[%s248 + $0xf0] sm:$0xff]
        %v2917 = vld [vmem:[%s248 + $0xf8] sm:$0xff]
        %v2918 = vld [vmem:[%s248 + $0x100] sm:$0xff]
        %v2919 = vld [vmem:[%s248 + $0x108] sm:$0xff]
        %v2920 = vld [vmem:[%s248 + $0x110] sm:$0xff]
        %v2921 = vld [vmem:[%s248 + $0x118] sm:$0xff]
        %v2922 = vld [vmem:[%s248 + $0x120] sm:$0xff]
        %v2923 = vld [vmem:[%s248 + $0x128] sm:$0xff]
        %v2924 = vld [vmem:[%s248 + $0x130] sm:$0xff]
        %v2925 = vld [vmem:[%s248 + $0x138] sm:$0xff]
        %v2926 = vld [vmem:[%s248 + $0x140] sm:$0xff]
        %v2927 = vld [vmem:[%s248 + $0x148] sm:$0xff]
        %v2928 = vld [vmem:[%s248 + $0x150] sm:$0xff]
        %v2929 = vld [vmem:[%s248 + $0x158] sm:$0xff]
        %v2930 = vld [vmem:[%s248 + $0x160] sm:$0xff]
        %v2931 = vld [vmem:[%s248 + $0x168] sm:$0xff]
        %v2932 = vld [vmem:[%s248 + $0x170] sm:$0xff]
        %v2933 = vld [vmem:[%s248 + $0x178] sm:$0xff]
        %v2934 = vld [vmem:[%s248 + $0x180] sm:$0xff]
        %v2935 = vld [vmem:[%s248 + $0x188] sm:$0xff]
        %v2936 = vld [vmem:[%s248 + $0x190] sm:$0xff]
        %v2937 = vld [vmem:[%s248 + $0x198] sm:$0xff]
        %v2938 = vld [vmem:[%s248 + $0x1a0] sm:$0xff]
        %v2939 = vld [vmem:[%s248 + $0x1a8] sm:$0xff]
        %v2940 = vld [vmem:[%s248 + $0x1b0] sm:$0xff]
        %v2941 = vld [vmem:[%s248 + $0x1b8] sm:$0xff]
        %v2942 = vld [vmem:[%s248 + $0x1c0] sm:$0xff]
        %v2943 = vld [vmem:[%s248 + $0x1c8] sm:$0xff]
        %v2944 = vld [vmem:[%s248 + $0x1d0] sm:$0xff]
        %v2945 = vld [vmem:[%s248 + $0x1d8] sm:$0xff]
        %v2946 = vld [vmem:[%s248 + $0x1e0] sm:$0xff]
        %v2947 = vld [vmem:[%s248 + $0x1e8] sm:$0xff]
        %v2948 = vld [vmem:[%s248 + $0x1f0] sm:$0xff]
        %v2949 = vld [vmem:[%s248 + $0x1f8] sm:$0xff]
        %v2950 = vld [vmem:[%s248 + $0x200] sm:$0xff]
        %v2951 = vld [vmem:[%s248 + $0x208] sm:$0xff]
        %v2952 = vld [vmem:[%s248 + $0x210] sm:$0xff]
        %v2953 = vld [vmem:[%s248 + $0x218] sm:$0xff]
        %v2954 = vld [vmem:[%s248 + $0x220] sm:$0x3f]
        %v2956 = vsel %vm333, %v2886, 0
        %v2959 = vsel %vm333, %v2887, 0
        %v2962 = vsel %vm333, %v2888, 0
        %v2965 = vsel %vm333, %v2889, 0
        %v2968 = vsel %vm333, %v2890, 0
        %v2971 = vsel %vm333, %v2891, 0
        %v2974 = vsel %vm333, %v2892, 0
        %v2977 = vsel %vm333, %v2893, 0
        %v2980 = vsel %vm333, %v2894, 0
        %v2983 = vsel %vm333, %v2895, 0
        %v2986 = vsel %vm333, %v2896, 0
        %v2989 = vsel %vm333, %v2897, 0
        %v2992 = vsel %vm333, %v2898, 0
        %v2995 = vsel %vm333, %v2899, 0
        %v2998 = vsel %vm333, %v2900, 0
        %v3001 = vsel %vm333, %v2901, 0
        %v3004 = vsel %vm333, %v2902, 0
        %v3007 = vsel %vm333, %v2903, 0
        %v3010 = vsel %vm333, %v2904, 0
        %v3013 = vsel %vm333, %v2905, 0
        %v3016 = vsel %vm333, %v2906, 0
        %v3019 = vsel %vm333, %v2907, 0
        %v3022 = vsel %vm333, %v2908, 0
        %v3025 = vsel %vm333, %v2909, 0
        %v3028 = vsel %vm333, %v2910, 0
        %v3031 = vsel %vm333, %v2911, 0
        %v3034 = vsel %vm333, %v2912, 0
        %v3037 = vsel %vm333, %v2913, 0
        %v3040 = vsel %vm333, %v2914, 0
        %v3043 = vsel %vm333, %v2915, 0
        %v3046 = vsel %vm333, %v2916, 0
        %v3049 = vsel %vm333, %v2917, 0
        %v3052 = vsel %vm333, %v2918, 0
        %v3055 = vsel %vm333, %v2919, 0
        %v3058 = vsel %vm333, %v2920, 0
        %v3061 = vsel %vm333, %v2921, 0
        %v3064 = vsel %vm333, %v2922, 0
        %v3067 = vsel %vm333, %v2923, 0
        %v3070 = vsel %vm333, %v2924, 0
        %v3073 = vsel %vm333, %v2925, 0
        %v3076 = vsel %vm333, %v2926, 0
        %v3079 = vsel %vm333, %v2927, 0
        %v3082 = vsel %vm333, %v2928, 0
        %v3085 = vsel %vm333, %v2929, 0
        %v3088 = vsel %vm333, %v2930, 0
        %v3091 = vsel %vm333, %v2931, 0
        %v3094 = vsel %vm333, %v2932, 0
        %v3097 = vsel %vm333, %v2933, 0
        %v3100 = vsel %vm333, %v2934, 0
        %v3103 = vsel %vm333, %v2935, 0
        %v3106 = vsel %vm333, %v2936, 0
        %v3109 = vsel %vm333, %v2937, 0
        %v3112 = vsel %vm333, %v2938, 0
        %v3115 = vsel %vm333, %v2939, 0
        %v3118 = vsel %vm333, %v2940, 0
        %v3121 = vsel %vm333, %v2941, 0
        %v3124 = vsel %vm333, %v2942, 0
        %v3127 = vsel %vm333, %v2943, 0
        %v3130 = vsel %vm333, %v2944, 0
        %v3133 = vsel %vm333, %v2945, 0
        %v3136 = vsel %vm333, %v2946, 0
        %v3139 = vsel %vm333, %v2947, 0
        %v3142 = vsel %vm333, %v2948, 0
        %v3145 = vsel %vm333, %v2949, 0
        %v3148 = vsel %vm333, %v2950, 0
        %v3151 = vsel %vm333, %v2951, 0
        %v3154 = vsel %vm333, %v2952, 0
        %v3157 = vsel %vm333, %v2953, 0
        %v3160 = vsel %vm333, %v2954, 0
        %3162 = vmatprep.subr.mxu0 0.0
        %3163 = vmatpush1.msra.mxu0 %v2884
        %3164 = vmatprep.subr.mxu0 0.0
        %3165 = vmatpush1.msra.mxu0 %v2885
        %3166 = vmatprep.subr.mxu0 0.0
        %3167 = vmatpush1.msra.mxu0 0.0
        %3168 = vmatprep.subr.mxu0 0.0
        %3169 = vmatpush1.msra.mxu0 0.0
        %3170 = vmatprep.subr.mxu0 0.0
        %3171 = vmatpush1.msra.mxu0 0.0
        %3172 = vmatprep.subr.mxu0 0.0
        %3173 = vmatpush1.msra.mxu0 0.0
        %3174 = vmatprep.subr.mxu0 0.0
        %3175 = vmatpush1.msra.mxu0 0.0
        %3176 = vmatprep.subr.mxu0 0.0
        %3177 = vmatpush1.msra.mxu0 0.0
        %3178 = vmatprep.subr.mxu0 0.0
        %3179 = vmatpush1.msra.mxu0 0.0
        %3180 = vmatprep.subr.mxu0 0.0
        %3181 = vmatpush1.msra.mxu0 0.0
        %3182 = vmatprep.subr.mxu0 0.0
        %3183 = vmatpush1.msra.mxu0 0.0
        %3184 = vmatprep.subr.mxu0 0.0
        %3185 = vmatpush1.msra.mxu0 0.0
        %3186 = vmatprep.subr.mxu0 0.0
        %3187 = vmatpush1.msra.mxu0 0.0
        %3188 = vmatprep.subr.mxu0 0.0
        %3189 = vmatpush1.msra.mxu0 0.0
        %3190 = vmatprep.subr.mxu0 0.0
        %3191 = vmatpush1.msra.mxu0 0.0
        %3192 = vmatprep.subr.mxu0 0.0
        %3193 = vmatpush1.msra.mxu0 0.0
        %3194 = vmatprep.subr.mxu0 0.0
        %3195 = vmatpush1.msra.mxu0 0.0
        %3196 = vmatprep.subr.mxu0 0.0
        %3197 = vmatpush1.msra.mxu0 0.0
        %3198 = vmatprep.subr.mxu0 0.0
        %3199 = vmatpush1.msra.mxu0 0.0
        %3200 = vmatprep.subr.mxu0 0.0
        %3201 = vmatpush1.msra.mxu0 0.0
        %3202 = vmatprep.subr.mxu0 0.0
        %3203 = vmatpush1.msra.mxu0 0.0
        %3204 = vmatprep.subr.mxu0 0.0
        %3205 = vmatpush1.msra.mxu0 0.0
        %3206 = vmatprep.subr.mxu0 0.0
        %3207 = vmatpush1.msra.mxu0 0.0
        %3208 = vmatprep.subr.mxu0 0.0
        %3209 = vmatpush1.msra.mxu0 0.0
        %3210 = vmatprep.subr.mxu0 0.0
        %3211 = vmatpush1.msra.mxu0 0.0
        %3212 = vmatprep.subr.mxu0 0.0
        %3213 = vmatpush1.msra.mxu0 0.0
        %3214 = vmatprep.subr.mxu0 0.0
        %3215 = vmatpush1.msra.mxu0 0.0
        %3216 = vmatprep.subr.mxu0 0.0
        %3217 = vmatpush1.msra.mxu0 0.0
        %3218 = vmatprep.subr.mxu0 0.0
        %3219 = vmatpush1.msra.mxu0 0.0
        %3220 = vmatprep.subr.mxu0 0.0
        %3221 = vmatpush1.msra.mxu0 0.0
        %3222 = vmatprep.subr.mxu0 0.0
        %3223 = vmatpush1.msra.mxu0 0.0
        %3224 = vmatprep.subr.mxu0 0.0
        %3225 = vmatpush1.msra.mxu0 0.0
        %3226 = vmatprep.mubr.f32.mxu0 0.0
        %3227 = vmatmul.mubr.f32.gmra.mrb[0].mxu0 %v2956
        %v3228 = vpop.f32.mrb[0].mxu0
        %v3229 = vadd.f32 0.0, %v3228
        %v3230 = vpop.f32.mrb[0].mxu0
        %3231 = vmatprep.mubr.f32.mxu0 0.0
        %3232 = vmatmul.mubr.f32.gmra.mrb[0].mxu0 %v2959
        %v3233 = vpop.f32.mrb[0].mxu0
        %v3234 = vadd.f32 0.0, %v3233
        %v3235 = vpop.f32.mrb[0].mxu0
        %3236 = vmatprep.mubr.f32.mxu0 0.0
        %3237 = vmatmul.mubr.f32.gmra.mrb[0].mxu0 %v2962
        %v3238 = vpop.f32.mrb[0].mxu0
        %v3239 = vadd.f32 0.0, %v3238
        %v3240 = vpop.f32.mrb[0].mxu0
        %3241 = vmatprep.mubr.f32.mxu0 0.0
        %3242 = vmatmul.mubr.f32.gmra.mrb[0].mxu0 %v2965
        %v3243 = vpop.f32.mrb[0].mxu0
        %v3244 = vadd.f32 0.0, %v3243
        %v3245 = vpop.f32.mrb[0].mxu0
        %3246 = vmatprep.mubr.f32.mxu0 0.0
        %3247 = vmatmul.mubr.f32.gmra.mrb[0].mxu0 %v2968
        %v3248 = vpop.f32.mrb[0].mxu0
        %v3249 = vadd.f32 0.0, %v3248
        %v3250 = vpop.f32.mrb[0].mxu0
        %3251 = vmatprep.mubr.f32.mxu0 0.0
        %3252 = vmatmul.mubr.f32.gmra.mrb[0].mxu0 %v2971
        %v3253 = vpop.f32.mrb[0].mxu0
        %v3254 = vadd.f32 0.0, %v3253
        %v3255 = vpop.f32.mrb[0].mxu0
        %3256 = vmatprep.mubr.f32.mxu0 0.0
        %3257 = vmatmul.mubr.f32.gmra.mrb[0].mxu0 %v2974
        %v3258 = vpop.f32.mrb[0].mxu0
        %v3259 = vadd.f32 0.0, %v3258
        %v3260 = vpop.f32.mrb[0].mxu0
        %3261 = vmatprep.mubr.f32.mxu0 0.0
        %3262 = vmatmul.mubr.f32.gmra.mrb[0].mxu0 %v2977
        %v3263 = vpop.f32.mrb[0].mxu0
        %v3264 = vadd.f32 0.0, %v3263
        %v3265 = vpop.f32.mrb[0].mxu0
        %3266 = vmatprep.mubr.f32.mxu0 0.0
        %3267 = vmatmul.mubr.f32.gmra.mrb[0].mxu0 %v2980
        %v3268 = vpop.f32.mrb[0].mxu0
        %v3269 = vadd.f32 0.0, %v3268
        %v3270 = vpop.f32.mrb[0].mxu0
        %3271 = vmatprep.mubr.f32.mxu0 0.0
        %3272 = vmatmul.mubr.f32.gmra.mrb[0].mxu0 %v2983
        %v3273 = vpop.f32.mrb[0].mxu0
        %v3274 = vadd.f32 0.0, %v3273
        %v3275 = vpop.f32.mrb[0].mxu0
        %3276 = vmatprep.mubr.f32.mxu0 0.0
        %3277 = vmatmul.mubr.f32.gmra.mrb[0].mxu0 %v2986
        %v3278 = vpop.f32.mrb[0].mxu0
        %v3279 = vadd.f32 0.0, %v3278
        %v3280 = vpop.f32.mrb[0].mxu0
        %3281 = vmatprep.mubr.f32.mxu0 0.0
        %3282 = vmatmul.mubr.f32.gmra.mrb[0].mxu0 %v2989
        %v3283 = vpop.f32.mrb[0].mxu0
        %v3284 = vadd.f32 0.0, %v3283
        %v3285 = vpop.f32.mrb[0].mxu0
        %3286 = vmatprep.mubr.f32.mxu0 0.0
        %3287 = vmatmul.mubr.f32.gmra.mrb[0].mxu0 %v2992
        %v3288 = vpop.f32.mrb[0].mxu0
        %v3289 = vadd.f32 0.0, %v3288
        %v3290 = vpop.f32.mrb[0].mxu0
        %3291 = vmatprep.mubr.f32.mxu0 0.0
        %3292 = vmatmul.mubr.f32.gmra.mrb[0].mxu0 %v2995
        %v3293 = vpop.f32.mrb[0].mxu0
        %v3294 = vadd.f32 0.0, %v3293
        %v3295 = vpop.f32.mrb[0].mxu0
        %3296 = vmatprep.mubr.f32.mxu0 0.0
        %3297 = vmatmul.mubr.f32.gmra.mrb[0].mxu0 %v2998
        %v3298 = vpop.f32.mrb[0].mxu0
        %v3299 = vadd.f32 0.0, %v3298
        %v3300 = vpop.f32.mrb[0].mxu0
        %3301 = vmatprep.mubr.f32.mxu0 0.0
        %3302 = vmatmul.mubr.f32.gmra.mrb[0].mxu0 %v3001
        %v3303 = vpop.f32.mrb[0].mxu0
        %v3304 = vadd.f32 0.0, %v3303
        %v3305 = vpop.f32.mrb[0].mxu0
        %3306 = vmatprep.mubr.f32.mxu0 0.0
        %3307 = vmatmul.mubr.f32.gmra.mrb[0].mxu0 %v3004
        %v3308 = vpop.f32.mrb[0].mxu0
        %v3309 = vadd.f32 0.0, %v3308
        %v3310 = vpop.f32.mrb[0].mxu0
        %3311 = vmatprep.mubr.f32.mxu0 0.0
        %3312 = vmatmul.mubr.f32.gmra.mrb[0].mxu0 %v3007
        %v3313 = vpop.f32.mrb[0].mxu0
        %v3314 = vadd.f32 0.0, %v3313
        %v3315 = vpop.f32.mrb[0].mxu0
        %3316 = vmatprep.mubr.f32.mxu0 0.0
        %3317 = vmatmul.mubr.f32.gmra.mrb[0].mxu0 %v3010
        %v3318 = vpop.f32.mrb[0].mxu0
        %v3319 = vadd.f32 0.0, %v3318
        %v3320 = vpop.f32.mrb[0].mxu0
        %3321 = vmatprep.mubr.f32.mxu0 0.0
        %3322 = vmatmul.mubr.f32.gmra.mrb[0].mxu0 %v3013
        %v3323 = vpop.f32.mrb[0].mxu0
        %v3324 = vadd.f32 0.0, %v3323
        %v3325 = vpop.f32.mrb[0].mxu0
        %3326 = vmatprep.mubr.f32.mxu0 0.0
        %3327 = vmatmul.mubr.f32.gmra.mrb[0].mxu0 %v3016
        %v3328 = vpop.f32.mrb[0].mxu0
        %v3329 = vadd.f32 0.0, %v3328
        %v3330 = vpop.f32.mrb[0].mxu0
        %3331 = vmatprep.mubr.f32.mxu0 0.0
        %3332 = vmatmul.mubr.f32.gmra.mrb[0].mxu0 %v3019
        %v3333 = vpop.f32.mrb[0].mxu0
        %v3334 = vadd.f32 0.0, %v3333
        %v3335 = vpop.f32.mrb[0].mxu0
        %3336 = vmatprep.mubr.f32.mxu0 0.0
        %3337 = vmatmul.mubr.f32.gmra.mrb[0].mxu0 %v3022
        %v3338 = vpop.f32.mrb[0].mxu0
        %v3339 = vadd.f32 0.0, %v3338
        %v3340 = vpop.f32.mrb[0].mxu0
        %3341 = vmatprep.mubr.f32.mxu0 0.0
        %3342 = vmatmul.mubr.f32.gmra.mrb[0].mxu0 %v3025
        %v3343 = vpop.f32.mrb[0].mxu0
        %v3344 = vadd.f32 0.0, %v3343
        %v3345 = vpop.f32.mrb[0].mxu0
        %3346 = vmatprep.mubr.f32.mxu0 0.0
        %3347 = vmatmul.mubr.f32.gmra.mrb[0].mxu0 %v3028
        %v3348 = vpop.f32.mrb[0].mxu0
        %v3349 = vadd.f32 0.0, %v3348
        %v3350 = vpop.f32.mrb[0].mxu0
        %3351 = vmatprep.mubr.f32.mxu0 0.0
        %3352 = vmatmul.mubr.f32.gmra.mrb[0].mxu0 %v3031
        %v3353 = vpop.f32.mrb[0].mxu0
        %v3354 = vadd.f32 0.0, %v3353
        %v3355 = vpop.f32.mrb[0].mxu0
        %3356 = vmatprep.mubr.f32.mxu0 0.0
        %3357 = vmatmul.mubr.f32.gmra.mrb[0].mxu0 %v3034
        %v3358 = vpop.f32.mrb[0].mxu0
        %v3359 = vadd.f32 0.0, %v3358
        %v3360 = vpop.f32.mrb[0].mxu0
        %3361 = vmatprep.mubr.f32.mxu0 0.0
        %3362 = vmatmul.mubr.f32.gmra.mrb[0].mxu0 %v3037
        %v3363 = vpop.f32.mrb[0].mxu0
        %v3364 = vadd.f32 0.0, %v3363
        %v3365 = vpop.f32.mrb[0].mxu0
        %3366 = vmatprep.mubr.f32.mxu0 0.0
        %3367 = vmatmul.mubr.f32.gmra.mrb[0].mxu0 %v3040
        %v3368 = vpop.f32.mrb[0].mxu0
        %v3369 = vadd.f32 0.0, %v3368
        %v3370 = vpop.f32.mrb[0].mxu0
        %3371 = vmatprep.mubr.f32.mxu0 0.0
        %3372 = vmatmul.mubr.f32.gmra.mrb[0].mxu0 %v3043
        %v3373 = vpop.f32.mrb[0].mxu0
        %v3374 = vadd.f32 0.0, %v3373
        %v3375 = vpop.f32.mrb[0].mxu0
        %3376 = vmatprep.mubr.f32.mxu0 0.0
        %3377 = vmatmul.mubr.f32.gmra.mrb[0].mxu0 %v3046
        %v3378 = vpop.f32.mrb[0].mxu0
        %v3379 = vadd.f32 0.0, %v3378
        %v3380 = vpop.f32.mrb[0].mxu0
        %3381 = vmatprep.mubr.f32.mxu0 0.0
        %3382 = vmatmul.mubr.f32.gmra.mrb[0].mxu0 %v3049
        %v3383 = vpop.f32.mrb[0].mxu0
        %v3384 = vadd.f32 0.0, %v3383
        %v3385 = vpop.f32.mrb[0].mxu0
        %3386 = vmatprep.mubr.f32.mxu0 0.0
        %3387 = vmatmul.mubr.f32.gmra.mrb[0].mxu0 %v3052
        %v3388 = vpop.f32.mrb[0].mxu0
        %v3389 = vadd.f32 0.0, %v3388
        %v3390 = vpop.f32.mrb[0].mxu0
        %3391 = vmatprep.mubr.f32.mxu0 0.0
        %3392 = vmatmul.mubr.f32.gmra.mrb[0].mxu0 %v3055
        %v3393 = vpop.f32.mrb[0].mxu0
        %v3394 = vadd.f32 0.0, %v3393
        %v3395 = vpop.f32.mrb[0].mxu0
        %3396 = vmatprep.mubr.f32.mxu0 0.0
        %3397 = vmatmul.mubr.f32.gmra.mrb[0].mxu0 %v3058
        %v3398 = vpop.f32.mrb[0].mxu0
        %v3399 = vadd.f32 0.0, %v3398
        %v3400 = vpop.f32.mrb[0].mxu0
        %3401 = vmatprep.mubr.f32.mxu0 0.0
        %3402 = vmatmul.mubr.f32.gmra.mrb[0].mxu0 %v3061
        %v3403 = vpop.f32.mrb[0].mxu0
        %v3404 = vadd.f32 0.0, %v3403
        %v3405 = vpop.f32.mrb[0].mxu0
        %3406 = vmatprep.mubr.f32.mxu0 0.0
        %3407 = vmatmul.mubr.f32.gmra.mrb[0].mxu0 %v3064
        %v3408 = vpop.f32.mrb[0].mxu0
        %v3409 = vadd.f32 0.0, %v3408
        %v3410 = vpop.f32.mrb[0].mxu0
        %3411 = vmatprep.mubr.f32.mxu0 0.0
        %3412 = vmatmul.mubr.f32.gmra.mrb[0].mxu0 %v3067
        %v3413 = vpop.f32.mrb[0].mxu0
        %v3414 = vadd.f32 0.0, %v3413
        %v3415 = vpop.f32.mrb[0].mxu0
        %3416 = vmatprep.mubr.f32.mxu0 0.0
        %3417 = vmatmul.mubr.f32.gmra.mrb[0].mxu0 %v3070
        %v3418 = vpop.f32.mrb[0].mxu0
        %v3419 = vadd.f32 0.0, %v3418
        %v3420 = vpop.f32.mrb[0].mxu0
        %3421 = vmatprep.mubr.f32.mxu0 0.0
        %3422 = vmatmul.mubr.f32.gmra.mrb[0].mxu0 %v3073
        %v3423 = vpop.f32.mrb[0].mxu0
        %v3424 = vadd.f32 0.0, %v3423
        %v3425 = vpop.f32.mrb[0].mxu0
        %3426 = vmatprep.mubr.f32.mxu0 0.0
        %3427 = vmatmul.mubr.f32.gmra.mrb[0].mxu0 %v3076
        %v3428 = vpop.f32.mrb[0].mxu0
        %v3429 = vadd.f32 0.0, %v3428
        %v3430 = vpop.f32.mrb[0].mxu0
        %3431 = vmatprep.mubr.f32.mxu0 0.0
        %3432 = vmatmul.mubr.f32.gmra.mrb[0].mxu0 %v3079
        %v3433 = vpop.f32.mrb[0].mxu0
        %v3434 = vadd.f32 0.0, %v3433
        %v3435 = vpop.f32.mrb[0].mxu0
        %3436 = vmatprep.mubr.f32.mxu0 0.0
        %3437 = vmatmul.mubr.f32.gmra.mrb[0].mxu0 %v3082
        %v3438 = vpop.f32.mrb[0].mxu0
        %v3439 = vadd.f32 0.0, %v3438
        %v3440 = vpop.f32.mrb[0].mxu0
        %3441 = vmatprep.mubr.f32.mxu0 0.0
        %3442 = vmatmul.mubr.f32.gmra.mrb[0].mxu0 %v3085
        %v3443 = vpop.f32.mrb[0].mxu0
        %v3444 = vadd.f32 0.0, %v3443
        %v3445 = vpop.f32.mrb[0].mxu0
        %3446 = vmatprep.mubr.f32.mxu0 0.0
        %3447 = vmatmul.mubr.f32.gmra.mrb[0].mxu0 %v3088
        %v3448 = vpop.f32.mrb[0].mxu0
        %v3449 = vadd.f32 0.0, %v3448
        %v3450 = vpop.f32.mrb[0].mxu0
        %3451 = vmatprep.mubr.f32.mxu0 0.0
        %3452 = vmatmul.mubr.f32.gmra.mrb[0].mxu0 %v3091
        %v3453 = vpop.f32.mrb[0].mxu0
        %v3454 = vadd.f32 0.0, %v3453
        %v3455 = vpop.f32.mrb[0].mxu0
        %3456 = vmatprep.mubr.f32.mxu0 0.0
        %3457 = vmatmul.mubr.f32.gmra.mrb[0].mxu0 %v3094
        %v3458 = vpop.f32.mrb[0].mxu0
        %v3459 = vadd.f32 0.0, %v3458
        %v3460 = vpop.f32.mrb[0].mxu0
        %3461 = vmatprep.mubr.f32.mxu0 0.0
        %3462 = vmatmul.mubr.f32.gmra.mrb[0].mxu0 %v3097
        %v3463 = vpop.f32.mrb[0].mxu0
        %v3464 = vadd.f32 0.0, %v3463
        %v3465 = vpop.f32.mrb[0].mxu0
        %3466 = vmatprep.mubr.f32.mxu0 0.0
        %3467 = vmatmul.mubr.f32.gmra.mrb[0].mxu0 %v3100
        %v3468 = vpop.f32.mrb[0].mxu0
        %v3469 = vadd.f32 0.0, %v3468
        %v3470 = vpop.f32.mrb[0].mxu0
        %3471 = vmatprep.mubr.f32.mxu0 0.0
        %3472 = vmatmul.mubr.f32.gmra.mrb[0].mxu0 %v3103
        %v3473 = vpop.f32.mrb[0].mxu0
        %v3474 = vadd.f32 0.0, %v3473
        %v3475 = vpop.f32.mrb[0].mxu0
        %3476 = vmatprep.mubr.f32.mxu0 0.0
        %3477 = vmatmul.mubr.f32.gmra.mrb[0].mxu0 %v3106
        %v3478 = vpop.f32.mrb[0].mxu0
        %v3479 = vadd.f32 0.0, %v3478
        %v3480 = vpop.f32.mrb[0].mxu0
        %3481 = vmatprep.mubr.f32.mxu0 0.0
        %3482 = vmatmul.mubr.f32.gmra.mrb[0].mxu0 %v3109
        %v3483 = vpop.f32.mrb[0].mxu0
        %v3484 = vadd.f32 0.0, %v3483
        %v3485 = vpop.f32.mrb[0].mxu0
        %3486 = vmatprep.mubr.f32.mxu0 0.0
        %3487 = vmatmul.mubr.f32.gmra.mrb[0].mxu0 %v3112
        %v3488 = vpop.f32.mrb[0].mxu0
        %v3489 = vadd.f32 0.0, %v3488
        %v3490 = vpop.f32.mrb[0].mxu0
        %3491 = vmatprep.mubr.f32.mxu0 0.0
        %3492 = vmatmul.mubr.f32.gmra.mrb[0].mxu0 %v3115
        %v3493 = vpop.f32.mrb[0].mxu0
        %v3494 = vadd.f32 0.0, %v3493
        %v3495 = vpop.f32.mrb[0].mxu0
        %3496 = vmatprep.mubr.f32.mxu0 0.0
        %3497 = vmatmul.mubr.f32.gmra.mrb[0].mxu0 %v3118
        %v3498 = vpop.f32.mrb[0].mxu0
        %v3499 = vadd.f32 0.0, %v3498
        %v3500 = vpop.f32.mrb[0].mxu0
        %3501 = vmatprep.mubr.f32.mxu0 0.0
        %3502 = vmatmul.mubr.f32.gmra.mrb[0].mxu0 %v3121
        %v3503 = vpop.f32.mrb[0].mxu0
        %v3504 = vadd.f32 0.0, %v3503
        %v3505 = vpop.f32.mrb[0].mxu0
        %3506 = vmatprep.mubr.f32.mxu0 0.0
        %3507 = vmatmul.mubr.f32.gmra.mrb[0].mxu0 %v3124
        %v3508 = vpop.f32.mrb[0].mxu0
        %v3509 = vadd.f32 0.0, %v3508
        %v3510 = vpop.f32.mrb[0].mxu0
        %3511 = vmatprep.mubr.f32.mxu0 0.0
        %3512 = vmatmul.mubr.f32.gmra.mrb[0].mxu0 %v3127
        %v3513 = vpop.f32.mrb[0].mxu0
        %v3514 = vadd.f32 0.0, %v3513
        %v3515 = vpop.f32.mrb[0].mxu0
        %3516 = vmatprep.mubr.f32.mxu0 0.0
        %3517 = vmatmul.mubr.f32.gmra.mrb[0].mxu0 %v3130
        %v3518 = vpop.f32.mrb[0].mxu0
        %v3519 = vadd.f32 0.0, %v3518
        %v3520 = vpop.f32.mrb[0].mxu0
        %3521 = vmatprep.mubr.f32.mxu0 0.0
        %3522 = vmatmul.mubr.f32.gmra.mrb[0].mxu0 %v3133
        %v3523 = vpop.f32.mrb[0].mxu0
        %v3524 = vadd.f32 0.0, %v3523
        %v3525 = vpop.f32.mrb[0].mxu0
        %3526 = vmatprep.mubr.f32.mxu0 0.0
        %3527 = vmatmul.mubr.f32.gmra.mrb[0].mxu0 %v3136
        %v3528 = vpop.f32.mrb[0].mxu0
        %v3529 = vadd.f32 0.0, %v3528
        %v3530 = vpop.f32.mrb[0].mxu0
        %3531 = vmatprep.mubr.f32.mxu0 0.0
        %3532 = vmatmul.mubr.f32.gmra.mrb[0].mxu0 %v3139
        %v3533 = vpop.f32.mrb[0].mxu0
        %v3534 = vadd.f32 0.0, %v3533
        %v3535 = vpop.f32.mrb[0].mxu0
        %3536 = vmatprep.mubr.f32.mxu0 0.0
        %3537 = vmatmul.mubr.f32.gmra.mrb[0].mxu0 %v3142
        %v3538 = vpop.f32.mrb[0].mxu0
        %v3539 = vadd.f32 0.0, %v3538
        %v3540 = vpop.f32.mrb[0].mxu0
        %3541 = vmatprep.mubr.f32.mxu0 0.0
        %3542 = vmatmul.mubr.f32.gmra.mrb[0].mxu0 %v3145
        %v3543 = vpop.f32.mrb[0].mxu0
        %v3544 = vadd.f32 0.0, %v3543
        %v3545 = vpop.f32.mrb[0].mxu0
        %3546 = vmatprep.mubr.f32.mxu0 0.0
        %3547 = vmatmul.mubr.f32.gmra.mrb[0].mxu0 %v3148
        %v3548 = vpop.f32.mrb[0].mxu0
        %v3549 = vadd.f32 0.0, %v3548
        %v3550 = vpop.f32.mrb[0].mxu0
        %3551 = vmatprep.mubr.f32.mxu0 0.0
        %3552 = vmatmul.mubr.f32.gmra.mrb[0].mxu0 %v3151
        %v3553 = vpop.f32.mrb[0].mxu0
        %v3554 = vadd.f32 0.0, %v3553
        %v3555 = vpop.f32.mrb[0].mxu0
        %3556 = vmatprep.mubr.f32.mxu0 0.0
        %3557 = vmatmul.mubr.f32.gmra.mrb[0].mxu0 %v3154
        %v3558 = vpop.f32.mrb[0].mxu0
        %v3559 = vadd.f32 0.0, %v3558
        %v3560 = vpop.f32.mrb[0].mxu0
        %3561 = vmatprep.mubr.f32.mxu0 0.0
        %3562 = vmatmul.mubr.f32.gmra.mrb[0].mxu0 %v3157
        %v3563 = vpop.f32.mrb[0].mxu0
        %v3564 = vadd.f32 0.0, %v3563
        %v3565 = vpop.f32.mrb[0].mxu0
        %3566 = vmatprep.mubr.f32.mxu0 0.0
        %3567 = vmatmul.mubr.f32.gmra.mrb[0].mxu0 %v3160
        %v3568 = vpop.f32.mrb[0].mxu0
        %v3569 = vadd.f32 0.0, %v3568
        %v3570 = vpop.f32.mrb[0].mxu0
        %3571 = vdwg.mxu0
        %v3572 = vld [vmem:[%s2] sm:$0xff]
        %v3573 = vld [vmem:[%s2 + $0x8] sm:$0xff]
        %v3574 = vld [vmem:[%s2 + $0x10] sm:$0xff]
        %v3575 = vld [vmem:[%s2 + $0x18] sm:$0xff]
        %v3576 = vld [vmem:[%s2 + $0x20] sm:$0xff]
        %v3577 = vld [vmem:[%s2 + $0x28] sm:$0xff]
        %v3578 = vld [vmem:[%s2 + $0x30] sm:$0xff]
        %v3579 = vld [vmem:[%s2 + $0x38] sm:$0xff]
        %v3580 = vld [vmem:[%s2 + $0x40] sm:$0xff]
        %v3581 = vld [vmem:[%s2 + $0x48] sm:$0xff]
        %v3583 = vsel %vm333, %v3229, 0
        %v3586 = vsel %vm333, %v3234, 0
        %v3589 = vsel %vm333, %v3239, 0
        %v3592 = vsel %vm333, %v3244, 0
        %v3595 = vsel %vm333, %v3249, 0
        %v3598 = vsel %vm333, %v3254, 0
        %v3601 = vsel %vm333, %v3259, 0
        %v3604 = vsel %vm333, %v3264, 0
        %v3607 = vsel %vm333, %v3269, 0
        %v3610 = vsel %vm333, %v3274, 0
        %v3613 = vsel %vm333, %v3279, 0
        %v3616 = vsel %vm333, %v3284, 0
        %v3619 = vsel %vm333, %v3289, 0
        %v3622 = vsel %vm333, %v3294, 0
        %v3625 = vsel %vm333, %v3299, 0
        %v3628 = vsel %vm333, %v3304, 0
        %v3631 = vsel %vm333, %v3309, 0
        %v3634 = vsel %vm333, %v3314, 0
        %v3637 = vsel %vm333, %v3319, 0
        %v3640 = vsel %vm333, %v3324, 0
        %v3643 = vsel %vm333, %v3329, 0
        %v3646 = vsel %vm333, %v3334, 0
        %v3649 = vsel %vm333, %v3339, 0
        %v3652 = vsel %vm333, %v3344, 0
        %v3655 = vsel %vm333, %v3349, 0
        %v3658 = vsel %vm333, %v3354, 0
        %v3661 = vsel %vm333, %v3359, 0
        %v3664 = vsel %vm333, %v3364, 0
        %v3667 = vsel %vm333, %v3369, 0
        %v3670 = vsel %vm333, %v3374, 0
        %v3673 = vsel %vm333, %v3379, 0
        %v3676 = vsel %vm333, %v3384, 0
        %v3679 = vsel %vm333, %v3389, 0
        %v3682 = vsel %vm333, %v3394, 0
        %v3685 = vsel %vm333, %v3399, 0
        %v3688 = vsel %vm333, %v3404, 0
        %v3691 = vsel %vm333, %v3409, 0
        %v3694 = vsel %vm333, %v3414, 0
        %v3697 = vsel %vm333, %v3419, 0
        %v3700 = vsel %vm333, %v3424, 0
        %v3703 = vsel %vm333, %v3429, 0
        %v3706 = vsel %vm333, %v3434, 0
        %v3709 = vsel %vm333, %v3439, 0
        %v3712 = vsel %vm333, %v3444, 0
        %v3715 = vsel %vm333, %v3449, 0
        %v3718 = vsel %vm333, %v3454, 0
        %v3721 = vsel %vm333, %v3459, 0
        %v3724 = vsel %vm333, %v3464, 0
        %v3727 = vsel %vm333, %v3469, 0
        %v3730 = vsel %vm333, %v3474, 0
        %v3733 = vsel %vm333, %v3479, 0
        %v3736 = vsel %vm333, %v3484, 0
        %v3739 = vsel %vm333, %v3489, 0
        %v3742 = vsel %vm333, %v3494, 0
        %v3745 = vsel %vm333, %v3499, 0
        %v3748 = vsel %vm333, %v3504, 0
        %v3751 = vsel %vm333, %v3509, 0
        %v3754 = vsel %vm333, %v3514, 0
        %v3757 = vsel %vm333, %v3519, 0
        %v3760 = vsel %vm333, %v3524, 0
        %v3763 = vsel %vm333, %v3529, 0
        %v3766 = vsel %vm333, %v3534, 0
        %v3769 = vsel %vm333, %v3539, 0
        %v3772 = vsel %vm333, %v3544, 0
        %v3775 = vsel %vm333, %v3549, 0
        %v3778 = vsel %vm333, %v3554, 0
        %v3781 = vsel %vm333, %v3559, 0
        %v3784 = vsel %vm333, %v3564, 0
        %v3787 = vsel %vm333, %v3569, 0
        %3789 = vmatprep.subr.mxu0 %v3573
        %3790 = vmatpush1.msra.mxu0 %v3572
        %3791 = vmatprep.subr.mxu0 %v3578
        %3792 = vmatpush1.msra.mxu0 %v3577
        %3793 = vmatprep.subr.mxu0 0.0
        %3794 = vmatpush1.msra.mxu0 0.0
        %3795 = vmatprep.subr.mxu0 0.0
        %3796 = vmatpush1.msra.mxu0 0.0
        %3797 = vmatprep.subr.mxu0 0.0
        %3798 = vmatpush1.msra.mxu0 0.0
        %3799 = vmatprep.subr.mxu0 0.0
        %3800 = vmatpush1.msra.mxu0 0.0
        %3801 = vmatprep.subr.mxu0 0.0
        %3802 = vmatpush1.msra.mxu0 0.0
        %3803 = vmatprep.subr.mxu0 0.0
        %3804 = vmatpush1.msra.mxu0 0.0
        %3805 = vmatprep.subr.mxu0 0.0
        %3806 = vmatpush1.msra.mxu0 0.0
        %3807 = vmatprep.subr.mxu0 0.0
        %3808 = vmatpush1.msra.mxu0 0.0
        %3809 = vmatprep.subr.mxu0 0.0
        %3810 = vmatpush1.msra.mxu0 0.0
        %3811 = vmatprep.subr.mxu0 0.0
        %3812 = vmatpush1.msra.mxu0 0.0
        %3813 = vmatprep.subr.mxu0 0.0
        %3814 = vmatpush1.msra.mxu0 0.0
        %3815 = vmatprep.subr.mxu0 0.0
        %3816 = vmatpush1.msra.mxu0 0.0
        %3817 = vmatprep.subr.mxu0 0.0
        %3818 = vmatpush1.msra.mxu0 0.0
        %3819 = vmatprep.subr.mxu0 0.0
        %3820 = vmatpush1.msra.mxu0 0.0
        %3821 = vmatprep.subr.mxu0 0.0
        %3822 = vmatpush1.msra.mxu0 0.0
        %3823 = vmatprep.subr.mxu0 0.0
        %3824 = vmatpush1.msra.mxu0 0.0
        %3825 = vmatprep.subr.mxu0 0.0
        %3826 = vmatpush1.msra.mxu0 0.0
        %3827 = vmatprep.subr.mxu0 0.0
        %3828 = vmatpush1.msra.mxu0 0.0
        %3829 = vmatprep.subr.mxu0 0.0
        %3830 = vmatpush1.msra.mxu0 0.0
        %3831 = vmatprep.subr.mxu0 0.0
        %3832 = vmatpush1.msra.mxu0 0.0
        %3833 = vmatprep.subr.mxu0 0.0
        %3834 = vmatpush1.msra.mxu0 0.0
        %3835 = vmatprep.subr.mxu0 0.0
        %3836 = vmatpush1.msra.mxu0 0.0
        %3837 = vmatprep.subr.mxu0 0.0
        %3838 = vmatpush1.msra.mxu0 0.0
        %3839 = vmatprep.subr.mxu0 0.0
        %3840 = vmatpush1.msra.mxu0 0.0
        %3841 = vmatprep.subr.mxu0 0.0
        %3842 = vmatpush1.msra.mxu0 0.0
        %3843 = vmatprep.subr.mxu0 0.0
        %3844 = vmatpush1.msra.mxu0 0.0
        %3845 = vmatprep.subr.mxu0 0.0
        %3846 = vmatpush1.msra.mxu0 0.0
        %3847 = vmatprep.subr.mxu0 0.0
        %3848 = vmatpush1.msra.mxu0 0.0
        %3849 = vmatprep.subr.mxu0 0.0
        %3850 = vmatpush1.msra.mxu0 0.0
        %3851 = vmatprep.subr.mxu0 0.0
        %3852 = vmatpush1.msra.mxu0 0.0
        %3853 = vmatprep.mubr.f32.mxu0 0.0
        %3854 = vmatmul.mubr.f32.gmra.mrb[0].mxu0 %v3583
        %v3855 = vpop.f32.mrb[0].mxu0
        %v3856 = vadd.f32 0.0, %v3855
        %v3857 = vpop.f32.mrb[0].mxu0
        %v3858 = vadd.f32 0.0, %v3857
        %3859 = vmatprep.mubr.f32.mxu0 0.0
        %3860 = vmatmul.mubr.f32.gmra.mrb[0].mxu0 %v3586
        %v3861 = vpop.f32.mrb[0].mxu0
        %v3862 = vadd.f32 0.0, %v3861
        %v3863 = vpop.f32.mrb[0].mxu0
        %v3864 = vadd.f32 0.0, %v3863
        %3865 = vmatprep.mubr.f32.mxu0 0.0
        %3866 = vmatmul.mubr.f32.gmra.mrb[0].mxu0 %v3589
        %v3867 = vpop.f32.mrb[0].mxu0
        %v3868 = vadd.f32 0.0, %v3867
        %v3869 = vpop.f32.mrb[0].mxu0
        %v3870 = vadd.f32 0.0, %v3869
        %3871 = vmatprep.mubr.f32.mxu0 0.0
        %3872 = vmatmul.mubr.f32.gmra.mrb[0].mxu0 %v3592
        %v3873 = vpop.f32.mrb[0].mxu0
        %v3874 = vadd.f32 0.0, %v3873
        %v3875 = vpop.f32.mrb[0].mxu0
        %v3876 = vadd.f32 0.0, %v3875
        %3877 = vmatprep.mubr.f32.mxu0 0.0
        %3878 = vmatmul.mubr.f32.gmra.mrb[0].mxu0 %v3595
        %v3879 = vpop.f32.mrb[0].mxu0
        %v3880 = vadd.f32 0.0, %v3879
        %v3881 = vpop.f32.mrb[0].mxu0
        %v3882 = vadd.f32 0.0, %v3881
        %3883 = vmatprep.mubr.f32.mxu0 0.0
        %3884 = vmatmul.mubr.f32.gmra.mrb[0].mxu0 %v3598
        %v3885 = vpop.f32.mrb[0].mxu0
        %v3886 = vadd.f32 0.0, %v3885
        %v3887 = vpop.f32.mrb[0].mxu0
        %v3888 = vadd.f32 0.0, %v3887
        %3889 = vmatprep.mubr.f32.mxu0 0.0
        %3890 = vmatmul.mubr.f32.gmra.mrb[0].mxu0 %v3601
        %v3891 = vpop.f32.mrb[0].mxu0
        %v3892 = vadd.f32 0.0, %v3891
        %v3893 = vpop.f32.mrb[0].mxu0
        %v3894 = vadd.f32 0.0, %v3893
        %3895 = vmatprep.mubr.f32.mxu0 0.0
        %3896 = vmatmul.mubr.f32.gmra.mrb[0].mxu0 %v3604
        %v3897 = vpop.f32.mrb[0].mxu0
        %v3898 = vadd.f32 0.0, %v3897
        %v3899 = vpop.f32.mrb[0].mxu0
        %v3900 = vadd.f32 0.0, %v3899
        %3901 = vmatprep.mubr.f32.mxu0 0.0
        %3902 = vmatmul.mubr.f32.gmra.mrb[0].mxu0 %v3607
        %v3903 = vpop.f32.mrb[0].mxu0
        %v3904 = vadd.f32 0.0, %v3903
        %v3905 = vpop.f32.mrb[0].mxu0
        %v3906 = vadd.f32 0.0, %v3905
        %3907 = vmatprep.mubr.f32.mxu0 0.0
        %3908 = vmatmul.mubr.f32.gmra.mrb[0].mxu0 %v3610
        %v3909 = vpop.f32.mrb[0].mxu0
        %v3910 = vadd.f32 0.0, %v3909
        %v3911 = vpop.f32.mrb[0].mxu0
        %v3912 = vadd.f32 0.0, %v3911
        %3913 = vmatprep.mubr.f32.mxu0 0.0
        %3914 = vmatmul.mubr.f32.gmra.mrb[0].mxu0 %v3613
        %v3915 = vpop.f32.mrb[0].mxu0
        %v3916 = vadd.f32 0.0, %v3915
        %v3917 = vpop.f32.mrb[0].mxu0
        %v3918 = vadd.f32 0.0, %v3917
        %3919 = vmatprep.mubr.f32.mxu0 0.0
        %3920 = vmatmul.mubr.f32.gmra.mrb[0].mxu0 %v3616
        %v3921 = vpop.f32.mrb[0].mxu0
        %v3922 = vadd.f32 0.0, %v3921
        %v3923 = vpop.f32.mrb[0].mxu0
        %v3924 = vadd.f32 0.0, %v3923
        %3925 = vmatprep.mubr.f32.mxu0 0.0
        %3926 = vmatmul.mubr.f32.gmra.mrb[0].mxu0 %v3619
        %v3927 = vpop.f32.mrb[0].mxu0
        %v3928 = vadd.f32 0.0, %v3927
        %v3929 = vpop.f32.mrb[0].mxu0
        %v3930 = vadd.f32 0.0, %v3929
        %3931 = vmatprep.mubr.f32.mxu0 0.0
        %3932 = vmatmul.mubr.f32.gmra.mrb[0].mxu0 %v3622
        %v3933 = vpop.f32.mrb[0].mxu0
        %v3934 = vadd.f32 0.0, %v3933
        %v3935 = vpop.f32.mrb[0].mxu0
        %v3936 = vadd.f32 0.0, %v3935
        %3937 = vmatprep.mubr.f32.mxu0 0.0
        %3938 = vmatmul.mubr.f32.gmra.mrb[0].mxu0 %v3625
        %v3939 = vpop.f32.mrb[0].mxu0
        %v3940 = vadd.f32 0.0, %v3939
        %v3941 = vpop.f32.mrb[0].mxu0
        %v3942 = vadd.f32 0.0, %v3941
        %3943 = vmatprep.mubr.f32.mxu0 0.0
        %3944 = vmatmul.mubr.f32.gmra.mrb[0].mxu0 %v3628
        %v3945 = vpop.f32.mrb[0].mxu0
        %v3946 = vadd.f32 0.0, %v3945
        %v3947 = vpop.f32.mrb[0].mxu0
        %v3948 = vadd.f32 0.0, %v3947
        %3949 = vmatprep.mubr.f32.mxu0 0.0
        %3950 = vmatmul.mubr.f32.gmra.mrb[0].mxu0 %v3631
        %v3951 = vpop.f32.mrb[0].mxu0
        %v3952 = vadd.f32 0.0, %v3951
        %v3953 = vpop.f32.mrb[0].mxu0
        %v3954 = vadd.f32 0.0, %v3953
        %3955 = vmatprep.mubr.f32.mxu0 0.0
        %3956 = vmatmul.mubr.f32.gmra.mrb[0].mxu0 %v3634
        %v3957 = vpop.f32.mrb[0].mxu0
        %v3958 = vadd.f32 0.0, %v3957
        %v3959 = vpop.f32.mrb[0].mxu0
        %v3960 = vadd.f32 0.0, %v3959
        %3961 = vmatprep.mubr.f32.mxu0 0.0
        %3962 = vmatmul.mubr.f32.gmra.mrb[0].mxu0 %v3637
        %v3963 = vpop.f32.mrb[0].mxu0
        %v3964 = vadd.f32 0.0, %v3963
        %v3965 = vpop.f32.mrb[0].mxu0
        %v3966 = vadd.f32 0.0, %v3965
        %3967 = vmatprep.mubr.f32.mxu0 0.0
        %3968 = vmatmul.mubr.f32.gmra.mrb[0].mxu0 %v3640
        %v3969 = vpop.f32.mrb[0].mxu0
        %v3970 = vadd.f32 0.0, %v3969
        %v3971 = vpop.f32.mrb[0].mxu0
        %v3972 = vadd.f32 0.0, %v3971
        %3973 = vmatprep.mubr.f32.mxu0 0.0
        %3974 = vmatmul.mubr.f32.gmra.mrb[0].mxu0 %v3643
        %v3975 = vpop.f32.mrb[0].mxu0
        %v3976 = vadd.f32 0.0, %v3975
        %v3977 = vpop.f32.mrb[0].mxu0
        %v3978 = vadd.f32 0.0, %v3977
        %3979 = vmatprep.mubr.f32.mxu0 0.0
        %3980 = vmatmul.mubr.f32.gmra.mrb[0].mxu0 %v3646
        %v3981 = vpop.f32.mrb[0].mxu0
        %v3982 = vadd.f32 0.0, %v3981
        %v3983 = vpop.f32.mrb[0].mxu0
        %v3984 = vadd.f32 0.0, %v3983
        %3985 = vmatprep.mubr.f32.mxu0 0.0
        %3986 = vmatmul.mubr.f32.gmra.mrb[0].mxu0 %v3649
        %v3987 = vpop.f32.mrb[0].mxu0
        %v3988 = vadd.f32 0.0, %v3987
        %v3989 = vpop.f32.mrb[0].mxu0
        %v3990 = vadd.f32 0.0, %v3989
        %3991 = vmatprep.mubr.f32.mxu0 0.0
        %3992 = vmatmul.mubr.f32.gmra.mrb[0].mxu0 %v3652
        %v3993 = vpop.f32.mrb[0].mxu0
        %v3994 = vadd.f32 0.0, %v3993
        %v3995 = vpop.f32.mrb[0].mxu0
        %v3996 = vadd.f32 0.0, %v3995
        %3997 = vmatprep.mubr.f32.mxu0 0.0
        %3998 = vmatmul.mubr.f32.gmra.mrb[0].mxu0 %v3655
        %v3999 = vpop.f32.mrb[0].mxu0
        %v4000 = vadd.f32 0.0, %v3999
        %v4001 = vpop.f32.mrb[0].mxu0
        %v4002 = vadd.f32 0.0, %v4001
        %4003 = vmatprep.mubr.f32.mxu0 0.0
        %4004 = vmatmul.mubr.f32.gmra.mrb[0].mxu0 %v3658
        %v4005 = vpop.f32.mrb[0].mxu0
        %v4006 = vadd.f32 0.0, %v4005
        %v4007 = vpop.f32.mrb[0].mxu0
        %v4008 = vadd.f32 0.0, %v4007
        %4009 = vmatprep.mubr.f32.mxu0 0.0
        %4010 = vmatmul.mubr.f32.gmra.mrb[0].mxu0 %v3661
        %v4011 = vpop.f32.mrb[0].mxu0
        %v4012 = vadd.f32 0.0, %v4011
        %v4013 = vpop.f32.mrb[0].mxu0
        %v4014 = vadd.f32 0.0, %v4013
        %4015 = vmatprep.mubr.f32.mxu0 0.0
        %4016 = vmatmul.mubr.f32.gmra.mrb[0].mxu0 %v3664
        %v4017 = vpop.f32.mrb[0].mxu0
        %v4018 = vadd.f32 0.0, %v4017
        %v4019 = vpop.f32.mrb[0].mxu0
        %v4020 = vadd.f32 0.0, %v4019
        %4021 = vmatprep.mubr.f32.mxu0 0.0
        %4022 = vmatmul.mubr.f32.gmra.mrb[0].mxu0 %v3667
        %v4023 = vpop.f32.mrb[0].mxu0
        %v4024 = vadd.f32 0.0, %v4023
        %v4025 = vpop.f32.mrb[0].mxu0
        %v4026 = vadd.f32 0.0, %v4025
        %4027 = vmatprep.mubr.f32.mxu0 0.0
        %4028 = vmatmul.mubr.f32.gmra.mrb[0].mxu0 %v3670
        %v4029 = vpop.f32.mrb[0].mxu0
        %v4030 = vadd.f32 0.0, %v4029
        %v4031 = vpop.f32.mrb[0].mxu0
        %v4032 = vadd.f32 0.0, %v4031
        %4033 = vmatprep.mubr.f32.mxu0 0.0
        %4034 = vmatmul.mubr.f32.gmra.mrb[0].mxu0 %v3673
        %v4035 = vpop.f32.mrb[0].mxu0
        %v4036 = vadd.f32 0.0, %v4035
        %v4037 = vpop.f32.mrb[0].mxu0
        %v4038 = vadd.f32 0.0, %v4037
        %4039 = vmatprep.mubr.f32.mxu0 0.0
        %4040 = vmatmul.mubr.f32.gmra.mrb[0].mxu0 %v3676
        %v4041 = vpop.f32.mrb[0].mxu0
        %v4042 = vadd.f32 0.0, %v4041
        %v4043 = vpop.f32.mrb[0].mxu0
        %v4044 = vadd.f32 0.0, %v4043
        %4045 = vmatprep.mubr.f32.mxu0 0.0
        %4046 = vmatmul.mubr.f32.gmra.mrb[0].mxu0 %v3679
        %v4047 = vpop.f32.mrb[0].mxu0
        %v4048 = vadd.f32 0.0, %v4047
        %v4049 = vpop.f32.mrb[0].mxu0
        %v4050 = vadd.f32 0.0, %v4049
        %4051 = vmatprep.mubr.f32.mxu0 0.0
        %4052 = vmatmul.mubr.f32.gmra.mrb[0].mxu0 %v3682
        %v4053 = vpop.f32.mrb[0].mxu0
        %v4054 = vadd.f32 0.0, %v4053
        %v4055 = vpop.f32.mrb[0].mxu0
        %v4056 = vadd.f32 0.0, %v4055
        %4057 = vmatprep.mubr.f32.mxu0 0.0
        %4058 = vmatmul.mubr.f32.gmra.mrb[0].mxu0 %v3685
        %v4059 = vpop.f32.mrb[0].mxu0
        %v4060 = vadd.f32 0.0, %v4059
        %v4061 = vpop.f32.mrb[0].mxu0
        %v4062 = vadd.f32 0.0, %v4061
        %4063 = vmatprep.mubr.f32.mxu0 0.0
        %4064 = vmatmul.mubr.f32.gmra.mrb[0].mxu0 %v3688
        %v4065 = vpop.f32.mrb[0].mxu0
        %v4066 = vadd.f32 0.0, %v4065
        %v4067 = vpop.f32.mrb[0].mxu0
        %v4068 = vadd.f32 0.0, %v4067
        %4069 = vmatprep.mubr.f32.mxu0 0.0
        %4070 = vmatmul.mubr.f32.gmra.mrb[0].mxu0 %v3691
        %v4071 = vpop.f32.mrb[0].mxu0
        %v4072 = vadd.f32 0.0, %v4071
        %v4073 = vpop.f32.mrb[0].mxu0
        %v4074 = vadd.f32 0.0, %v4073
        %4075 = vmatprep.mubr.f32.mxu0 0.0
        %4076 = vmatmul.mubr.f32.gmra.mrb[0].mxu0 %v3694
        %v4077 = vpop.f32.mrb[0].mxu0
        %v4078 = vadd.f32 0.0, %v4077
        %v4079 = vpop.f32.mrb[0].mxu0
        %v4080 = vadd.f32 0.0, %v4079
        %4081 = vmatprep.mubr.f32.mxu0 0.0
        %4082 = vmatmul.mubr.f32.gmra.mrb[0].mxu0 %v3697
        %v4083 = vpop.f32.mrb[0].mxu0
        %v4084 = vadd.f32 0.0, %v4083
        %v4085 = vpop.f32.mrb[0].mxu0
        %v4086 = vadd.f32 0.0, %v4085
        %4087 = vmatprep.mubr.f32.mxu0 0.0
        %4088 = vmatmul.mubr.f32.gmra.mrb[0].mxu0 %v3700
        %v4089 = vpop.f32.mrb[0].mxu0
        %v4090 = vadd.f32 0.0, %v4089
        %v4091 = vpop.f32.mrb[0].mxu0
        %v4092 = vadd.f32 0.0, %v4091
        %4093 = vmatprep.mubr.f32.mxu0 0.0
        %4094 = vmatmul.mubr.f32.gmra.mrb[0].mxu0 %v3703
        %v4095 = vpop.f32.mrb[0].mxu0
        %v4096 = vadd.f32 0.0, %v4095
        %v4097 = vpop.f32.mrb[0].mxu0
        %v4098 = vadd.f32 0.0, %v4097
        %4099 = vmatprep.mubr.f32.mxu0 0.0
        %4100 = vmatmul.mubr.f32.gmra.mrb[0].mxu0 %v3706
        %v4101 = vpop.f32.mrb[0].mxu0
        %v4102 = vadd.f32 0.0, %v4101
        %v4103 = vpop.f32.mrb[0].mxu0
        %v4104 = vadd.f32 0.0, %v4103
        %4105 = vmatprep.mubr.f32.mxu0 0.0
        %4106 = vmatmul.mubr.f32.gmra.mrb[0].mxu0 %v3709
        %v4107 = vpop.f32.mrb[0].mxu0
        %v4108 = vadd.f32 0.0, %v4107
        %v4109 = vpop.f32.mrb[0].mxu0
        %v4110 = vadd.f32 0.0, %v4109
        %4111 = vmatprep.mubr.f32.mxu0 0.0
        %4112 = vmatmul.mubr.f32.gmra.mrb[0].mxu0 %v3712
        %v4113 = vpop.f32.mrb[0].mxu0
        %v4114 = vadd.f32 0.0, %v4113
        %v4115 = vpop.f32.mrb[0].mxu0
        %v4116 = vadd.f32 0.0, %v4115
        %4117 = vmatprep.mubr.f32.mxu0 0.0
        %4118 = vmatmul.mubr.f32.gmra.mrb[0].mxu0 %v3715
        %v4119 = vpop.f32.mrb[0].mxu0
        %v4120 = vadd.f32 0.0, %v4119
        %v4121 = vpop.f32.mrb[0].mxu0
        %v4122 = vadd.f32 0.0, %v4121
        %4123 = vmatprep.mubr.f32.mxu0 0.0
        %4124 = vmatmul.mubr.f32.gmra.mrb[0].mxu0 %v3718
        %v4125 = vpop.f32.mrb[0].mxu0
        %v4126 = vadd.f32 0.0, %v4125
        %v4127 = vpop.f32.mrb[0].mxu0
        %v4128 = vadd.f32 0.0, %v4127
        %4129 = vmatprep.mubr.f32.mxu0 0.0
        %4130 = vmatmul.mubr.f32.gmra.mrb[0].mxu0 %v3721
        %v4131 = vpop.f32.mrb[0].mxu0
        %v4132 = vadd.f32 0.0, %v4131
        %v4133 = vpop.f32.mrb[0].mxu0
        %v4134 = vadd.f32 0.0, %v4133
        %4135 = vmatprep.mubr.f32.mxu0 0.0
        %4136 = vmatmul.mubr.f32.gmra.mrb[0].mxu0 %v3724
        %v4137 = vpop.f32.mrb[0].mxu0
        %v4138 = vadd.f32 0.0, %v4137
        %v4139 = vpop.f32.mrb[0].mxu0
        %v4140 = vadd.f32 0.0, %v4139
        %4141 = vmatprep.mubr.f32.mxu0 0.0
        %4142 = vmatmul.mubr.f32.gmra.mrb[0].mxu0 %v3727
        %v4143 = vpop.f32.mrb[0].mxu0
        %v4144 = vadd.f32 0.0, %v4143
        %v4145 = vpop.f32.mrb[0].mxu0
        %v4146 = vadd.f32 0.0, %v4145
        %4147 = vmatprep.mubr.f32.mxu0 0.0
        %4148 = vmatmul.mubr.f32.gmra.mrb[0].mxu0 %v3730
        %v4149 = vpop.f32.mrb[0].mxu0
        %v4150 = vadd.f32 0.0, %v4149
        %v4151 = vpop.f32.mrb[0].mxu0
        %v4152 = vadd.f32 0.0, %v4151
        %4153 = vmatprep.mubr.f32.mxu0 0.0
        %4154 = vmatmul.mubr.f32.gmra.mrb[0].mxu0 %v3733
        %v4155 = vpop.f32.mrb[0].mxu0
        %v4156 = vadd.f32 0.0, %v4155
        %v4157 = vpop.f32.mrb[0].mxu0
        %v4158 = vadd.f32 0.0, %v4157
        %4159 = vmatprep.mubr.f32.mxu0 0.0
        %4160 = vmatmul.mubr.f32.gmra.mrb[0].mxu0 %v3736
        %v4161 = vpop.f32.mrb[0].mxu0
        %v4162 = vadd.f32 0.0, %v4161
        %v4163 = vpop.f32.mrb[0].mxu0
        %v4164 = vadd.f32 0.0, %v4163
        %4165 = vmatprep.mubr.f32.mxu0 0.0
        %4166 = vmatmul.mubr.f32.gmra.mrb[0].mxu0 %v3739
        %v4167 = vpop.f32.mrb[0].mxu0
        %v4168 = vadd.f32 0.0, %v4167
        %v4169 = vpop.f32.mrb[0].mxu0
        %v4170 = vadd.f32 0.0, %v4169
        %4171 = vmatprep.mubr.f32.mxu0 0.0
        %4172 = vmatmul.mubr.f32.gmra.mrb[0].mxu0 %v3742
        %v4173 = vpop.f32.mrb[0].mxu0
        %v4174 = vadd.f32 0.0, %v4173
        %v4175 = vpop.f32.mrb[0].mxu0
        %v4176 = vadd.f32 0.0, %v4175
        %4177 = vmatprep.mubr.f32.mxu0 0.0
        %4178 = vmatmul.mubr.f32.gmra.mrb[0].mxu0 %v3745
        %v4179 = vpop.f32.mrb[0].mxu0
        %v4180 = vadd.f32 0.0, %v4179
        %v4181 = vpop.f32.mrb[0].mxu0
        %v4182 = vadd.f32 0.0, %v4181
        %4183 = vmatprep.mubr.f32.mxu0 0.0
        %4184 = vmatmul.mubr.f32.gmra.mrb[0].mxu0 %v3748
        %v4185 = vpop.f32.mrb[0].mxu0
        %v4186 = vadd.f32 0.0, %v4185
        %v4187 = vpop.f32.mrb[0].mxu0
        %v4188 = vadd.f32 0.0, %v4187
        %4189 = vmatprep.mubr.f32.mxu0 0.0
        %4190 = vmatmul.mubr.f32.gmra.mrb[0].mxu0 %v3751
        %v4191 = vpop.f32.mrb[0].mxu0
        %v4192 = vadd.f32 0.0, %v4191
        %v4193 = vpop.f32.mrb[0].mxu0
        %v4194 = vadd.f32 0.0, %v4193
        %4195 = vmatprep.mubr.f32.mxu0 0.0
        %4196 = vmatmul.mubr.f32.gmra.mrb[0].mxu0 %v3754
        %v4197 = vpop.f32.mrb[0].mxu0
        %v4198 = vadd.f32 0.0, %v4197
        %v4199 = vpop.f32.mrb[0].mxu0
        %v4200 = vadd.f32 0.0, %v4199
        %4201 = vmatprep.mubr.f32.mxu0 0.0
        %4202 = vmatmul.mubr.f32.gmra.mrb[0].mxu0 %v3757
        %v4203 = vpop.f32.mrb[0].mxu0
        %v4204 = vadd.f32 0.0, %v4203
        %v4205 = vpop.f32.mrb[0].mxu0
        %v4206 = vadd.f32 0.0, %v4205
        %4207 = vmatprep.mubr.f32.mxu0 0.0
        %4208 = vmatmul.mubr.f32.gmra.mrb[0].mxu0 %v3760
        %v4209 = vpop.f32.mrb[0].mxu0
        %v4210 = vadd.f32 0.0, %v4209
        %v4211 = vpop.f32.mrb[0].mxu0
        %v4212 = vadd.f32 0.0, %v4211
        %4213 = vmatprep.mubr.f32.mxu0 0.0
        %4214 = vmatmul.mubr.f32.gmra.mrb[0].mxu0 %v3763
        %v4215 = vpop.f32.mrb[0].mxu0
        %v4216 = vadd.f32 0.0, %v4215
        %v4217 = vpop.f32.mrb[0].mxu0
        %v4218 = vadd.f32 0.0, %v4217
        %4219 = vmatprep.mubr.f32.mxu0 0.0
        %4220 = vmatmul.mubr.f32.gmra.mrb[0].mxu0 %v3766
        %v4221 = vpop.f32.mrb[0].mxu0
        %v4222 = vadd.f32 0.0, %v4221
        %v4223 = vpop.f32.mrb[0].mxu0
        %v4224 = vadd.f32 0.0, %v4223
        %4225 = vmatprep.mubr.f32.mxu0 0.0
        %4226 = vmatmul.mubr.f32.gmra.mrb[0].mxu0 %v3769
        %v4227 = vpop.f32.mrb[0].mxu0
        %v4228 = vadd.f32 0.0, %v4227
        %v4229 = vpop.f32.mrb[0].mxu0
        %v4230 = vadd.f32 0.0, %v4229
        %4231 = vmatprep.mubr.f32.mxu0 0.0
        %4232 = vmatmul.mubr.f32.gmra.mrb[0].mxu0 %v3772
        %v4233 = vpop.f32.mrb[0].mxu0
        %v4234 = vadd.f32 0.0, %v4233
        %v4235 = vpop.f32.mrb[0].mxu0
        %v4236 = vadd.f32 0.0, %v4235
        %4237 = vmatprep.mubr.f32.mxu0 0.0
        %4238 = vmatmul.mubr.f32.gmra.mrb[0].mxu0 %v3775
        %v4239 = vpop.f32.mrb[0].mxu0
        %v4240 = vadd.f32 0.0, %v4239
        %v4241 = vpop.f32.mrb[0].mxu0
        %v4242 = vadd.f32 0.0, %v4241
        %4243 = vmatprep.mubr.f32.mxu0 0.0
        %4244 = vmatmul.mubr.f32.gmra.mrb[0].mxu0 %v3778
        %v4245 = vpop.f32.mrb[0].mxu0
        %v4246 = vadd.f32 0.0, %v4245
        %v4247 = vpop.f32.mrb[0].mxu0
        %v4248 = vadd.f32 0.0, %v4247
        %4249 = vmatprep.mubr.f32.mxu0 0.0
        %4250 = vmatmul.mubr.f32.gmra.mrb[0].mxu0 %v3781
        %v4251 = vpop.f32.mrb[0].mxu0
        %v4252 = vadd.f32 0.0, %v4251
        %v4253 = vpop.f32.mrb[0].mxu0
        %v4254 = vadd.f32 0.0, %v4253
        %4255 = vmatprep.mubr.f32.mxu0 0.0
        %4256 = vmatmul.mubr.f32.gmra.mrb[0].mxu0 %v3784
        %v4257 = vpop.f32.mrb[0].mxu0
        %v4258 = vadd.f32 0.0, %v4257
        %v4259 = vpop.f32.mrb[0].mxu0
        %v4260 = vadd.f32 0.0, %v4259
        %4261 = vmatprep.mubr.f32.mxu0 0.0
        %4262 = vmatmul.mubr.f32.gmra.mrb[0].mxu0 %v3787
        %v4263 = vpop.f32.mrb[0].mxu0
        %v4264 = vadd.f32 0.0, %v4263
        %v4265 = vpop.f32.mrb[0].mxu0
        %v4266 = vadd.f32 0.0, %v4265
        %4267 = vdwg.mxu0
        %4268 = vmatprep.subr.mxu0 %v3575
        %4269 = vmatpush1.msra.mxu0 %v3574
        %4270 = vmatprep.subr.mxu0 %v3580
        %4271 = vmatpush1.msra.mxu0 %v3579
        %4272 = vmatprep.subr.mxu0 0.0
        %4273 = vmatpush1.msra.mxu0 0.0
        %4274 = vmatprep.subr.mxu0 0.0
        %4275 = vmatpush1.msra.mxu0 0.0
        %4276 = vmatprep.subr.mxu0 0.0
        %4277 = vmatpush1.msra.mxu0 0.0
        %4278 = vmatprep.subr.mxu0 0.0
        %4279 = vmatpush1.msra.mxu0 0.0
        %4280 = vmatprep.subr.mxu0 0.0
        %4281 = vmatpush1.msra.mxu0 0.0
        %4282 = vmatprep.subr.mxu0 0.0
        %4283 = vmatpush1.msra.mxu0 0.0
        %4284 = vmatprep.subr.mxu0 0.0
        %4285 = vmatpush1.msra.mxu0 0.0
        %4286 = vmatprep.subr.mxu0 0.0
        %4287 = vmatpush1.msra.mxu0 0.0
        %4288 = vmatprep.subr.mxu0 0.0
        %4289 = vmatpush1.msra.mxu0 0.0
        %4290 = vmatprep.subr.mxu0 0.0
        %4291 = vmatpush1.msra.mxu0 0.0
        %4292 = vmatprep.subr.mxu0 0.0
        %4293 = vmatpush1.msra.mxu0 0.0
        %4294 = vmatprep.subr.mxu0 0.0
        %4295 = vmatpush1.msra.mxu0 0.0
        %4296 = vmatprep.subr.mxu0 0.0
        %4297 = vmatpush1.msra.mxu0 0.0
        %4298 = vmatprep.subr.mxu0 0.0
        %4299 = vmatpush1.msra.mxu0 0.0
        %4300 = vmatprep.subr.mxu0 0.0
        %4301 = vmatpush1.msra.mxu0 0.0
        %4302 = vmatprep.subr.mxu0 0.0
        %4303 = vmatpush1.msra.mxu0 0.0
        %4304 = vmatprep.subr.mxu0 0.0
        %4305 = vmatpush1.msra.mxu0 0.0
        %4306 = vmatprep.subr.mxu0 0.0
        %4307 = vmatpush1.msra.mxu0 0.0
        %4308 = vmatprep.subr.mxu0 0.0
        %4309 = vmatpush1.msra.mxu0 0.0
        %4310 = vmatprep.subr.mxu0 0.0
        %4311 = vmatpush1.msra.mxu0 0.0
        %4312 = vmatprep.subr.mxu0 0.0
        %4313 = vmatpush1.msra.mxu0 0.0
        %4314 = vmatprep.subr.mxu0 0.0
        %4315 = vmatpush1.msra.mxu0 0.0
        %4316 = vmatprep.subr.mxu0 0.0
        %4317 = vmatpush1.msra.mxu0 0.0
        %4318 = vmatprep.subr.mxu0 0.0
        %4319 = vmatpush1.msra.mxu0 0.0
        %4320 = vmatprep.subr.mxu0 0.0
        %4321 = vmatpush1.msra.mxu0 0.0
        %4322 = vmatprep.subr.mxu0 0.0
        %4323 = vmatpush1.msra.mxu0 0.0
        %4324 = vmatprep.subr.mxu0 0.0
        %4325 = vmatpush1.msra.mxu0 0.0
        %4326 = vmatprep.subr.mxu0 0.0
        %4327 = vmatpush1.msra.mxu0 0.0
        %4328 = vmatprep.subr.mxu0 0.0
        %4329 = vmatpush1.msra.mxu0 0.0
        %4330 = vmatprep.subr.mxu0 0.0
        %4331 = vmatpush1.msra.mxu0 0.0
        %4332 = vmatprep.mubr.f32.mxu0 0.0
        %4333 = vmatmul.mubr.f32.gmra.mrb[0].mxu0 %v3583
        %v4334 = vpop.f32.mrb[0].mxu0
        %v4335 = vadd.f32 0.0, %v4334
        %v4336 = vpop.f32.mrb[0].mxu0
        %v4337 = vadd.f32 0.0, %v4336
        %4338 = vmatprep.mubr.f32.mxu0 0.0
        %4339 = vmatmul.mubr.f32.gmra.mrb[0].mxu0 %v3586
        %v4340 = vpop.f32.mrb[0].mxu0
        %v4341 = vadd.f32 0.0, %v4340
        %v4342 = vpop.f32.mrb[0].mxu0
        %v4343 = vadd.f32 0.0, %v4342
        %4344 = vmatprep.mubr.f32.mxu0 0.0
        %4345 = vmatmul.mubr.f32.gmra.mrb[0].mxu0 %v3589
        %v4346 = vpop.f32.mrb[0].mxu0
        %v4347 = vadd.f32 0.0, %v4346
        %v4348 = vpop.f32.mrb[0].mxu0
        %v4349 = vadd.f32 0.0, %v4348
        %4350 = vmatprep.mubr.f32.mxu0 0.0
        %4351 = vmatmul.mubr.f32.gmra.mrb[0].mxu0 %v3592
        %v4352 = vpop.f32.mrb[0].mxu0
        %v4353 = vadd.f32 0.0, %v4352
        %v4354 = vpop.f32.mrb[0].mxu0
        %v4355 = vadd.f32 0.0, %v4354
        %4356 = vmatprep.mubr.f32.mxu0 0.0
        %4357 = vmatmul.mubr.f32.gmra.mrb[0].mxu0 %v3595
        %v4358 = vpop.f32.mrb[0].mxu0
        %v4359 = vadd.f32 0.0, %v4358
        %v4360 = vpop.f32.mrb[0].mxu0
        %v4361 = vadd.f32 0.0, %v4360
        %4362 = vmatprep.mubr.f32.mxu0 0.0
        %4363 = vmatmul.mubr.f32.gmra.mrb[0].mxu0 %v3598
        %v4364 = vpop.f32.mrb[0].mxu0
        %v4365 = vadd.f32 0.0, %v4364
        %v4366 = vpop.f32.mrb[0].mxu0
        %v4367 = vadd.f32 0.0, %v4366
        %4368 = vmatprep.mubr.f32.mxu0 0.0
        %4369 = vmatmul.mubr.f32.gmra.mrb[0].mxu0 %v3601
        %v4370 = vpop.f32.mrb[0].mxu0
        %v4371 = vadd.f32 0.0, %v4370
        %v4372 = vpop.f32.mrb[0].mxu0
        %v4373 = vadd.f32 0.0, %v4372
        %4374 = vmatprep.mubr.f32.mxu0 0.0
        %4375 = vmatmul.mubr.f32.gmra.mrb[0].mxu0 %v3604
        %v4376 = vpop.f32.mrb[0].mxu0
        %v4377 = vadd.f32 0.0, %v4376
        %v4378 = vpop.f32.mrb[0].mxu0
        %v4379 = vadd.f32 0.0, %v4378
        %4380 = vmatprep.mubr.f32.mxu0 0.0
        %4381 = vmatmul.mubr.f32.gmra.mrb[0].mxu0 %v3607
        %v4382 = vpop.f32.mrb[0].mxu0
        %v4383 = vadd.f32 0.0, %v4382
        %v4384 = vpop.f32.mrb[0].mxu0
        %v4385 = vadd.f32 0.0, %v4384
        %4386 = vmatprep.mubr.f32.mxu0 0.0
        %4387 = vmatmul.mubr.f32.gmra.mrb[0].mxu0 %v3610
        %v4388 = vpop.f32.mrb[0].mxu0
        %v4389 = vadd.f32 0.0, %v4388
        %v4390 = vpop.f32.mrb[0].mxu0
        %v4391 = vadd.f32 0.0, %v4390
        %4392 = vmatprep.mubr.f32.mxu0 0.0
        %4393 = vmatmul.mubr.f32.gmra.mrb[0].mxu0 %v3613
        %v4394 = vpop.f32.mrb[0].mxu0
        %v4395 = vadd.f32 0.0, %v4394
        %v4396 = vpop.f32.mrb[0].mxu0
        %v4397 = vadd.f32 0.0, %v4396
        %4398 = vmatprep.mubr.f32.mxu0 0.0
        %4399 = vmatmul.mubr.f32.gmra.mrb[0].mxu0 %v3616
        %v4400 = vpop.f32.mrb[0].mxu0
        %v4401 = vadd.f32 0.0, %v4400
        %v4402 = vpop.f32.mrb[0].mxu0
        %v4403 = vadd.f32 0.0, %v4402
        %4404 = vmatprep.mubr.f32.mxu0 0.0
        %4405 = vmatmul.mubr.f32.gmra.mrb[0].mxu0 %v3619
        %v4406 = vpop.f32.mrb[0].mxu0
        %v4407 = vadd.f32 0.0, %v4406
        %v4408 = vpop.f32.mrb[0].mxu0
        %v4409 = vadd.f32 0.0, %v4408
        %4410 = vmatprep.mubr.f32.mxu0 0.0
        %4411 = vmatmul.mubr.f32.gmra.mrb[0].mxu0 %v3622
        %v4412 = vpop.f32.mrb[0].mxu0
        %v4413 = vadd.f32 0.0, %v4412
        %v4414 = vpop.f32.mrb[0].mxu0
        %v4415 = vadd.f32 0.0, %v4414
        %4416 = vmatprep.mubr.f32.mxu0 0.0
        %4417 = vmatmul.mubr.f32.gmra.mrb[0].mxu0 %v3625
        %v4418 = vpop.f32.mrb[0].mxu0
        %v4419 = vadd.f32 0.0, %v4418
        %v4420 = vpop.f32.mrb[0].mxu0
        %v4421 = vadd.f32 0.0, %v4420
        %4422 = vmatprep.mubr.f32.mxu0 0.0
        %4423 = vmatmul.mubr.f32.gmra.mrb[0].mxu0 %v3628
        %v4424 = vpop.f32.mrb[0].mxu0
        %v4425 = vadd.f32 0.0, %v4424
        %v4426 = vpop.f32.mrb[0].mxu0
        %v4427 = vadd.f32 0.0, %v4426
        %4428 = vmatprep.mubr.f32.mxu0 0.0
        %4429 = vmatmul.mubr.f32.gmra.mrb[0].mxu0 %v3631
        %v4430 = vpop.f32.mrb[0].mxu0
        %v4431 = vadd.f32 0.0, %v4430
        %v4432 = vpop.f32.mrb[0].mxu0
        %v4433 = vadd.f32 0.0, %v4432
        %4434 = vmatprep.mubr.f32.mxu0 0.0
        %4435 = vmatmul.mubr.f32.gmra.mrb[0].mxu0 %v3634
        %v4436 = vpop.f32.mrb[0].mxu0
        %v4437 = vadd.f32 0.0, %v4436
        %v4438 = vpop.f32.mrb[0].mxu0
        %v4439 = vadd.f32 0.0, %v4438
        %4440 = vmatprep.mubr.f32.mxu0 0.0
        %4441 = vmatmul.mubr.f32.gmra.mrb[0].mxu0 %v3637
        %v4442 = vpop.f32.mrb[0].mxu0
        %v4443 = vadd.f32 0.0, %v4442
        %v4444 = vpop.f32.mrb[0].mxu0
        %v4445 = vadd.f32 0.0, %v4444
        %4446 = vmatprep.mubr.f32.mxu0 0.0
        %4447 = vmatmul.mubr.f32.gmra.mrb[0].mxu0 %v3640
        %v4448 = vpop.f32.mrb[0].mxu0
        %v4449 = vadd.f32 0.0, %v4448
        %v4450 = vpop.f32.mrb[0].mxu0
        %v4451 = vadd.f32 0.0, %v4450
        %4452 = vmatprep.mubr.f32.mxu0 0.0
        %4453 = vmatmul.mubr.f32.gmra.mrb[0].mxu0 %v3643
        %v4454 = vpop.f32.mrb[0].mxu0
        %v4455 = vadd.f32 0.0, %v4454
        %v4456 = vpop.f32.mrb[0].mxu0
        %v4457 = vadd.f32 0.0, %v4456
        %4458 = vmatprep.mubr.f32.mxu0 0.0
        %4459 = vmatmul.mubr.f32.gmra.mrb[0].mxu0 %v3646
        %v4460 = vpop.f32.mrb[0].mxu0
        %v4461 = vadd.f32 0.0, %v4460
        %v4462 = vpop.f32.mrb[0].mxu0
        %v4463 = vadd.f32 0.0, %v4462
        %4464 = vmatprep.mubr.f32.mxu0 0.0
        %4465 = vmatmul.mubr.f32.gmra.mrb[0].mxu0 %v3649
        %v4466 = vpop.f32.mrb[0].mxu0
        %v4467 = vadd.f32 0.0, %v4466
        %v4468 = vpop.f32.mrb[0].mxu0
        %v4469 = vadd.f32 0.0, %v4468
        %4470 = vmatprep.mubr.f32.mxu0 0.0
        %4471 = vmatmul.mubr.f32.gmra.mrb[0].mxu0 %v3652
        %v4472 = vpop.f32.mrb[0].mxu0
        %v4473 = vadd.f32 0.0, %v4472
        %v4474 = vpop.f32.mrb[0].mxu0
        %v4475 = vadd.f32 0.0, %v4474
        %4476 = vmatprep.mubr.f32.mxu0 0.0
        %4477 = vmatmul.mubr.f32.gmra.mrb[0].mxu0 %v3655
        %v4478 = vpop.f32.mrb[0].mxu0
        %v4479 = vadd.f32 0.0, %v4478
        %v4480 = vpop.f32.mrb[0].mxu0
        %v4481 = vadd.f32 0.0, %v4480
        %4482 = vmatprep.mubr.f32.mxu0 0.0
        %4483 = vmatmul.mubr.f32.gmra.mrb[0].mxu0 %v3658
        %v4484 = vpop.f32.mrb[0].mxu0
        %v4485 = vadd.f32 0.0, %v4484
        %v4486 = vpop.f32.mrb[0].mxu0
        %v4487 = vadd.f32 0.0, %v4486
        %4488 = vmatprep.mubr.f32.mxu0 0.0
        %4489 = vmatmul.mubr.f32.gmra.mrb[0].mxu0 %v3661
        %v4490 = vpop.f32.mrb[0].mxu0
        %v4491 = vadd.f32 0.0, %v4490
        %v4492 = vpop.f32.mrb[0].mxu0
        %v4493 = vadd.f32 0.0, %v4492
        %4494 = vmatprep.mubr.f32.mxu0 0.0
        %4495 = vmatmul.mubr.f32.gmra.mrb[0].mxu0 %v3664
        %v4496 = vpop.f32.mrb[0].mxu0
        %v4497 = vadd.f32 0.0, %v4496
        %v4498 = vpop.f32.mrb[0].mxu0
        %v4499 = vadd.f32 0.0, %v4498
        %4500 = vmatprep.mubr.f32.mxu0 0.0
        %4501 = vmatmul.mubr.f32.gmra.mrb[0].mxu0 %v3667
        %v4502 = vpop.f32.mrb[0].mxu0
        %v4503 = vadd.f32 0.0, %v4502
        %v4504 = vpop.f32.mrb[0].mxu0
        %v4505 = vadd.f32 0.0, %v4504
        %4506 = vmatprep.mubr.f32.mxu0 0.0
        %4507 = vmatmul.mubr.f32.gmra.mrb[0].mxu0 %v3670
        %v4508 = vpop.f32.mrb[0].mxu0
        %v4509 = vadd.f32 0.0, %v4508
        %v4510 = vpop.f32.mrb[0].mxu0
        %v4511 = vadd.f32 0.0, %v4510
        %4512 = vmatprep.mubr.f32.mxu0 0.0
        %4513 = vmatmul.mubr.f32.gmra.mrb[0].mxu0 %v3673
        %v4514 = vpop.f32.mrb[0].mxu0
        %v4515 = vadd.f32 0.0, %v4514
        %v4516 = vpop.f32.mrb[0].mxu0
        %v4517 = vadd.f32 0.0, %v4516
        %4518 = vmatprep.mubr.f32.mxu0 0.0
        %4519 = vmatmul.mubr.f32.gmra.mrb[0].mxu0 %v3676
        %v4520 = vpop.f32.mrb[0].mxu0
        %v4521 = vadd.f32 0.0, %v4520
        %v4522 = vpop.f32.mrb[0].mxu0
        %v4523 = vadd.f32 0.0, %v4522
        %4524 = vmatprep.mubr.f32.mxu0 0.0
        %4525 = vmatmul.mubr.f32.gmra.mrb[0].mxu0 %v3679
        %v4526 = vpop.f32.mrb[0].mxu0
        %v4527 = vadd.f32 0.0, %v4526
        %v4528 = vpop.f32.mrb[0].mxu0
        %v4529 = vadd.f32 0.0, %v4528
        %4530 = vmatprep.mubr.f32.mxu0 0.0
        %4531 = vmatmul.mubr.f32.gmra.mrb[0].mxu0 %v3682
        %v4532 = vpop.f32.mrb[0].mxu0
        %v4533 = vadd.f32 0.0, %v4532
        %v4534 = vpop.f32.mrb[0].mxu0
        %v4535 = vadd.f32 0.0, %v4534
        %4536 = vmatprep.mubr.f32.mxu0 0.0
        %4537 = vmatmul.mubr.f32.gmra.mrb[0].mxu0 %v3685
        %v4538 = vpop.f32.mrb[0].mxu0
        %v4539 = vadd.f32 0.0, %v4538
        %v4540 = vpop.f32.mrb[0].mxu0
        %v4541 = vadd.f32 0.0, %v4540
        %4542 = vmatprep.mubr.f32.mxu0 0.0
        %4543 = vmatmul.mubr.f32.gmra.mrb[0].mxu0 %v3688
        %v4544 = vpop.f32.mrb[0].mxu0
        %v4545 = vadd.f32 0.0, %v4544
        %v4546 = vpop.f32.mrb[0].mxu0
        %v4547 = vadd.f32 0.0, %v4546
        %4548 = vmatprep.mubr.f32.mxu0 0.0
        %4549 = vmatmul.mubr.f32.gmra.mrb[0].mxu0 %v3691
        %v4550 = vpop.f32.mrb[0].mxu0
        %v4551 = vadd.f32 0.0, %v4550
        %v4552 = vpop.f32.mrb[0].mxu0
        %v4553 = vadd.f32 0.0, %v4552
        %4554 = vmatprep.mubr.f32.mxu0 0.0
        %4555 = vmatmul.mubr.f32.gmra.mrb[0].mxu0 %v3694
        %v4556 = vpop.f32.mrb[0].mxu0
        %v4557 = vadd.f32 0.0, %v4556
        %v4558 = vpop.f32.mrb[0].mxu0
        %v4559 = vadd.f32 0.0, %v4558
        %4560 = vmatprep.mubr.f32.mxu0 0.0
        %4561 = vmatmul.mubr.f32.gmra.mrb[0].mxu0 %v3697
        %v4562 = vpop.f32.mrb[0].mxu0
        %v4563 = vadd.f32 0.0, %v4562
        %v4564 = vpop.f32.mrb[0].mxu0
        %v4565 = vadd.f32 0.0, %v4564
        %4566 = vmatprep.mubr.f32.mxu0 0.0
        %4567 = vmatmul.mubr.f32.gmra.mrb[0].mxu0 %v3700
        %v4568 = vpop.f32.mrb[0].mxu0
        %v4569 = vadd.f32 0.0, %v4568
        %v4570 = vpop.f32.mrb[0].mxu0
        %v4571 = vadd.f32 0.0, %v4570
        %4572 = vmatprep.mubr.f32.mxu0 0.0
        %4573 = vmatmul.mubr.f32.gmra.mrb[0].mxu0 %v3703
        %v4574 = vpop.f32.mrb[0].mxu0
        %v4575 = vadd.f32 0.0, %v4574
        %v4576 = vpop.f32.mrb[0].mxu0
        %v4577 = vadd.f32 0.0, %v4576
        %4578 = vmatprep.mubr.f32.mxu0 0.0
        %4579 = vmatmul.mubr.f32.gmra.mrb[0].mxu0 %v3706
        %v4580 = vpop.f32.mrb[0].mxu0
        %v4581 = vadd.f32 0.0, %v4580
        %v4582 = vpop.f32.mrb[0].mxu0
        %v4583 = vadd.f32 0.0, %v4582
        %4584 = vmatprep.mubr.f32.mxu0 0.0
        %4585 = vmatmul.mubr.f32.gmra.mrb[0].mxu0 %v3709
        %v4586 = vpop.f32.mrb[0].mxu0
        %v4587 = vadd.f32 0.0, %v4586
        %v4588 = vpop.f32.mrb[0].mxu0
        %v4589 = vadd.f32 0.0, %v4588
        %4590 = vmatprep.mubr.f32.mxu0 0.0
        %4591 = vmatmul.mubr.f32.gmra.mrb[0].mxu0 %v3712
        %v4592 = vpop.f32.mrb[0].mxu0
        %v4593 = vadd.f32 0.0, %v4592
        %v4594 = vpop.f32.mrb[0].mxu0
        %v4595 = vadd.f32 0.0, %v4594
        %4596 = vmatprep.mubr.f32.mxu0 0.0
        %4597 = vmatmul.mubr.f32.gmra.mrb[0].mxu0 %v3715
        %v4598 = vpop.f32.mrb[0].mxu0
        %v4599 = vadd.f32 0.0, %v4598
        %v4600 = vpop.f32.mrb[0].mxu0
        %v4601 = vadd.f32 0.0, %v4600
        %4602 = vmatprep.mubr.f32.mxu0 0.0
        %4603 = vmatmul.mubr.f32.gmra.mrb[0].mxu0 %v3718
        %v4604 = vpop.f32.mrb[0].mxu0
        %v4605 = vadd.f32 0.0, %v4604
        %v4606 = vpop.f32.mrb[0].mxu0
        %v4607 = vadd.f32 0.0, %v4606
        %4608 = vmatprep.mubr.f32.mxu0 0.0
        %4609 = vmatmul.mubr.f32.gmra.mrb[0].mxu0 %v3721
        %v4610 = vpop.f32.mrb[0].mxu0
        %v4611 = vadd.f32 0.0, %v4610
        %v4612 = vpop.f32.mrb[0].mxu0
        %v4613 = vadd.f32 0.0, %v4612
        %4614 = vmatprep.mubr.f32.mxu0 0.0
        %4615 = vmatmul.mubr.f32.gmra.mrb[0].mxu0 %v3724
        %v4616 = vpop.f32.mrb[0].mxu0
        %v4617 = vadd.f32 0.0, %v4616
        %v4618 = vpop.f32.mrb[0].mxu0
        %v4619 = vadd.f32 0.0, %v4618
        %4620 = vmatprep.mubr.f32.mxu0 0.0
        %4621 = vmatmul.mubr.f32.gmra.mrb[0].mxu0 %v3727
        %v4622 = vpop.f32.mrb[0].mxu0
        %v4623 = vadd.f32 0.0, %v4622
        %v4624 = vpop.f32.mrb[0].mxu0
        %v4625 = vadd.f32 0.0, %v4624
        %4626 = vmatprep.mubr.f32.mxu0 0.0
        %4627 = vmatmul.mubr.f32.gmra.mrb[0].mxu0 %v3730
        %v4628 = vpop.f32.mrb[0].mxu0
        %v4629 = vadd.f32 0.0, %v4628
        %v4630 = vpop.f32.mrb[0].mxu0
        %v4631 = vadd.f32 0.0, %v4630
        %4632 = vmatprep.mubr.f32.mxu0 0.0
        %4633 = vmatmul.mubr.f32.gmra.mrb[0].mxu0 %v3733
        %v4634 = vpop.f32.mrb[0].mxu0
        %v4635 = vadd.f32 0.0, %v4634
        %v4636 = vpop.f32.mrb[0].mxu0
        %v4637 = vadd.f32 0.0, %v4636
        %4638 = vmatprep.mubr.f32.mxu0 0.0
        %4639 = vmatmul.mubr.f32.gmra.mrb[0].mxu0 %v3736
        %v4640 = vpop.f32.mrb[0].mxu0
        %v4641 = vadd.f32 0.0, %v4640
        %v4642 = vpop.f32.mrb[0].mxu0
        %v4643 = vadd.f32 0.0, %v4642
        %4644 = vmatprep.mubr.f32.mxu0 0.0
        %4645 = vmatmul.mubr.f32.gmra.mrb[0].mxu0 %v3739
        %v4646 = vpop.f32.mrb[0].mxu0
        %v4647 = vadd.f32 0.0, %v4646
        %v4648 = vpop.f32.mrb[0].mxu0
        %v4649 = vadd.f32 0.0, %v4648
        %4650 = vmatprep.mubr.f32.mxu0 0.0
        %4651 = vmatmul.mubr.f32.gmra.mrb[0].mxu0 %v3742
        %v4652 = vpop.f32.mrb[0].mxu0
        %v4653 = vadd.f32 0.0, %v4652
        %v4654 = vpop.f32.mrb[0].mxu0
        %v4655 = vadd.f32 0.0, %v4654
        %4656 = vmatprep.mubr.f32.mxu0 0.0
        %4657 = vmatmul.mubr.f32.gmra.mrb[0].mxu0 %v3745
        %v4658 = vpop.f32.mrb[0].mxu0
        %v4659 = vadd.f32 0.0, %v4658
        %v4660 = vpop.f32.mrb[0].mxu0
        %v4661 = vadd.f32 0.0, %v4660
        %4662 = vmatprep.mubr.f32.mxu0 0.0
        %4663 = vmatmul.mubr.f32.gmra.mrb[0].mxu0 %v3748
        %v4664 = vpop.f32.mrb[0].mxu0
        %v4665 = vadd.f32 0.0, %v4664
        %v4666 = vpop.f32.mrb[0].mxu0
        %v4667 = vadd.f32 0.0, %v4666
        %4668 = vmatprep.mubr.f32.mxu0 0.0
        %4669 = vmatmul.mubr.f32.gmra.mrb[0].mxu0 %v3751
        %v4670 = vpop.f32.mrb[0].mxu0
        %v4671 = vadd.f32 0.0, %v4670
        %v4672 = vpop.f32.mrb[0].mxu0
        %v4673 = vadd.f32 0.0, %v4672
        %4674 = vmatprep.mubr.f32.mxu0 0.0
        %4675 = vmatmul.mubr.f32.gmra.mrb[0].mxu0 %v3754
        %v4676 = vpop.f32.mrb[0].mxu0
        %v4677 = vadd.f32 0.0, %v4676
        %v4678 = vpop.f32.mrb[0].mxu0
        %v4679 = vadd.f32 0.0, %v4678
        %4680 = vmatprep.mubr.f32.mxu0 0.0
        %4681 = vmatmul.mubr.f32.gmra.mrb[0].mxu0 %v3757
        %v4682 = vpop.f32.mrb[0].mxu0
        %v4683 = vadd.f32 0.0, %v4682
        %v4684 = vpop.f32.mrb[0].mxu0
        %v4685 = vadd.f32 0.0, %v4684
        %4686 = vmatprep.mubr.f32.mxu0 0.0
        %4687 = vmatmul.mubr.f32.gmra.mrb[0].mxu0 %v3760
        %v4688 = vpop.f32.mrb[0].mxu0
        %v4689 = vadd.f32 0.0, %v4688
        %v4690 = vpop.f32.mrb[0].mxu0
        %v4691 = vadd.f32 0.0, %v4690
        %4692 = vmatprep.mubr.f32.mxu0 0.0
        %4693 = vmatmul.mubr.f32.gmra.mrb[0].mxu0 %v3763
        %v4694 = vpop.f32.mrb[0].mxu0
        %v4695 = vadd.f32 0.0, %v4694
        %v4696 = vpop.f32.mrb[0].mxu0
        %v4697 = vadd.f32 0.0, %v4696
        %4698 = vmatprep.mubr.f32.mxu0 0.0
        %4699 = vmatmul.mubr.f32.gmra.mrb[0].mxu0 %v3766
        %v4700 = vpop.f32.mrb[0].mxu0
        %v4701 = vadd.f32 0.0, %v4700
        %v4702 = vpop.f32.mrb[0].mxu0
        %v4703 = vadd.f32 0.0, %v4702
        %4704 = vmatprep.mubr.f32.mxu0 0.0
        %4705 = vmatmul.mubr.f32.gmra.mrb[0].mxu0 %v3769
        %v4706 = vpop.f32.mrb[0].mxu0
        %v4707 = vadd.f32 0.0, %v4706
        %v4708 = vpop.f32.mrb[0].mxu0
        %v4709 = vadd.f32 0.0, %v4708
        %4710 = vmatprep.mubr.f32.mxu0 0.0
        %4711 = vmatmul.mubr.f32.gmra.mrb[0].mxu0 %v3772
        %v4712 = vpop.f32.mrb[0].mxu0
        %v4713 = vadd.f32 0.0, %v4712
        %v4714 = vpop.f32.mrb[0].mxu0
        %v4715 = vadd.f32 0.0, %v4714
        %4716 = vmatprep.mubr.f32.mxu0 0.0
        %4717 = vmatmul.mubr.f32.gmra.mrb[0].mxu0 %v3775
        %v4718 = vpop.f32.mrb[0].mxu0
        %v4719 = vadd.f32 0.0, %v4718
        %v4720 = vpop.f32.mrb[0].mxu0
        %v4721 = vadd.f32 0.0, %v4720
        %4722 = vmatprep.mubr.f32.mxu0 0.0
        %4723 = vmatmul.mubr.f32.gmra.mrb[0].mxu0 %v3778
        %v4724 = vpop.f32.mrb[0].mxu0
        %v4725 = vadd.f32 0.0, %v4724
        %v4726 = vpop.f32.mrb[0].mxu0
        %v4727 = vadd.f32 0.0, %v4726
        %4728 = vmatprep.mubr.f32.mxu0 0.0
        %4729 = vmatmul.mubr.f32.gmra.mrb[0].mxu0 %v3781
        %v4730 = vpop.f32.mrb[0].mxu0
        %v4731 = vadd.f32 0.0, %v4730
        %v4732 = vpop.f32.mrb[0].mxu0
        %v4733 = vadd.f32 0.0, %v4732
        %4734 = vmatprep.mubr.f32.mxu0 0.0
        %4735 = vmatmul.mubr.f32.gmra.mrb[0].mxu0 %v3784
        %v4736 = vpop.f32.mrb[0].mxu0
        %v4737 = vadd.f32 0.0, %v4736
        %v4738 = vpop.f32.mrb[0].mxu0
        %v4739 = vadd.f32 0.0, %v4738
        %4740 = vmatprep.mubr.f32.mxu0 0.0
        %4741 = vmatmul.mubr.f32.gmra.mrb[0].mxu0 %v3787
        %v4742 = vpop.f32.mrb[0].mxu0
        %v4743 = vadd.f32 0.0, %v4742
        %v4744 = vpop.f32.mrb[0].mxu0
        %v4745 = vadd.f32 0.0, %v4744
        %4746 = vdwg.mxu0
        %4747 = vmatprep.subr.mxu0 0.0
        %4748 = vmatpush1.msra.mxu0 %v3576
        %4749 = vmatprep.subr.mxu0 0.0
        %4750 = vmatpush1.msra.mxu0 %v3581
        %4751 = vmatprep.subr.mxu0 0.0
        %4752 = vmatpush1.msra.mxu0 0.0
        %4753 = vmatprep.subr.mxu0 0.0
        %4754 = vmatpush1.msra.mxu0 0.0
        %4755 = vmatprep.subr.mxu0 0.0
        %4756 = vmatpush1.msra.mxu0 0.0
        %4757 = vmatprep.subr.mxu0 0.0
        %4758 = vmatpush1.msra.mxu0 0.0
        %4759 = vmatprep.subr.mxu0 0.0
        %4760 = vmatpush1.msra.mxu0 0.0
        %4761 = vmatprep.subr.mxu0 0.0
        %4762 = vmatpush1.msra.mxu0 0.0
        %4763 = vmatprep.subr.mxu0 0.0
        %4764 = vmatpush1.msra.mxu0 0.0
        %4765 = vmatprep.subr.mxu0 0.0
        %4766 = vmatpush1.msra.mxu0 0.0
        %4767 = vmatprep.subr.mxu0 0.0
        %4768 = vmatpush1.msra.mxu0 0.0
        %4769 = vmatprep.subr.mxu0 0.0
        %4770 = vmatpush1.msra.mxu0 0.0
        %4771 = vmatprep.subr.mxu0 0.0
        %4772 = vmatpush1.msra.mxu0 0.0
        %4773 = vmatprep.subr.mxu0 0.0
        %4774 = vmatpush1.msra.mxu0 0.0
        %4775 = vmatprep.subr.mxu0 0.0
        %4776 = vmatpush1.msra.mxu0 0.0
        %4777 = vmatprep.subr.mxu0 0.0
        %4778 = vmatpush1.msra.mxu0 0.0
        %4779 = vmatprep.subr.mxu0 0.0
        %4780 = vmatpush1.msra.mxu0 0.0
        %4781 = vmatprep.subr.mxu0 0.0
        %4782 = vmatpush1.msra.mxu0 0.0
        %4783 = vmatprep.subr.mxu0 0.0
        %4784 = vmatpush1.msra.mxu0 0.0
        %4785 = vmatprep.subr.mxu0 0.0
        %4786 = vmatpush1.msra.mxu0 0.0
        %4787 = vmatprep.subr.mxu0 0.0
        %4788 = vmatpush1.msra.mxu0 0.0
        %4789 = vmatprep.subr.mxu0 0.0
        %4790 = vmatpush1.msra.mxu0 0.0
        %4791 = vmatprep.subr.mxu0 0.0
        %4792 = vmatpush1.msra.mxu0 0.0
        %4793 = vmatprep.subr.mxu0 0.0
        %4794 = vmatpush1.msra.mxu0 0.0
        %4795 = vmatprep.subr.mxu0 0.0
        %4796 = vmatpush1.msra.mxu0 0.0
        %4797 = vmatprep.subr.mxu0 0.0
        %4798 = vmatpush1.msra.mxu0 0.0
        %4799 = vmatprep.subr.mxu0 0.0
        %4800 = vmatpush1.msra.mxu0 0.0
        %4801 = vmatprep.subr.mxu0 0.0
        %4802 = vmatpush1.msra.mxu0 0.0
        %4803 = vmatprep.subr.mxu0 0.0
        %4804 = vmatpush1.msra.mxu0 0.0
        %4805 = vmatprep.subr.mxu0 0.0
        %4806 = vmatpush1.msra.mxu0 0.0
        %4807 = vmatprep.subr.mxu0 0.0
        %4808 = vmatpush1.msra.mxu0 0.0
        %4809 = vmatprep.subr.mxu0 0.0
        %4810 = vmatpush1.msra.mxu0 0.0
        %4811 = vmatprep.mubr.f32.mxu0 0.0
        %4812 = vmatmul.mubr.f32.gmra.mrb[0].mxu0 %v3583
        %v4813 = vpop.f32.mrb[0].mxu0
        %v4814 = vadd.f32 0.0, %v4813
        %v4815 = vpop.f32.mrb[0].mxu0
        %4816 = vmatprep.mubr.f32.mxu0 0.0
        %4817 = vmatmul.mubr.f32.gmra.mrb[0].mxu0 %v3586
        %v4818 = vpop.f32.mrb[0].mxu0
        %v4819 = vadd.f32 0.0, %v4818
        %v4820 = vpop.f32.mrb[0].mxu0
        %4821 = vmatprep.mubr.f32.mxu0 0.0
        %4822 = vmatmul.mubr.f32.gmra.mrb[0].mxu0 %v3589
        %v4823 = vpop.f32.mrb[0].mxu0
        %v4824 = vadd.f32 0.0, %v4823
        %v4825 = vpop.f32.mrb[0].mxu0
        %4826 = vmatprep.mubr.f32.mxu0 0.0
        %4827 = vmatmul.mubr.f32.gmra.mrb[0].mxu0 %v3592
        %v4828 = vpop.f32.mrb[0].mxu0
        %v4829 = vadd.f32 0.0, %v4828
        %v4830 = vpop.f32.mrb[0].mxu0
        %4831 = vmatprep.mubr.f32.mxu0 0.0
        %4832 = vmatmul.mubr.f32.gmra.mrb[0].mxu0 %v3595
        %v4833 = vpop.f32.mrb[0].mxu0
        %v4834 = vadd.f32 0.0, %v4833
        %v4835 = vpop.f32.mrb[0].mxu0
        %4836 = vmatprep.mubr.f32.mxu0 0.0
        %4837 = vmatmul.mubr.f32.gmra.mrb[0].mxu0 %v3598
        %v4838 = vpop.f32.mrb[0].mxu0
        %v4839 = vadd.f32 0.0, %v4838
        %v4840 = vpop.f32.mrb[0].mxu0
        %4841 = vmatprep.mubr.f32.mxu0 0.0
        %4842 = vmatmul.mubr.f32.gmra.mrb[0].mxu0 %v3601
        %v4843 = vpop.f32.mrb[0].mxu0
        %v4844 = vadd.f32 0.0, %v4843
        %v4845 = vpop.f32.mrb[0].mxu0
        %4846 = vmatprep.mubr.f32.mxu0 0.0
        %4847 = vmatmul.mubr.f32.gmra.mrb[0].mxu0 %v3604
        %v4848 = vpop.f32.mrb[0].mxu0
        %v4849 = vadd.f32 0.0, %v4848
        %v4850 = vpop.f32.mrb[0].mxu0
        %4851 = vmatprep.mubr.f32.mxu0 0.0
        %4852 = vmatmul.mubr.f32.gmra.mrb[0].mxu0 %v3607
        %v4853 = vpop.f32.mrb[0].mxu0
        %v4854 = vadd.f32 0.0, %v4853
        %v4855 = vpop.f32.mrb[0].mxu0
        %4856 = vmatprep.mubr.f32.mxu0 0.0
        %4857 = vmatmul.mubr.f32.gmra.mrb[0].mxu0 %v3610
        %v4858 = vpop.f32.mrb[0].mxu0
        %v4859 = vadd.f32 0.0, %v4858
        %v4860 = vpop.f32.mrb[0].mxu0
        %4861 = vmatprep.mubr.f32.mxu0 0.0
        %4862 = vmatmul.mubr.f32.gmra.mrb[0].mxu0 %v3613
        %v4863 = vpop.f32.mrb[0].mxu0
        %v4864 = vadd.f32 0.0, %v4863
        %v4865 = vpop.f32.mrb[0].mxu0
        %4866 = vmatprep.mubr.f32.mxu0 0.0
        %4867 = vmatmul.mubr.f32.gmra.mrb[0].mxu0 %v3616
        %v4868 = vpop.f32.mrb[0].mxu0
        %v4869 = vadd.f32 0.0, %v4868
        %v4870 = vpop.f32.mrb[0].mxu0
        %4871 = vmatprep.mubr.f32.mxu0 0.0
        %4872 = vmatmul.mubr.f32.gmra.mrb[0].mxu0 %v3619
        %v4873 = vpop.f32.mrb[0].mxu0
        %v4874 = vadd.f32 0.0, %v4873
        %v4875 = vpop.f32.mrb[0].mxu0
        %4876 = vmatprep.mubr.f32.mxu0 0.0
        %4877 = vmatmul.mubr.f32.gmra.mrb[0].mxu0 %v3622
        %v4878 = vpop.f32.mrb[0].mxu0
        %v4879 = vadd.f32 0.0, %v4878
        %v4880 = vpop.f32.mrb[0].mxu0
        %4881 = vmatprep.mubr.f32.mxu0 0.0
        %4882 = vmatmul.mubr.f32.gmra.mrb[0].mxu0 %v3625
        %v4883 = vpop.f32.mrb[0].mxu0
        %v4884 = vadd.f32 0.0, %v4883
        %v4885 = vpop.f32.mrb[0].mxu0
        %4886 = vmatprep.mubr.f32.mxu0 0.0
        %4887 = vmatmul.mubr.f32.gmra.mrb[0].mxu0 %v3628
        %v4888 = vpop.f32.mrb[0].mxu0
        %v4889 = vadd.f32 0.0, %v4888
        %v4890 = vpop.f32.mrb[0].mxu0
        %4891 = vmatprep.mubr.f32.mxu0 0.0
        %4892 = vmatmul.mubr.f32.gmra.mrb[0].mxu0 %v3631
        %v4893 = vpop.f32.mrb[0].mxu0
        %v4894 = vadd.f32 0.0, %v4893
        %v4895 = vpop.f32.mrb[0].mxu0
        %4896 = vmatprep.mubr.f32.mxu0 0.0
        %4897 = vmatmul.mubr.f32.gmra.mrb[0].mxu0 %v3634
        %v4898 = vpop.f32.mrb[0].mxu0
        %v4899 = vadd.f32 0.0, %v4898
        %v4900 = vpop.f32.mrb[0].mxu0
        %4901 = vmatprep.mubr.f32.mxu0 0.0
        %4902 = vmatmul.mubr.f32.gmra.mrb[0].mxu0 %v3637
        %v4903 = vpop.f32.mrb[0].mxu0
        %v4904 = vadd.f32 0.0, %v4903
        %v4905 = vpop.f32.mrb[0].mxu0
        %4906 = vmatprep.mubr.f32.mxu0 0.0
        %4907 = vmatmul.mubr.f32.gmra.mrb[0].mxu0 %v3640
        %v4908 = vpop.f32.mrb[0].mxu0
        %v4909 = vadd.f32 0.0, %v4908
        %v4910 = vpop.f32.mrb[0].mxu0
        %4911 = vmatprep.mubr.f32.mxu0 0.0
        %4912 = vmatmul.mubr.f32.gmra.mrb[0].mxu0 %v3643
        %v4913 = vpop.f32.mrb[0].mxu0
        %v4914 = vadd.f32 0.0, %v4913
        %v4915 = vpop.f32.mrb[0].mxu0
        %4916 = vmatprep.mubr.f32.mxu0 0.0
        %4917 = vmatmul.mubr.f32.gmra.mrb[0].mxu0 %v3646
        %v4918 = vpop.f32.mrb[0].mxu0
        %v4919 = vadd.f32 0.0, %v4918
        %v4920 = vpop.f32.mrb[0].mxu0
        %4921 = vmatprep.mubr.f32.mxu0 0.0
        %4922 = vmatmul.mubr.f32.gmra.mrb[0].mxu0 %v3649
        %v4923 = vpop.f32.mrb[0].mxu0
        %v4924 = vadd.f32 0.0, %v4923
        %v4925 = vpop.f32.mrb[0].mxu0
        %4926 = vmatprep.mubr.f32.mxu0 0.0
        %4927 = vmatmul.mubr.f32.gmra.mrb[0].mxu0 %v3652
        %v4928 = vpop.f32.mrb[0].mxu0
        %v4929 = vadd.f32 0.0, %v4928
        %v4930 = vpop.f32.mrb[0].mxu0
        %4931 = vmatprep.mubr.f32.mxu0 0.0
        %4932 = vmatmul.mubr.f32.gmra.mrb[0].mxu0 %v3655
        %v4933 = vpop.f32.mrb[0].mxu0
        %v4934 = vadd.f32 0.0, %v4933
        %v4935 = vpop.f32.mrb[0].mxu0
        %4936 = vmatprep.mubr.f32.mxu0 0.0
        %4937 = vmatmul.mubr.f32.gmra.mrb[0].mxu0 %v3658
        %v4938 = vpop.f32.mrb[0].mxu0
        %v4939 = vadd.f32 0.0, %v4938
        %v4940 = vpop.f32.mrb[0].mxu0
        %4941 = vmatprep.mubr.f32.mxu0 0.0
        %4942 = vmatmul.mubr.f32.gmra.mrb[0].mxu0 %v3661
        %v4943 = vpop.f32.mrb[0].mxu0
        %v4944 = vadd.f32 0.0, %v4943
        %v4945 = vpop.f32.mrb[0].mxu0
        %4946 = vmatprep.mubr.f32.mxu0 0.0
        %4947 = vmatmul.mubr.f32.gmra.mrb[0].mxu0 %v3664
        %v4948 = vpop.f32.mrb[0].mxu0
        %v4949 = vadd.f32 0.0, %v4948
        %v4950 = vpop.f32.mrb[0].mxu0
        %4951 = vmatprep.mubr.f32.mxu0 0.0
        %4952 = vmatmul.mubr.f32.gmra.mrb[0].mxu0 %v3667
        %v4953 = vpop.f32.mrb[0].mxu0
        %v4954 = vadd.f32 0.0, %v4953
        %v4955 = vpop.f32.mrb[0].mxu0
        %4956 = vmatprep.mubr.f32.mxu0 0.0
        %4957 = vmatmul.mubr.f32.gmra.mrb[0].mxu0 %v3670
        %v4958 = vpop.f32.mrb[0].mxu0
        %v4959 = vadd.f32 0.0, %v4958
        %v4960 = vpop.f32.mrb[0].mxu0
        %4961 = vmatprep.mubr.f32.mxu0 0.0
        %4962 = vmatmul.mubr.f32.gmra.mrb[0].mxu0 %v3673
        %v4963 = vpop.f32.mrb[0].mxu0
        %v4964 = vadd.f32 0.0, %v4963
        %v4965 = vpop.f32.mrb[0].mxu0
        %4966 = vmatprep.mubr.f32.mxu0 0.0
        %4967 = vmatmul.mubr.f32.gmra.mrb[0].mxu0 %v3676
        %v4968 = vpop.f32.mrb[0].mxu0
        %v4969 = vadd.f32 0.0, %v4968
        %v4970 = vpop.f32.mrb[0].mxu0
        %4971 = vmatprep.mubr.f32.mxu0 0.0
        %4972 = vmatmul.mubr.f32.gmra.mrb[0].mxu0 %v3679
        %v4973 = vpop.f32.mrb[0].mxu0
        %v4974 = vadd.f32 0.0, %v4973
        %v4975 = vpop.f32.mrb[0].mxu0
        %4976 = vmatprep.mubr.f32.mxu0 0.0
        %4977 = vmatmul.mubr.f32.gmra.mrb[0].mxu0 %v3682
        %v4978 = vpop.f32.mrb[0].mxu0
        %v4979 = vadd.f32 0.0, %v4978
        %v4980 = vpop.f32.mrb[0].mxu0
        %4981 = vmatprep.mubr.f32.mxu0 0.0
        %4982 = vmatmul.mubr.f32.gmra.mrb[0].mxu0 %v3685
        %v4983 = vpop.f32.mrb[0].mxu0
        %v4984 = vadd.f32 0.0, %v4983
        %v4985 = vpop.f32.mrb[0].mxu0
        %4986 = vmatprep.mubr.f32.mxu0 0.0
        %4987 = vmatmul.mubr.f32.gmra.mrb[0].mxu0 %v3688
        %v4988 = vpop.f32.mrb[0].mxu0
        %v4989 = vadd.f32 0.0, %v4988
        %v4990 = vpop.f32.mrb[0].mxu0
        %4991 = vmatprep.mubr.f32.mxu0 0.0
        %4992 = vmatmul.mubr.f32.gmra.mrb[0].mxu0 %v3691
        %v4993 = vpop.f32.mrb[0].mxu0
        %v4994 = vadd.f32 0.0, %v4993
        %v4995 = vpop.f32.mrb[0].mxu0
        %4996 = vmatprep.mubr.f32.mxu0 0.0
        %4997 = vmatmul.mubr.f32.gmra.mrb[0].mxu0 %v3694
        %v4998 = vpop.f32.mrb[0].mxu0
        %v4999 = vadd.f32 0.0, %v4998
        %v5000 = vpop.f32.mrb[0].mxu0
        %5001 = vmatprep.mubr.f32.mxu0 0.0
        %5002 = vmatmul.mubr.f32.gmra.mrb[0].mxu0 %v3697
        %v5003 = vpop.f32.mrb[0].mxu0
        %v5004 = vadd.f32 0.0, %v5003
        %v5005 = vpop.f32.mrb[0].mxu0
        %5006 = vmatprep.mubr.f32.mxu0 0.0
        %5007 = vmatmul.mubr.f32.gmra.mrb[0].mxu0 %v3700
        %v5008 = vpop.f32.mrb[0].mxu0
        %v5009 = vadd.f32 0.0, %v5008
        %v5010 = vpop.f32.mrb[0].mxu0
        %5011 = vmatprep.mubr.f32.mxu0 0.0
        %5012 = vmatmul.mubr.f32.gmra.mrb[0].mxu0 %v3703
        %v5013 = vpop.f32.mrb[0].mxu0
        %v5014 = vadd.f32 0.0, %v5013
        %v5015 = vpop.f32.mrb[0].mxu0
        %5016 = vmatprep.mubr.f32.mxu0 0.0
        %5017 = vmatmul.mubr.f32.gmra.mrb[0].mxu0 %v3706
        %v5018 = vpop.f32.mrb[0].mxu0
        %v5019 = vadd.f32 0.0, %v5018
        %v5020 = vpop.f32.mrb[0].mxu0
        %5021 = vmatprep.mubr.f32.mxu0 0.0
        %5022 = vmatmul.mubr.f32.gmra.mrb[0].mxu0 %v3709
        %v5023 = vpop.f32.mrb[0].mxu0
        %v5024 = vadd.f32 0.0, %v5023
        %v5025 = vpop.f32.mrb[0].mxu0
        %5026 = vmatprep.mubr.f32.mxu0 0.0
        %5027 = vmatmul.mubr.f32.gmra.mrb[0].mxu0 %v3712
        %v5028 = vpop.f32.mrb[0].mxu0
        %v5029 = vadd.f32 0.0, %v5028
        %v5030 = vpop.f32.mrb[0].mxu0
        %5031 = vmatprep.mubr.f32.mxu0 0.0
        %5032 = vmatmul.mubr.f32.gmra.mrb[0].mxu0 %v3715
        %v5033 = vpop.f32.mrb[0].mxu0
        %v5034 = vadd.f32 0.0, %v5033
        %v5035 = vpop.f32.mrb[0].mxu0
        %5036 = vmatprep.mubr.f32.mxu0 0.0
        %5037 = vmatmul.mubr.f32.gmra.mrb[0].mxu0 %v3718
        %v5038 = vpop.f32.mrb[0].mxu0
        %v5039 = vadd.f32 0.0, %v5038
        %v5040 = vpop.f32.mrb[0].mxu0
        %5041 = vmatprep.mubr.f32.mxu0 0.0
        %5042 = vmatmul.mubr.f32.gmra.mrb[0].mxu0 %v3721
        %v5043 = vpop.f32.mrb[0].mxu0
        %v5044 = vadd.f32 0.0, %v5043
        %v5045 = vpop.f32.mrb[0].mxu0
        %5046 = vmatprep.mubr.f32.mxu0 0.0
        %5047 = vmatmul.mubr.f32.gmra.mrb[0].mxu0 %v3724
        %v5048 = vpop.f32.mrb[0].mxu0
        %v5049 = vadd.f32 0.0, %v5048
        %v5050 = vpop.f32.mrb[0].mxu0
        %5051 = vmatprep.mubr.f32.mxu0 0.0
        %5052 = vmatmul.mubr.f32.gmra.mrb[0].mxu0 %v3727
        %v5053 = vpop.f32.mrb[0].mxu0
        %v5054 = vadd.f32 0.0, %v5053
        %v5055 = vpop.f32.mrb[0].mxu0
        %5056 = vmatprep.mubr.f32.mxu0 0.0
        %5057 = vmatmul.mubr.f32.gmra.mrb[0].mxu0 %v3730
        %v5058 = vpop.f32.mrb[0].mxu0
        %v5059 = vadd.f32 0.0, %v5058
        %v5060 = vpop.f32.mrb[0].mxu0
        %5061 = vmatprep.mubr.f32.mxu0 0.0
        %5062 = vmatmul.mubr.f32.gmra.mrb[0].mxu0 %v3733
        %v5063 = vpop.f32.mrb[0].mxu0
        %v5064 = vadd.f32 0.0, %v5063
        %v5065 = vpop.f32.mrb[0].mxu0
        %5066 = vmatprep.mubr.f32.mxu0 0.0
        %5067 = vmatmul.mubr.f32.gmra.mrb[0].mxu0 %v3736
        %v5068 = vpop.f32.mrb[0].mxu0
        %v5069 = vadd.f32 0.0, %v5068
        %v5070 = vpop.f32.mrb[0].mxu0
        %5071 = vmatprep.mubr.f32.mxu0 0.0
        %5072 = vmatmul.mubr.f32.gmra.mrb[0].mxu0 %v3739
        %v5073 = vpop.f32.mrb[0].mxu0
        %v5074 = vadd.f32 0.0, %v5073
        %v5075 = vpop.f32.mrb[0].mxu0
        %5076 = vmatprep.mubr.f32.mxu0 0.0
        %5077 = vmatmul.mubr.f32.gmra.mrb[0].mxu0 %v3742
        %v5078 = vpop.f32.mrb[0].mxu0
        %v5079 = vadd.f32 0.0, %v5078
        %v5080 = vpop.f32.mrb[0].mxu0
        %5081 = vmatprep.mubr.f32.mxu0 0.0
        %5082 = vmatmul.mubr.f32.gmra.mrb[0].mxu0 %v3745
        %v5083 = vpop.f32.mrb[0].mxu0
        %v5084 = vadd.f32 0.0, %v5083
        %v5085 = vpop.f32.mrb[0].mxu0
        %5086 = vmatprep.mubr.f32.mxu0 0.0
        %5087 = vmatmul.mubr.f32.gmra.mrb[0].mxu0 %v3748
        %v5088 = vpop.f32.mrb[0].mxu0
        %v5089 = vadd.f32 0.0, %v5088
        %v5090 = vpop.f32.mrb[0].mxu0
        %5091 = vmatprep.mubr.f32.mxu0 0.0
        %5092 = vmatmul.mubr.f32.gmra.mrb[0].mxu0 %v3751
        %v5093 = vpop.f32.mrb[0].mxu0
        %v5094 = vadd.f32 0.0, %v5093
        %v5095 = vpop.f32.mrb[0].mxu0
        %5096 = vmatprep.mubr.f32.mxu0 0.0
        %5097 = vmatmul.mubr.f32.gmra.mrb[0].mxu0 %v3754
        %v5098 = vpop.f32.mrb[0].mxu0
        %v5099 = vadd.f32 0.0, %v5098
        %v5100 = vpop.f32.mrb[0].mxu0
        %5101 = vmatprep.mubr.f32.mxu0 0.0
        %5102 = vmatmul.mubr.f32.gmra.mrb[0].mxu0 %v3757
        %v5103 = vpop.f32.mrb[0].mxu0
        %v5104 = vadd.f32 0.0, %v5103
        %v5105 = vpop.f32.mrb[0].mxu0
        %5106 = vmatprep.mubr.f32.mxu0 0.0
        %5107 = vmatmul.mubr.f32.gmra.mrb[0].mxu0 %v3760
        %v5108 = vpop.f32.mrb[0].mxu0
        %v5109 = vadd.f32 0.0, %v5108
        %v5110 = vpop.f32.mrb[0].mxu0
        %5111 = vmatprep.mubr.f32.mxu0 0.0
        %5112 = vmatmul.mubr.f32.gmra.mrb[0].mxu0 %v3763
        %v5113 = vpop.f32.mrb[0].mxu0
        %v5114 = vadd.f32 0.0, %v5113
        %v5115 = vpop.f32.mrb[0].mxu0
        %5116 = vmatprep.mubr.f32.mxu0 0.0
        %5117 = vmatmul.mubr.f32.gmra.mrb[0].mxu0 %v3766
        %v5118 = vpop.f32.mrb[0].mxu0
        %v5119 = vadd.f32 0.0, %v5118
        %v5120 = vpop.f32.mrb[0].mxu0
        %5121 = vmatprep.mubr.f32.mxu0 0.0
        %5122 = vmatmul.mubr.f32.gmra.mrb[0].mxu0 %v3769
        %v5123 = vpop.f32.mrb[0].mxu0
        %v5124 = vadd.f32 0.0, %v5123
        %v5125 = vpop.f32.mrb[0].mxu0
        %5126 = vmatprep.mubr.f32.mxu0 0.0
        %5127 = vmatmul.mubr.f32.gmra.mrb[0].mxu0 %v3772
        %v5128 = vpop.f32.mrb[0].mxu0
        %v5129 = vadd.f32 0.0, %v5128
        %v5130 = vpop.f32.mrb[0].mxu0
        %5131 = vmatprep.mubr.f32.mxu0 0.0
        %5132 = vmatmul.mubr.f32.gmra.mrb[0].mxu0 %v3775
        %v5133 = vpop.f32.mrb[0].mxu0
        %v5134 = vadd.f32 0.0, %v5133
        %v5135 = vpop.f32.mrb[0].mxu0
        %5136 = vmatprep.mubr.f32.mxu0 0.0
        %5137 = vmatmul.mubr.f32.gmra.mrb[0].mxu0 %v3778
        %v5138 = vpop.f32.mrb[0].mxu0
        %v5139 = vadd.f32 0.0, %v5138
        %v5140 = vpop.f32.mrb[0].mxu0
        %5141 = vmatprep.mubr.f32.mxu0 0.0
        %5142 = vmatmul.mubr.f32.gmra.mrb[0].mxu0 %v3781
        %v5143 = vpop.f32.mrb[0].mxu0
        %v5144 = vadd.f32 0.0, %v5143
        %v5145 = vpop.f32.mrb[0].mxu0
        %5146 = vmatprep.mubr.f32.mxu0 0.0
        %5147 = vmatmul.mubr.f32.gmra.mrb[0].mxu0 %v3784
        %v5148 = vpop.f32.mrb[0].mxu0
        %v5149 = vadd.f32 0.0, %v5148
        %v5150 = vpop.f32.mrb[0].mxu0
        %5151 = vmatprep.mubr.f32.mxu0 0.0
        %5152 = vmatmul.mubr.f32.gmra.mrb[0].mxu0 %v3787
        %v5153 = vpop.f32.mrb[0].mxu0
        %v5154 = vadd.f32 0.0, %v5153
        %v5155 = vpop.f32.mrb[0].mxu0
        %5156 = vdwg.mxu0
        %s5157 = scalar_lea.vmem %s259, 2760
        %5158 = vst [vmem:[%s5157] sm:$0xff] %v3856
        %5159 = vst [vmem:[%s5157 + $0x8] sm:$0xff] %v3858
        %5160 = vst [vmem:[%s5157 + $0x10] sm:$0xff] %v4335
        %5161 = vst [vmem:[%s5157 + $0x18] sm:$0xff] %v4337
        %5162 = vst.msk [vmem:[%s5157 + $0x20] sm:$0xff] %vm2540, %v4814
        %5163 = vst [vmem:[%s5157 + $0x28] sm:$0xff] %v3862
        %5164 = vst [vmem:[%s5157 + $0x30] sm:$0xff] %v3864
        %5165 = vst [vmem:[%s5157 + $0x38] sm:$0xff] %v4341
        %5166 = vst [vmem:[%s5157 + $0x40] sm:$0xff] %v4343
        %5167 = vst.msk [vmem:[%s5157 + $0x48] sm:$0xff] %vm2540, %v4819
        %5168 = vst [vmem:[%s5157 + $0x50] sm:$0xff] %v3868
        %5169 = vst [vmem:[%s5157 + $0x58] sm:$0xff] %v3870
        %5170 = vst [vmem:[%s5157 + $0x60] sm:$0xff] %v4347
        %5171 = vst [vmem:[%s5157 + $0x68] sm:$0xff] %v4349
        %5172 = vst.msk [vmem:[%s5157 + $0x70] sm:$0xff] %vm2540, %v4824
        %5173 = vst [vmem:[%s5157 + $0x78] sm:$0xff] %v3874
        %5174 = vst [vmem:[%s5157 + $0x80] sm:$0xff] %v3876
        %5175 = vst [vmem:[%s5157 + $0x88] sm:$0xff] %v4353
        %5176 = vst [vmem:[%s5157 + $0x90] sm:$0xff] %v4355
        %5177 = vst.msk [vmem:[%s5157 + $0x98] sm:$0xff] %vm2540, %v4829
        %5178 = vst [vmem:[%s5157 + $0xa0] sm:$0xff] %v3880
        %5179 = vst [vmem:[%s5157 + $0xa8] sm:$0xff] %v3882
        %5180 = vst [vmem:[%s5157 + $0xb0] sm:$0xff] %v4359
        %5181 = vst [vmem:[%s5157 + $0xb8] sm:$0xff] %v4361
        %5182 = vst.msk [vmem:[%s5157 + $0xc0] sm:$0xff] %vm2540, %v4834
        %5183 = vst [vmem:[%s5157 + $0xc8] sm:$0xff] %v3886
        %5184 = vst [vmem:[%s5157 + $0xd0] sm:$0xff] %v3888
        %5185 = vst [vmem:[%s5157 + $0xd8] sm:$0xff] %v4365
        %5186 = vst [vmem:[%s5157 + $0xe0] sm:$0xff] %v4367
        %5187 = vst.msk [vmem:[%s5157 + $0xe8] sm:$0xff] %vm2540, %v4839
        %5188 = vst [vmem:[%s5157 + $0xf0] sm:$0xff] %v3892
        %5189 = vst [vmem:[%s5157 + $0xf8] sm:$0xff] %v3894
        %5190 = vst [vmem:[%s5157 + $0x100] sm:$0xff] %v4371
        %5191 = vst [vmem:[%s5157 + $0x108] sm:$0xff] %v4373
        %5192 = vst.msk [vmem:[%s5157 + $0x110] sm:$0xff] %vm2540, %v4844
        %5193 = vst [vmem:[%s5157 + $0x118] sm:$0xff] %v3898
        %5194 = vst [vmem:[%s5157 + $0x120] sm:$0xff] %v3900
        %5195 = vst [vmem:[%s5157 + $0x128] sm:$0xff] %v4377
        %5196 = vst [vmem:[%s5157 + $0x130] sm:$0xff] %v4379
        %5197 = vst.msk [vmem:[%s5157 + $0x138] sm:$0xff] %vm2540, %v4849
        %5198 = vst [vmem:[%s5157 + $0x140] sm:$0xff] %v3904
        %5199 = vst [vmem:[%s5157 + $0x148] sm:$0xff] %v3906
        %5200 = vst [vmem:[%s5157 + $0x150] sm:$0xff] %v4383
        %5201 = vst [vmem:[%s5157 + $0x158] sm:$0xff] %v4385
        %5202 = vst.msk [vmem:[%s5157 + $0x160] sm:$0xff] %vm2540, %v4854
        %5203 = vst [vmem:[%s5157 + $0x168] sm:$0xff] %v3910
        %5204 = vst [vmem:[%s5157 + $0x170] sm:$0xff] %v3912
        %5205 = vst [vmem:[%s5157 + $0x178] sm:$0xff] %v4389
        %5206 = vst [vmem:[%s5157 + $0x180] sm:$0xff] %v4391
        %5207 = vst.msk [vmem:[%s5157 + $0x188] sm:$0xff] %vm2540, %v4859
        %5208 = vst [vmem:[%s5157 + $0x190] sm:$0xff] %v3916
        %5209 = vst [vmem:[%s5157 + $0x198] sm:$0xff] %v3918
        %5210 = vst [vmem:[%s5157 + $0x1a0] sm:$0xff] %v4395
        %5211 = vst [vmem:[%s5157 + $0x1a8] sm:$0xff] %v4397
        %5212 = vst.msk [vmem:[%s5157 + $0x1b0] sm:$0xff] %vm2540, %v4864
        %5213 = vst [vmem:[%s5157 + $0x1b8] sm:$0xff] %v3922
        %5214 = vst [vmem:[%s5157 + $0x1c0] sm:$0xff] %v3924
        %5215 = vst [vmem:[%s5157 + $0x1c8] sm:$0xff] %v4401
        %5216 = vst [vmem:[%s5157 + $0x1d0] sm:$0xff] %v4403
        %5217 = vst.msk [vmem:[%s5157 + $0x1d8] sm:$0xff] %vm2540, %v4869
        %5218 = vst [vmem:[%s5157 + $0x1e0] sm:$0xff] %v3928
        %5219 = vst [vmem:[%s5157 + $0x1e8] sm:$0xff] %v3930
        %5220 = vst [vmem:[%s5157 + $0x1f0] sm:$0xff] %v4407
        %5221 = vst [vmem:[%s5157 + $0x1f8] sm:$0xff] %v4409
        %5222 = vst.msk [vmem:[%s5157 + $0x200] sm:$0xff] %vm2540, %v4874
        %5223 = vst [vmem:[%s5157 + $0x208] sm:$0xff] %v3934
        %5224 = vst [vmem:[%s5157 + $0x210] sm:$0xff] %v3936
        %5225 = vst [vmem:[%s5157 + $0x218] sm:$0xff] %v4413
        %5226 = vst [vmem:[%s5157 + $0x220] sm:$0xff] %v4415
        %5227 = vst.msk [vmem:[%s5157 + $0x228] sm:$0xff] %vm2540, %v4879
        %5228 = vst [vmem:[%s5157 + $0x230] sm:$0xff] %v3940
        %5229 = vst [vmem:[%s5157 + $0x238] sm:$0xff] %v3942
        %5230 = vst [vmem:[%s5157 + $0x240] sm:$0xff] %v4419
        %5231 = vst [vmem:[%s5157 + $0x248] sm:$0xff] %v4421
        %5232 = vst.msk [vmem:[%s5157 + $0x250] sm:$0xff] %vm2540, %v4884
        %5233 = vst [vmem:[%s5157 + $0x258] sm:$0xff] %v3946
        %5234 = vst [vmem:[%s5157 + $0x260] sm:$0xff] %v3948
        %5235 = vst [vmem:[%s5157 + $0x268] sm:$0xff] %v4425
        %5236 = vst [vmem:[%s5157 + $0x270] sm:$0xff] %v4427
        %5237 = vst.msk [vmem:[%s5157 + $0x278] sm:$0xff] %vm2540, %v4889
        %5238 = vst [vmem:[%s5157 + $0x280] sm:$0xff] %v3952
        %5239 = vst [vmem:[%s5157 + $0x288] sm:$0xff] %v3954
        %5240 = vst [vmem:[%s5157 + $0x290] sm:$0xff] %v4431
        %5241 = vst [vmem:[%s5157 + $0x298] sm:$0xff] %v4433
        %5242 = vst.msk [vmem:[%s5157 + $0x2a0] sm:$0xff] %vm2540, %v4894
        %5243 = vst [vmem:[%s5157 + $0x2a8] sm:$0xff] %v3958
        %5244 = vst [vmem:[%s5157 + $0x2b0] sm:$0xff] %v3960
        %5245 = vst [vmem:[%s5157 + $0x2b8] sm:$0xff] %v4437
        %5246 = vst [vmem:[%s5157 + $0x2c0] sm:$0xff] %v4439
        %5247 = vst.msk [vmem:[%s5157 + $0x2c8] sm:$0xff] %vm2540, %v4899
        %5248 = vst [vmem:[%s5157 + $0x2d0] sm:$0xff] %v3964
        %5249 = vst [vmem:[%s5157 + $0x2d8] sm:$0xff] %v3966
        %5250 = vst [vmem:[%s5157 + $0x2e0] sm:$0xff] %v4443
        %5251 = vst [vmem:[%s5157 + $0x2e8] sm:$0xff] %v4445
        %5252 = vst.msk [vmem:[%s5157 + $0x2f0] sm:$0xff] %vm2540, %v4904
        %5253 = vst [vmem:[%s5157 + $0x2f8] sm:$0xff] %v3970
        %5254 = vst [vmem:[%s5157 + $0x300] sm:$0xff] %v3972
        %5255 = vst [vmem:[%s5157 + $0x308] sm:$0xff] %v4449
        %5256 = vst [vmem:[%s5157 + $0x310] sm:$0xff] %v4451
        %5257 = vst.msk [vmem:[%s5157 + $0x318] sm:$0xff] %vm2540, %v4909
        %5258 = vst [vmem:[%s5157 + $0x320] sm:$0xff] %v3976
        %5259 = vst [vmem:[%s5157 + $0x328] sm:$0xff] %v3978
        %5260 = vst [vmem:[%s5157 + $0x330] sm:$0xff] %v4455
        %5261 = vst [vmem:[%s5157 + $0x338] sm:$0xff] %v4457
        %5262 = vst.msk [vmem:[%s5157 + $0x340] sm:$0xff] %vm2540, %v4914
        %5263 = vst [vmem:[%s5157 + $0x348] sm:$0xff] %v3982
        %5264 = vst [vmem:[%s5157 + $0x350] sm:$0xff] %v3984
        %5265 = vst [vmem:[%s5157 + $0x358] sm:$0xff] %v4461
        %5266 = vst [vmem:[%s5157 + $0x360] sm:$0xff] %v4463
        %5267 = vst.msk [vmem:[%s5157 + $0x368] sm:$0xff] %vm2540, %v4919
        %5268 = vst [vmem:[%s5157 + $0x370] sm:$0xff] %v3988
        %5269 = vst [vmem:[%s5157 + $0x378] sm:$0xff] %v3990
        %5270 = vst [vmem:[%s5157 + $0x380] sm:$0xff] %v4467
        %5271 = vst [vmem:[%s5157 + $0x388] sm:$0xff] %v4469
        %5272 = vst.msk [vmem:[%s5157 + $0x390] sm:$0xff] %vm2540, %v4924
        %5273 = vst [vmem:[%s5157 + $0x398] sm:$0xff] %v3994
        %5274 = vst [vmem:[%s5157 + $0x3a0] sm:$0xff] %v3996
        %5275 = vst [vmem:[%s5157 + $0x3a8] sm:$0xff] %v4473
        %5276 = vst [vmem:[%s5157 + $0x3b0] sm:$0xff] %v4475
        %5277 = vst.msk [vmem:[%s5157 + $0x3b8] sm:$0xff] %vm2540, %v4929
        %5278 = vst [vmem:[%s5157 + $0x3c0] sm:$0xff] %v4000
        %5279 = vst [vmem:[%s5157 + $0x3c8] sm:$0xff] %v4002
        %5280 = vst [vmem:[%s5157 + $0x3d0] sm:$0xff] %v4479
        %5281 = vst [vmem:[%s5157 + $0x3d8] sm:$0xff] %v4481
        %5282 = vst.msk [vmem:[%s5157 + $0x3e0] sm:$0xff] %vm2540, %v4934
        %5283 = vst [vmem:[%s5157 + $0x3e8] sm:$0xff] %v4006
        %5284 = vst [vmem:[%s5157 + $0x3f0] sm:$0xff] %v4008
        %5285 = vst [vmem:[%s5157 + $0x3f8] sm:$0xff] %v4485
        %5286 = vst [vmem:[%s5157 + $0x400] sm:$0xff] %v4487
        %5287 = vst.msk [vmem:[%s5157 + $0x408] sm:$0xff] %vm2540, %v4939
        %5288 = vst [vmem:[%s5157 + $0x410] sm:$0xff] %v4012
        %5289 = vst [vmem:[%s5157 + $0x418] sm:$0xff] %v4014
        %5290 = vst [vmem:[%s5157 + $0x420] sm:$0xff] %v4491
        %5291 = vst [vmem:[%s5157 + $0x428] sm:$0xff] %v4493
        %5292 = vst.msk [vmem:[%s5157 + $0x430] sm:$0xff] %vm2540, %v4944
        %5293 = vst [vmem:[%s5157 + $0x438] sm:$0xff] %v4018
        %5294 = vst [vmem:[%s5157 + $0x440] sm:$0xff] %v4020
        %5295 = vst [vmem:[%s5157 + $0x448] sm:$0xff] %v4497
        %5296 = vst [vmem:[%s5157 + $0x450] sm:$0xff] %v4499
        %5297 = vst.msk [vmem:[%s5157 + $0x458] sm:$0xff] %vm2540, %v4949
        %5298 = vst [vmem:[%s5157 + $0x460] sm:$0xff] %v4024
        %5299 = vst [vmem:[%s5157 + $0x468] sm:$0xff] %v4026
        %5300 = vst [vmem:[%s5157 + $0x470] sm:$0xff] %v4503
        %5301 = vst [vmem:[%s5157 + $0x478] sm:$0xff] %v4505
        %5302 = vst.msk [vmem:[%s5157 + $0x480] sm:$0xff] %vm2540, %v4954
        %5303 = vst [vmem:[%s5157 + $0x488] sm:$0xff] %v4030
        %5304 = vst [vmem:[%s5157 + $0x490] sm:$0xff] %v4032
        %5305 = vst [vmem:[%s5157 + $0x498] sm:$0xff] %v4509
        %5306 = vst [vmem:[%s5157 + $0x4a0] sm:$0xff] %v4511
        %5307 = vst.msk [vmem:[%s5157 + $0x4a8] sm:$0xff] %vm2540, %v4959
        %5308 = vst [vmem:[%s5157 + $0x4b0] sm:$0xff] %v4036
        %5309 = vst [vmem:[%s5157 + $0x4b8] sm:$0xff] %v4038
        %5310 = vst [vmem:[%s5157 + $0x4c0] sm:$0xff] %v4515
        %5311 = vst [vmem:[%s5157 + $0x4c8] sm:$0xff] %v4517
        %5312 = vst.msk [vmem:[%s5157 + $0x4d0] sm:$0xff] %vm2540, %v4964
        %5313 = vst [vmem:[%s5157 + $0x4d8] sm:$0xff] %v4042
        %5314 = vst [vmem:[%s5157 + $0x4e0] sm:$0xff] %v4044
        %5315 = vst [vmem:[%s5157 + $0x4e8] sm:$0xff] %v4521
        %5316 = vst [vmem:[%s5157 + $0x4f0] sm:$0xff] %v4523
        %5317 = vst.msk [vmem:[%s5157 + $0x4f8] sm:$0xff] %vm2540, %v4969
        %5318 = vst [vmem:[%s5157 + $0x500] sm:$0xff] %v4048
        %5319 = vst [vmem:[%s5157 + $0x508] sm:$0xff] %v4050
        %5320 = vst [vmem:[%s5157 + $0x510] sm:$0xff] %v4527
        %5321 = vst [vmem:[%s5157 + $0x518] sm:$0xff] %v4529
        %5322 = vst.msk [vmem:[%s5157 + $0x520] sm:$0xff] %vm2540, %v4974
        %5323 = vst [vmem:[%s5157 + $0x528] sm:$0xff] %v4054
        %5324 = vst [vmem:[%s5157 + $0x530] sm:$0xff] %v4056
        %5325 = vst [vmem:[%s5157 + $0x538] sm:$0xff] %v4533
        %5326 = vst [vmem:[%s5157 + $0x540] sm:$0xff] %v4535
        %5327 = vst.msk [vmem:[%s5157 + $0x548] sm:$0xff] %vm2540, %v4979
        %5328 = vst [vmem:[%s5157 + $0x550] sm:$0xff] %v4060
        %5329 = vst [vmem:[%s5157 + $0x558] sm:$0xff] %v4062
        %5330 = vst [vmem:[%s5157 + $0x560] sm:$0xff] %v4539
        %5331 = vst [vmem:[%s5157 + $0x568] sm:$0xff] %v4541
        %5332 = vst.msk [vmem:[%s5157 + $0x570] sm:$0xff] %vm2540, %v4984
        %5333 = vst [vmem:[%s5157 + $0x578] sm:$0xff] %v4066
        %5334 = vst [vmem:[%s5157 + $0x580] sm:$0xff] %v4068
        %5335 = vst [vmem:[%s5157 + $0x588] sm:$0xff] %v4545
        %5336 = vst [vmem:[%s5157 + $0x590] sm:$0xff] %v4547
        %5337 = vst.msk [vmem:[%s5157 + $0x598] sm:$0xff] %vm2540, %v4989
        %5338 = vst [vmem:[%s5157 + $0x5a0] sm:$0xff] %v4072
        %5339 = vst [vmem:[%s5157 + $0x5a8] sm:$0xff] %v4074
        %5340 = vst [vmem:[%s5157 + $0x5b0] sm:$0xff] %v4551
        %5341 = vst [vmem:[%s5157 + $0x5b8] sm:$0xff] %v4553
        %5342 = vst.msk [vmem:[%s5157 + $0x5c0] sm:$0xff] %vm2540, %v4994
        %5343 = vst [vmem:[%s5157 + $0x5c8] sm:$0xff] %v4078
        %5344 = vst [vmem:[%s5157 + $0x5d0] sm:$0xff] %v4080
        %5345 = vst [vmem:[%s5157 + $0x5d8] sm:$0xff] %v4557
        %5346 = vst [vmem:[%s5157 + $0x5e0] sm:$0xff] %v4559
        %5347 = vst.msk [vmem:[%s5157 + $0x5e8] sm:$0xff] %vm2540, %v4999
        %5348 = vst [vmem:[%s5157 + $0x5f0] sm:$0xff] %v4084
        %5349 = vst [vmem:[%s5157 + $0x5f8] sm:$0xff] %v4086
        %5350 = vst [vmem:[%s5157 + $0x600] sm:$0xff] %v4563
        %5351 = vst [vmem:[%s5157 + $0x608] sm:$0xff] %v4565
        %5352 = vst.msk [vmem:[%s5157 + $0x610] sm:$0xff] %vm2540, %v5004
        %5353 = vst [vmem:[%s5157 + $0x618] sm:$0xff] %v4090
        %5354 = vst [vmem:[%s5157 + $0x620] sm:$0xff] %v4092
        %5355 = vst [vmem:[%s5157 + $0x628] sm:$0xff] %v4569
        %5356 = vst [vmem:[%s5157 + $0x630] sm:$0xff] %v4571
        %5357 = vst.msk [vmem:[%s5157 + $0x638] sm:$0xff] %vm2540, %v5009
        %5358 = vst [vmem:[%s5157 + $0x640] sm:$0xff] %v4096
        %5359 = vst [vmem:[%s5157 + $0x648] sm:$0xff] %v4098
        %5360 = vst [vmem:[%s5157 + $0x650] sm:$0xff] %v4575
        %5361 = vst [vmem:[%s5157 + $0x658] sm:$0xff] %v4577
        %5362 = vst.msk [vmem:[%s5157 + $0x660] sm:$0xff] %vm2540, %v5014
        %5363 = vst [vmem:[%s5157 + $0x668] sm:$0xff] %v4102
        %5364 = vst [vmem:[%s5157 + $0x670] sm:$0xff] %v4104
        %5365 = vst [vmem:[%s5157 + $0x678] sm:$0xff] %v4581
        %5366 = vst [vmem:[%s5157 + $0x680] sm:$0xff] %v4583
        %5367 = vst.msk [vmem:[%s5157 + $0x688] sm:$0xff] %vm2540, %v5019
        %5368 = vst [vmem:[%s5157 + $0x690] sm:$0xff] %v4108
        %5369 = vst [vmem:[%s5157 + $0x698] sm:$0xff] %v4110
        %5370 = vst [vmem:[%s5157 + $0x6a0] sm:$0xff] %v4587
        %5371 = vst [vmem:[%s5157 + $0x6a8] sm:$0xff] %v4589
        %5372 = vst.msk [vmem:[%s5157 + $0x6b0] sm:$0xff] %vm2540, %v5024
        %5373 = vst [vmem:[%s5157 + $0x6b8] sm:$0xff] %v4114
        %5374 = vst [vmem:[%s5157 + $0x6c0] sm:$0xff] %v4116
        %5375 = vst [vmem:[%s5157 + $0x6c8] sm:$0xff] %v4593
        %5376 = vst [vmem:[%s5157 + $0x6d0] sm:$0xff] %v4595
        %5377 = vst.msk [vmem:[%s5157 + $0x6d8] sm:$0xff] %vm2540, %v5029
        %5378 = vst [vmem:[%s5157 + $0x6e0] sm:$0xff] %v4120
        %5379 = vst [vmem:[%s5157 + $0x6e8] sm:$0xff] %v4122
        %5380 = vst [vmem:[%s5157 + $0x6f0] sm:$0xff] %v4599
        %5381 = vst [vmem:[%s5157 + $0x6f8] sm:$0xff] %v4601
        %5382 = vst.msk [vmem:[%s5157 + $0x700] sm:$0xff] %vm2540, %v5034
        %5383 = vst [vmem:[%s5157 + $0x708] sm:$0xff] %v4126
        %5384 = vst [vmem:[%s5157 + $0x710] sm:$0xff] %v4128
        %5385 = vst [vmem:[%s5157 + $0x718] sm:$0xff] %v4605
        %5386 = vst [vmem:[%s5157 + $0x720] sm:$0xff] %v4607
        %5387 = vst.msk [vmem:[%s5157 + $0x728] sm:$0xff] %vm2540, %v5039
        %5388 = vst [vmem:[%s5157 + $0x730] sm:$0xff] %v4132
        %5389 = vst [vmem:[%s5157 + $0x738] sm:$0xff] %v4134
        %5390 = vst [vmem:[%s5157 + $0x740] sm:$0xff] %v4611
        %5391 = vst [vmem:[%s5157 + $0x748] sm:$0xff] %v4613
        %5392 = vst.msk [vmem:[%s5157 + $0x750] sm:$0xff] %vm2540, %v5044
        %5393 = vst [vmem:[%s5157 + $0x758] sm:$0xff] %v4138
        %5394 = vst [vmem:[%s5157 + $0x760] sm:$0xff] %v4140
        %5395 = vst [vmem:[%s5157 + $0x768] sm:$0xff] %v4617
        %5396 = vst [vmem:[%s5157 + $0x770] sm:$0xff] %v4619
        %5397 = vst.msk [vmem:[%s5157 + $0x778] sm:$0xff] %vm2540, %v5049
        %5398 = vst [vmem:[%s5157 + $0x780] sm:$0xff] %v4144
        %5399 = vst [vmem:[%s5157 + $0x788] sm:$0xff] %v4146
        %5400 = vst [vmem:[%s5157 + $0x790] sm:$0xff] %v4623
        %5401 = vst [vmem:[%s5157 + $0x798] sm:$0xff] %v4625
        %5402 = vst.msk [vmem:[%s5157 + $0x7a0] sm:$0xff] %vm2540, %v5054
        %5403 = vst [vmem:[%s5157 + $0x7a8] sm:$0xff] %v4150
        %5404 = vst [vmem:[%s5157 + $0x7b0] sm:$0xff] %v4152
        %5405 = vst [vmem:[%s5157 + $0x7b8] sm:$0xff] %v4629
        %5406 = vst [vmem:[%s5157 + $0x7c0] sm:$0xff] %v4631
        %5407 = vst.msk [vmem:[%s5157 + $0x7c8] sm:$0xff] %vm2540, %v5059
        %5408 = vst [vmem:[%s5157 + $0x7d0] sm:$0xff] %v4156
        %5409 = vst [vmem:[%s5157 + $0x7d8] sm:$0xff] %v4158
        %5410 = vst [vmem:[%s5157 + $0x7e0] sm:$0xff] %v4635
        %5411 = vst [vmem:[%s5157 + $0x7e8] sm:$0xff] %v4637
        %5412 = vst.msk [vmem:[%s5157 + $0x7f0] sm:$0xff] %vm2540, %v5064
        %5413 = vst [vmem:[%s5157 + $0x7f8] sm:$0xff] %v4162
        %5414 = vst [vmem:[%s5157 + $0x800] sm:$0xff] %v4164
        %5415 = vst [vmem:[%s5157 + $0x808] sm:$0xff] %v4641
        %5416 = vst [vmem:[%s5157 + $0x810] sm:$0xff] %v4643
        %5417 = vst.msk [vmem:[%s5157 + $0x818] sm:$0xff] %vm2540, %v5069
        %5418 = vst [vmem:[%s5157 + $0x820] sm:$0xff] %v4168
        %5419 = vst [vmem:[%s5157 + $0x828] sm:$0xff] %v4170
        %5420 = vst [vmem:[%s5157 + $0x830] sm:$0xff] %v4647
        %5421 = vst [vmem:[%s5157 + $0x838] sm:$0xff] %v4649
        %5422 = vst.msk [vmem:[%s5157 + $0x840] sm:$0xff] %vm2540, %v5074
        %5423 = vst [vmem:[%s5157 + $0x848] sm:$0xff] %v4174
        %5424 = vst [vmem:[%s5157 + $0x850] sm:$0xff] %v4176
        %5425 = vst [vmem:[%s5157 + $0x858] sm:$0xff] %v4653
        %5426 = vst [vmem:[%s5157 + $0x860] sm:$0xff] %v4655
        %5427 = vst.msk [vmem:[%s5157 + $0x868] sm:$0xff] %vm2540, %v5079
        %5428 = vst [vmem:[%s5157 + $0x870] sm:$0xff] %v4180
        %5429 = vst [vmem:[%s5157 + $0x878] sm:$0xff] %v4182
        %5430 = vst [vmem:[%s5157 + $0x880] sm:$0xff] %v4659
        %5431 = vst [vmem:[%s5157 + $0x888] sm:$0xff] %v4661
        %5432 = vst.msk [vmem:[%s5157 + $0x890] sm:$0xff] %vm2540, %v5084
        %5433 = vst [vmem:[%s5157 + $0x898] sm:$0xff] %v4186
        %5434 = vst [vmem:[%s5157 + $0x8a0] sm:$0xff] %v4188
        %5435 = vst [vmem:[%s5157 + $0x8a8] sm:$0xff] %v4665
        %5436 = vst [vmem:[%s5157 + $0x8b0] sm:$0xff] %v4667
        %5437 = vst.msk [vmem:[%s5157 + $0x8b8] sm:$0xff] %vm2540, %v5089
        %5438 = vst [vmem:[%s5157 + $0x8c0] sm:$0xff] %v4192
        %5439 = vst [vmem:[%s5157 + $0x8c8] sm:$0xff] %v4194
        %5440 = vst [vmem:[%s5157 + $0x8d0] sm:$0xff] %v4671
        %5441 = vst [vmem:[%s5157 + $0x8d8] sm:$0xff] %v4673
        %5442 = vst.msk [vmem:[%s5157 + $0x8e0] sm:$0xff] %vm2540, %v5094
        %5443 = vst [vmem:[%s5157 + $0x8e8] sm:$0xff] %v4198
        %5444 = vst [vmem:[%s5157 + $0x8f0] sm:$0xff] %v4200
        %5445 = vst [vmem:[%s5157 + $0x8f8] sm:$0xff] %v4677
        %5446 = vst [vmem:[%s5157 + $0x900] sm:$0xff] %v4679
        %5447 = vst.msk [vmem:[%s5157 + $0x908] sm:$0xff] %vm2540, %v5099
        %5448 = vst [vmem:[%s5157 + $0x910] sm:$0xff] %v4204
        %5449 = vst [vmem:[%s5157 + $0x918] sm:$0xff] %v4206
        %5450 = vst [vmem:[%s5157 + $0x920] sm:$0xff] %v4683
        %5451 = vst [vmem:[%s5157 + $0x928] sm:$0xff] %v4685
        %5452 = vst.msk [vmem:[%s5157 + $0x930] sm:$0xff] %vm2540, %v5104
        %5453 = vst [vmem:[%s5157 + $0x938] sm:$0xff] %v4210
        %5454 = vst [vmem:[%s5157 + $0x940] sm:$0xff] %v4212
        %5455 = vst [vmem:[%s5157 + $0x948] sm:$0xff] %v4689
        %5456 = vst [vmem:[%s5157 + $0x950] sm:$0xff] %v4691
        %5457 = vst.msk [vmem:[%s5157 + $0x958] sm:$0xff] %vm2540, %v5109
        %5458 = vst [vmem:[%s5157 + $0x960] sm:$0xff] %v4216
        %5459 = vst [vmem:[%s5157 + $0x968] sm:$0xff] %v4218
        %5460 = vst [vmem:[%s5157 + $0x970] sm:$0xff] %v4695
        %5461 = vst [vmem:[%s5157 + $0x978] sm:$0xff] %v4697
        %5462 = vst.msk [vmem:[%s5157 + $0x980] sm:$0xff] %vm2540, %v5114
        %5463 = vst [vmem:[%s5157 + $0x988] sm:$0xff] %v4222
        %5464 = vst [vmem:[%s5157 + $0x990] sm:$0xff] %v4224
        %5465 = vst [vmem:[%s5157 + $0x998] sm:$0xff] %v4701
        %5466 = vst [vmem:[%s5157 + $0x9a0] sm:$0xff] %v4703
        %5467 = vst.msk [vmem:[%s5157 + $0x9a8] sm:$0xff] %vm2540, %v5119
        %5468 = vst [vmem:[%s5157 + $0x9b0] sm:$0xff] %v4228
        %5469 = vst [vmem:[%s5157 + $0x9b8] sm:$0xff] %v4230
        %5470 = vst [vmem:[%s5157 + $0x9c0] sm:$0xff] %v4707
        %5471 = vst [vmem:[%s5157 + $0x9c8] sm:$0xff] %v4709
        %5472 = vst.msk [vmem:[%s5157 + $0x9d0] sm:$0xff] %vm2540, %v5124
        %5473 = vst [vmem:[%s5157 + $0x9d8] sm:$0xff] %v4234
        %5474 = vst [vmem:[%s5157 + $0x9e0] sm:$0xff] %v4236
        %5475 = vst [vmem:[%s5157 + $0x9e8] sm:$0xff] %v4713
        %5476 = vst [vmem:[%s5157 + $0x9f0] sm:$0xff] %v4715
        %5477 = vst.msk [vmem:[%s5157 + $0x9f8] sm:$0xff] %vm2540, %v5129
        %5478 = vst [vmem:[%s5157 + $0xa00] sm:$0xff] %v4240
        %5479 = vst [vmem:[%s5157 + $0xa08] sm:$0xff] %v4242
        %5480 = vst [vmem:[%s5157 + $0xa10] sm:$0xff] %v4719
        %5481 = vst [vmem:[%s5157 + $0xa18] sm:$0xff] %v4721
        %5482 = vst.msk [vmem:[%s5157 + $0xa20] sm:$0xff] %vm2540, %v5134
        %5483 = vst [vmem:[%s5157 + $0xa28] sm:$0xff] %v4246
        %5484 = vst [vmem:[%s5157 + $0xa30] sm:$0xff] %v4248
        %5485 = vst [vmem:[%s5157 + $0xa38] sm:$0xff] %v4725
        %5486 = vst [vmem:[%s5157 + $0xa40] sm:$0xff] %v4727
        %5487 = vst.msk [vmem:[%s5157 + $0xa48] sm:$0xff] %vm2540, %v5139
        %5488 = vst [vmem:[%s5157 + $0xa50] sm:$0xff] %v4252
        %5489 = vst [vmem:[%s5157 + $0xa58] sm:$0xff] %v4254
        %5490 = vst [vmem:[%s5157 + $0xa60] sm:$0xff] %v4731
        %5491 = vst [vmem:[%s5157 + $0xa68] sm:$0xff] %v4733
        %5492 = vst.msk [vmem:[%s5157 + $0xa70] sm:$0xff] %vm2540, %v5144
        %5493 = vst [vmem:[%s5157 + $0xa78] sm:$0xff] %v4258
        %5494 = vst [vmem:[%s5157 + $0xa80] sm:$0xff] %v4260
        %5495 = vst [vmem:[%s5157 + $0xa88] sm:$0xff] %v4737
        %5496 = vst [vmem:[%s5157 + $0xa90] sm:$0xff] %v4739
        %5497 = vst.msk [vmem:[%s5157 + $0xa98] sm:$0xff] %vm2540, %v5149
        %5498 = vst [vmem:[%s5157 + $0xaa0] sm:$0x3f] %v4264
        %5499 = vst [vmem:[%s5157 + $0xaa8] sm:$0x3f] %v4266
        %5500 = vst [vmem:[%s5157 + $0xab0] sm:$0x3f] %v4743
        %5501 = vst [vmem:[%s5157 + $0xab8] sm:$0x3f] %v4745
        %5502 = vst.msk [vmem:[%s5157 + $0xac0] sm:$0x3f] %vm2881, %v5154
        %v5503 = vld [vmem:[%s204] sm:$0xff]
        %v5504 = vld [vmem:[%s204 + $0x8] sm:$0xff]
        %v5505 = vld [vmem:[%s248] sm:$0xff]
        %v5506 = vld [vmem:[%s248 + $0x8] sm:$0xff]
        %v5507 = vld [vmem:[%s248 + $0x10] sm:$0xff]
        %v5508 = vld [vmem:[%s248 + $0x18] sm:$0xff]
        %v5509 = vld [vmem:[%s248 + $0x20] sm:$0xff]
        %v5510 = vld [vmem:[%s248 + $0x28] sm:$0xff]
        %v5511 = vld [vmem:[%s248 + $0x30] sm:$0xff]
        %v5512 = vld [vmem:[%s248 + $0x38] sm:$0xff]
        %v5513 = vld [vmem:[%s248 + $0x40] sm:$0xff]
        %v5514 = vld [vmem:[%s248 + $0x48] sm:$0xff]
        %v5515 = vld [vmem:[%s248 + $0x50] sm:$0xff]
        %v5516 = vld [vmem:[%s248 + $0x58] sm:$0xff]
        %v5517 = vld [vmem:[%s248 + $0x60] sm:$0xff]
        %v5518 = vld [vmem:[%s248 + $0x68] sm:$0xff]
        %v5519 = vld [vmem:[%s248 + $0x70] sm:$0xff]
        %v5520 = vld [vmem:[%s248 + $0x78] sm:$0xff]
        %v5521 = vld [vmem:[%s248 + $0x80] sm:$0xff]
        %v5522 = vld [vmem:[%s248 + $0x88] sm:$0xff]
        %v5523 = vld [vmem:[%s248 + $0x90] sm:$0xff]
        %v5524 = vld [vmem:[%s248 + $0x98] sm:$0xff]
        %v5525 = vld [vmem:[%s248 + $0xa0] sm:$0xff]
        %v5526 = vld [vmem:[%s248 + $0xa8] sm:$0xff]
        %v5527 = vld [vmem:[%s248 + $0xb0] sm:$0xff]
        %v5528 = vld [vmem:[%s248 + $0xb8] sm:$0xff]
        %v5529 = vld [vmem:[%s248 + $0xc0] sm:$0xff]
        %v5530 = vld [vmem:[%s248 + $0xc8] sm:$0xff]
        %v5531 = vld [vmem:[%s248 + $0xd0] sm:$0xff]
        %v5532 = vld [vmem:[%s248 + $0xd8] sm:$0xff]
        %v5533 = vld [vmem:[%s248 + $0xe0] sm:$0xff]
        %v5534 = vld [vmem:[%s248 + $0xe8] sm:$0xff]
        %v5535 = vld [vmem:[%s248 + $0xf0] sm:$0xff]
        %v5536 = vld [vmem:[%s248 + $0xf8] sm:$0xff]
        %v5537 = vld [vmem:[%s248 + $0x100] sm:$0xff]
        %v5538 = vld [vmem:[%s248 + $0x108] sm:$0xff]
        %v5539 = vld [vmem:[%s248 + $0x110] sm:$0xff]
        %v5540 = vld [vmem:[%s248 + $0x118] sm:$0xff]
        %v5541 = vld [vmem:[%s248 + $0x120] sm:$0xff]
        %v5542 = vld [vmem:[%s248 + $0x128] sm:$0xff]
        %v5543 = vld [vmem:[%s248 + $0x130] sm:$0xff]
        %v5544 = vld [vmem:[%s248 + $0x138] sm:$0xff]
        %v5545 = vld [vmem:[%s248 + $0x140] sm:$0xff]
        %v5546 = vld [vmem:[%s248 + $0x148] sm:$0xff]
        %v5547 = vld [vmem:[%s248 + $0x150] sm:$0xff]
        %v5548 = vld [vmem:[%s248 + $0x158] sm:$0xff]
        %v5549 = vld [vmem:[%s248 + $0x160] sm:$0xff]
        %v5550 = vld [vmem:[%s248 + $0x168] sm:$0xff]
        %v5551 = vld [vmem:[%s248 + $0x170] sm:$0xff]
        %v5552 = vld [vmem:[%s248 + $0x178] sm:$0xff]
        %v5553 = vld [vmem:[%s248 + $0x180] sm:$0xff]
        %v5554 = vld [vmem:[%s248 + $0x188] sm:$0xff]
        %v5555 = vld [vmem:[%s248 + $0x190] sm:$0xff]
        %v5556 = vld [vmem:[%s248 + $0x198] sm:$0xff]
        %v5557 = vld [vmem:[%s248 + $0x1a0] sm:$0xff]
        %v5558 = vld [vmem:[%s248 + $0x1a8] sm:$0xff]
        %v5559 = vld [vmem:[%s248 + $0x1b0] sm:$0xff]
        %v5560 = vld [vmem:[%s248 + $0x1b8] sm:$0xff]
        %v5561 = vld [vmem:[%s248 + $0x1c0] sm:$0xff]
        %v5562 = vld [vmem:[%s248 + $0x1c8] sm:$0xff]
        %v5563 = vld [vmem:[%s248 + $0x1d0] sm:$0xff]
        %v5564 = vld [vmem:[%s248 + $0x1d8] sm:$0xff]
        %v5565 = vld [vmem:[%s248 + $0x1e0] sm:$0xff]
        %v5566 = vld [vmem:[%s248 + $0x1e8] sm:$0xff]
        %v5567 = vld [vmem:[%s248 + $0x1f0] sm:$0xff]
        %v5568 = vld [vmem:[%s248 + $0x1f8] sm:$0xff]
        %v5569 = vld [vmem:[%s248 + $0x200] sm:$0xff]
        %v5570 = vld [vmem:[%s248 + $0x208] sm:$0xff]
        %v5571 = vld [vmem:[%s248 + $0x210] sm:$0xff]
        %v5572 = vld [vmem:[%s248 + $0x218] sm:$0xff]
        %v5573 = vld [vmem:[%s248 + $0x220] sm:$0x3f]
        %v5575 = vsel %vm333, %v5505, 0
        %v5578 = vsel %vm333, %v5506, 0
        %v5581 = vsel %vm333, %v5507, 0
        %v5584 = vsel %vm333, %v5508, 0
        %v5587 = vsel %vm333, %v5509, 0
        %v5590 = vsel %vm333, %v5510, 0
        %v5593 = vsel %vm333, %v5511, 0
        %v5596 = vsel %vm333, %v5512, 0
        %v5599 = vsel %vm333, %v5513, 0
        %v5602 = vsel %vm333, %v5514, 0
        %v5605 = vsel %vm333, %v5515, 0
        %v5608 = vsel %vm333, %v5516, 0
        %v5611 = vsel %vm333, %v5517, 0
        %v5614 = vsel %vm333, %v5518, 0
        %v5617 = vsel %vm333, %v5519, 0
        %v5620 = vsel %vm333, %v5520, 0
        %v5623 = vsel %vm333, %v5521, 0
        %v5626 = vsel %vm333, %v5522, 0
        %v5629 = vsel %vm333, %v5523, 0
        %v5632 = vsel %vm333, %v5524, 0
        %v5635 = vsel %vm333, %v5525, 0
        %v5638 = vsel %vm333, %v5526, 0
        %v5641 = vsel %vm333, %v5527, 0
        %v5644 = vsel %vm333, %v5528, 0
        %v5647 = vsel %vm333, %v5529, 0
        %v5650 = vsel %vm333, %v5530, 0
        %v5653 = vsel %vm333, %v5531, 0
        %v5656 = vsel %vm333, %v5532, 0
        %v5659 = vsel %vm333, %v5533, 0
        %v5662 = vsel %vm333, %v5534, 0
        %v5665 = vsel %vm333, %v5535, 0
        %v5668 = vsel %vm333, %v5536, 0
        %v5671 = vsel %vm333, %v5537, 0
        %v5674 = vsel %vm333, %v5538, 0
        %v5677 = vsel %vm333, %v5539, 0
        %v5680 = vsel %vm333, %v5540, 0
        %v5683 = vsel %vm333, %v5541, 0
        %v5686 = vsel %vm333, %v5542, 0
        %v5689 = vsel %vm333, %v5543, 0
        %v5692 = vsel %vm333, %v5544, 0
        %v5695 = vsel %vm333, %v5545, 0
        %v5698 = vsel %vm333, %v5546, 0
        %v5701 = vsel %vm333, %v5547, 0
        %v5704 = vsel %vm333, %v5548, 0
        %v5707 = vsel %vm333, %v5549, 0
        %v5710 = vsel %vm333, %v5550, 0
        %v5713 = vsel %vm333, %v5551, 0
        %v5716 = vsel %vm333, %v5552, 0
        %v5719 = vsel %vm333, %v5553, 0
        %v5722 = vsel %vm333, %v5554, 0
        %v5725 = vsel %vm333, %v5555, 0
        %v5728 = vsel %vm333, %v5556, 0
        %v5731 = vsel %vm333, %v5557, 0
        %v5734 = vsel %vm333, %v5558, 0
        %v5737 = vsel %vm333, %v5559, 0
        %v5740 = vsel %vm333, %v5560, 0
        %v5743 = vsel %vm333, %v5561, 0
        %v5746 = vsel %vm333, %v5562, 0
        %v5749 = vsel %vm333, %v5563, 0
        %v5752 = vsel %vm333, %v5564, 0
        %v5755 = vsel %vm333, %v5565, 0
        %v5758 = vsel %vm333, %v5566, 0
        %v5761 = vsel %vm333, %v5567, 0
        %v5764 = vsel %vm333, %v5568, 0
        %v5767 = vsel %vm333, %v5569, 0
        %v5770 = vsel %vm333, %v5570, 0
        %v5773 = vsel %vm333, %v5571, 0
        %v5776 = vsel %vm333, %v5572, 0
        %v5779 = vsel %vm333, %v5573, 0
        %5781 = vmatprep.subr.mxu0 0.0
        %5782 = vmatpush1.msra.mxu0 %v5503
        %5783 = vmatprep.subr.mxu0 0.0
        %5784 = vmatpush1.msra.mxu0 %v5504
        %5785 = vmatprep.subr.mxu0 0.0
        %5786 = vmatpush1.msra.mxu0 0.0
        %5787 = vmatprep.subr.mxu0 0.0
        %5788 = vmatpush1.msra.mxu0 0.0
        %5789 = vmatprep.subr.mxu0 0.0
        %5790 = vmatpush1.msra.mxu0 0.0
        %5791 = vmatprep.subr.mxu0 0.0
        %5792 = vmatpush1.msra.mxu0 0.0
        %5793 = vmatprep.subr.mxu0 0.0
        %5794 = vmatpush1.msra.mxu0 0.0
        %5795 = vmatprep.subr.mxu0 0.0
        %5796 = vmatpush1.msra.mxu0 0.0
        %5797 = vmatprep.subr.mxu0 0.0
        %5798 = vmatpush1.msra.mxu0 0.0
        %5799 = vmatprep.subr.mxu0 0.0
        %5800 = vmatpush1.msra.mxu0 0.0
        %5801 = vmatprep.subr.mxu0 0.0
        %5802 = vmatpush1.msra.mxu0 0.0
        %5803 = vmatprep.subr.mxu0 0.0
        %5804 = vmatpush1.msra.mxu0 0.0
        %5805 = vmatprep.subr.mxu0 0.0
        %5806 = vmatpush1.msra.mxu0 0.0
        %5807 = vmatprep.subr.mxu0 0.0
        %5808 = vmatpush1.msra.mxu0 0.0
        %5809 = vmatprep.subr.mxu0 0.0
        %5810 = vmatpush1.msra.mxu0 0.0
        %5811 = vmatprep.subr.mxu0 0.0
        %5812 = vmatpush1.msra.mxu0 0.0
        %5813 = vmatprep.subr.mxu0 0.0
        %5814 = vmatpush1.msra.mxu0 0.0
        %5815 = vmatprep.subr.mxu0 0.0
        %5816 = vmatpush1.msra.mxu0 0.0
        %5817 = vmatprep.subr.mxu0 0.0
        %5818 = vmatpush1.msra.mxu0 0.0
        %5819 = vmatprep.subr.mxu0 0.0
        %5820 = vmatpush1.msra.mxu0 0.0
        %5821 = vmatprep.subr.mxu0 0.0
        %5822 = vmatpush1.msra.mxu0 0.0
        %5823 = vmatprep.subr.mxu0 0.0
        %5824 = vmatpush1.msra.mxu0 0.0
        %5825 = vmatprep.subr.mxu0 0.0
        %5826 = vmatpush1.msra.mxu0 0.0
        %5827 = vmatprep.subr.mxu0 0.0
        %5828 = vmatpush1.msra.mxu0 0.0
        %5829 = vmatprep.subr.mxu0 0.0
        %5830 = vmatpush1.msra.mxu0 0.0
        %5831 = vmatprep.subr.mxu0 0.0
        %5832 = vmatpush1.msra.mxu0 0.0
        %5833 = vmatprep.subr.mxu0 0.0
        %5834 = vmatpush1.msra.mxu0 0.0
        %5835 = vmatprep.subr.mxu0 0.0
        %5836 = vmatpush1.msra.mxu0 0.0
        %5837 = vmatprep.subr.mxu0 0.0
        %5838 = vmatpush1.msra.mxu0 0.0
        %5839 = vmatprep.subr.mxu0 0.0
        %5840 = vmatpush1.msra.mxu0 0.0
        %5841 = vmatprep.subr.mxu0 0.0
        %5842 = vmatpush1.msra.mxu0 0.0
        %5843 = vmatprep.subr.mxu0 0.0
        %5844 = vmatpush1.msra.mxu0 0.0
        %5845 = vmatprep.mubr.f32.mxu0 0.0
        %5846 = vmatmul.mubr.f32.gmra.mrb[0].mxu0 %v5575
        %v5847 = vpop.f32.mrb[0].mxu0
        %v5848 = vadd.f32 0.0, %v5847
        %v5849 = vpop.f32.mrb[0].mxu0
        %5850 = vmatprep.mubr.f32.mxu0 0.0
        %5851 = vmatmul.mubr.f32.gmra.mrb[0].mxu0 %v5578
        %v5852 = vpop.f32.mrb[0].mxu0
        %v5853 = vadd.f32 0.0, %v5852
        %v5854 = vpop.f32.mrb[0].mxu0
        %5855 = vmatprep.mubr.f32.mxu0 0.0
        %5856 = vmatmul.mubr.f32.gmra.mrb[0].mxu0 %v5581
        %v5857 = vpop.f32.mrb[0].mxu0
        %v5858 = vadd.f32 0.0, %v5857
        %v5859 = vpop.f32.mrb[0].mxu0
        %5860 = vmatprep.mubr.f32.mxu0 0.0
        %5861 = vmatmul.mubr.f32.gmra.mrb[0].mxu0 %v5584
        %v5862 = vpop.f32.mrb[0].mxu0
        %v5863 = vadd.f32 0.0, %v5862
        %v5864 = vpop.f32.mrb[0].mxu0
        %5865 = vmatprep.mubr.f32.mxu0 0.0
        %5866 = vmatmul.mubr.f32.gmra.mrb[0].mxu0 %v5587
        %v5867 = vpop.f32.mrb[0].mxu0
        %v5868 = vadd.f32 0.0, %v5867
        %v5869 = vpop.f32.mrb[0].mxu0
        %5870 = vmatprep.mubr.f32.mxu0 0.0
        %5871 = vmatmul.mubr.f32.gmra.mrb[0].mxu0 %v5590
        %v5872 = vpop.f32.mrb[0].mxu0
        %v5873 = vadd.f32 0.0, %v5872
        %v5874 = vpop.f32.mrb[0].mxu0
        %5875 = vmatprep.mubr.f32.mxu0 0.0
        %5876 = vmatmul.mubr.f32.gmra.mrb[0].mxu0 %v5593
        %v5877 = vpop.f32.mrb[0].mxu0
        %v5878 = vadd.f32 0.0, %v5877
        %v5879 = vpop.f32.mrb[0].mxu0
        %5880 = vmatprep.mubr.f32.mxu0 0.0
        %5881 = vmatmul.mubr.f32.gmra.mrb[0].mxu0 %v5596
        %v5882 = vpop.f32.mrb[0].mxu0
        %v5883 = vadd.f32 0.0, %v5882
        %v5884 = vpop.f32.mrb[0].mxu0
        %5885 = vmatprep.mubr.f32.mxu0 0.0
        %5886 = vmatmul.mubr.f32.gmra.mrb[0].mxu0 %v5599
        %v5887 = vpop.f32.mrb[0].mxu0
        %v5888 = vadd.f32 0.0, %v5887
        %v5889 = vpop.f32.mrb[0].mxu0
        %5890 = vmatprep.mubr.f32.mxu0 0.0
        %5891 = vmatmul.mubr.f32.gmra.mrb[0].mxu0 %v5602
        %v5892 = vpop.f32.mrb[0].mxu0
        %v5893 = vadd.f32 0.0, %v5892
        %v5894 = vpop.f32.mrb[0].mxu0
        %5895 = vmatprep.mubr.f32.mxu0 0.0
        %5896 = vmatmul.mubr.f32.gmra.mrb[0].mxu0 %v5605
        %v5897 = vpop.f32.mrb[0].mxu0
        %v5898 = vadd.f32 0.0, %v5897
        %v5899 = vpop.f32.mrb[0].mxu0
        %5900 = vmatprep.mubr.f32.mxu0 0.0
        %5901 = vmatmul.mubr.f32.gmra.mrb[0].mxu0 %v5608
        %v5902 = vpop.f32.mrb[0].mxu0
        %v5903 = vadd.f32 0.0, %v5902
        %v5904 = vpop.f32.mrb[0].mxu0
        %5905 = vmatprep.mubr.f32.mxu0 0.0
        %5906 = vmatmul.mubr.f32.gmra.mrb[0].mxu0 %v5611
        %v5907 = vpop.f32.mrb[0].mxu0
        %v5908 = vadd.f32 0.0, %v5907
        %v5909 = vpop.f32.mrb[0].mxu0
        %5910 = vmatprep.mubr.f32.mxu0 0.0
        %5911 = vmatmul.mubr.f32.gmra.mrb[0].mxu0 %v5614
        %v5912 = vpop.f32.mrb[0].mxu0
        %v5913 = vadd.f32 0.0, %v5912
        %v5914 = vpop.f32.mrb[0].mxu0
        %5915 = vmatprep.mubr.f32.mxu0 0.0
        %5916 = vmatmul.mubr.f32.gmra.mrb[0].mxu0 %v5617
        %v5917 = vpop.f32.mrb[0].mxu0
        %v5918 = vadd.f32 0.0, %v5917
        %v5919 = vpop.f32.mrb[0].mxu0
        %5920 = vmatprep.mubr.f32.mxu0 0.0
        %5921 = vmatmul.mubr.f32.gmra.mrb[0].mxu0 %v5620
        %v5922 = vpop.f32.mrb[0].mxu0
        %v5923 = vadd.f32 0.0, %v5922
        %v5924 = vpop.f32.mrb[0].mxu0
        %5925 = vmatprep.mubr.f32.mxu0 0.0
        %5926 = vmatmul.mubr.f32.gmra.mrb[0].mxu0 %v5623
        %v5927 = vpop.f32.mrb[0].mxu0
        %v5928 = vadd.f32 0.0, %v5927
        %v5929 = vpop.f32.mrb[0].mxu0
        %5930 = vmatprep.mubr.f32.mxu0 0.0
        %5931 = vmatmul.mubr.f32.gmra.mrb[0].mxu0 %v5626
        %v5932 = vpop.f32.mrb[0].mxu0
        %v5933 = vadd.f32 0.0, %v5932
        %v5934 = vpop.f32.mrb[0].mxu0
        %5935 = vmatprep.mubr.f32.mxu0 0.0
        %5936 = vmatmul.mubr.f32.gmra.mrb[0].mxu0 %v5629
        %v5937 = vpop.f32.mrb[0].mxu0
        %v5938 = vadd.f32 0.0, %v5937
        %v5939 = vpop.f32.mrb[0].mxu0
        %5940 = vmatprep.mubr.f32.mxu0 0.0
        %5941 = vmatmul.mubr.f32.gmra.mrb[0].mxu0 %v5632
        %v5942 = vpop.f32.mrb[0].mxu0
        %v5943 = vadd.f32 0.0, %v5942
        %v5944 = vpop.f32.mrb[0].mxu0
        %5945 = vmatprep.mubr.f32.mxu0 0.0
        %5946 = vmatmul.mubr.f32.gmra.mrb[0].mxu0 %v5635
        %v5947 = vpop.f32.mrb[0].mxu0
        %v5948 = vadd.f32 0.0, %v5947
        %v5949 = vpop.f32.mrb[0].mxu0
        %5950 = vmatprep.mubr.f32.mxu0 0.0
        %5951 = vmatmul.mubr.f32.gmra.mrb[0].mxu0 %v5638
        %v5952 = vpop.f32.mrb[0].mxu0
        %v5953 = vadd.f32 0.0, %v5952
        %v5954 = vpop.f32.mrb[0].mxu0
        %5955 = vmatprep.mubr.f32.mxu0 0.0
        %5956 = vmatmul.mubr.f32.gmra.mrb[0].mxu0 %v5641
        %v5957 = vpop.f32.mrb[0].mxu0
        %v5958 = vadd.f32 0.0, %v5957
        %v5959 = vpop.f32.mrb[0].mxu0
        %5960 = vmatprep.mubr.f32.mxu0 0.0
        %5961 = vmatmul.mubr.f32.gmra.mrb[0].mxu0 %v5644
        %v5962 = vpop.f32.mrb[0].mxu0
        %v5963 = vadd.f32 0.0, %v5962
        %v5964 = vpop.f32.mrb[0].mxu0
        %5965 = vmatprep.mubr.f32.mxu0 0.0
        %5966 = vmatmul.mubr.f32.gmra.mrb[0].mxu0 %v5647
        %v5967 = vpop.f32.mrb[0].mxu0
        %v5968 = vadd.f32 0.0, %v5967
        %v5969 = vpop.f32.mrb[0].mxu0
        %5970 = vmatprep.mubr.f32.mxu0 0.0
        %5971 = vmatmul.mubr.f32.gmra.mrb[0].mxu0 %v5650
        %v5972 = vpop.f32.mrb[0].mxu0
        %v5973 = vadd.f32 0.0, %v5972
        %v5974 = vpop.f32.mrb[0].mxu0
        %5975 = vmatprep.mubr.f32.mxu0 0.0
        %5976 = vmatmul.mubr.f32.gmra.mrb[0].mxu0 %v5653
        %v5977 = vpop.f32.mrb[0].mxu0
        %v5978 = vadd.f32 0.0, %v5977
        %v5979 = vpop.f32.mrb[0].mxu0
        %5980 = vmatprep.mubr.f32.mxu0 0.0
        %5981 = vmatmul.mubr.f32.gmra.mrb[0].mxu0 %v5656
        %v5982 = vpop.f32.mrb[0].mxu0
        %v5983 = vadd.f32 0.0, %v5982
        %v5984 = vpop.f32.mrb[0].mxu0
        %5985 = vmatprep.mubr.f32.mxu0 0.0
        %5986 = vmatmul.mubr.f32.gmra.mrb[0].mxu0 %v5659
        %v5987 = vpop.f32.mrb[0].mxu0
        %v5988 = vadd.f32 0.0, %v5987
        %v5989 = vpop.f32.mrb[0].mxu0
        %5990 = vmatprep.mubr.f32.mxu0 0.0
        %5991 = vmatmul.mubr.f32.gmra.mrb[0].mxu0 %v5662
        %v5992 = vpop.f32.mrb[0].mxu0
        %v5993 = vadd.f32 0.0, %v5992
        %v5994 = vpop.f32.mrb[0].mxu0
        %5995 = vmatprep.mubr.f32.mxu0 0.0
        %5996 = vmatmul.mubr.f32.gmra.mrb[0].mxu0 %v5665
        %v5997 = vpop.f32.mrb[0].mxu0
        %v5998 = vadd.f32 0.0, %v5997
        %v5999 = vpop.f32.mrb[0].mxu0
        %6000 = vmatprep.mubr.f32.mxu0 0.0
        %6001 = vmatmul.mubr.f32.gmra.mrb[0].mxu0 %v5668
        %v6002 = vpop.f32.mrb[0].mxu0
        %v6003 = vadd.f32 0.0, %v6002
        %v6004 = vpop.f32.mrb[0].mxu0
        %6005 = vmatprep.mubr.f32.mxu0 0.0
        %6006 = vmatmul.mubr.f32.gmra.mrb[0].mxu0 %v5671
        %v6007 = vpop.f32.mrb[0].mxu0
        %v6008 = vadd.f32 0.0, %v6007
        %v6009 = vpop.f32.mrb[0].mxu0
        %6010 = vmatprep.mubr.f32.mxu0 0.0
        %6011 = vmatmul.mubr.f32.gmra.mrb[0].mxu0 %v5674
        %v6012 = vpop.f32.mrb[0].mxu0
        %v6013 = vadd.f32 0.0, %v6012
        %v6014 = vpop.f32.mrb[0].mxu0
        %6015 = vmatprep.mubr.f32.mxu0 0.0
        %6016 = vmatmul.mubr.f32.gmra.mrb[0].mxu0 %v5677
        %v6017 = vpop.f32.mrb[0].mxu0
        %v6018 = vadd.f32 0.0, %v6017
        %v6019 = vpop.f32.mrb[0].mxu0
        %6020 = vmatprep.mubr.f32.mxu0 0.0
        %6021 = vmatmul.mubr.f32.gmra.mrb[0].mxu0 %v5680
        %v6022 = vpop.f32.mrb[0].mxu0
        %v6023 = vadd.f32 0.0, %v6022
        %v6024 = vpop.f32.mrb[0].mxu0
        %6025 = vmatprep.mubr.f32.mxu0 0.0
        %6026 = vmatmul.mubr.f32.gmra.mrb[0].mxu0 %v5683
        %v6027 = vpop.f32.mrb[0].mxu0
        %v6028 = vadd.f32 0.0, %v6027
        %v6029 = vpop.f32.mrb[0].mxu0
        %6030 = vmatprep.mubr.f32.mxu0 0.0
        %6031 = vmatmul.mubr.f32.gmra.mrb[0].mxu0 %v5686
        %v6032 = vpop.f32.mrb[0].mxu0
        %v6033 = vadd.f32 0.0, %v6032
        %v6034 = vpop.f32.mrb[0].mxu0
        %6035 = vmatprep.mubr.f32.mxu0 0.0
        %6036 = vmatmul.mubr.f32.gmra.mrb[0].mxu0 %v5689
        %v6037 = vpop.f32.mrb[0].mxu0
        %v6038 = vadd.f32 0.0, %v6037
        %v6039 = vpop.f32.mrb[0].mxu0
        %6040 = vmatprep.mubr.f32.mxu0 0.0
        %6041 = vmatmul.mubr.f32.gmra.mrb[0].mxu0 %v5692
        %v6042 = vpop.f32.mrb[0].mxu0
        %v6043 = vadd.f32 0.0, %v6042
        %v6044 = vpop.f32.mrb[0].mxu0
        %6045 = vmatprep.mubr.f32.mxu0 0.0
        %6046 = vmatmul.mubr.f32.gmra.mrb[0].mxu0 %v5695
        %v6047 = vpop.f32.mrb[0].mxu0
        %v6048 = vadd.f32 0.0, %v6047
        %v6049 = vpop.f32.mrb[0].mxu0
        %6050 = vmatprep.mubr.f32.mxu0 0.0
        %6051 = vmatmul.mubr.f32.gmra.mrb[0].mxu0 %v5698
        %v6052 = vpop.f32.mrb[0].mxu0
        %v6053 = vadd.f32 0.0, %v6052
        %v6054 = vpop.f32.mrb[0].mxu0
        %6055 = vmatprep.mubr.f32.mxu0 0.0
        %6056 = vmatmul.mubr.f32.gmra.mrb[0].mxu0 %v5701
        %v6057 = vpop.f32.mrb[0].mxu0
        %v6058 = vadd.f32 0.0, %v6057
        %v6059 = vpop.f32.mrb[0].mxu0
        %6060 = vmatprep.mubr.f32.mxu0 0.0
        %6061 = vmatmul.mubr.f32.gmra.mrb[0].mxu0 %v5704
        %v6062 = vpop.f32.mrb[0].mxu0
        %v6063 = vadd.f32 0.0, %v6062
        %v6064 = vpop.f32.mrb[0].mxu0
        %6065 = vmatprep.mubr.f32.mxu0 0.0
        %6066 = vmatmul.mubr.f32.gmra.mrb[0].mxu0 %v5707
        %v6067 = vpop.f32.mrb[0].mxu0
        %v6068 = vadd.f32 0.0, %v6067
        %v6069 = vpop.f32.mrb[0].mxu0
        %6070 = vmatprep.mubr.f32.mxu0 0.0
        %6071 = vmatmul.mubr.f32.gmra.mrb[0].mxu0 %v5710
        %v6072 = vpop.f32.mrb[0].mxu0
        %v6073 = vadd.f32 0.0, %v6072
        %v6074 = vpop.f32.mrb[0].mxu0
        %6075 = vmatprep.mubr.f32.mxu0 0.0
        %6076 = vmatmul.mubr.f32.gmra.mrb[0].mxu0 %v5713
        %v6077 = vpop.f32.mrb[0].mxu0
        %v6078 = vadd.f32 0.0, %v6077
        %v6079 = vpop.f32.mrb[0].mxu0
        %6080 = vmatprep.mubr.f32.mxu0 0.0
        %6081 = vmatmul.mubr.f32.gmra.mrb[0].mxu0 %v5716
        %v6082 = vpop.f32.mrb[0].mxu0
        %v6083 = vadd.f32 0.0, %v6082
        %v6084 = vpop.f32.mrb[0].mxu0
        %6085 = vmatprep.mubr.f32.mxu0 0.0
        %6086 = vmatmul.mubr.f32.gmra.mrb[0].mxu0 %v5719
        %v6087 = vpop.f32.mrb[0].mxu0
        %v6088 = vadd.f32 0.0, %v6087
        %v6089 = vpop.f32.mrb[0].mxu0
        %6090 = vmatprep.mubr.f32.mxu0 0.0
        %6091 = vmatmul.mubr.f32.gmra.mrb[0].mxu0 %v5722
        %v6092 = vpop.f32.mrb[0].mxu0
        %v6093 = vadd.f32 0.0, %v6092
        %v6094 = vpop.f32.mrb[0].mxu0
        %6095 = vmatprep.mubr.f32.mxu0 0.0
        %6096 = vmatmul.mubr.f32.gmra.mrb[0].mxu0 %v5725
        %v6097 = vpop.f32.mrb[0].mxu0
        %v6098 = vadd.f32 0.0, %v6097
        %v6099 = vpop.f32.mrb[0].mxu0
        %6100 = vmatprep.mubr.f32.mxu0 0.0
        %6101 = vmatmul.mubr.f32.gmra.mrb[0].mxu0 %v5728
        %v6102 = vpop.f32.mrb[0].mxu0
        %v6103 = vadd.f32 0.0, %v6102
        %v6104 = vpop.f32.mrb[0].mxu0
        %6105 = vmatprep.mubr.f32.mxu0 0.0
        %6106 = vmatmul.mubr.f32.gmra.mrb[0].mxu0 %v5731
        %v6107 = vpop.f32.mrb[0].mxu0
        %v6108 = vadd.f32 0.0, %v6107
        %v6109 = vpop.f32.mrb[0].mxu0
        %6110 = vmatprep.mubr.f32.mxu0 0.0
        %6111 = vmatmul.mubr.f32.gmra.mrb[0].mxu0 %v5734
        %v6112 = vpop.f32.mrb[0].mxu0
        %v6113 = vadd.f32 0.0, %v6112
        %v6114 = vpop.f32.mrb[0].mxu0
        %6115 = vmatprep.mubr.f32.mxu0 0.0
        %6116 = vmatmul.mubr.f32.gmra.mrb[0].mxu0 %v5737
        %v6117 = vpop.f32.mrb[0].mxu0
        %v6118 = vadd.f32 0.0, %v6117
        %v6119 = vpop.f32.mrb[0].mxu0
        %6120 = vmatprep.mubr.f32.mxu0 0.0
        %6121 = vmatmul.mubr.f32.gmra.mrb[0].mxu0 %v5740
        %v6122 = vpop.f32.mrb[0].mxu0
        %v6123 = vadd.f32 0.0, %v6122
        %v6124 = vpop.f32.mrb[0].mxu0
        %6125 = vmatprep.mubr.f32.mxu0 0.0
        %6126 = vmatmul.mubr.f32.gmra.mrb[0].mxu0 %v5743
        %v6127 = vpop.f32.mrb[0].mxu0
        %v6128 = vadd.f32 0.0, %v6127
        %v6129 = vpop.f32.mrb[0].mxu0
        %6130 = vmatprep.mubr.f32.mxu0 0.0
        %6131 = vmatmul.mubr.f32.gmra.mrb[0].mxu0 %v5746
        %v6132 = vpop.f32.mrb[0].mxu0
        %v6133 = vadd.f32 0.0, %v6132
        %v6134 = vpop.f32.mrb[0].mxu0
        %6135 = vmatprep.mubr.f32.mxu0 0.0
        %6136 = vmatmul.mubr.f32.gmra.mrb[0].mxu0 %v5749
        %v6137 = vpop.f32.mrb[0].mxu0
        %v6138 = vadd.f32 0.0, %v6137
        %v6139 = vpop.f32.mrb[0].mxu0
        %6140 = vmatprep.mubr.f32.mxu0 0.0
        %6141 = vmatmul.mubr.f32.gmra.mrb[0].mxu0 %v5752
        %v6142 = vpop.f32.mrb[0].mxu0
        %v6143 = vadd.f32 0.0, %v6142
        %v6144 = vpop.f32.mrb[0].mxu0
        %6145 = vmatprep.mubr.f32.mxu0 0.0
        %6146 = vmatmul.mubr.f32.gmra.mrb[0].mxu0 %v5755
        %v6147 = vpop.f32.mrb[0].mxu0
        %v6148 = vadd.f32 0.0, %v6147
        %v6149 = vpop.f32.mrb[0].mxu0
        %6150 = vmatprep.mubr.f32.mxu0 0.0
        %6151 = vmatmul.mubr.f32.gmra.mrb[0].mxu0 %v5758
        %v6152 = vpop.f32.mrb[0].mxu0
        %v6153 = vadd.f32 0.0, %v6152
        %v6154 = vpop.f32.mrb[0].mxu0
        %6155 = vmatprep.mubr.f32.mxu0 0.0
        %6156 = vmatmul.mubr.f32.gmra.mrb[0].mxu0 %v5761
        %v6157 = vpop.f32.mrb[0].mxu0
        %v6158 = vadd.f32 0.0, %v6157
        %v6159 = vpop.f32.mrb[0].mxu0
        %6160 = vmatprep.mubr.f32.mxu0 0.0
        %6161 = vmatmul.mubr.f32.gmra.mrb[0].mxu0 %v5764
        %v6162 = vpop.f32.mrb[0].mxu0
        %v6163 = vadd.f32 0.0, %v6162
        %v6164 = vpop.f32.mrb[0].mxu0
        %6165 = vmatprep.mubr.f32.mxu0 0.0
        %6166 = vmatmul.mubr.f32.gmra.mrb[0].mxu0 %v5767
        %v6167 = vpop.f32.mrb[0].mxu0
        %v6168 = vadd.f32 0.0, %v6167
        %v6169 = vpop.f32.mrb[0].mxu0
        %6170 = vmatprep.mubr.f32.mxu0 0.0
        %6171 = vmatmul.mubr.f32.gmra.mrb[0].mxu0 %v5770
        %v6172 = vpop.f32.mrb[0].mxu0
        %v6173 = vadd.f32 0.0, %v6172
        %v6174 = vpop.f32.mrb[0].mxu0
        %6175 = vmatprep.mubr.f32.mxu0 0.0
        %6176 = vmatmul.mubr.f32.gmra.mrb[0].mxu0 %v5773
        %v6177 = vpop.f32.mrb[0].mxu0
        %v6178 = vadd.f32 0.0, %v6177
        %v6179 = vpop.f32.mrb[0].mxu0
        %6180 = vmatprep.mubr.f32.mxu0 0.0
        %6181 = vmatmul.mubr.f32.gmra.mrb[0].mxu0 %v5776
        %v6182 = vpop.f32.mrb[0].mxu0
        %v6183 = vadd.f32 0.0, %v6182
        %v6184 = vpop.f32.mrb[0].mxu0
        %6185 = vmatprep.mubr.f32.mxu0 0.0
        %6186 = vmatmul.mubr.f32.gmra.mrb[0].mxu0 %v5779
        %v6187 = vpop.f32.mrb[0].mxu0
        %v6188 = vadd.f32 0.0, %v6187
        %v6189 = vpop.f32.mrb[0].mxu0
        %6190 = vdwg.mxu0
        %v6191 = vld [vmem:[%s2] sm:$0xff]
        %v6192 = vld [vmem:[%s2 + $0x8] sm:$0xff]
        %v6193 = vld [vmem:[%s2 + $0x10] sm:$0xff]
        %v6194 = vld [vmem:[%s2 + $0x18] sm:$0xff]
        %v6195 = vld [vmem:[%s2 + $0x20] sm:$0xff]
        %v6196 = vld [vmem:[%s2 + $0x28] sm:$0xff]
        %v6197 = vld [vmem:[%s2 + $0x30] sm:$0xff]
        %v6198 = vld [vmem:[%s2 + $0x38] sm:$0xff]
        %v6199 = vld [vmem:[%s2 + $0x40] sm:$0xff]
        %v6200 = vld [vmem:[%s2 + $0x48] sm:$0xff]
        %v6202 = vsel %vm333, %v5848, 0
        %v6205 = vsel %vm333, %v5853, 0
        %v6208 = vsel %vm333, %v5858, 0
        %v6211 = vsel %vm333, %v5863, 0
        %v6214 = vsel %vm333, %v5868, 0
        %v6217 = vsel %vm333, %v5873, 0
        %v6220 = vsel %vm333, %v5878, 0
        %v6223 = vsel %vm333, %v5883, 0
        %v6226 = vsel %vm333, %v5888, 0
        %v6229 = vsel %vm333, %v5893, 0
        %v6232 = vsel %vm333, %v5898, 0
        %v6235 = vsel %vm333, %v5903, 0
        %v6238 = vsel %vm333, %v5908, 0
        %v6241 = vsel %vm333, %v5913, 0
        %v6244 = vsel %vm333, %v5918, 0
        %v6247 = vsel %vm333, %v5923, 0
        %v6250 = vsel %vm333, %v5928, 0
        %v6253 = vsel %vm333, %v5933, 0
        %v6256 = vsel %vm333, %v5938, 0
        %v6259 = vsel %vm333, %v5943, 0
        %v6262 = vsel %vm333, %v5948, 0
        %v6265 = vsel %vm333, %v5953, 0
        %v6268 = vsel %vm333, %v5958, 0
        %v6271 = vsel %vm333, %v5963, 0
        %v6274 = vsel %vm333, %v5968, 0
        %v6277 = vsel %vm333, %v5973, 0
        %v6280 = vsel %vm333, %v5978, 0
        %v6283 = vsel %vm333, %v5983, 0
        %v6286 = vsel %vm333, %v5988, 0
        %v6289 = vsel %vm333, %v5993, 0
        %v6292 = vsel %vm333, %v5998, 0
        %v6295 = vsel %vm333, %v6003, 0
        %v6298 = vsel %vm333, %v6008, 0
        %v6301 = vsel %vm333, %v6013, 0
        %v6304 = vsel %vm333, %v6018, 0
        %v6307 = vsel %vm333, %v6023, 0
        %v6310 = vsel %vm333, %v6028, 0
        %v6313 = vsel %vm333, %v6033, 0
        %v6316 = vsel %vm333, %v6038, 0
        %v6319 = vsel %vm333, %v6043, 0
        %v6322 = vsel %vm333, %v6048, 0
        %v6325 = vsel %vm333, %v6053, 0
        %v6328 = vsel %vm333, %v6058, 0
        %v6331 = vsel %vm333, %v6063, 0
        %v6334 = vsel %vm333, %v6068, 0
        %v6337 = vsel %vm333, %v6073, 0
        %v6340 = vsel %vm333, %v6078, 0
        %v6343 = vsel %vm333, %v6083, 0
        %v6346 = vsel %vm333, %v6088, 0
        %v6349 = vsel %vm333, %v6093, 0
        %v6352 = vsel %vm333, %v6098, 0
        %v6355 = vsel %vm333, %v6103, 0
        %v6358 = vsel %vm333, %v6108, 0
        %v6361 = vsel %vm333, %v6113, 0
        %v6364 = vsel %vm333, %v6118, 0
        %v6367 = vsel %vm333, %v6123, 0
        %v6370 = vsel %vm333, %v6128, 0
        %v6373 = vsel %vm333, %v6133, 0
        %v6376 = vsel %vm333, %v6138, 0
        %v6379 = vsel %vm333, %v6143, 0
        %v6382 = vsel %vm333, %v6148, 0
        %v6385 = vsel %vm333, %v6153, 0
        %v6388 = vsel %vm333, %v6158, 0
        %v6391 = vsel %vm333, %v6163, 0
        %v6394 = vsel %vm333, %v6168, 0
        %v6397 = vsel %vm333, %v6173, 0
        %v6400 = vsel %vm333, %v6178, 0
        %v6403 = vsel %vm333, %v6183, 0
        %v6406 = vsel %vm333, %v6188, 0
        %6408 = vmatprep.subr.mxu0 %v6192
        %6409 = vmatpush1.msra.mxu0 %v6191
        %6410 = vmatprep.subr.mxu0 %v6197
        %6411 = vmatpush1.msra.mxu0 %v6196
        %6412 = vmatprep.subr.mxu0 0.0
        %6413 = vmatpush1.msra.mxu0 0.0
        %6414 = vmatprep.subr.mxu0 0.0
        %6415 = vmatpush1.msra.mxu0 0.0
        %6416 = vmatprep.subr.mxu0 0.0
        %6417 = vmatpush1.msra.mxu0 0.0
        %6418 = vmatprep.subr.mxu0 0.0
        %6419 = vmatpush1.msra.mxu0 0.0
        %6420 = vmatprep.subr.mxu0 0.0
        %6421 = vmatpush1.msra.mxu0 0.0
        %6422 = vmatprep.subr.mxu0 0.0
        %6423 = vmatpush1.msra.mxu0 0.0
        %6424 = vmatprep.subr.mxu0 0.0
        %6425 = vmatpush1.msra.mxu0 0.0
        %6426 = vmatprep.subr.mxu0 0.0
        %6427 = vmatpush1.msra.mxu0 0.0
        %6428 = vmatprep.subr.mxu0 0.0
        %6429 = vmatpush1.msra.mxu0 0.0
        %6430 = vmatprep.subr.mxu0 0.0
        %6431 = vmatpush1.msra.mxu0 0.0
        %6432 = vmatprep.subr.mxu0 0.0
        %6433 = vmatpush1.msra.mxu0 0.0
        %6434 = vmatprep.subr.mxu0 0.0
        %6435 = vmatpush1.msra.mxu0 0.0
        %6436 = vmatprep.subr.mxu0 0.0
        %6437 = vmatpush1.msra.mxu0 0.0
        %6438 = vmatprep.subr.mxu0 0.0
        %6439 = vmatpush1.msra.mxu0 0.0
        %6440 = vmatprep.subr.mxu0 0.0
        %6441 = vmatpush1.msra.mxu0 0.0
        %6442 = vmatprep.subr.mxu0 0.0
        %6443 = vmatpush1.msra.mxu0 0.0
        %6444 = vmatprep.subr.mxu0 0.0
        %6445 = vmatpush1.msra.mxu0 0.0
        %6446 = vmatprep.subr.mxu0 0.0
        %6447 = vmatpush1.msra.mxu0 0.0
        %6448 = vmatprep.subr.mxu0 0.0
        %6449 = vmatpush1.msra.mxu0 0.0
        %6450 = vmatprep.subr.mxu0 0.0
        %6451 = vmatpush1.msra.mxu0 0.0
        %6452 = vmatprep.subr.mxu0 0.0
        %6453 = vmatpush1.msra.mxu0 0.0
        %6454 = vmatprep.subr.mxu0 0.0
        %6455 = vmatpush1.msra.mxu0 0.0
        %6456 = vmatprep.subr.mxu0 0.0
        %6457 = vmatpush1.msra.mxu0 0.0
        %6458 = vmatprep.subr.mxu0 0.0
        %6459 = vmatpush1.msra.mxu0 0.0
        %6460 = vmatprep.subr.mxu0 0.0
        %6461 = vmatpush1.msra.mxu0 0.0
        %6462 = vmatprep.subr.mxu0 0.0
        %6463 = vmatpush1.msra.mxu0 0.0
        %6464 = vmatprep.subr.mxu0 0.0
        %6465 = vmatpush1.msra.mxu0 0.0
        %6466 = vmatprep.subr.mxu0 0.0
        %6467 = vmatpush1.msra.mxu0 0.0
        %6468 = vmatprep.subr.mxu0 0.0
        %6469 = vmatpush1.msra.mxu0 0.0
        %6470 = vmatprep.subr.mxu0 0.0
        %6471 = vmatpush1.msra.mxu0 0.0
        %6472 = vmatprep.mubr.f32.mxu0 0.0
        %6473 = vmatmul.mubr.f32.gmra.mrb[0].mxu0 %v6202
        %v6474 = vpop.f32.mrb[0].mxu0
        %v6475 = vadd.f32 0.0, %v6474
        %v6476 = vpop.f32.mrb[0].mxu0
        %v6477 = vadd.f32 0.0, %v6476
        %6478 = vmatprep.mubr.f32.mxu0 0.0
        %6479 = vmatmul.mubr.f32.gmra.mrb[0].mxu0 %v6205
        %v6480 = vpop.f32.mrb[0].mxu0
        %v6481 = vadd.f32 0.0, %v6480
        %v6482 = vpop.f32.mrb[0].mxu0
        %v6483 = vadd.f32 0.0, %v6482
        %6484 = vmatprep.mubr.f32.mxu0 0.0
        %6485 = vmatmul.mubr.f32.gmra.mrb[0].mxu0 %v6208
        %v6486 = vpop.f32.mrb[0].mxu0
        %v6487 = vadd.f32 0.0, %v6486
        %v6488 = vpop.f32.mrb[0].mxu0
        %v6489 = vadd.f32 0.0, %v6488
        %6490 = vmatprep.mubr.f32.mxu0 0.0
        %6491 = vmatmul.mubr.f32.gmra.mrb[0].mxu0 %v6211
        %v6492 = vpop.f32.mrb[0].mxu0
        %v6493 = vadd.f32 0.0, %v6492
        %v6494 = vpop.f32.mrb[0].mxu0
        %v6495 = vadd.f32 0.0, %v6494
        %6496 = vmatprep.mubr.f32.mxu0 0.0
        %6497 = vmatmul.mubr.f32.gmra.mrb[0].mxu0 %v6214
        %v6498 = vpop.f32.mrb[0].mxu0
        %v6499 = vadd.f32 0.0, %v6498
        %v6500 = vpop.f32.mrb[0].mxu0
        %v6501 = vadd.f32 0.0, %v6500
        %6502 = vmatprep.mubr.f32.mxu0 0.0
        %6503 = vmatmul.mubr.f32.gmra.mrb[0].mxu0 %v6217
        %v6504 = vpop.f32.mrb[0].mxu0
        %v6505 = vadd.f32 0.0, %v6504
        %v6506 = vpop.f32.mrb[0].mxu0
        %v6507 = vadd.f32 0.0, %v6506
        %6508 = vmatprep.mubr.f32.mxu0 0.0
        %6509 = vmatmul.mubr.f32.gmra.mrb[0].mxu0 %v6220
        %v6510 = vpop.f32.mrb[0].mxu0
        %v6511 = vadd.f32 0.0, %v6510
        %v6512 = vpop.f32.mrb[0].mxu0
        %v6513 = vadd.f32 0.0, %v6512
        %6514 = vmatprep.mubr.f32.mxu0 0.0
        %6515 = vmatmul.mubr.f32.gmra.mrb[0].mxu0 %v6223
        %v6516 = vpop.f32.mrb[0].mxu0
        %v6517 = vadd.f32 0.0, %v6516
        %v6518 = vpop.f32.mrb[0].mxu0
        %v6519 = vadd.f32 0.0, %v6518
        %6520 = vmatprep.mubr.f32.mxu0 0.0
        %6521 = vmatmul.mubr.f32.gmra.mrb[0].mxu0 %v6226
        %v6522 = vpop.f32.mrb[0].mxu0
        %v6523 = vadd.f32 0.0, %v6522
        %v6524 = vpop.f32.mrb[0].mxu0
        %v6525 = vadd.f32 0.0, %v6524
        %6526 = vmatprep.mubr.f32.mxu0 0.0
        %6527 = vmatmul.mubr.f32.gmra.mrb[0].mxu0 %v6229
        %v6528 = vpop.f32.mrb[0].mxu0
        %v6529 = vadd.f32 0.0, %v6528
        %v6530 = vpop.f32.mrb[0].mxu0
        %v6531 = vadd.f32 0.0, %v6530
        %6532 = vmatprep.mubr.f32.mxu0 0.0
        %6533 = vmatmul.mubr.f32.gmra.mrb[0].mxu0 %v6232
        %v6534 = vpop.f32.mrb[0].mxu0
        %v6535 = vadd.f32 0.0, %v6534
        %v6536 = vpop.f32.mrb[0].mxu0
        %v6537 = vadd.f32 0.0, %v6536
        %6538 = vmatprep.mubr.f32.mxu0 0.0
        %6539 = vmatmul.mubr.f32.gmra.mrb[0].mxu0 %v6235
        %v6540 = vpop.f32.mrb[0].mxu0
        %v6541 = vadd.f32 0.0, %v6540
        %v6542 = vpop.f32.mrb[0].mxu0
        %v6543 = vadd.f32 0.0, %v6542
        %6544 = vmatprep.mubr.f32.mxu0 0.0
        %6545 = vmatmul.mubr.f32.gmra.mrb[0].mxu0 %v6238
        %v6546 = vpop.f32.mrb[0].mxu0
        %v6547 = vadd.f32 0.0, %v6546
        %v6548 = vpop.f32.mrb[0].mxu0
        %v6549 = vadd.f32 0.0, %v6548
        %6550 = vmatprep.mubr.f32.mxu0 0.0
        %6551 = vmatmul.mubr.f32.gmra.mrb[0].mxu0 %v6241
        %v6552 = vpop.f32.mrb[0].mxu0
        %v6553 = vadd.f32 0.0, %v6552
        %v6554 = vpop.f32.mrb[0].mxu0
        %v6555 = vadd.f32 0.0, %v6554
        %6556 = vmatprep.mubr.f32.mxu0 0.0
        %6557 = vmatmul.mubr.f32.gmra.mrb[0].mxu0 %v6244
        %v6558 = vpop.f32.mrb[0].mxu0
        %v6559 = vadd.f32 0.0, %v6558
        %v6560 = vpop.f32.mrb[0].mxu0
        %v6561 = vadd.f32 0.0, %v6560
        %6562 = vmatprep.mubr.f32.mxu0 0.0
        %6563 = vmatmul.mubr.f32.gmra.mrb[0].mxu0 %v6247
        %v6564 = vpop.f32.mrb[0].mxu0
        %v6565 = vadd.f32 0.0, %v6564
        %v6566 = vpop.f32.mrb[0].mxu0
        %v6567 = vadd.f32 0.0, %v6566
        %6568 = vmatprep.mubr.f32.mxu0 0.0
        %6569 = vmatmul.mubr.f32.gmra.mrb[0].mxu0 %v6250
        %v6570 = vpop.f32.mrb[0].mxu0
        %v6571 = vadd.f32 0.0, %v6570
        %v6572 = vpop.f32.mrb[0].mxu0
        %v6573 = vadd.f32 0.0, %v6572
        %6574 = vmatprep.mubr.f32.mxu0 0.0
        %6575 = vmatmul.mubr.f32.gmra.mrb[0].mxu0 %v6253
        %v6576 = vpop.f32.mrb[0].mxu0
        %v6577 = vadd.f32 0.0, %v6576
        %v6578 = vpop.f32.mrb[0].mxu0
        %v6579 = vadd.f32 0.0, %v6578
        %6580 = vmatprep.mubr.f32.mxu0 0.0
        %6581 = vmatmul.mubr.f32.gmra.mrb[0].mxu0 %v6256
        %v6582 = vpop.f32.mrb[0].mxu0
        %v6583 = vadd.f32 0.0, %v6582
        %v6584 = vpop.f32.mrb[0].mxu0
        %v6585 = vadd.f32 0.0, %v6584
        %6586 = vmatprep.mubr.f32.mxu0 0.0
        %6587 = vmatmul.mubr.f32.gmra.mrb[0].mxu0 %v6259
        %v6588 = vpop.f32.mrb[0].mxu0
        %v6589 = vadd.f32 0.0, %v6588
        %v6590 = vpop.f32.mrb[0].mxu0
        %v6591 = vadd.f32 0.0, %v6590
        %6592 = vmatprep.mubr.f32.mxu0 0.0
        %6593 = vmatmul.mubr.f32.gmra.mrb[0].mxu0 %v6262
        %v6594 = vpop.f32.mrb[0].mxu0
        %v6595 = vadd.f32 0.0, %v6594
        %v6596 = vpop.f32.mrb[0].mxu0
        %v6597 = vadd.f32 0.0, %v6596
        %6598 = vmatprep.mubr.f32.mxu0 0.0
        %6599 = vmatmul.mubr.f32.gmra.mrb[0].mxu0 %v6265
        %v6600 = vpop.f32.mrb[0].mxu0
        %v6601 = vadd.f32 0.0, %v6600
        %v6602 = vpop.f32.mrb[0].mxu0
        %v6603 = vadd.f32 0.0, %v6602
        %6604 = vmatprep.mubr.f32.mxu0 0.0
        %6605 = vmatmul.mubr.f32.gmra.mrb[0].mxu0 %v6268
        %v6606 = vpop.f32.mrb[0].mxu0
        %v6607 = vadd.f32 0.0, %v6606
        %v6608 = vpop.f32.mrb[0].mxu0
        %v6609 = vadd.f32 0.0, %v6608
        %6610 = vmatprep.mubr.f32.mxu0 0.0
        %6611 = vmatmul.mubr.f32.gmra.mrb[0].mxu0 %v6271
        %v6612 = vpop.f32.mrb[0].mxu0
        %v6613 = vadd.f32 0.0, %v6612
        %v6614 = vpop.f32.mrb[0].mxu0
        %v6615 = vadd.f32 0.0, %v6614
        %6616 = vmatprep.mubr.f32.mxu0 0.0
        %6617 = vmatmul.mubr.f32.gmra.mrb[0].mxu0 %v6274
        %v6618 = vpop.f32.mrb[0].mxu0
        %v6619 = vadd.f32 0.0, %v6618
        %v6620 = vpop.f32.mrb[0].mxu0
        %v6621 = vadd.f32 0.0, %v6620
        %6622 = vmatprep.mubr.f32.mxu0 0.0
        %6623 = vmatmul.mubr.f32.gmra.mrb[0].mxu0 %v6277
        %v6624 = vpop.f32.mrb[0].mxu0
        %v6625 = vadd.f32 0.0, %v6624
        %v6626 = vpop.f32.mrb[0].mxu0
        %v6627 = vadd.f32 0.0, %v6626
        %6628 = vmatprep.mubr.f32.mxu0 0.0
        %6629 = vmatmul.mubr.f32.gmra.mrb[0].mxu0 %v6280
        %v6630 = vpop.f32.mrb[0].mxu0
        %v6631 = vadd.f32 0.0, %v6630
        %v6632 = vpop.f32.mrb[0].mxu0
        %v6633 = vadd.f32 0.0, %v6632
        %6634 = vmatprep.mubr.f32.mxu0 0.0
        %6635 = vmatmul.mubr.f32.gmra.mrb[0].mxu0 %v6283
        %v6636 = vpop.f32.mrb[0].mxu0
        %v6637 = vadd.f32 0.0, %v6636
        %v6638 = vpop.f32.mrb[0].mxu0
        %v6639 = vadd.f32 0.0, %v6638
        %6640 = vmatprep.mubr.f32.mxu0 0.0
        %6641 = vmatmul.mubr.f32.gmra.mrb[0].mxu0 %v6286
        %v6642 = vpop.f32.mrb[0].mxu0
        %v6643 = vadd.f32 0.0, %v6642
        %v6644 = vpop.f32.mrb[0].mxu0
        %v6645 = vadd.f32 0.0, %v6644
        %6646 = vmatprep.mubr.f32.mxu0 0.0
        %6647 = vmatmul.mubr.f32.gmra.mrb[0].mxu0 %v6289
        %v6648 = vpop.f32.mrb[0].mxu0
        %v6649 = vadd.f32 0.0, %v6648
        %v6650 = vpop.f32.mrb[0].mxu0
        %v6651 = vadd.f32 0.0, %v6650
        %6652 = vmatprep.mubr.f32.mxu0 0.0
        %6653 = vmatmul.mubr.f32.gmra.mrb[0].mxu0 %v6292
        %v6654 = vpop.f32.mrb[0].mxu0
        %v6655 = vadd.f32 0.0, %v6654
        %v6656 = vpop.f32.mrb[0].mxu0
        %v6657 = vadd.f32 0.0, %v6656
        %6658 = vmatprep.mubr.f32.mxu0 0.0
        %6659 = vmatmul.mubr.f32.gmra.mrb[0].mxu0 %v6295
        %v6660 = vpop.f32.mrb[0].mxu0
        %v6661 = vadd.f32 0.0, %v6660
        %v6662 = vpop.f32.mrb[0].mxu0
        %v6663 = vadd.f32 0.0, %v6662
        %6664 = vmatprep.mubr.f32.mxu0 0.0
        %6665 = vmatmul.mubr.f32.gmra.mrb[0].mxu0 %v6298
        %v6666 = vpop.f32.mrb[0].mxu0
        %v6667 = vadd.f32 0.0, %v6666
        %v6668 = vpop.f32.mrb[0].mxu0
        %v6669 = vadd.f32 0.0, %v6668
        %6670 = vmatprep.mubr.f32.mxu0 0.0
        %6671 = vmatmul.mubr.f32.gmra.mrb[0].mxu0 %v6301
        %v6672 = vpop.f32.mrb[0].mxu0
        %v6673 = vadd.f32 0.0, %v6672
        %v6674 = vpop.f32.mrb[0].mxu0
        %v6675 = vadd.f32 0.0, %v6674
        %6676 = vmatprep.mubr.f32.mxu0 0.0
        %6677 = vmatmul.mubr.f32.gmra.mrb[0].mxu0 %v6304
        %v6678 = vpop.f32.mrb[0].mxu0
        %v6679 = vadd.f32 0.0, %v6678
        %v6680 = vpop.f32.mrb[0].mxu0
        %v6681 = vadd.f32 0.0, %v6680
        %6682 = vmatprep.mubr.f32.mxu0 0.0
        %6683 = vmatmul.mubr.f32.gmra.mrb[0].mxu0 %v6307
        %v6684 = vpop.f32.mrb[0].mxu0
        %v6685 = vadd.f32 0.0, %v6684
        %v6686 = vpop.f32.mrb[0].mxu0
        %v6687 = vadd.f32 0.0, %v6686
        %6688 = vmatprep.mubr.f32.mxu0 0.0
        %6689 = vmatmul.mubr.f32.gmra.mrb[0].mxu0 %v6310
        %v6690 = vpop.f32.mrb[0].mxu0
        %v6691 = vadd.f32 0.0, %v6690
        %v6692 = vpop.f32.mrb[0].mxu0
        %v6693 = vadd.f32 0.0, %v6692
        %6694 = vmatprep.mubr.f32.mxu0 0.0
        %6695 = vmatmul.mubr.f32.gmra.mrb[0].mxu0 %v6313
        %v6696 = vpop.f32.mrb[0].mxu0
        %v6697 = vadd.f32 0.0, %v6696
        %v6698 = vpop.f32.mrb[0].mxu0
        %v6699 = vadd.f32 0.0, %v6698
        %6700 = vmatprep.mubr.f32.mxu0 0.0
        %6701 = vmatmul.mubr.f32.gmra.mrb[0].mxu0 %v6316
        %v6702 = vpop.f32.mrb[0].mxu0
        %v6703 = vadd.f32 0.0, %v6702
        %v6704 = vpop.f32.mrb[0].mxu0
        %v6705 = vadd.f32 0.0, %v6704
        %6706 = vmatprep.mubr.f32.mxu0 0.0
        %6707 = vmatmul.mubr.f32.gmra.mrb[0].mxu0 %v6319
        %v6708 = vpop.f32.mrb[0].mxu0
        %v6709 = vadd.f32 0.0, %v6708
        %v6710 = vpop.f32.mrb[0].mxu0
        %v6711 = vadd.f32 0.0, %v6710
        %6712 = vmatprep.mubr.f32.mxu0 0.0
        %6713 = vmatmul.mubr.f32.gmra.mrb[0].mxu0 %v6322
        %v6714 = vpop.f32.mrb[0].mxu0
        %v6715 = vadd.f32 0.0, %v6714
        %v6716 = vpop.f32.mrb[0].mxu0
        %v6717 = vadd.f32 0.0, %v6716
        %6718 = vmatprep.mubr.f32.mxu0 0.0
        %6719 = vmatmul.mubr.f32.gmra.mrb[0].mxu0 %v6325
        %v6720 = vpop.f32.mrb[0].mxu0
        %v6721 = vadd.f32 0.0, %v6720
        %v6722 = vpop.f32.mrb[0].mxu0
        %v6723 = vadd.f32 0.0, %v6722
        %6724 = vmatprep.mubr.f32.mxu0 0.0
        %6725 = vmatmul.mubr.f32.gmra.mrb[0].mxu0 %v6328
        %v6726 = vpop.f32.mrb[0].mxu0
        %v6727 = vadd.f32 0.0, %v6726
        %v6728 = vpop.f32.mrb[0].mxu0
        %v6729 = vadd.f32 0.0, %v6728
        %6730 = vmatprep.mubr.f32.mxu0 0.0
        %6731 = vmatmul.mubr.f32.gmra.mrb[0].mxu0 %v6331
        %v6732 = vpop.f32.mrb[0].mxu0
        %v6733 = vadd.f32 0.0, %v6732
        %v6734 = vpop.f32.mrb[0].mxu0
        %v6735 = vadd.f32 0.0, %v6734
        %6736 = vmatprep.mubr.f32.mxu0 0.0
        %6737 = vmatmul.mubr.f32.gmra.mrb[0].mxu0 %v6334
        %v6738 = vpop.f32.mrb[0].mxu0
        %v6739 = vadd.f32 0.0, %v6738
        %v6740 = vpop.f32.mrb[0].mxu0
        %v6741 = vadd.f32 0.0, %v6740
        %6742 = vmatprep.mubr.f32.mxu0 0.0
        %6743 = vmatmul.mubr.f32.gmra.mrb[0].mxu0 %v6337
        %v6744 = vpop.f32.mrb[0].mxu0
        %v6745 = vadd.f32 0.0, %v6744
        %v6746 = vpop.f32.mrb[0].mxu0
        %v6747 = vadd.f32 0.0, %v6746
        %6748 = vmatprep.mubr.f32.mxu0 0.0
        %6749 = vmatmul.mubr.f32.gmra.mrb[0].mxu0 %v6340
        %v6750 = vpop.f32.mrb[0].mxu0
        %v6751 = vadd.f32 0.0, %v6750
        %v6752 = vpop.f32.mrb[0].mxu0
        %v6753 = vadd.f32 0.0, %v6752
        %6754 = vmatprep.mubr.f32.mxu0 0.0
        %6755 = vmatmul.mubr.f32.gmra.mrb[0].mxu0 %v6343
        %v6756 = vpop.f32.mrb[0].mxu0
        %v6757 = vadd.f32 0.0, %v6756
        %v6758 = vpop.f32.mrb[0].mxu0
        %v6759 = vadd.f32 0.0, %v6758
        %6760 = vmatprep.mubr.f32.mxu0 0.0
        %6761 = vmatmul.mubr.f32.gmra.mrb[0].mxu0 %v6346
        %v6762 = vpop.f32.mrb[0].mxu0
        %v6763 = vadd.f32 0.0, %v6762
        %v6764 = vpop.f32.mrb[0].mxu0
        %v6765 = vadd.f32 0.0, %v6764
        %6766 = vmatprep.mubr.f32.mxu0 0.0
        %6767 = vmatmul.mubr.f32.gmra.mrb[0].mxu0 %v6349
        %v6768 = vpop.f32.mrb[0].mxu0
        %v6769 = vadd.f32 0.0, %v6768
        %v6770 = vpop.f32.mrb[0].mxu0
        %v6771 = vadd.f32 0.0, %v6770
        %6772 = vmatprep.mubr.f32.mxu0 0.0
        %6773 = vmatmul.mubr.f32.gmra.mrb[0].mxu0 %v6352
        %v6774 = vpop.f32.mrb[0].mxu0
        %v6775 = vadd.f32 0.0, %v6774
        %v6776 = vpop.f32.mrb[0].mxu0
        %v6777 = vadd.f32 0.0, %v6776
        %6778 = vmatprep.mubr.f32.mxu0 0.0
        %6779 = vmatmul.mubr.f32.gmra.mrb[0].mxu0 %v6355
        %v6780 = vpop.f32.mrb[0].mxu0
        %v6781 = vadd.f32 0.0, %v6780
        %v6782 = vpop.f32.mrb[0].mxu0
        %v6783 = vadd.f32 0.0, %v6782
        %6784 = vmatprep.mubr.f32.mxu0 0.0
        %6785 = vmatmul.mubr.f32.gmra.mrb[0].mxu0 %v6358
        %v6786 = vpop.f32.mrb[0].mxu0
        %v6787 = vadd.f32 0.0, %v6786
        %v6788 = vpop.f32.mrb[0].mxu0
        %v6789 = vadd.f32 0.0, %v6788
        %6790 = vmatprep.mubr.f32.mxu0 0.0
        %6791 = vmatmul.mubr.f32.gmra.mrb[0].mxu0 %v6361
        %v6792 = vpop.f32.mrb[0].mxu0
        %v6793 = vadd.f32 0.0, %v6792
        %v6794 = vpop.f32.mrb[0].mxu0
        %v6795 = vadd.f32 0.0, %v6794
        %6796 = vmatprep.mubr.f32.mxu0 0.0
        %6797 = vmatmul.mubr.f32.gmra.mrb[0].mxu0 %v6364
        %v6798 = vpop.f32.mrb[0].mxu0
        %v6799 = vadd.f32 0.0, %v6798
        %v6800 = vpop.f32.mrb[0].mxu0
        %v6801 = vadd.f32 0.0, %v6800
        %6802 = vmatprep.mubr.f32.mxu0 0.0
        %6803 = vmatmul.mubr.f32.gmra.mrb[0].mxu0 %v6367
        %v6804 = vpop.f32.mrb[0].mxu0
        %v6805 = vadd.f32 0.0, %v6804
        %v6806 = vpop.f32.mrb[0].mxu0
        %v6807 = vadd.f32 0.0, %v6806
        %6808 = vmatprep.mubr.f32.mxu0 0.0
        %6809 = vmatmul.mubr.f32.gmra.mrb[0].mxu0 %v6370
        %v6810 = vpop.f32.mrb[0].mxu0
        %v6811 = vadd.f32 0.0, %v6810
        %v6812 = vpop.f32.mrb[0].mxu0
        %v6813 = vadd.f32 0.0, %v6812
        %6814 = vmatprep.mubr.f32.mxu0 0.0
        %6815 = vmatmul.mubr.f32.gmra.mrb[0].mxu0 %v6373
        %v6816 = vpop.f32.mrb[0].mxu0
        %v6817 = vadd.f32 0.0, %v6816
        %v6818 = vpop.f32.mrb[0].mxu0
        %v6819 = vadd.f32 0.0, %v6818
        %6820 = vmatprep.mubr.f32.mxu0 0.0
        %6821 = vmatmul.mubr.f32.gmra.mrb[0].mxu0 %v6376
        %v6822 = vpop.f32.mrb[0].mxu0
        %v6823 = vadd.f32 0.0, %v6822
        %v6824 = vpop.f32.mrb[0].mxu0
        %v6825 = vadd.f32 0.0, %v6824
        %6826 = vmatprep.mubr.f32.mxu0 0.0
        %6827 = vmatmul.mubr.f32.gmra.mrb[0].mxu0 %v6379
        %v6828 = vpop.f32.mrb[0].mxu0
        %v6829 = vadd.f32 0.0, %v6828
        %v6830 = vpop.f32.mrb[0].mxu0
        %v6831 = vadd.f32 0.0, %v6830
        %6832 = vmatprep.mubr.f32.mxu0 0.0
        %6833 = vmatmul.mubr.f32.gmra.mrb[0].mxu0 %v6382
        %v6834 = vpop.f32.mrb[0].mxu0
        %v6835 = vadd.f32 0.0, %v6834
        %v6836 = vpop.f32.mrb[0].mxu0
        %v6837 = vadd.f32 0.0, %v6836
        %6838 = vmatprep.mubr.f32.mxu0 0.0
        %6839 = vmatmul.mubr.f32.gmra.mrb[0].mxu0 %v6385
        %v6840 = vpop.f32.mrb[0].mxu0
        %v6841 = vadd.f32 0.0, %v6840
        %v6842 = vpop.f32.mrb[0].mxu0
        %v6843 = vadd.f32 0.0, %v6842
        %6844 = vmatprep.mubr.f32.mxu0 0.0
        %6845 = vmatmul.mubr.f32.gmra.mrb[0].mxu0 %v6388
        %v6846 = vpop.f32.mrb[0].mxu0
        %v6847 = vadd.f32 0.0, %v6846
        %v6848 = vpop.f32.mrb[0].mxu0
        %v6849 = vadd.f32 0.0, %v6848
        %6850 = vmatprep.mubr.f32.mxu0 0.0
        %6851 = vmatmul.mubr.f32.gmra.mrb[0].mxu0 %v6391
        %v6852 = vpop.f32.mrb[0].mxu0
        %v6853 = vadd.f32 0.0, %v6852
        %v6854 = vpop.f32.mrb[0].mxu0
        %v6855 = vadd.f32 0.0, %v6854
        %6856 = vmatprep.mubr.f32.mxu0 0.0
        %6857 = vmatmul.mubr.f32.gmra.mrb[0].mxu0 %v6394
        %v6858 = vpop.f32.mrb[0].mxu0
        %v6859 = vadd.f32 0.0, %v6858
        %v6860 = vpop.f32.mrb[0].mxu0
        %v6861 = vadd.f32 0.0, %v6860
        %6862 = vmatprep.mubr.f32.mxu0 0.0
        %6863 = vmatmul.mubr.f32.gmra.mrb[0].mxu0 %v6397
        %v6864 = vpop.f32.mrb[0].mxu0
        %v6865 = vadd.f32 0.0, %v6864
        %v6866 = vpop.f32.mrb[0].mxu0
        %v6867 = vadd.f32 0.0, %v6866
        %6868 = vmatprep.mubr.f32.mxu0 0.0
        %6869 = vmatmul.mubr.f32.gmra.mrb[0].mxu0 %v6400
        %v6870 = vpop.f32.mrb[0].mxu0
        %v6871 = vadd.f32 0.0, %v6870
        %v6872 = vpop.f32.mrb[0].mxu0
        %v6873 = vadd.f32 0.0, %v6872
        %6874 = vmatprep.mubr.f32.mxu0 0.0
        %6875 = vmatmul.mubr.f32.gmra.mrb[0].mxu0 %v6403
        %v6876 = vpop.f32.mrb[0].mxu0
        %v6877 = vadd.f32 0.0, %v6876
        %v6878 = vpop.f32.mrb[0].mxu0
        %v6879 = vadd.f32 0.0, %v6878
        %6880 = vmatprep.mubr.f32.mxu0 0.0
        %6881 = vmatmul.mubr.f32.gmra.mrb[0].mxu0 %v6406
        %v6882 = vpop.f32.mrb[0].mxu0
        %v6883 = vadd.f32 0.0, %v6882
        %v6884 = vpop.f32.mrb[0].mxu0
        %v6885 = vadd.f32 0.0, %v6884
        %6886 = vdwg.mxu0
        %6887 = vmatprep.subr.mxu0 %v6194
        %6888 = vmatpush1.msra.mxu0 %v6193
        %6889 = vmatprep.subr.mxu0 %v6199
        %6890 = vmatpush1.msra.mxu0 %v6198
        %6891 = vmatprep.subr.mxu0 0.0
        %6892 = vmatpush1.msra.mxu0 0.0
        %6893 = vmatprep.subr.mxu0 0.0
        %6894 = vmatpush1.msra.mxu0 0.0
        %6895 = vmatprep.subr.mxu0 0.0
        %6896 = vmatpush1.msra.mxu0 0.0
        %6897 = vmatprep.subr.mxu0 0.0
        %6898 = vmatpush1.msra.mxu0 0.0
        %6899 = vmatprep.subr.mxu0 0.0
        %6900 = vmatpush1.msra.mxu0 0.0
        %6901 = vmatprep.subr.mxu0 0.0
        %6902 = vmatpush1.msra.mxu0 0.0
        %6903 = vmatprep.subr.mxu0 0.0
        %6904 = vmatpush1.msra.mxu0 0.0
        %6905 = vmatprep.subr.mxu0 0.0
        %6906 = vmatpush1.msra.mxu0 0.0
        %6907 = vmatprep.subr.mxu0 0.0
        %6908 = vmatpush1.msra.mxu0 0.0
        %6909 = vmatprep.subr.mxu0 0.0
        %6910 = vmatpush1.msra.mxu0 0.0
        %6911 = vmatprep.subr.mxu0 0.0
        %6912 = vmatpush1.msra.mxu0 0.0
        %6913 = vmatprep.subr.mxu0 0.0
        %6914 = vmatpush1.msra.mxu0 0.0
        %6915 = vmatprep.subr.mxu0 0.0
        %6916 = vmatpush1.msra.mxu0 0.0
        %6917 = vmatprep.subr.mxu0 0.0
        %6918 = vmatpush1.msra.mxu0 0.0
        %6919 = vmatprep.subr.mxu0 0.0
        %6920 = vmatpush1.msra.mxu0 0.0
        %6921 = vmatprep.subr.mxu0 0.0
        %6922 = vmatpush1.msra.mxu0 0.0
        %6923 = vmatprep.subr.mxu0 0.0
        %6924 = vmatpush1.msra.mxu0 0.0
        %6925 = vmatprep.subr.mxu0 0.0
        %6926 = vmatpush1.msra.mxu0 0.0
        %6927 = vmatprep.subr.mxu0 0.0
        %6928 = vmatpush1.msra.mxu0 0.0
        %6929 = vmatprep.subr.mxu0 0.0
        %6930 = vmatpush1.msra.mxu0 0.0
        %6931 = vmatprep.subr.mxu0 0.0
        %6932 = vmatpush1.msra.mxu0 0.0
        %6933 = vmatprep.subr.mxu0 0.0
        %6934 = vmatpush1.msra.mxu0 0.0
        %6935 = vmatprep.subr.mxu0 0.0
        %6936 = vmatpush1.msra.mxu0 0.0
        %6937 = vmatprep.subr.mxu0 0.0
        %6938 = vmatpush1.msra.mxu0 0.0
        %6939 = vmatprep.subr.mxu0 0.0
        %6940 = vmatpush1.msra.mxu0 0.0
        %6941 = vmatprep.subr.mxu0 0.0
        %6942 = vmatpush1.msra.mxu0 0.0
        %6943 = vmatprep.subr.mxu0 0.0
        %6944 = vmatpush1.msra.mxu0 0.0
        %6945 = vmatprep.subr.mxu0 0.0
        %6946 = vmatpush1.msra.mxu0 0.0
        %6947 = vmatprep.subr.mxu0 0.0
        %6948 = vmatpush1.msra.mxu0 0.0
        %6949 = vmatprep.subr.mxu0 0.0
        %6950 = vmatpush1.msra.mxu0 0.0
        %6951 = vmatprep.mubr.f32.mxu0 0.0
        %6952 = vmatmul.mubr.f32.gmra.mrb[0].mxu0 %v6202
        %v6953 = vpop.f32.mrb[0].mxu0
        %v6954 = vadd.f32 0.0, %v6953
        %v6955 = vpop.f32.mrb[0].mxu0
        %v6956 = vadd.f32 0.0, %v6955
        %6957 = vmatprep.mubr.f32.mxu0 0.0
        %6958 = vmatmul.mubr.f32.gmra.mrb[0].mxu0 %v6205
        %v6959 = vpop.f32.mrb[0].mxu0
        %v6960 = vadd.f32 0.0, %v6959
        %v6961 = vpop.f32.mrb[0].mxu0
        %v6962 = vadd.f32 0.0, %v6961
        %6963 = vmatprep.mubr.f32.mxu0 0.0
        %6964 = vmatmul.mubr.f32.gmra.mrb[0].mxu0 %v6208
        %v6965 = vpop.f32.mrb[0].mxu0
        %v6966 = vadd.f32 0.0, %v6965
        %v6967 = vpop.f32.mrb[0].mxu0
        %v6968 = vadd.f32 0.0, %v6967
        %6969 = vmatprep.mubr.f32.mxu0 0.0
        %6970 = vmatmul.mubr.f32.gmra.mrb[0].mxu0 %v6211
        %v6971 = vpop.f32.mrb[0].mxu0
        %v6972 = vadd.f32 0.0, %v6971
        %v6973 = vpop.f32.mrb[0].mxu0
        %v6974 = vadd.f32 0.0, %v6973
        %6975 = vmatprep.mubr.f32.mxu0 0.0
        %6976 = vmatmul.mubr.f32.gmra.mrb[0].mxu0 %v6214
        %v6977 = vpop.f32.mrb[0].mxu0
        %v6978 = vadd.f32 0.0, %v6977
        %v6979 = vpop.f32.mrb[0].mxu0
        %v6980 = vadd.f32 0.0, %v6979
        %6981 = vmatprep.mubr.f32.mxu0 0.0
        %6982 = vmatmul.mubr.f32.gmra.mrb[0].mxu0 %v6217
        %v6983 = vpop.f32.mrb[0].mxu0
        %v6984 = vadd.f32 0.0, %v6983
        %v6985 = vpop.f32.mrb[0].mxu0
        %v6986 = vadd.f32 0.0, %v6985
        %6987 = vmatprep.mubr.f32.mxu0 0.0
        %6988 = vmatmul.mubr.f32.gmra.mrb[0].mxu0 %v6220
        %v6989 = vpop.f32.mrb[0].mxu0
        %v6990 = vadd.f32 0.0, %v6989
        %v6991 = vpop.f32.mrb[0].mxu0
        %v6992 = vadd.f32 0.0, %v6991
        %6993 = vmatprep.mubr.f32.mxu0 0.0
        %6994 = vmatmul.mubr.f32.gmra.mrb[0].mxu0 %v6223
        %v6995 = vpop.f32.mrb[0].mxu0
        %v6996 = vadd.f32 0.0, %v6995
        %v6997 = vpop.f32.mrb[0].mxu0
        %v6998 = vadd.f32 0.0, %v6997
        %6999 = vmatprep.mubr.f32.mxu0 0.0
        %7000 = vmatmul.mubr.f32.gmra.mrb[0].mxu0 %v6226
        %v7001 = vpop.f32.mrb[0].mxu0
        %v7002 = vadd.f32 0.0, %v7001
        %v7003 = vpop.f32.mrb[0].mxu0
        %v7004 = vadd.f32 0.0, %v7003
        %7005 = vmatprep.mubr.f32.mxu0 0.0
        %7006 = vmatmul.mubr.f32.gmra.mrb[0].mxu0 %v6229
        %v7007 = vpop.f32.mrb[0].mxu0
        %v7008 = vadd.f32 0.0, %v7007
        %v7009 = vpop.f32.mrb[0].mxu0
        %v7010 = vadd.f32 0.0, %v7009
        %7011 = vmatprep.mubr.f32.mxu0 0.0
        %7012 = vmatmul.mubr.f32.gmra.mrb[0].mxu0 %v6232
        %v7013 = vpop.f32.mrb[0].mxu0
        %v7014 = vadd.f32 0.0, %v7013
        %v7015 = vpop.f32.mrb[0].mxu0
        %v7016 = vadd.f32 0.0, %v7015
        %7017 = vmatprep.mubr.f32.mxu0 0.0
        %7018 = vmatmul.mubr.f32.gmra.mrb[0].mxu0 %v6235
        %v7019 = vpop.f32.mrb[0].mxu0
        %v7020 = vadd.f32 0.0, %v7019
        %v7021 = vpop.f32.mrb[0].mxu0
        %v7022 = vadd.f32 0.0, %v7021
        %7023 = vmatprep.mubr.f32.mxu0 0.0
        %7024 = vmatmul.mubr.f32.gmra.mrb[0].mxu0 %v6238
        %v7025 = vpop.f32.mrb[0].mxu0
        %v7026 = vadd.f32 0.0, %v7025
        %v7027 = vpop.f32.mrb[0].mxu0
        %v7028 = vadd.f32 0.0, %v7027
        %7029 = vmatprep.mubr.f32.mxu0 0.0
        %7030 = vmatmul.mubr.f32.gmra.mrb[0].mxu0 %v6241
        %v7031 = vpop.f32.mrb[0].mxu0
        %v7032 = vadd.f32 0.0, %v7031
        %v7033 = vpop.f32.mrb[0].mxu0
        %v7034 = vadd.f32 0.0, %v7033
        %7035 = vmatprep.mubr.f32.mxu0 0.0
        %7036 = vmatmul.mubr.f32.gmra.mrb[0].mxu0 %v6244
        %v7037 = vpop.f32.mrb[0].mxu0
        %v7038 = vadd.f32 0.0, %v7037
        %v7039 = vpop.f32.mrb[0].mxu0
        %v7040 = vadd.f32 0.0, %v7039
        %7041 = vmatprep.mubr.f32.mxu0 0.0
        %7042 = vmatmul.mubr.f32.gmra.mrb[0].mxu0 %v6247
        %v7043 = vpop.f32.mrb[0].mxu0
        %v7044 = vadd.f32 0.0, %v7043
        %v7045 = vpop.f32.mrb[0].mxu0
        %v7046 = vadd.f32 0.0, %v7045
        %7047 = vmatprep.mubr.f32.mxu0 0.0
        %7048 = vmatmul.mubr.f32.gmra.mrb[0].mxu0 %v6250
        %v7049 = vpop.f32.mrb[0].mxu0
        %v7050 = vadd.f32 0.0, %v7049
        %v7051 = vpop.f32.mrb[0].mxu0
        %v7052 = vadd.f32 0.0, %v7051
        %7053 = vmatprep.mubr.f32.mxu0 0.0
        %7054 = vmatmul.mubr.f32.gmra.mrb[0].mxu0 %v6253
        %v7055 = vpop.f32.mrb[0].mxu0
        %v7056 = vadd.f32 0.0, %v7055
        %v7057 = vpop.f32.mrb[0].mxu0
        %v7058 = vadd.f32 0.0, %v7057
        %7059 = vmatprep.mubr.f32.mxu0 0.0
        %7060 = vmatmul.mubr.f32.gmra.mrb[0].mxu0 %v6256
        %v7061 = vpop.f32.mrb[0].mxu0
        %v7062 = vadd.f32 0.0, %v7061
        %v7063 = vpop.f32.mrb[0].mxu0
        %v7064 = vadd.f32 0.0, %v7063
        %7065 = vmatprep.mubr.f32.mxu0 0.0
        %7066 = vmatmul.mubr.f32.gmra.mrb[0].mxu0 %v6259
        %v7067 = vpop.f32.mrb[0].mxu0
        %v7068 = vadd.f32 0.0, %v7067
        %v7069 = vpop.f32.mrb[0].mxu0
        %v7070 = vadd.f32 0.0, %v7069
        %7071 = vmatprep.mubr.f32.mxu0 0.0
        %7072 = vmatmul.mubr.f32.gmra.mrb[0].mxu0 %v6262
        %v7073 = vpop.f32.mrb[0].mxu0
        %v7074 = vadd.f32 0.0, %v7073
        %v7075 = vpop.f32.mrb[0].mxu0
        %v7076 = vadd.f32 0.0, %v7075
        %7077 = vmatprep.mubr.f32.mxu0 0.0
        %7078 = vmatmul.mubr.f32.gmra.mrb[0].mxu0 %v6265
        %v7079 = vpop.f32.mrb[0].mxu0
        %v7080 = vadd.f32 0.0, %v7079
        %v7081 = vpop.f32.mrb[0].mxu0
        %v7082 = vadd.f32 0.0, %v7081
        %7083 = vmatprep.mubr.f32.mxu0 0.0
        %7084 = vmatmul.mubr.f32.gmra.mrb[0].mxu0 %v6268
        %v7085 = vpop.f32.mrb[0].mxu0
        %v7086 = vadd.f32 0.0, %v7085
        %v7087 = vpop.f32.mrb[0].mxu0
        %v7088 = vadd.f32 0.0, %v7087
        %7089 = vmatprep.mubr.f32.mxu0 0.0
        %7090 = vmatmul.mubr.f32.gmra.mrb[0].mxu0 %v6271
        %v7091 = vpop.f32.mrb[0].mxu0
        %v7092 = vadd.f32 0.0, %v7091
        %v7093 = vpop.f32.mrb[0].mxu0
        %v7094 = vadd.f32 0.0, %v7093
        %7095 = vmatprep.mubr.f32.mxu0 0.0
        %7096 = vmatmul.mubr.f32.gmra.mrb[0].mxu0 %v6274
        %v7097 = vpop.f32.mrb[0].mxu0
        %v7098 = vadd.f32 0.0, %v7097
        %v7099 = vpop.f32.mrb[0].mxu0
        %v7100 = vadd.f32 0.0, %v7099
        %7101 = vmatprep.mubr.f32.mxu0 0.0
        %7102 = vmatmul.mubr.f32.gmra.mrb[0].mxu0 %v6277
        %v7103 = vpop.f32.mrb[0].mxu0
        %v7104 = vadd.f32 0.0, %v7103
        %v7105 = vpop.f32.mrb[0].mxu0
        %v7106 = vadd.f32 0.0, %v7105
        %7107 = vmatprep.mubr.f32.mxu0 0.0
        %7108 = vmatmul.mubr.f32.gmra.mrb[0].mxu0 %v6280
        %v7109 = vpop.f32.mrb[0].mxu0
        %v7110 = vadd.f32 0.0, %v7109
        %v7111 = vpop.f32.mrb[0].mxu0
        %v7112 = vadd.f32 0.0, %v7111
        %7113 = vmatprep.mubr.f32.mxu0 0.0
        %7114 = vmatmul.mubr.f32.gmra.mrb[0].mxu0 %v6283
        %v7115 = vpop.f32.mrb[0].mxu0
        %v7116 = vadd.f32 0.0, %v7115
        %v7117 = vpop.f32.mrb[0].mxu0
        %v7118 = vadd.f32 0.0, %v7117
        %7119 = vmatprep.mubr.f32.mxu0 0.0
        %7120 = vmatmul.mubr.f32.gmra.mrb[0].mxu0 %v6286
        %v7121 = vpop.f32.mrb[0].mxu0
        %v7122 = vadd.f32 0.0, %v7121
        %v7123 = vpop.f32.mrb[0].mxu0
        %v7124 = vadd.f32 0.0, %v7123
        %7125 = vmatprep.mubr.f32.mxu0 0.0
        %7126 = vmatmul.mubr.f32.gmra.mrb[0].mxu0 %v6289
        %v7127 = vpop.f32.mrb[0].mxu0
        %v7128 = vadd.f32 0.0, %v7127
        %v7129 = vpop.f32.mrb[0].mxu0
        %v7130 = vadd.f32 0.0, %v7129
        %7131 = vmatprep.mubr.f32.mxu0 0.0
        %7132 = vmatmul.mubr.f32.gmra.mrb[0].mxu0 %v6292
        %v7133 = vpop.f32.mrb[0].mxu0
        %v7134 = vadd.f32 0.0, %v7133
        %v7135 = vpop.f32.mrb[0].mxu0
        %v7136 = vadd.f32 0.0, %v7135
        %7137 = vmatprep.mubr.f32.mxu0 0.0
        %7138 = vmatmul.mubr.f32.gmra.mrb[0].mxu0 %v6295
        %v7139 = vpop.f32.mrb[0].mxu0
        %v7140 = vadd.f32 0.0, %v7139
        %v7141 = vpop.f32.mrb[0].mxu0
        %v7142 = vadd.f32 0.0, %v7141
        %7143 = vmatprep.mubr.f32.mxu0 0.0
        %7144 = vmatmul.mubr.f32.gmra.mrb[0].mxu0 %v6298
        %v7145 = vpop.f32.mrb[0].mxu0
        %v7146 = vadd.f32 0.0, %v7145
        %v7147 = vpop.f32.mrb[0].mxu0
        %v7148 = vadd.f32 0.0, %v7147
        %7149 = vmatprep.mubr.f32.mxu0 0.0
        %7150 = vmatmul.mubr.f32.gmra.mrb[0].mxu0 %v6301
        %v7151 = vpop.f32.mrb[0].mxu0
        %v7152 = vadd.f32 0.0, %v7151
        %v7153 = vpop.f32.mrb[0].mxu0
        %v7154 = vadd.f32 0.0, %v7153
        %7155 = vmatprep.mubr.f32.mxu0 0.0
        %7156 = vmatmul.mubr.f32.gmra.mrb[0].mxu0 %v6304
        %v7157 = vpop.f32.mrb[0].mxu0
        %v7158 = vadd.f32 0.0, %v7157
        %v7159 = vpop.f32.mrb[0].mxu0
        %v7160 = vadd.f32 0.0, %v7159
        %7161 = vmatprep.mubr.f32.mxu0 0.0
        %7162 = vmatmul.mubr.f32.gmra.mrb[0].mxu0 %v6307
        %v7163 = vpop.f32.mrb[0].mxu0
        %v7164 = vadd.f32 0.0, %v7163
        %v7165 = vpop.f32.mrb[0].mxu0
        %v7166 = vadd.f32 0.0, %v7165
        %7167 = vmatprep.mubr.f32.mxu0 0.0
        %7168 = vmatmul.mubr.f32.gmra.mrb[0].mxu0 %v6310
        %v7169 = vpop.f32.mrb[0].mxu0
        %v7170 = vadd.f32 0.0, %v7169
        %v7171 = vpop.f32.mrb[0].mxu0
        %v7172 = vadd.f32 0.0, %v7171
        %7173 = vmatprep.mubr.f32.mxu0 0.0
        %7174 = vmatmul.mubr.f32.gmra.mrb[0].mxu0 %v6313
        %v7175 = vpop.f32.mrb[0].mxu0
        %v7176 = vadd.f32 0.0, %v7175
        %v7177 = vpop.f32.mrb[0].mxu0
        %v7178 = vadd.f32 0.0, %v7177
        %7179 = vmatprep.mubr.f32.mxu0 0.0
        %7180 = vmatmul.mubr.f32.gmra.mrb[0].mxu0 %v6316
        %v7181 = vpop.f32.mrb[0].mxu0
        %v7182 = vadd.f32 0.0, %v7181
        %v7183 = vpop.f32.mrb[0].mxu0
        %v7184 = vadd.f32 0.0, %v7183
        %7185 = vmatprep.mubr.f32.mxu0 0.0
        %7186 = vmatmul.mubr.f32.gmra.mrb[0].mxu0 %v6319
        %v7187 = vpop.f32.mrb[0].mxu0
        %v7188 = vadd.f32 0.0, %v7187
        %v7189 = vpop.f32.mrb[0].mxu0
        %v7190 = vadd.f32 0.0, %v7189
        %7191 = vmatprep.mubr.f32.mxu0 0.0
        %7192 = vmatmul.mubr.f32.gmra.mrb[0].mxu0 %v6322
        %v7193 = vpop.f32.mrb[0].mxu0
        %v7194 = vadd.f32 0.0, %v7193
        %v7195 = vpop.f32.mrb[0].mxu0
        %v7196 = vadd.f32 0.0, %v7195
        %7197 = vmatprep.mubr.f32.mxu0 0.0
        %7198 = vmatmul.mubr.f32.gmra.mrb[0].mxu0 %v6325
        %v7199 = vpop.f32.mrb[0].mxu0
        %v7200 = vadd.f32 0.0, %v7199
        %v7201 = vpop.f32.mrb[0].mxu0
        %v7202 = vadd.f32 0.0, %v7201
        %7203 = vmatprep.mubr.f32.mxu0 0.0
        %7204 = vmatmul.mubr.f32.gmra.mrb[0].mxu0 %v6328
        %v7205 = vpop.f32.mrb[0].mxu0
        %v7206 = vadd.f32 0.0, %v7205
        %v7207 = vpop.f32.mrb[0].mxu0
        %v7208 = vadd.f32 0.0, %v7207
        %7209 = vmatprep.mubr.f32.mxu0 0.0
        %7210 = vmatmul.mubr.f32.gmra.mrb[0].mxu0 %v6331
        %v7211 = vpop.f32.mrb[0].mxu0
        %v7212 = vadd.f32 0.0, %v7211
        %v7213 = vpop.f32.mrb[0].mxu0
        %v7214 = vadd.f32 0.0, %v7213
        %7215 = vmatprep.mubr.f32.mxu0 0.0
        %7216 = vmatmul.mubr.f32.gmra.mrb[0].mxu0 %v6334
        %v7217 = vpop.f32.mrb[0].mxu0
        %v7218 = vadd.f32 0.0, %v7217
        %v7219 = vpop.f32.mrb[0].mxu0
        %v7220 = vadd.f32 0.0, %v7219
        %7221 = vmatprep.mubr.f32.mxu0 0.0
        %7222 = vmatmul.mubr.f32.gmra.mrb[0].mxu0 %v6337
        %v7223 = vpop.f32.mrb[0].mxu0
        %v7224 = vadd.f32 0.0, %v7223
        %v7225 = vpop.f32.mrb[0].mxu0
        %v7226 = vadd.f32 0.0, %v7225
        %7227 = vmatprep.mubr.f32.mxu0 0.0
        %7228 = vmatmul.mubr.f32.gmra.mrb[0].mxu0 %v6340
        %v7229 = vpop.f32.mrb[0].mxu0
        %v7230 = vadd.f32 0.0, %v7229
        %v7231 = vpop.f32.mrb[0].mxu0
        %v7232 = vadd.f32 0.0, %v7231
        %7233 = vmatprep.mubr.f32.mxu0 0.0
        %7234 = vmatmul.mubr.f32.gmra.mrb[0].mxu0 %v6343
        %v7235 = vpop.f32.mrb[0].mxu0
        %v7236 = vadd.f32 0.0, %v7235
        %v7237 = vpop.f32.mrb[0].mxu0
        %v7238 = vadd.f32 0.0, %v7237
        %7239 = vmatprep.mubr.f32.mxu0 0.0
        %7240 = vmatmul.mubr.f32.gmra.mrb[0].mxu0 %v6346
        %v7241 = vpop.f32.mrb[0].mxu0
        %v7242 = vadd.f32 0.0, %v7241
        %v7243 = vpop.f32.mrb[0].mxu0
        %v7244 = vadd.f32 0.0, %v7243
        %7245 = vmatprep.mubr.f32.mxu0 0.0
        %7246 = vmatmul.mubr.f32.gmra.mrb[0].mxu0 %v6349
        %v7247 = vpop.f32.mrb[0].mxu0
        %v7248 = vadd.f32 0.0, %v7247
        %v7249 = vpop.f32.mrb[0].mxu0
        %v7250 = vadd.f32 0.0, %v7249
        %7251 = vmatprep.mubr.f32.mxu0 0.0
        %7252 = vmatmul.mubr.f32.gmra.mrb[0].mxu0 %v6352
        %v7253 = vpop.f32.mrb[0].mxu0
        %v7254 = vadd.f32 0.0, %v7253
        %v7255 = vpop.f32.mrb[0].mxu0
        %v7256 = vadd.f32 0.0, %v7255
        %7257 = vmatprep.mubr.f32.mxu0 0.0
        %7258 = vmatmul.mubr.f32.gmra.mrb[0].mxu0 %v6355
        %v7259 = vpop.f32.mrb[0].mxu0
        %v7260 = vadd.f32 0.0, %v7259
        %v7261 = vpop.f32.mrb[0].mxu0
        %v7262 = vadd.f32 0.0, %v7261
        %7263 = vmatprep.mubr.f32.mxu0 0.0
        %7264 = vmatmul.mubr.f32.gmra.mrb[0].mxu0 %v6358
        %v7265 = vpop.f32.mrb[0].mxu0
        %v7266 = vadd.f32 0.0, %v7265
        %v7267 = vpop.f32.mrb[0].mxu0
        %v7268 = vadd.f32 0.0, %v7267
        %7269 = vmatprep.mubr.f32.mxu0 0.0
        %7270 = vmatmul.mubr.f32.gmra.mrb[0].mxu0 %v6361
        %v7271 = vpop.f32.mrb[0].mxu0
        %v7272 = vadd.f32 0.0, %v7271
        %v7273 = vpop.f32.mrb[0].mxu0
        %v7274 = vadd.f32 0.0, %v7273
        %7275 = vmatprep.mubr.f32.mxu0 0.0
        %7276 = vmatmul.mubr.f32.gmra.mrb[0].mxu0 %v6364
        %v7277 = vpop.f32.mrb[0].mxu0
        %v7278 = vadd.f32 0.0, %v7277
        %v7279 = vpop.f32.mrb[0].mxu0
        %v7280 = vadd.f32 0.0, %v7279
        %7281 = vmatprep.mubr.f32.mxu0 0.0
        %7282 = vmatmul.mubr.f32.gmra.mrb[0].mxu0 %v6367
        %v7283 = vpop.f32.mrb[0].mxu0
        %v7284 = vadd.f32 0.0, %v7283
        %v7285 = vpop.f32.mrb[0].mxu0
        %v7286 = vadd.f32 0.0, %v7285
        %7287 = vmatprep.mubr.f32.mxu0 0.0
        %7288 = vmatmul.mubr.f32.gmra.mrb[0].mxu0 %v6370
        %v7289 = vpop.f32.mrb[0].mxu0
        %v7290 = vadd.f32 0.0, %v7289
        %v7291 = vpop.f32.mrb[0].mxu0
        %v7292 = vadd.f32 0.0, %v7291
        %7293 = vmatprep.mubr.f32.mxu0 0.0
        %7294 = vmatmul.mubr.f32.gmra.mrb[0].mxu0 %v6373
        %v7295 = vpop.f32.mrb[0].mxu0
        %v7296 = vadd.f32 0.0, %v7295
        %v7297 = vpop.f32.mrb[0].mxu0
        %v7298 = vadd.f32 0.0, %v7297
        %7299 = vmatprep.mubr.f32.mxu0 0.0
        %7300 = vmatmul.mubr.f32.gmra.mrb[0].mxu0 %v6376
        %v7301 = vpop.f32.mrb[0].mxu0
        %v7302 = vadd.f32 0.0, %v7301
        %v7303 = vpop.f32.mrb[0].mxu0
        %v7304 = vadd.f32 0.0, %v7303
        %7305 = vmatprep.mubr.f32.mxu0 0.0
        %7306 = vmatmul.mubr.f32.gmra.mrb[0].mxu0 %v6379
        %v7307 = vpop.f32.mrb[0].mxu0
        %v7308 = vadd.f32 0.0, %v7307
        %v7309 = vpop.f32.mrb[0].mxu0
        %v7310 = vadd.f32 0.0, %v7309
        %7311 = vmatprep.mubr.f32.mxu0 0.0
        %7312 = vmatmul.mubr.f32.gmra.mrb[0].mxu0 %v6382
        %v7313 = vpop.f32.mrb[0].mxu0
        %v7314 = vadd.f32 0.0, %v7313
        %v7315 = vpop.f32.mrb[0].mxu0
        %v7316 = vadd.f32 0.0, %v7315
        %7317 = vmatprep.mubr.f32.mxu0 0.0
        %7318 = vmatmul.mubr.f32.gmra.mrb[0].mxu0 %v6385
        %v7319 = vpop.f32.mrb[0].mxu0
        %v7320 = vadd.f32 0.0, %v7319
        %v7321 = vpop.f32.mrb[0].mxu0
        %v7322 = vadd.f32 0.0, %v7321
        %7323 = vmatprep.mubr.f32.mxu0 0.0
        %7324 = vmatmul.mubr.f32.gmra.mrb[0].mxu0 %v6388
        %v7325 = vpop.f32.mrb[0].mxu0
        %v7326 = vadd.f32 0.0, %v7325
        %v7327 = vpop.f32.mrb[0].mxu0
        %v7328 = vadd.f32 0.0, %v7327
        %7329 = vmatprep.mubr.f32.mxu0 0.0
        %7330 = vmatmul.mubr.f32.gmra.mrb[0].mxu0 %v6391
        %v7331 = vpop.f32.mrb[0].mxu0
        %v7332 = vadd.f32 0.0, %v7331
        %v7333 = vpop.f32.mrb[0].mxu0
        %v7334 = vadd.f32 0.0, %v7333
        %7335 = vmatprep.mubr.f32.mxu0 0.0
        %7336 = vmatmul.mubr.f32.gmra.mrb[0].mxu0 %v6394
        %v7337 = vpop.f32.mrb[0].mxu0
        %v7338 = vadd.f32 0.0, %v7337
        %v7339 = vpop.f32.mrb[0].mxu0
        %v7340 = vadd.f32 0.0, %v7339
        %7341 = vmatprep.mubr.f32.mxu0 0.0
        %7342 = vmatmul.mubr.f32.gmra.mrb[0].mxu0 %v6397
        %v7343 = vpop.f32.mrb[0].mxu0
        %v7344 = vadd.f32 0.0, %v7343
        %v7345 = vpop.f32.mrb[0].mxu0
        %v7346 = vadd.f32 0.0, %v7345
        %7347 = vmatprep.mubr.f32.mxu0 0.0
        %7348 = vmatmul.mubr.f32.gmra.mrb[0].mxu0 %v6400
        %v7349 = vpop.f32.mrb[0].mxu0
        %v7350 = vadd.f32 0.0, %v7349
        %v7351 = vpop.f32.mrb[0].mxu0
        %v7352 = vadd.f32 0.0, %v7351
        %7353 = vmatprep.mubr.f32.mxu0 0.0
        %7354 = vmatmul.mubr.f32.gmra.mrb[0].mxu0 %v6403
        %v7355 = vpop.f32.mrb[0].mxu0
        %v7356 = vadd.f32 0.0, %v7355
        %v7357 = vpop.f32.mrb[0].mxu0
        %v7358 = vadd.f32 0.0, %v7357
        %7359 = vmatprep.mubr.f32.mxu0 0.0
        %7360 = vmatmul.mubr.f32.gmra.mrb[0].mxu0 %v6406
        %v7361 = vpop.f32.mrb[0].mxu0
        %v7362 = vadd.f32 0.0, %v7361
        %v7363 = vpop.f32.mrb[0].mxu0
        %v7364 = vadd.f32 0.0, %v7363
        %7365 = vdwg.mxu0
        %7366 = vmatprep.subr.mxu0 0.0
        %7367 = vmatpush1.msra.mxu0 %v6195
        %7368 = vmatprep.subr.mxu0 0.0
        %7369 = vmatpush1.msra.mxu0 %v6200
        %7370 = vmatprep.subr.mxu0 0.0
        %7371 = vmatpush1.msra.mxu0 0.0
        %7372 = vmatprep.subr.mxu0 0.0
        %7373 = vmatpush1.msra.mxu0 0.0
        %7374 = vmatprep.subr.mxu0 0.0
        %7375 = vmatpush1.msra.mxu0 0.0
        %7376 = vmatprep.subr.mxu0 0.0
        %7377 = vmatpush1.msra.mxu0 0.0
        %7378 = vmatprep.subr.mxu0 0.0
        %7379 = vmatpush1.msra.mxu0 0.0
        %7380 = vmatprep.subr.mxu0 0.0
        %7381 = vmatpush1.msra.mxu0 0.0
        %7382 = vmatprep.subr.mxu0 0.0
        %7383 = vmatpush1.msra.mxu0 0.0
        %7384 = vmatprep.subr.mxu0 0.0
        %7385 = vmatpush1.msra.mxu0 0.0
        %7386 = vmatprep.subr.mxu0 0.0
        %7387 = vmatpush1.msra.mxu0 0.0
        %7388 = vmatprep.subr.mxu0 0.0
        %7389 = vmatpush1.msra.mxu0 0.0
        %7390 = vmatprep.subr.mxu0 0.0
        %7391 = vmatpush1.msra.mxu0 0.0
        %7392 = vmatprep.subr.mxu0 0.0
        %7393 = vmatpush1.msra.mxu0 0.0
        %7394 = vmatprep.subr.mxu0 0.0
        %7395 = vmatpush1.msra.mxu0 0.0
        %7396 = vmatprep.subr.mxu0 0.0
        %7397 = vmatpush1.msra.mxu0 0.0
        %7398 = vmatprep.subr.mxu0 0.0
        %7399 = vmatpush1.msra.mxu0 0.0
        %7400 = vmatprep.subr.mxu0 0.0
        %7401 = vmatpush1.msra.mxu0 0.0
        %7402 = vmatprep.subr.mxu0 0.0
        %7403 = vmatpush1.msra.mxu0 0.0
        %7404 = vmatprep.subr.mxu0 0.0
        %7405 = vmatpush1.msra.mxu0 0.0
        %7406 = vmatprep.subr.mxu0 0.0
        %7407 = vmatpush1.msra.mxu0 0.0
        %7408 = vmatprep.subr.mxu0 0.0
        %7409 = vmatpush1.msra.mxu0 0.0
        %7410 = vmatprep.subr.mxu0 0.0
        %7411 = vmatpush1.msra.mxu0 0.0
        %7412 = vmatprep.subr.mxu0 0.0
        %7413 = vmatpush1.msra.mxu0 0.0
        %7414 = vmatprep.subr.mxu0 0.0
        %7415 = vmatpush1.msra.mxu0 0.0
        %7416 = vmatprep.subr.mxu0 0.0
        %7417 = vmatpush1.msra.mxu0 0.0
        %7418 = vmatprep.subr.mxu0 0.0
        %7419 = vmatpush1.msra.mxu0 0.0
        %7420 = vmatprep.subr.mxu0 0.0
        %7421 = vmatpush1.msra.mxu0 0.0
        %7422 = vmatprep.subr.mxu0 0.0
        %7423 = vmatpush1.msra.mxu0 0.0
        %7424 = vmatprep.subr.mxu0 0.0
        %7425 = vmatpush1.msra.mxu0 0.0
        %7426 = vmatprep.subr.mxu0 0.0
        %7427 = vmatpush1.msra.mxu0 0.0
        %7428 = vmatprep.subr.mxu0 0.0
        %7429 = vmatpush1.msra.mxu0 0.0
        %7430 = vmatprep.mubr.f32.mxu0 0.0
        %7431 = vmatmul.mubr.f32.gmra.mrb[0].mxu0 %v6202
        %v7432 = vpop.f32.mrb[0].mxu0
        %v7433 = vadd.f32 0.0, %v7432
        %v7434 = vpop.f32.mrb[0].mxu0
        %7435 = vmatprep.mubr.f32.mxu0 0.0
        %7436 = vmatmul.mubr.f32.gmra.mrb[0].mxu0 %v6205
        %v7437 = vpop.f32.mrb[0].mxu0
        %v7438 = vadd.f32 0.0, %v7437
        %v7439 = vpop.f32.mrb[0].mxu0
        %7440 = vmatprep.mubr.f32.mxu0 0.0
        %7441 = vmatmul.mubr.f32.gmra.mrb[0].mxu0 %v6208
        %v7442 = vpop.f32.mrb[0].mxu0
        %v7443 = vadd.f32 0.0, %v7442
        %v7444 = vpop.f32.mrb[0].mxu0
        %7445 = vmatprep.mubr.f32.mxu0 0.0
        %7446 = vmatmul.mubr.f32.gmra.mrb[0].mxu0 %v6211
        %v7447 = vpop.f32.mrb[0].mxu0
        %v7448 = vadd.f32 0.0, %v7447
        %v7449 = vpop.f32.mrb[0].mxu0
        %7450 = vmatprep.mubr.f32.mxu0 0.0
        %7451 = vmatmul.mubr.f32.gmra.mrb[0].mxu0 %v6214
        %v7452 = vpop.f32.mrb[0].mxu0
        %v7453 = vadd.f32 0.0, %v7452
        %v7454 = vpop.f32.mrb[0].mxu0
        %7455 = vmatprep.mubr.f32.mxu0 0.0
        %7456 = vmatmul.mubr.f32.gmra.mrb[0].mxu0 %v6217
        %v7457 = vpop.f32.mrb[0].mxu0
        %v7458 = vadd.f32 0.0, %v7457
        %v7459 = vpop.f32.mrb[0].mxu0
        %7460 = vmatprep.mubr.f32.mxu0 0.0
        %7461 = vmatmul.mubr.f32.gmra.mrb[0].mxu0 %v6220
        %v7462 = vpop.f32.mrb[0].mxu0
        %v7463 = vadd.f32 0.0, %v7462
        %v7464 = vpop.f32.mrb[0].mxu0
        %7465 = vmatprep.mubr.f32.mxu0 0.0
        %7466 = vmatmul.mubr.f32.gmra.mrb[0].mxu0 %v6223
        %v7467 = vpop.f32.mrb[0].mxu0
        %v7468 = vadd.f32 0.0, %v7467
        %v7469 = vpop.f32.mrb[0].mxu0
        %7470 = vmatprep.mubr.f32.mxu0 0.0
        %7471 = vmatmul.mubr.f32.gmra.mrb[0].mxu0 %v6226
        %v7472 = vpop.f32.mrb[0].mxu0
        %v7473 = vadd.f32 0.0, %v7472
        %v7474 = vpop.f32.mrb[0].mxu0
        %7475 = vmatprep.mubr.f32.mxu0 0.0
        %7476 = vmatmul.mubr.f32.gmra.mrb[0].mxu0 %v6229
        %v7477 = vpop.f32.mrb[0].mxu0
        %v7478 = vadd.f32 0.0, %v7477
        %v7479 = vpop.f32.mrb[0].mxu0
        %7480 = vmatprep.mubr.f32.mxu0 0.0
        %7481 = vmatmul.mubr.f32.gmra.mrb[0].mxu0 %v6232
        %v7482 = vpop.f32.mrb[0].mxu0
        %v7483 = vadd.f32 0.0, %v7482
        %v7484 = vpop.f32.mrb[0].mxu0
        %7485 = vmatprep.mubr.f32.mxu0 0.0
        %7486 = vmatmul.mubr.f32.gmra.mrb[0].mxu0 %v6235
        %v7487 = vpop.f32.mrb[0].mxu0
        %v7488 = vadd.f32 0.0, %v7487
        %v7489 = vpop.f32.mrb[0].mxu0
        %7490 = vmatprep.mubr.f32.mxu0 0.0
        %7491 = vmatmul.mubr.f32.gmra.mrb[0].mxu0 %v6238
        %v7492 = vpop.f32.mrb[0].mxu0
        %v7493 = vadd.f32 0.0, %v7492
        %v7494 = vpop.f32.mrb[0].mxu0
        %7495 = vmatprep.mubr.f32.mxu0 0.0
        %7496 = vmatmul.mubr.f32.gmra.mrb[0].mxu0 %v6241
        %v7497 = vpop.f32.mrb[0].mxu0
        %v7498 = vadd.f32 0.0, %v7497
        %v7499 = vpop.f32.mrb[0].mxu0
        %7500 = vmatprep.mubr.f32.mxu0 0.0
        %7501 = vmatmul.mubr.f32.gmra.mrb[0].mxu0 %v6244
        %v7502 = vpop.f32.mrb[0].mxu0
        %v7503 = vadd.f32 0.0, %v7502
        %v7504 = vpop.f32.mrb[0].mxu0
        %7505 = vmatprep.mubr.f32.mxu0 0.0
        %7506 = vmatmul.mubr.f32.gmra.mrb[0].mxu0 %v6247
        %v7507 = vpop.f32.mrb[0].mxu0
        %v7508 = vadd.f32 0.0, %v7507
        %v7509 = vpop.f32.mrb[0].mxu0
        %7510 = vmatprep.mubr.f32.mxu0 0.0
        %7511 = vmatmul.mubr.f32.gmra.mrb[0].mxu0 %v6250
        %v7512 = vpop.f32.mrb[0].mxu0
        %v7513 = vadd.f32 0.0, %v7512
        %v7514 = vpop.f32.mrb[0].mxu0
        %7515 = vmatprep.mubr.f32.mxu0 0.0
        %7516 = vmatmul.mubr.f32.gmra.mrb[0].mxu0 %v6253
        %v7517 = vpop.f32.mrb[0].mxu0
        %v7518 = vadd.f32 0.0, %v7517
        %v7519 = vpop.f32.mrb[0].mxu0
        %7520 = vmatprep.mubr.f32.mxu0 0.0
        %7521 = vmatmul.mubr.f32.gmra.mrb[0].mxu0 %v6256
        %v7522 = vpop.f32.mrb[0].mxu0
        %v7523 = vadd.f32 0.0, %v7522
        %v7524 = vpop.f32.mrb[0].mxu0
        %7525 = vmatprep.mubr.f32.mxu0 0.0
        %7526 = vmatmul.mubr.f32.gmra.mrb[0].mxu0 %v6259
        %v7527 = vpop.f32.mrb[0].mxu0
        %v7528 = vadd.f32 0.0, %v7527
        %v7529 = vpop.f32.mrb[0].mxu0
        %7530 = vmatprep.mubr.f32.mxu0 0.0
        %7531 = vmatmul.mubr.f32.gmra.mrb[0].mxu0 %v6262
        %v7532 = vpop.f32.mrb[0].mxu0
        %v7533 = vadd.f32 0.0, %v7532
        %v7534 = vpop.f32.mrb[0].mxu0
        %7535 = vmatprep.mubr.f32.mxu0 0.0
        %7536 = vmatmul.mubr.f32.gmra.mrb[0].mxu0 %v6265
        %v7537 = vpop.f32.mrb[0].mxu0
        %v7538 = vadd.f32 0.0, %v7537
        %v7539 = vpop.f32.mrb[0].mxu0
        %7540 = vmatprep.mubr.f32.mxu0 0.0
        %7541 = vmatmul.mubr.f32.gmra.mrb[0].mxu0 %v6268
        %v7542 = vpop.f32.mrb[0].mxu0
        %v7543 = vadd.f32 0.0, %v7542
        %v7544 = vpop.f32.mrb[0].mxu0
        %7545 = vmatprep.mubr.f32.mxu0 0.0
        %7546 = vmatmul.mubr.f32.gmra.mrb[0].mxu0 %v6271
        %v7547 = vpop.f32.mrb[0].mxu0
        %v7548 = vadd.f32 0.0, %v7547
        %v7549 = vpop.f32.mrb[0].mxu0
        %7550 = vmatprep.mubr.f32.mxu0 0.0
        %7551 = vmatmul.mubr.f32.gmra.mrb[0].mxu0 %v6274
        %v7552 = vpop.f32.mrb[0].mxu0
        %v7553 = vadd.f32 0.0, %v7552
        %v7554 = vpop.f32.mrb[0].mxu0
        %7555 = vmatprep.mubr.f32.mxu0 0.0
        %7556 = vmatmul.mubr.f32.gmra.mrb[0].mxu0 %v6277
        %v7557 = vpop.f32.mrb[0].mxu0
        %v7558 = vadd.f32 0.0, %v7557
        %v7559 = vpop.f32.mrb[0].mxu0
        %7560 = vmatprep.mubr.f32.mxu0 0.0
        %7561 = vmatmul.mubr.f32.gmra.mrb[0].mxu0 %v6280
        %v7562 = vpop.f32.mrb[0].mxu0
        %v7563 = vadd.f32 0.0, %v7562
        %v7564 = vpop.f32.mrb[0].mxu0
        %7565 = vmatprep.mubr.f32.mxu0 0.0
        %7566 = vmatmul.mubr.f32.gmra.mrb[0].mxu0 %v6283
        %v7567 = vpop.f32.mrb[0].mxu0
        %v7568 = vadd.f32 0.0, %v7567
        %v7569 = vpop.f32.mrb[0].mxu0
        %7570 = vmatprep.mubr.f32.mxu0 0.0
        %7571 = vmatmul.mubr.f32.gmra.mrb[0].mxu0 %v6286
        %v7572 = vpop.f32.mrb[0].mxu0
        %v7573 = vadd.f32 0.0, %v7572
        %v7574 = vpop.f32.mrb[0].mxu0
        %7575 = vmatprep.mubr.f32.mxu0 0.0
        %7576 = vmatmul.mubr.f32.gmra.mrb[0].mxu0 %v6289
        %v7577 = vpop.f32.mrb[0].mxu0
        %v7578 = vadd.f32 0.0, %v7577
        %v7579 = vpop.f32.mrb[0].mxu0
        %7580 = vmatprep.mubr.f32.mxu0 0.0
        %7581 = vmatmul.mubr.f32.gmra.mrb[0].mxu0 %v6292
        %v7582 = vpop.f32.mrb[0].mxu0
        %v7583 = vadd.f32 0.0, %v7582
        %v7584 = vpop.f32.mrb[0].mxu0
        %7585 = vmatprep.mubr.f32.mxu0 0.0
        %7586 = vmatmul.mubr.f32.gmra.mrb[0].mxu0 %v6295
        %v7587 = vpop.f32.mrb[0].mxu0
        %v7588 = vadd.f32 0.0, %v7587
        %v7589 = vpop.f32.mrb[0].mxu0
        %7590 = vmatprep.mubr.f32.mxu0 0.0
        %7591 = vmatmul.mubr.f32.gmra.mrb[0].mxu0 %v6298
        %v7592 = vpop.f32.mrb[0].mxu0
        %v7593 = vadd.f32 0.0, %v7592
        %v7594 = vpop.f32.mrb[0].mxu0
        %7595 = vmatprep.mubr.f32.mxu0 0.0
        %7596 = vmatmul.mubr.f32.gmra.mrb[0].mxu0 %v6301
        %v7597 = vpop.f32.mrb[0].mxu0
        %v7598 = vadd.f32 0.0, %v7597
        %v7599 = vpop.f32.mrb[0].mxu0
        %7600 = vmatprep.mubr.f32.mxu0 0.0
        %7601 = vmatmul.mubr.f32.gmra.mrb[0].mxu0 %v6304
        %v7602 = vpop.f32.mrb[0].mxu0
        %v7603 = vadd.f32 0.0, %v7602
        %v7604 = vpop.f32.mrb[0].mxu0
        %7605 = vmatprep.mubr.f32.mxu0 0.0
        %7606 = vmatmul.mubr.f32.gmra.mrb[0].mxu0 %v6307
        %v7607 = vpop.f32.mrb[0].mxu0
        %v7608 = vadd.f32 0.0, %v7607
        %v7609 = vpop.f32.mrb[0].mxu0
        %7610 = vmatprep.mubr.f32.mxu0 0.0
        %7611 = vmatmul.mubr.f32.gmra.mrb[0].mxu0 %v6310
        %v7612 = vpop.f32.mrb[0].mxu0
        %v7613 = vadd.f32 0.0, %v7612
        %v7614 = vpop.f32.mrb[0].mxu0
        %7615 = vmatprep.mubr.f32.mxu0 0.0
        %7616 = vmatmul.mubr.f32.gmra.mrb[0].mxu0 %v6313
        %v7617 = vpop.f32.mrb[0].mxu0
        %v7618 = vadd.f32 0.0, %v7617
        %v7619 = vpop.f32.mrb[0].mxu0
        %7620 = vmatprep.mubr.f32.mxu0 0.0
        %7621 = vmatmul.mubr.f32.gmra.mrb[0].mxu0 %v6316
        %v7622 = vpop.f32.mrb[0].mxu0
        %v7623 = vadd.f32 0.0, %v7622
        %v7624 = vpop.f32.mrb[0].mxu0
        %7625 = vmatprep.mubr.f32.mxu0 0.0
        %7626 = vmatmul.mubr.f32.gmra.mrb[0].mxu0 %v6319
        %v7627 = vpop.f32.mrb[0].mxu0
        %v7628 = vadd.f32 0.0, %v7627
        %v7629 = vpop.f32.mrb[0].mxu0
        %7630 = vmatprep.mubr.f32.mxu0 0.0
        %7631 = vmatmul.mubr.f32.gmra.mrb[0].mxu0 %v6322
        %v7632 = vpop.f32.mrb[0].mxu0
        %v7633 = vadd.f32 0.0, %v7632
        %v7634 = vpop.f32.mrb[0].mxu0
        %7635 = vmatprep.mubr.f32.mxu0 0.0
        %7636 = vmatmul.mubr.f32.gmra.mrb[0].mxu0 %v6325
        %v7637 = vpop.f32.mrb[0].mxu0
        %v7638 = vadd.f32 0.0, %v7637
        %v7639 = vpop.f32.mrb[0].mxu0
        %7640 = vmatprep.mubr.f32.mxu0 0.0
        %7641 = vmatmul.mubr.f32.gmra.mrb[0].mxu0 %v6328
        %v7642 = vpop.f32.mrb[0].mxu0
        %v7643 = vadd.f32 0.0, %v7642
        %v7644 = vpop.f32.mrb[0].mxu0
        %7645 = vmatprep.mubr.f32.mxu0 0.0
        %7646 = vmatmul.mubr.f32.gmra.mrb[0].mxu0 %v6331
        %v7647 = vpop.f32.mrb[0].mxu0
        %v7648 = vadd.f32 0.0, %v7647
        %v7649 = vpop.f32.mrb[0].mxu0
        %7650 = vmatprep.mubr.f32.mxu0 0.0
        %7651 = vmatmul.mubr.f32.gmra.mrb[0].mxu0 %v6334
        %v7652 = vpop.f32.mrb[0].mxu0
        %v7653 = vadd.f32 0.0, %v7652
        %v7654 = vpop.f32.mrb[0].mxu0
        %7655 = vmatprep.mubr.f32.mxu0 0.0
        %7656 = vmatmul.mubr.f32.gmra.mrb[0].mxu0 %v6337
        %v7657 = vpop.f32.mrb[0].mxu0
        %v7658 = vadd.f32 0.0, %v7657
        %v7659 = vpop.f32.mrb[0].mxu0
        %7660 = vmatprep.mubr.f32.mxu0 0.0
        %7661 = vmatmul.mubr.f32.gmra.mrb[0].mxu0 %v6340
        %v7662 = vpop.f32.mrb[0].mxu0
        %v7663 = vadd.f32 0.0, %v7662
        %v7664 = vpop.f32.mrb[0].mxu0
        %7665 = vmatprep.mubr.f32.mxu0 0.0
        %7666 = vmatmul.mubr.f32.gmra.mrb[0].mxu0 %v6343
        %v7667 = vpop.f32.mrb[0].mxu0
        %v7668 = vadd.f32 0.0, %v7667
        %v7669 = vpop.f32.mrb[0].mxu0
        %7670 = vmatprep.mubr.f32.mxu0 0.0
        %7671 = vmatmul.mubr.f32.gmra.mrb[0].mxu0 %v6346
        %v7672 = vpop.f32.mrb[0].mxu0
        %v7673 = vadd.f32 0.0, %v7672
        %v7674 = vpop.f32.mrb[0].mxu0
        %7675 = vmatprep.mubr.f32.mxu0 0.0
        %7676 = vmatmul.mubr.f32.gmra.mrb[0].mxu0 %v6349
        %v7677 = vpop.f32.mrb[0].mxu0
        %v7678 = vadd.f32 0.0, %v7677
        %v7679 = vpop.f32.mrb[0].mxu0
        %7680 = vmatprep.mubr.f32.mxu0 0.0
        %7681 = vmatmul.mubr.f32.gmra.mrb[0].mxu0 %v6352
        %v7682 = vpop.f32.mrb[0].mxu0
        %v7683 = vadd.f32 0.0, %v7682
        %v7684 = vpop.f32.mrb[0].mxu0
        %7685 = vmatprep.mubr.f32.mxu0 0.0
        %7686 = vmatmul.mubr.f32.gmra.mrb[0].mxu0 %v6355
        %v7687 = vpop.f32.mrb[0].mxu0
        %v7688 = vadd.f32 0.0, %v7687
        %v7689 = vpop.f32.mrb[0].mxu0
        %7690 = vmatprep.mubr.f32.mxu0 0.0
        %7691 = vmatmul.mubr.f32.gmra.mrb[0].mxu0 %v6358
        %v7692 = vpop.f32.mrb[0].mxu0
        %v7693 = vadd.f32 0.0, %v7692
        %v7694 = vpop.f32.mrb[0].mxu0
        %7695 = vmatprep.mubr.f32.mxu0 0.0
        %7696 = vmatmul.mubr.f32.gmra.mrb[0].mxu0 %v6361
        %v7697 = vpop.f32.mrb[0].mxu0
        %v7698 = vadd.f32 0.0, %v7697
        %v7699 = vpop.f32.mrb[0].mxu0
        %7700 = vmatprep.mubr.f32.mxu0 0.0
        %7701 = vmatmul.mubr.f32.gmra.mrb[0].mxu0 %v6364
        %v7702 = vpop.f32.mrb[0].mxu0
        %v7703 = vadd.f32 0.0, %v7702
        %v7704 = vpop.f32.mrb[0].mxu0
        %7705 = vmatprep.mubr.f32.mxu0 0.0
        %7706 = vmatmul.mubr.f32.gmra.mrb[0].mxu0 %v6367
        %v7707 = vpop.f32.mrb[0].mxu0
        %v7708 = vadd.f32 0.0, %v7707
        %v7709 = vpop.f32.mrb[0].mxu0
        %7710 = vmatprep.mubr.f32.mxu0 0.0
        %7711 = vmatmul.mubr.f32.gmra.mrb[0].mxu0 %v6370
        %v7712 = vpop.f32.mrb[0].mxu0
        %v7713 = vadd.f32 0.0, %v7712
        %v7714 = vpop.f32.mrb[0].mxu0
        %7715 = vmatprep.mubr.f32.mxu0 0.0
        %7716 = vmatmul.mubr.f32.gmra.mrb[0].mxu0 %v6373
        %v7717 = vpop.f32.mrb[0].mxu0
        %v7718 = vadd.f32 0.0, %v7717
        %v7719 = vpop.f32.mrb[0].mxu0
        %7720 = vmatprep.mubr.f32.mxu0 0.0
        %7721 = vmatmul.mubr.f32.gmra.mrb[0].mxu0 %v6376
        %v7722 = vpop.f32.mrb[0].mxu0
        %v7723 = vadd.f32 0.0, %v7722
        %v7724 = vpop.f32.mrb[0].mxu0
        %7725 = vmatprep.mubr.f32.mxu0 0.0
        %7726 = vmatmul.mubr.f32.gmra.mrb[0].mxu0 %v6379
        %v7727 = vpop.f32.mrb[0].mxu0
        %v7728 = vadd.f32 0.0, %v7727
        %v7729 = vpop.f32.mrb[0].mxu0
        %7730 = vmatprep.mubr.f32.mxu0 0.0
        %7731 = vmatmul.mubr.f32.gmra.mrb[0].mxu0 %v6382
        %v7732 = vpop.f32.mrb[0].mxu0
        %v7733 = vadd.f32 0.0, %v7732
        %v7734 = vpop.f32.mrb[0].mxu0
        %7735 = vmatprep.mubr.f32.mxu0 0.0
        %7736 = vmatmul.mubr.f32.gmra.mrb[0].mxu0 %v6385
        %v7737 = vpop.f32.mrb[0].mxu0
        %v7738 = vadd.f32 0.0, %v7737
        %v7739 = vpop.f32.mrb[0].mxu0
        %7740 = vmatprep.mubr.f32.mxu0 0.0
        %7741 = vmatmul.mubr.f32.gmra.mrb[0].mxu0 %v6388
        %v7742 = vpop.f32.mrb[0].mxu0
        %v7743 = vadd.f32 0.0, %v7742
        %v7744 = vpop.f32.mrb[0].mxu0
        %7745 = vmatprep.mubr.f32.mxu0 0.0
        %7746 = vmatmul.mubr.f32.gmra.mrb[0].mxu0 %v6391
        %v7747 = vpop.f32.mrb[0].mxu0
        %v7748 = vadd.f32 0.0, %v7747
        %v7749 = vpop.f32.mrb[0].mxu0
        %7750 = vmatprep.mubr.f32.mxu0 0.0
        %7751 = vmatmul.mubr.f32.gmra.mrb[0].mxu0 %v6394
        %v7752 = vpop.f32.mrb[0].mxu0
        %v7753 = vadd.f32 0.0, %v7752
        %v7754 = vpop.f32.mrb[0].mxu0
        %7755 = vmatprep.mubr.f32.mxu0 0.0
        %7756 = vmatmul.mubr.f32.gmra.mrb[0].mxu0 %v6397
        %v7757 = vpop.f32.mrb[0].mxu0
        %v7758 = vadd.f32 0.0, %v7757
        %v7759 = vpop.f32.mrb[0].mxu0
        %7760 = vmatprep.mubr.f32.mxu0 0.0
        %7761 = vmatmul.mubr.f32.gmra.mrb[0].mxu0 %v6400
        %v7762 = vpop.f32.mrb[0].mxu0
        %v7763 = vadd.f32 0.0, %v7762
        %v7764 = vpop.f32.mrb[0].mxu0
        %7765 = vmatprep.mubr.f32.mxu0 0.0
        %7766 = vmatmul.mubr.f32.gmra.mrb[0].mxu0 %v6403
        %v7767 = vpop.f32.mrb[0].mxu0
        %v7768 = vadd.f32 0.0, %v7767
        %v7769 = vpop.f32.mrb[0].mxu0
        %7770 = vmatprep.mubr.f32.mxu0 0.0
        %7771 = vmatmul.mubr.f32.gmra.mrb[0].mxu0 %v6406
        %v7772 = vpop.f32.mrb[0].mxu0
        %v7773 = vadd.f32 0.0, %v7772
        %v7774 = vpop.f32.mrb[0].mxu0
        %7775 = vdwg.mxu0
        %s7776 = scalar_lea.vmem %s259, 5520
        %7777 = vst [vmem:[%s7776] sm:$0xff] %v6475
        %7778 = vst [vmem:[%s7776 + $0x8] sm:$0xff] %v6477
        %7779 = vst [vmem:[%s7776 + $0x10] sm:$0xff] %v6954
        %7780 = vst [vmem:[%s7776 + $0x18] sm:$0xff] %v6956
        %7781 = vst.msk [vmem:[%s7776 + $0x20] sm:$0xff] %vm2540, %v7433
        %7782 = vst [vmem:[%s7776 + $0x28] sm:$0xff] %v6481
        %7783 = vst [vmem:[%s7776 + $0x30] sm:$0xff] %v6483
        %7784 = vst [vmem:[%s7776 + $0x38] sm:$0xff] %v6960
        %7785 = vst [vmem:[%s7776 + $0x40] sm:$0xff] %v6962
        %7786 = vst.msk [vmem:[%s7776 + $0x48] sm:$0xff] %vm2540, %v7438
        %7787 = vst [vmem:[%s7776 + $0x50] sm:$0xff] %v6487
        %7788 = vst [vmem:[%s7776 + $0x58] sm:$0xff] %v6489
        %7789 = vst [vmem:[%s7776 + $0x60] sm:$0xff] %v6966
        %7790 = vst [vmem:[%s7776 + $0x68] sm:$0xff] %v6968
        %7791 = vst.msk [vmem:[%s7776 + $0x70] sm:$0xff] %vm2540, %v7443
        %7792 = vst [vmem:[%s7776 + $0x78] sm:$0xff] %v6493
        %7793 = vst [vmem:[%s7776 + $0x80] sm:$0xff] %v6495
        %7794 = vst [vmem:[%s7776 + $0x88] sm:$0xff] %v6972
        %7795 = vst [vmem:[%s7776 + $0x90] sm:$0xff] %v6974
        %7796 = vst.msk [vmem:[%s7776 + $0x98] sm:$0xff] %vm2540, %v7448
        %7797 = vst [vmem:[%s7776 + $0xa0] sm:$0xff] %v6499
        %7798 = vst [vmem:[%s7776 + $0xa8] sm:$0xff] %v6501
        %7799 = vst [vmem:[%s7776 + $0xb0] sm:$0xff] %v6978
        %7800 = vst [vmem:[%s7776 + $0xb8] sm:$0xff] %v6980
        %7801 = vst.msk [vmem:[%s7776 + $0xc0] sm:$0xff] %vm2540, %v7453
        %7802 = vst [vmem:[%s7776 + $0xc8] sm:$0xff] %v6505
        %7803 = vst [vmem:[%s7776 + $0xd0] sm:$0xff] %v6507
        %7804 = vst [vmem:[%s7776 + $0xd8] sm:$0xff] %v6984
        %7805 = vst [vmem:[%s7776 + $0xe0] sm:$0xff] %v6986
        %7806 = vst.msk [vmem:[%s7776 + $0xe8] sm:$0xff] %vm2540, %v7458
        %7807 = vst [vmem:[%s7776 + $0xf0] sm:$0xff] %v6511
        %7808 = vst [vmem:[%s7776 + $0xf8] sm:$0xff] %v6513
        %7809 = vst [vmem:[%s7776 + $0x100] sm:$0xff] %v6990
        %7810 = vst [vmem:[%s7776 + $0x108] sm:$0xff] %v6992
        %7811 = vst.msk [vmem:[%s7776 + $0x110] sm:$0xff] %vm2540, %v7463
        %7812 = vst [vmem:[%s7776 + $0x118] sm:$0xff] %v6517
        %7813 = vst [vmem:[%s7776 + $0x120] sm:$0xff] %v6519
        %7814 = vst [vmem:[%s7776 + $0x128] sm:$0xff] %v6996
        %7815 = vst [vmem:[%s7776 + $0x130] sm:$0xff] %v6998
        %7816 = vst.msk [vmem:[%s7776 + $0x138] sm:$0xff] %vm2540, %v7468
        %7817 = vst [vmem:[%s7776 + $0x140] sm:$0xff] %v6523
        %7818 = vst [vmem:[%s7776 + $0x148] sm:$0xff] %v6525
        %7819 = vst [vmem:[%s7776 + $0x150] sm:$0xff] %v7002
        %7820 = vst [vmem:[%s7776 + $0x158] sm:$0xff] %v7004
        %7821 = vst.msk [vmem:[%s7776 + $0x160] sm:$0xff] %vm2540, %v7473
        %7822 = vst [vmem:[%s7776 + $0x168] sm:$0xff] %v6529
        %7823 = vst [vmem:[%s7776 + $0x170] sm:$0xff] %v6531
        %7824 = vst [vmem:[%s7776 + $0x178] sm:$0xff] %v7008
        %7825 = vst [vmem:[%s7776 + $0x180] sm:$0xff] %v7010
        %7826 = vst.msk [vmem:[%s7776 + $0x188] sm:$0xff] %vm2540, %v7478
        %7827 = vst [vmem:[%s7776 + $0x190] sm:$0xff] %v6535
        %7828 = vst [vmem:[%s7776 + $0x198] sm:$0xff] %v6537
        %7829 = vst [vmem:[%s7776 + $0x1a0] sm:$0xff] %v7014
        %7830 = vst [vmem:[%s7776 + $0x1a8] sm:$0xff] %v7016
        %7831 = vst.msk [vmem:[%s7776 + $0x1b0] sm:$0xff] %vm2540, %v7483
        %7832 = vst [vmem:[%s7776 + $0x1b8] sm:$0xff] %v6541
        %7833 = vst [vmem:[%s7776 + $0x1c0] sm:$0xff] %v6543
        %7834 = vst [vmem:[%s7776 + $0x1c8] sm:$0xff] %v7020
        %7835 = vst [vmem:[%s7776 + $0x1d0] sm:$0xff] %v7022
        %7836 = vst.msk [vmem:[%s7776 + $0x1d8] sm:$0xff] %vm2540, %v7488
        %7837 = vst [vmem:[%s7776 + $0x1e0] sm:$0xff] %v6547
        %7838 = vst [vmem:[%s7776 + $0x1e8] sm:$0xff] %v6549
        %7839 = vst [vmem:[%s7776 + $0x1f0] sm:$0xff] %v7026
        %7840 = vst [vmem:[%s7776 + $0x1f8] sm:$0xff] %v7028
        %7841 = vst.msk [vmem:[%s7776 + $0x200] sm:$0xff] %vm2540, %v7493
        %7842 = vst [vmem:[%s7776 + $0x208] sm:$0xff] %v6553
        %7843 = vst [vmem:[%s7776 + $0x210] sm:$0xff] %v6555
        %7844 = vst [vmem:[%s7776 + $0x218] sm:$0xff] %v7032
        %7845 = vst [vmem:[%s7776 + $0x220] sm:$0xff] %v7034
        %7846 = vst.msk [vmem:[%s7776 + $0x228] sm:$0xff] %vm2540, %v7498
        %7847 = vst [vmem:[%s7776 + $0x230] sm:$0xff] %v6559
        %7848 = vst [vmem:[%s7776 + $0x238] sm:$0xff] %v6561
        %7849 = vst [vmem:[%s7776 + $0x240] sm:$0xff] %v7038
        %7850 = vst [vmem:[%s7776 + $0x248] sm:$0xff] %v7040
        %7851 = vst.msk [vmem:[%s7776 + $0x250] sm:$0xff] %vm2540, %v7503
        %7852 = vst [vmem:[%s7776 + $0x258] sm:$0xff] %v6565
        %7853 = vst [vmem:[%s7776 + $0x260] sm:$0xff] %v6567
        %7854 = vst [vmem:[%s7776 + $0x268] sm:$0xff] %v7044
        %7855 = vst [vmem:[%s7776 + $0x270] sm:$0xff] %v7046
        %7856 = vst.msk [vmem:[%s7776 + $0x278] sm:$0xff] %vm2540, %v7508
        %7857 = vst [vmem:[%s7776 + $0x280] sm:$0xff] %v6571
        %7858 = vst [vmem:[%s7776 + $0x288] sm:$0xff] %v6573
        %7859 = vst [vmem:[%s7776 + $0x290] sm:$0xff] %v7050
        %7860 = vst [vmem:[%s7776 + $0x298] sm:$0xff] %v7052
        %7861 = vst.msk [vmem:[%s7776 + $0x2a0] sm:$0xff] %vm2540, %v7513
        %7862 = vst [vmem:[%s7776 + $0x2a8] sm:$0xff] %v6577
        %7863 = vst [vmem:[%s7776 + $0x2b0] sm:$0xff] %v6579
        %7864 = vst [vmem:[%s7776 + $0x2b8] sm:$0xff] %v7056
        %7865 = vst [vmem:[%s7776 + $0x2c0] sm:$0xff] %v7058
        %7866 = vst.msk [vmem:[%s7776 + $0x2c8] sm:$0xff] %vm2540, %v7518
        %7867 = vst [vmem:[%s7776 + $0x2d0] sm:$0xff] %v6583
        %7868 = vst [vmem:[%s7776 + $0x2d8] sm:$0xff] %v6585
        %7869 = vst [vmem:[%s7776 + $0x2e0] sm:$0xff] %v7062
        %7870 = vst [vmem:[%s7776 + $0x2e8] sm:$0xff] %v7064
        %7871 = vst.msk [vmem:[%s7776 + $0x2f0] sm:$0xff] %vm2540, %v7523
        %7872 = vst [vmem:[%s7776 + $0x2f8] sm:$0xff] %v6589
        %7873 = vst [vmem:[%s7776 + $0x300] sm:$0xff] %v6591
        %7874 = vst [vmem:[%s7776 + $0x308] sm:$0xff] %v7068
        %7875 = vst [vmem:[%s7776 + $0x310] sm:$0xff] %v7070
        %7876 = vst.msk [vmem:[%s7776 + $0x318] sm:$0xff] %vm2540, %v7528
        %7877 = vst [vmem:[%s7776 + $0x320] sm:$0xff] %v6595
        %7878 = vst [vmem:[%s7776 + $0x328] sm:$0xff] %v6597
        %7879 = vst [vmem:[%s7776 + $0x330] sm:$0xff] %v7074
        %7880 = vst [vmem:[%s7776 + $0x338] sm:$0xff] %v7076
        %7881 = vst.msk [vmem:[%s7776 + $0x340] sm:$0xff] %vm2540, %v7533
        %7882 = vst [vmem:[%s7776 + $0x348] sm:$0xff] %v6601
        %7883 = vst [vmem:[%s7776 + $0x350] sm:$0xff] %v6603
        %7884 = vst [vmem:[%s7776 + $0x358] sm:$0xff] %v7080
        %7885 = vst [vmem:[%s7776 + $0x360] sm:$0xff] %v7082
        %7886 = vst.msk [vmem:[%s7776 + $0x368] sm:$0xff] %vm2540, %v7538
        %7887 = vst [vmem:[%s7776 + $0x370] sm:$0xff] %v6607
        %7888 = vst [vmem:[%s7776 + $0x378] sm:$0xff] %v6609
        %7889 = vst [vmem:[%s7776 + $0x380] sm:$0xff] %v7086
        %7890 = vst [vmem:[%s7776 + $0x388] sm:$0xff] %v7088
        %7891 = vst.msk [vmem:[%s7776 + $0x390] sm:$0xff] %vm2540, %v7543
        %7892 = vst [vmem:[%s7776 + $0x398] sm:$0xff] %v6613
        %7893 = vst [vmem:[%s7776 + $0x3a0] sm:$0xff] %v6615
        %7894 = vst [vmem:[%s7776 + $0x3a8] sm:$0xff] %v7092
        %7895 = vst [vmem:[%s7776 + $0x3b0] sm:$0xff] %v7094
        %7896 = vst.msk [vmem:[%s7776 + $0x3b8] sm:$0xff] %vm2540, %v7548
        %7897 = vst [vmem:[%s7776 + $0x3c0] sm:$0xff] %v6619
        %7898 = vst [vmem:[%s7776 + $0x3c8] sm:$0xff] %v6621
        %7899 = vst [vmem:[%s7776 + $0x3d0] sm:$0xff] %v7098
        %7900 = vst [vmem:[%s7776 + $0x3d8] sm:$0xff] %v7100
        %7901 = vst.msk [vmem:[%s7776 + $0x3e0] sm:$0xff] %vm2540, %v7553
        %7902 = vst [vmem:[%s7776 + $0x3e8] sm:$0xff] %v6625
        %7903 = vst [vmem:[%s7776 + $0x3f0] sm:$0xff] %v6627
        %7904 = vst [vmem:[%s7776 + $0x3f8] sm:$0xff] %v7104
        %7905 = vst [vmem:[%s7776 + $0x400] sm:$0xff] %v7106
        %7906 = vst.msk [vmem:[%s7776 + $0x408] sm:$0xff] %vm2540, %v7558
        %7907 = vst [vmem:[%s7776 + $0x410] sm:$0xff] %v6631
        %7908 = vst [vmem:[%s7776 + $0x418] sm:$0xff] %v6633
        %7909 = vst [vmem:[%s7776 + $0x420] sm:$0xff] %v7110
        %7910 = vst [vmem:[%s7776 + $0x428] sm:$0xff] %v7112
        %7911 = vst.msk [vmem:[%s7776 + $0x430] sm:$0xff] %vm2540, %v7563
        %7912 = vst [vmem:[%s7776 + $0x438] sm:$0xff] %v6637
        %7913 = vst [vmem:[%s7776 + $0x440] sm:$0xff] %v6639
        %7914 = vst [vmem:[%s7776 + $0x448] sm:$0xff] %v7116
        %7915 = vst [vmem:[%s7776 + $0x450] sm:$0xff] %v7118
        %7916 = vst.msk [vmem:[%s7776 + $0x458] sm:$0xff] %vm2540, %v7568
        %7917 = vst [vmem:[%s7776 + $0x460] sm:$0xff] %v6643
        %7918 = vst [vmem:[%s7776 + $0x468] sm:$0xff] %v6645
        %7919 = vst [vmem:[%s7776 + $0x470] sm:$0xff] %v7122
        %7920 = vst [vmem:[%s7776 + $0x478] sm:$0xff] %v7124
        %7921 = vst.msk [vmem:[%s7776 + $0x480] sm:$0xff] %vm2540, %v7573
        %7922 = vst [vmem:[%s7776 + $0x488] sm:$0xff] %v6649
        %7923 = vst [vmem:[%s7776 + $0x490] sm:$0xff] %v6651
        %7924 = vst [vmem:[%s7776 + $0x498] sm:$0xff] %v7128
        %7925 = vst [vmem:[%s7776 + $0x4a0] sm:$0xff] %v7130
        %7926 = vst.msk [vmem:[%s7776 + $0x4a8] sm:$0xff] %vm2540, %v7578
        %7927 = vst [vmem:[%s7776 + $0x4b0] sm:$0xff] %v6655
        %7928 = vst [vmem:[%s7776 + $0x4b8] sm:$0xff] %v6657
        %7929 = vst [vmem:[%s7776 + $0x4c0] sm:$0xff] %v7134
        %7930 = vst [vmem:[%s7776 + $0x4c8] sm:$0xff] %v7136
        %7931 = vst.msk [vmem:[%s7776 + $0x4d0] sm:$0xff] %vm2540, %v7583
        %7932 = vst [vmem:[%s7776 + $0x4d8] sm:$0xff] %v6661
        %7933 = vst [vmem:[%s7776 + $0x4e0] sm:$0xff] %v6663
        %7934 = vst [vmem:[%s7776 + $0x4e8] sm:$0xff] %v7140
        %7935 = vst [vmem:[%s7776 + $0x4f0] sm:$0xff] %v7142
        %7936 = vst.msk [vmem:[%s7776 + $0x4f8] sm:$0xff] %vm2540, %v7588
        %7937 = vst [vmem:[%s7776 + $0x500] sm:$0xff] %v6667
        %7938 = vst [vmem:[%s7776 + $0x508] sm:$0xff] %v6669
        %7939 = vst [vmem:[%s7776 + $0x510] sm:$0xff] %v7146
        %7940 = vst [vmem:[%s7776 + $0x518] sm:$0xff] %v7148
        %7941 = vst.msk [vmem:[%s7776 + $0x520] sm:$0xff] %vm2540, %v7593
        %7942 = vst [vmem:[%s7776 + $0x528] sm:$0xff] %v6673
        %7943 = vst [vmem:[%s7776 + $0x530] sm:$0xff] %v6675
        %7944 = vst [vmem:[%s7776 + $0x538] sm:$0xff] %v7152
        %7945 = vst [vmem:[%s7776 + $0x540] sm:$0xff] %v7154
        %7946 = vst.msk [vmem:[%s7776 + $0x548] sm:$0xff] %vm2540, %v7598
        %7947 = vst [vmem:[%s7776 + $0x550] sm:$0xff] %v6679
        %7948 = vst [vmem:[%s7776 + $0x558] sm:$0xff] %v6681
        %7949 = vst [vmem:[%s7776 + $0x560] sm:$0xff] %v7158
        %7950 = vst [vmem:[%s7776 + $0x568] sm:$0xff] %v7160
        %7951 = vst.msk [vmem:[%s7776 + $0x570] sm:$0xff] %vm2540, %v7603
        %7952 = vst [vmem:[%s7776 + $0x578] sm:$0xff] %v6685
        %7953 = vst [vmem:[%s7776 + $0x580] sm:$0xff] %v6687
        %7954 = vst [vmem:[%s7776 + $0x588] sm:$0xff] %v7164
        %7955 = vst [vmem:[%s7776 + $0x590] sm:$0xff] %v7166
        %7956 = vst.msk [vmem:[%s7776 + $0x598] sm:$0xff] %vm2540, %v7608
        %7957 = vst [vmem:[%s7776 + $0x5a0] sm:$0xff] %v6691
        %7958 = vst [vmem:[%s7776 + $0x5a8] sm:$0xff] %v6693
        %7959 = vst [vmem:[%s7776 + $0x5b0] sm:$0xff] %v7170
        %7960 = vst [vmem:[%s7776 + $0x5b8] sm:$0xff] %v7172
        %7961 = vst.msk [vmem:[%s7776 + $0x5c0] sm:$0xff] %vm2540, %v7613
        %7962 = vst [vmem:[%s7776 + $0x5c8] sm:$0xff] %v6697
        %7963 = vst [vmem:[%s7776 + $0x5d0] sm:$0xff] %v6699
        %7964 = vst [vmem:[%s7776 + $0x5d8] sm:$0xff] %v7176
        %7965 = vst [vmem:[%s7776 + $0x5e0] sm:$0xff] %v7178
        %7966 = vst.msk [vmem:[%s7776 + $0x5e8] sm:$0xff] %vm2540, %v7618
        %7967 = vst [vmem:[%s7776 + $0x5f0] sm:$0xff] %v6703
        %7968 = vst [vmem:[%s7776 + $0x5f8] sm:$0xff] %v6705
        %7969 = vst [vmem:[%s7776 + $0x600] sm:$0xff] %v7182
        %7970 = vst [vmem:[%s7776 + $0x608] sm:$0xff] %v7184
        %7971 = vst.msk [vmem:[%s7776 + $0x610] sm:$0xff] %vm2540, %v7623
        %7972 = vst [vmem:[%s7776 + $0x618] sm:$0xff] %v6709
        %7973 = vst [vmem:[%s7776 + $0x620] sm:$0xff] %v6711
        %7974 = vst [vmem:[%s7776 + $0x628] sm:$0xff] %v7188
        %7975 = vst [vmem:[%s7776 + $0x630] sm:$0xff] %v7190
        %7976 = vst.msk [vmem:[%s7776 + $0x638] sm:$0xff] %vm2540, %v7628
        %7977 = vst [vmem:[%s7776 + $0x640] sm:$0xff] %v6715
        %7978 = vst [vmem:[%s7776 + $0x648] sm:$0xff] %v6717
        %7979 = vst [vmem:[%s7776 + $0x650] sm:$0xff] %v7194
        %7980 = vst [vmem:[%s7776 + $0x658] sm:$0xff] %v7196
        %7981 = vst.msk [vmem:[%s7776 + $0x660] sm:$0xff] %vm2540, %v7633
        %7982 = vst [vmem:[%s7776 + $0x668] sm:$0xff] %v6721
        %7983 = vst [vmem:[%s7776 + $0x670] sm:$0xff] %v6723
        %7984 = vst [vmem:[%s7776 + $0x678] sm:$0xff] %v7200
        %7985 = vst [vmem:[%s7776 + $0x680] sm:$0xff] %v7202
        %7986 = vst.msk [vmem:[%s7776 + $0x688] sm:$0xff] %vm2540, %v7638
        %7987 = vst [vmem:[%s7776 + $0x690] sm:$0xff] %v6727
        %7988 = vst [vmem:[%s7776 + $0x698] sm:$0xff] %v6729
        %7989 = vst [vmem:[%s7776 + $0x6a0] sm:$0xff] %v7206
        %7990 = vst [vmem:[%s7776 + $0x6a8] sm:$0xff] %v7208
        %7991 = vst.msk [vmem:[%s7776 + $0x6b0] sm:$0xff] %vm2540, %v7643
        %7992 = vst [vmem:[%s7776 + $0x6b8] sm:$0xff] %v6733
        %7993 = vst [vmem:[%s7776 + $0x6c0] sm:$0xff] %v6735
        %7994 = vst [vmem:[%s7776 + $0x6c8] sm:$0xff] %v7212
        %7995 = vst [vmem:[%s7776 + $0x6d0] sm:$0xff] %v7214
        %7996 = vst.msk [vmem:[%s7776 + $0x6d8] sm:$0xff] %vm2540, %v7648
        %7997 = vst [vmem:[%s7776 + $0x6e0] sm:$0xff] %v6739
        %7998 = vst [vmem:[%s7776 + $0x6e8] sm:$0xff] %v6741
        %7999 = vst [vmem:[%s7776 + $0x6f0] sm:$0xff] %v7218
        %8000 = vst [vmem:[%s7776 + $0x6f8] sm:$0xff] %v7220
        %8001 = vst.msk [vmem:[%s7776 + $0x700] sm:$0xff] %vm2540, %v7653
        %8002 = vst [vmem:[%s7776 + $0x708] sm:$0xff] %v6745
        %8003 = vst [vmem:[%s7776 + $0x710] sm:$0xff] %v6747
        %8004 = vst [vmem:[%s7776 + $0x718] sm:$0xff] %v7224
        %8005 = vst [vmem:[%s7776 + $0x720] sm:$0xff] %v7226
        %8006 = vst.msk [vmem:[%s7776 + $0x728] sm:$0xff] %vm2540, %v7658
        %8007 = vst [vmem:[%s7776 + $0x730] sm:$0xff] %v6751
        %8008 = vst [vmem:[%s7776 + $0x738] sm:$0xff] %v6753
        %8009 = vst [vmem:[%s7776 + $0x740] sm:$0xff] %v7230
        %8010 = vst [vmem:[%s7776 + $0x748] sm:$0xff] %v7232
        %8011 = vst.msk [vmem:[%s7776 + $0x750] sm:$0xff] %vm2540, %v7663
        %8012 = vst [vmem:[%s7776 + $0x758] sm:$0xff] %v6757
        %8013 = vst [vmem:[%s7776 + $0x760] sm:$0xff] %v6759
        %8014 = vst [vmem:[%s7776 + $0x768] sm:$0xff] %v7236
        %8015 = vst [vmem:[%s7776 + $0x770] sm:$0xff] %v7238
        %8016 = vst.msk [vmem:[%s7776 + $0x778] sm:$0xff] %vm2540, %v7668
        %8017 = vst [vmem:[%s7776 + $0x780] sm:$0xff] %v6763
        %8018 = vst [vmem:[%s7776 + $0x788] sm:$0xff] %v6765
        %8019 = vst [vmem:[%s7776 + $0x790] sm:$0xff] %v7242
        %8020 = vst [vmem:[%s7776 + $0x798] sm:$0xff] %v7244
        %8021 = vst.msk [vmem:[%s7776 + $0x7a0] sm:$0xff] %vm2540, %v7673
        %8022 = vst [vmem:[%s7776 + $0x7a8] sm:$0xff] %v6769
        %8023 = vst [vmem:[%s7776 + $0x7b0] sm:$0xff] %v6771
        %8024 = vst [vmem:[%s7776 + $0x7b8] sm:$0xff] %v7248
        %8025 = vst [vmem:[%s7776 + $0x7c0] sm:$0xff] %v7250
        %8026 = vst.msk [vmem:[%s7776 + $0x7c8] sm:$0xff] %vm2540, %v7678
        %8027 = vst [vmem:[%s7776 + $0x7d0] sm:$0xff] %v6775
        %8028 = vst [vmem:[%s7776 + $0x7d8] sm:$0xff] %v6777
        %8029 = vst [vmem:[%s7776 + $0x7e0] sm:$0xff] %v7254
        %8030 = vst [vmem:[%s7776 + $0x7e8] sm:$0xff] %v7256
        %8031 = vst.msk [vmem:[%s7776 + $0x7f0] sm:$0xff] %vm2540, %v7683
        %8032 = vst [vmem:[%s7776 + $0x7f8] sm:$0xff] %v6781
        %8033 = vst [vmem:[%s7776 + $0x800] sm:$0xff] %v6783
        %8034 = vst [vmem:[%s7776 + $0x808] sm:$0xff] %v7260
        %8035 = vst [vmem:[%s7776 + $0x810] sm:$0xff] %v7262
        %8036 = vst.msk [vmem:[%s7776 + $0x818] sm:$0xff] %vm2540, %v7688
        %8037 = vst [vmem:[%s7776 + $0x820] sm:$0xff] %v6787
        %8038 = vst [vmem:[%s7776 + $0x828] sm:$0xff] %v6789
        %8039 = vst [vmem:[%s7776 + $0x830] sm:$0xff] %v7266
        %8040 = vst [vmem:[%s7776 + $0x838] sm:$0xff] %v7268
        %8041 = vst.msk [vmem:[%s7776 + $0x840] sm:$0xff] %vm2540, %v7693
        %8042 = vst [vmem:[%s7776 + $0x848] sm:$0xff] %v6793
        %8043 = vst [vmem:[%s7776 + $0x850] sm:$0xff] %v6795
        %8044 = vst [vmem:[%s7776 + $0x858] sm:$0xff] %v7272
        %8045 = vst [vmem:[%s7776 + $0x860] sm:$0xff] %v7274
        %8046 = vst.msk [vmem:[%s7776 + $0x868] sm:$0xff] %vm2540, %v7698
        %8047 = vst [vmem:[%s7776 + $0x870] sm:$0xff] %v6799
        %8048 = vst [vmem:[%s7776 + $0x878] sm:$0xff] %v6801
        %8049 = vst [vmem:[%s7776 + $0x880] sm:$0xff] %v7278
        %8050 = vst [vmem:[%s7776 + $0x888] sm:$0xff] %v7280
        %8051 = vst.msk [vmem:[%s7776 + $0x890] sm:$0xff] %vm2540, %v7703
        %8052 = vst [vmem:[%s7776 + $0x898] sm:$0xff] %v6805
        %8053 = vst [vmem:[%s7776 + $0x8a0] sm:$0xff] %v6807
        %8054 = vst [vmem:[%s7776 + $0x8a8] sm:$0xff] %v7284
        %8055 = vst [vmem:[%s7776 + $0x8b0] sm:$0xff] %v7286
        %8056 = vst.msk [vmem:[%s7776 + $0x8b8] sm:$0xff] %vm2540, %v7708
        %8057 = vst [vmem:[%s7776 + $0x8c0] sm:$0xff] %v6811
        %8058 = vst [vmem:[%s7776 + $0x8c8] sm:$0xff] %v6813
        %8059 = vst [vmem:[%s7776 + $0x8d0] sm:$0xff] %v7290
        %8060 = vst [vmem:[%s7776 + $0x8d8] sm:$0xff] %v7292
        %8061 = vst.msk [vmem:[%s7776 + $0x8e0] sm:$0xff] %vm2540, %v7713
        %8062 = vst [vmem:[%s7776 + $0x8e8] sm:$0xff] %v6817
        %8063 = vst [vmem:[%s7776 + $0x8f0] sm:$0xff] %v6819
        %8064 = vst [vmem:[%s7776 + $0x8f8] sm:$0xff] %v7296
        %8065 = vst [vmem:[%s7776 + $0x900] sm:$0xff] %v7298
        %8066 = vst.msk [vmem:[%s7776 + $0x908] sm:$0xff] %vm2540, %v7718
        %8067 = vst [vmem:[%s7776 + $0x910] sm:$0xff] %v6823
        %8068 = vst [vmem:[%s7776 + $0x918] sm:$0xff] %v6825
        %8069 = vst [vmem:[%s7776 + $0x920] sm:$0xff] %v7302
        %8070 = vst [vmem:[%s7776 + $0x928] sm:$0xff] %v7304
        %8071 = vst.msk [vmem:[%s7776 + $0x930] sm:$0xff] %vm2540, %v7723
        %8072 = vst [vmem:[%s7776 + $0x938] sm:$0xff] %v6829
        %8073 = vst [vmem:[%s7776 + $0x940] sm:$0xff] %v6831
        %8074 = vst [vmem:[%s7776 + $0x948] sm:$0xff] %v7308
        %8075 = vst [vmem:[%s7776 + $0x950] sm:$0xff] %v7310
        %8076 = vst.msk [vmem:[%s7776 + $0x958] sm:$0xff] %vm2540, %v7728
        %8077 = vst [vmem:[%s7776 + $0x960] sm:$0xff] %v6835
        %8078 = vst [vmem:[%s7776 + $0x968] sm:$0xff] %v6837
        %8079 = vst [vmem:[%s7776 + $0x970] sm:$0xff] %v7314
        %8080 = vst [vmem:[%s7776 + $0x978] sm:$0xff] %v7316
        %8081 = vst.msk [vmem:[%s7776 + $0x980] sm:$0xff] %vm2540, %v7733
        %8082 = vst [vmem:[%s7776 + $0x988] sm:$0xff] %v6841
        %8083 = vst [vmem:[%s7776 + $0x990] sm:$0xff] %v6843
        %8084 = vst [vmem:[%s7776 + $0x998] sm:$0xff] %v7320
        %8085 = vst [vmem:[%s7776 + $0x9a0] sm:$0xff] %v7322
        %8086 = vst.msk [vmem:[%s7776 + $0x9a8] sm:$0xff] %vm2540, %v7738
        %8087 = vst [vmem:[%s7776 + $0x9b0] sm:$0xff] %v6847
        %8088 = vst [vmem:[%s7776 + $0x9b8] sm:$0xff] %v6849
        %8089 = vst [vmem:[%s7776 + $0x9c0] sm:$0xff] %v7326
        %8090 = vst [vmem:[%s7776 + $0x9c8] sm:$0xff] %v7328
        %8091 = vst.msk [vmem:[%s7776 + $0x9d0] sm:$0xff] %vm2540, %v7743
        %8092 = vst [vmem:[%s7776 + $0x9d8] sm:$0xff] %v6853
        %8093 = vst [vmem:[%s7776 + $0x9e0] sm:$0xff] %v6855
        %8094 = vst [vmem:[%s7776 + $0x9e8] sm:$0xff] %v7332
        %8095 = vst [vmem:[%s7776 + $0x9f0] sm:$0xff] %v7334
        %8096 = vst.msk [vmem:[%s7776 + $0x9f8] sm:$0xff] %vm2540, %v7748
        %8097 = vst [vmem:[%s7776 + $0xa00] sm:$0xff] %v6859
        %8098 = vst [vmem:[%s7776 + $0xa08] sm:$0xff] %v6861
        %8099 = vst [vmem:[%s7776 + $0xa10] sm:$0xff] %v7338
        %8100 = vst [vmem:[%s7776 + $0xa18] sm:$0xff] %v7340
        %8101 = vst.msk [vmem:[%s7776 + $0xa20] sm:$0xff] %vm2540, %v7753
        %8102 = vst [vmem:[%s7776 + $0xa28] sm:$0xff] %v6865
        %8103 = vst [vmem:[%s7776 + $0xa30] sm:$0xff] %v6867
        %8104 = vst [vmem:[%s7776 + $0xa38] sm:$0xff] %v7344
        %8105 = vst [vmem:[%s7776 + $0xa40] sm:$0xff] %v7346
        %8106 = vst.msk [vmem:[%s7776 + $0xa48] sm:$0xff] %vm2540, %v7758
        %8107 = vst [vmem:[%s7776 + $0xa50] sm:$0xff] %v6871
        %8108 = vst [vmem:[%s7776 + $0xa58] sm:$0xff] %v6873
        %8109 = vst [vmem:[%s7776 + $0xa60] sm:$0xff] %v7350
        %8110 = vst [vmem:[%s7776 + $0xa68] sm:$0xff] %v7352
        %8111 = vst.msk [vmem:[%s7776 + $0xa70] sm:$0xff] %vm2540, %v7763
        %8112 = vst [vmem:[%s7776 + $0xa78] sm:$0xff] %v6877
        %8113 = vst [vmem:[%s7776 + $0xa80] sm:$0xff] %v6879
        %8114 = vst [vmem:[%s7776 + $0xa88] sm:$0xff] %v7356
        %8115 = vst [vmem:[%s7776 + $0xa90] sm:$0xff] %v7358
        %8116 = vst.msk [vmem:[%s7776 + $0xa98] sm:$0xff] %vm2540, %v7768
        %8117 = vst [vmem:[%s7776 + $0xaa0] sm:$0x3f] %v6883
        %8118 = vst [vmem:[%s7776 + $0xaa8] sm:$0x3f] %v6885
        %8119 = vst [vmem:[%s7776 + $0xab0] sm:$0x3f] %v7362
        %8120 = vst [vmem:[%s7776 + $0xab8] sm:$0x3f] %v7364
        %8121 = vst.msk [vmem:[%s7776 + $0xac0] sm:$0x3f] %vm2881, %v7773
        %s8122 = smul.u32 69, %s23
        %p8123 = scmp.lt.s32.totalorder %s22, 1
        %s8124 = scalar_select %p8123, %s22, 1
        %p8125 = scmp.lt.s32.totalorder %s8122, 68
        %s8126 = scalar_select %p8125, %s8122, 68
        %s8127 = smul.addr %s8126, 5
        %s8128 = smul.addr %s8124, 1035
        %s8129 = sadd.s32 %s8127, %s8128
        %s8130 = smul.addr %s8129, 8
        %s8131 = scalar_lea.vmem %s3, %s8130
        // Predicated region
        $region37: #{fast_base_transform.1} parent=31 // pred_check
          %p8132 = pneg %p133
        $region38: #{fast_base_transform.1} parent=31 // pred_check_branch
          %8134 = sbr.rel (%p8132) target = $region40
        $region39: #{fast_base_transform.1} parent=31 // pred_region
          %s8135 = smul.u32 69, %s23
        $region40: #{fast_base_transform.1} parent=31 // pred_fallthru
          _
      $region32: #{fast_base_transform.1} parent=5 // pred_fallthru
        _
      %p8136 = scmp.le.s32.totalorder 2, %s12
      // Predicated region
      $region41: #{fast_base_transform.1} parent=5 // pred_check
        %p8137 = pneg %p8136
      $region42: #{fast_base_transform.1} parent=5 // pred_check_branch
        %8139 = sbr.rel (%p8137) target = $region44
      $region43: #{fast_base_transform.1} parent=5 // pred_region
        %s8140 = ssub.s32 %s12, 2
        // Predicated region
        $region45: #{fast_base_transform.1} parent=43 // pred_check
          %p8141 = pneg %p139
        $region46: #{fast_base_transform.1} parent=43 // pred_check_branch
          %8143 = sbr.rel (%p8141) target = $region48
        $region47: #{fast_base_transform.1} parent=43 // pred_region
          %s8144 = smul.u32 69, %s26
          %p8145 = scmp.lt.s32.totalorder %s25, 1
          %s8146 = scalar_select %p8145, %s25, 1
          %p8147 = scmp.lt.s32.totalorder %s8144, 68
          %s8148 = scalar_select %p8147, %s8144, 68
          %s8149 = smul.addr %s8148, 5
          %s8150 = smul.addr %s8146, 1035
          %s8151 = sadd.s32 %s8149, %s8150
          %s8152 = smul.addr %s8151, 8
          %s8153 = scalar_lea.vmem %s3, %s8152
        $region48: #{fast_base_transform.1} parent=43 // pred_fallthru
          _
      $region44: #{fast_base_transform.1} parent=5 // pred_fallthru
        _
    $region6: #{fast_base_transform.1} parent=1 // loop_footer
      %s16 = sadd.s32 1, %s12
    $region7: #{fast_base_transform.1} parent=1 // loop_footer_branch
      %11 = sbr.rel target = $region3
    $region8: #{fast_base_transform.1} parent=1 // loop_exit
      _
    %8154 = vsyncpa [#allocation3], 1
    %s8155 = scalar_lea.sflag [#allocation3], 1
    %8156 = vsyncpa %s8155, 1

</llo_original>
